<compile_context>
chip_gen: v6e
topology: v6e:2x2x1
jax: 0.10.0
libtpu: 0.0.40
codegen_flags: <defaults>
</compile_context>

<pallas_src>
import jax
import jax.numpy as jnp
from jax.experimental import pallas as pl
from jax.experimental.pallas import tpu as pltpu


LATENT = 64                                  # fc6 input features
FC_DIMS = (64, 128, 256, 512, 1024, 1280)    # fc6 .. fc10
SEC_LEN = 256
N_SEC = 5
DECONV_KS = (5, 9, 17, 33, 65)               # deconv1_2 .. deconv1_6 kernel sizes
DECONV_PADS = (2, 4, 8, 16, 32)


# ----------------------------- Pallas kernel --------------------------------
def _netnet_decoder_kernel(x_ref,
                           w6_ref, b6_ref, w7_ref, b7_ref, w8_ref, b8_ref,
                           w9_ref, b9_ref, w10_ref, b10_ref,
                           tmat_ref, dbias_ref,
                           out_ref):
    """Entire NetnetDecoder forward for one (sublane-padded) batch tile."""

    def dense_relu(h, w_ref, b_ref):
        # bf16 operands on the MXU, f32 accumulation; bias + relu in f32 on the VPU.
        y = jnp.dot(h.astype(jnp.bfloat16), w_ref[...],
                    preferred_element_type=jnp.float32)
        return jnp.maximum(y + b_ref[...], 0.0)

    h = x_ref[...]                               # [M, 64]   f32
    h = dense_relu(h, w6_ref, b6_ref)            # [M, 128]
    h = dense_relu(h, w7_ref, b7_ref)            # [M, 256]
    h = dense_relu(h, w8_ref, b8_ref)            # [M, 512]
    h = dense_relu(h, w9_ref, b9_ref)            # [M, 1024]
    h = dense_relu(h, w10_ref, b10_ref)          # [M, 1280]

    # Five ConvTranspose1d(1,1,K,stride=1) layers as [256,256] Toeplitz matmuls.
    h_bf = h.astype(jnp.bfloat16)
    m = out_ref.shape[0]
    acc = jnp.zeros((m, SEC_LEN), jnp.float32)
    for s in range(N_SEC):                       # static unroll (5 sections)
        sec = h_bf[:, s * SEC_LEN:(s + 1) * SEC_LEN]      # lane-aligned static slice
        y = jnp.dot(sec, tmat_ref[s], preferred_element_type=jnp.float32)
        y = y + dbias_ref[s]                              # [1,256] broadcast bias
        acc = acc + jnp.maximum(y, 0.0)                   # relu per deconv, then sum
    out_ref[...] = jnp.tanh(acc)                 # lane-dense [M, 256] store


def _full_spec(shape):
    # Whole-array block, single grid point.
    return pl.BlockSpec(shape, lambda: (0,) * len(shape))


def netnet_decoder_pallas(x, params):
    """x: [N, 64] -> output [N, 1, 256] (matches PyTorch NetnetDecoder.forward)."""
    n = x.shape[0]
    m = max(8, ((n + 7) // 8) * 8)               # pad batch to f32 sublane quantum
    x_pad = jnp.zeros((m, LATENT), jnp.float32).at[:n].set(x.astype(jnp.float32))

    args = (x_pad,)
    for i in range(5):
        args += (params[f"w{i + 6}"], params[f"b{i + 6}"])
    args += (params["tmat"], params["dbias"])

    fc_flops = sum(a * b for a, b in zip(FC_DIMS[:-1], FC_DIMS[1:]))
    flops = 2 * m * (fc_flops + N_SEC * SEC_LEN * SEC_LEN)
    bytes_accessed = sum(int(a.size) * a.dtype.itemsize for a in args) + m * SEC_LEN * 4
    cost = pl.CostEstimate(flops=flops,
                           transcendentals=m * SEC_LEN,          # tanh
                           bytes_accessed=bytes_accessed)

    out = pl.pallas_call(
        _netnet_decoder_kernel,
        out_shape=jax.ShapeDtypeStruct((m, SEC_LEN), jnp.float32),
        grid=(),
        in_specs=[_full_spec(a.shape) for a in args],
        out_specs=_full_spec((m, SEC_LEN)),
        cost_estimate=cost,
    )(*args)

    # Slice padded rows back off and restore the PyTorch [N, 1, 256] channel layout.
    return out[:n].reshape(n, 1, SEC_LEN)


# ------------------------ deterministic parameter init ----------------------
def init_params(key):
    ks = jax.random.split(key, 16)

    def linear(k, fan_in, fan_out):
        kw, kb = jax.random.split(k)
        bound = 1.0 / (fan_in ** 0.5)
        w = jax.random.uniform(kw, (fan_in, fan_out), jnp.float32, -bound, bound)
        b = jax.random.uniform(kb, (1, fan_out), jnp.float32, -bound, bound)
        return w, b

    p = {}
    # fc6 .. fc10 (the only Linear layers used in forward).
    for i, (fi, fo) in enumerate(zip(FC_DIMS[:-1], FC_DIMS[1:])):
        w, b = linear(ks[i], fi, fo)
        p[f"w{i + 6}"] = w.astype(jnp.bfloat16)   # bf16 weights: halve DMA bytes
        p[f"b{i + 6}"] = b                        # f32 biases

    # deconv1_2 .. deconv1_6 as Toeplitz matrices:
    #   ConvTranspose1d (stride=1, padding=p):  y[j] = bias + sum_i x[i] * w[j - i + p]
    # so y = x @ T + bias with T[i, j] = w[j - i + p] where valid, else 0.
    idx_i = jnp.arange(SEC_LEN)[:, None]
    idx_j = jnp.arange(SEC_LEN)[None, :]
    tmats, dbias = [], []
    for s, (K, pad) in enumerate(zip(DECONV_KS, DECONV_PADS)):
        kw, kb = jax.random.split(ks[8 + s])
        bound = 1.0 / (K ** 0.5)
        w = jax.random.uniform(kw, (K,), jnp.float32, -bound, bound)
        b = jax.random.uniform(kb, (), jnp.float32, -bound, bound)
        kk = idx_j - idx_i + pad
        t = jnp.where((kk >= 0) & (kk < K), w[jnp.clip(kk, 0, K - 1)], 0.0)
        tmats.append(t)
        dbias.append(jnp.full((1, SEC_LEN), b, jnp.float32))
    p["tmat"] = jnp.stack(tmats).astype(jnp.bfloat16)   # [5, 256, 256] bf16
    p["dbias"] = jnp.stack(dbias)                       # [5, 1, 256]   f32
    return p


# --------------------------------- main --------------------------------------
if __name__ == "__main__":
    key = jax.random.PRNGKey(0)
    k_param, k_x = jax.random.split(key)

    N = 2
    params = init_params(k_param)
    x = jax.random.normal(k_x, (N, LATENT), jnp.float32)   # fc6 expects 64 features

    out = netnet_decoder_pallas(x, params)
    jax.block_until_ready(out)

    assert out.shape == (N, 1, SEC_LEN)                    # [N, 1, 256] like PyTorch
    assert bool(jnp.all(jnp.isfinite(out)))
    assert bool(jnp.all(jnp.abs(out) <= 1.0))              # tanh output range
    print("KERNEL_OK")
</pallas_src>

<mosaic_0001>
module attributes {stable_mosaic.version = 11 : i64} {
  func.func @_netnet_decoder_kernel(%arg0: memref<8x64xf32, #tpu.memory_space<vmem>>, %arg1: memref<64x128xbf16, #tpu.memory_space<vmem>>, %arg2: memref<1x128xf32, #tpu.memory_space<vmem>>, %arg3: memref<128x256xbf16, #tpu.memory_space<vmem>>, %arg4: memref<1x256xf32, #tpu.memory_space<vmem>>, %arg5: memref<256x512xbf16, #tpu.memory_space<vmem>>, %arg6: memref<1x512xf32, #tpu.memory_space<vmem>>, %arg7: memref<512x1024xbf16, #tpu.memory_space<vmem>>, %arg8: memref<1x1024xf32, #tpu.memory_space<vmem>>, %arg9: memref<1024x1280xbf16, #tpu.memory_space<vmem>>, %arg10: memref<1x1280xf32, #tpu.memory_space<vmem>>, %arg11: memref<5x256x256xbf16, #tpu.memory_space<vmem>>, %arg12: memref<5x1x256xf32, #tpu.memory_space<vmem>>, %arg13: memref<8x256xf32, #tpu.memory_space<vmem>>) attributes {dimension_semantics = [], scalar_prefetch = 0 : i64, scratch_operands = 0 : i64, tpu.core_type = #tpu.core_type<tc>} {
    %c0 = arith.constant 0 : index
    %c0_0 = arith.constant 0 : index
    %0 = vector.load %arg0[%c0, %c0_0] : memref<8x64xf32, #tpu.memory_space<vmem>>, vector<8x64xf32>
    %1 = arith.truncf %0 : vector<8x64xf32> to vector<8x64xbf16>
    %c0_1 = arith.constant 0 : index
    %c0_2 = arith.constant 0 : index
    %2 = vector.load %arg1[%c0_1, %c0_2] : memref<64x128xbf16, #tpu.memory_space<vmem>>, vector<64x128xbf16>
    %cst = arith.constant dense<0.000000e+00> : vector<8x128xf32>
    %3 = tpu.matmul %1, %2, %cst {dimension_numbers = #tpu.dot_dimension_numbers<[1], [0], [0], [1], [0, 0, 1, 1], [], []>} : vector<8x64xbf16>, vector<64x128xbf16>, vector<8x128xf32> -> vector<8x128xf32>
    %c0_3 = arith.constant 0 : index
    %c0_4 = arith.constant 0 : index
    %4 = vector.load %arg2[%c0_3, %c0_4] : memref<1x128xf32, #tpu.memory_space<vmem>>, vector<1x128xf32>
    %5 = vector.broadcast %4 : vector<1x128xf32> to vector<8x128xf32>
    %6 = arith.addf %3, %5 : vector<8x128xf32>
    %cst_5 = arith.constant 0.000000e+00 : f32
    %7 = vector.broadcast %cst_5 : f32 to vector<8x128xf32>
    %8 = arith.maximumf %6, %7 : vector<8x128xf32>
    %9 = arith.truncf %8 : vector<8x128xf32> to vector<8x128xbf16>
    %c0_6 = arith.constant 0 : index
    %c0_7 = arith.constant 0 : index
    %10 = vector.load %arg3[%c0_6, %c0_7] : memref<128x256xbf16, #tpu.memory_space<vmem>>, vector<128x256xbf16>
    %cst_8 = arith.constant dense<0.000000e+00> : vector<8x256xf32>
    %11 = tpu.matmul %9, %10, %cst_8 {dimension_numbers = #tpu.dot_dimension_numbers<[1], [0], [0], [1], [0, 0, 1, 1], [], []>} : vector<8x128xbf16>, vector<128x256xbf16>, vector<8x256xf32> -> vector<8x256xf32>
    %c0_9 = arith.constant 0 : index
    %c0_10 = arith.constant 0 : index
    %12 = vector.load %arg4[%c0_9, %c0_10] : memref<1x256xf32, #tpu.memory_space<vmem>>, vector<1x256xf32>
    %13 = vector.broadcast %12 : vector<1x256xf32> to vector<8x256xf32>
    %14 = arith.addf %11, %13 : vector<8x256xf32>
    %cst_11 = arith.constant 0.000000e+00 : f32
    %15 = vector.broadcast %cst_11 : f32 to vector<8x256xf32>
    %16 = arith.maximumf %14, %15 : vector<8x256xf32>
    %17 = arith.truncf %16 : vector<8x256xf32> to vector<8x256xbf16>
    %c0_12 = arith.constant 0 : index
    %c0_13 = arith.constant 0 : index
    %18 = vector.load %arg5[%c0_12, %c0_13] : memref<256x512xbf16, #tpu.memory_space<vmem>>, vector<256x512xbf16>
    %cst_14 = arith.constant dense<0.000000e+00> : vector<8x512xf32>
    %19 = tpu.matmul %17, %18, %cst_14 {dimension_numbers = #tpu.dot_dimension_numbers<[1], [0], [0], [1], [0, 0, 1, 1], [], []>} : vector<8x256xbf16>, vector<256x512xbf16>, vector<8x512xf32> -> vector<8x512xf32>
    %c0_15 = arith.constant 0 : index
    %c0_16 = arith.constant 0 : index
    %20 = vector.load %arg6[%c0_15, %c0_16] : memref<1x512xf32, #tpu.memory_space<vmem>>, vector<1x512xf32>
    %21 = vector.broadcast %20 : vector<1x512xf32> to vector<8x512xf32>
    %22 = arith.addf %19, %21 : vector<8x512xf32>
    %cst_17 = arith.constant 0.000000e+00 : f32
    %23 = vector.broadcast %cst_17 : f32 to vector<8x512xf32>
    %24 = arith.maximumf %22, %23 : vector<8x512xf32>
    %25 = arith.truncf %24 : vector<8x512xf32> to vector<8x512xbf16>
    %c0_18 = arith.constant 0 : index
    %c0_19 = arith.constant 0 : index
    %26 = vector.load %arg7[%c0_18, %c0_19] : memref<512x1024xbf16, #tpu.memory_space<vmem>>, vector<512x1024xbf16>
    %cst_20 = arith.constant dense<0.000000e+00> : vector<8x1024xf32>
    %27 = tpu.matmul %25, %26, %cst_20 {dimension_numbers = #tpu.dot_dimension_numbers<[1], [0], [0], [1], [0, 0, 1, 1], [], []>} : vector<8x512xbf16>, vector<512x1024xbf16>, vector<8x1024xf32> -> vector<8x1024xf32>
    %c0_21 = arith.constant 0 : index
    %c0_22 = arith.constant 0 : index
    %28 = vector.load %arg8[%c0_21, %c0_22] : memref<1x1024xf32, #tpu.memory_space<vmem>>, vector<1x1024xf32>
    %29 = vector.broadcast %28 : vector<1x1024xf32> to vector<8x1024xf32>
    %30 = arith.addf %27, %29 : vector<8x1024xf32>
    %cst_23 = arith.constant 0.000000e+00 : f32
    %31 = vector.broadcast %cst_23 : f32 to vector<8x1024xf32>
    %32 = arith.maximumf %30, %31 : vector<8x1024xf32>
    %33 = arith.truncf %32 : vector<8x1024xf32> to vector<8x1024xbf16>
    %c0_24 = arith.constant 0 : index
    %c0_25 = arith.constant 0 : index
    %34 = vector.load %arg9[%c0_24, %c0_25] : memref<1024x1280xbf16, #tpu.memory_space<vmem>>, vector<1024x1280xbf16>
    %cst_26 = arith.constant dense<0.000000e+00> : vector<8x1280xf32>
    %35 = tpu.matmul %33, %34, %cst_26 {dimension_numbers = #tpu.dot_dimension_numbers<[1], [0], [0], [1], [0, 0, 1, 1], [], []>} : vector<8x1024xbf16>, vector<1024x1280xbf16>, vector<8x1280xf32> -> vector<8x1280xf32>
    %c0_27 = arith.constant 0 : index
    %c0_28 = arith.constant 0 : index
    %36 = vector.load %arg10[%c0_27, %c0_28] : memref<1x1280xf32, #tpu.memory_space<vmem>>, vector<1x1280xf32>
    %37 = vector.broadcast %36 : vector<1x1280xf32> to vector<8x1280xf32>
    %38 = arith.addf %35, %37 : vector<8x1280xf32>
    %cst_29 = arith.constant 0.000000e+00 : f32
    %39 = vector.broadcast %cst_29 : f32 to vector<8x1280xf32>
    %40 = arith.maximumf %38, %39 : vector<8x1280xf32>
    %41 = arith.truncf %40 : vector<8x1280xf32> to vector<8x1280xbf16>
    %cst_30 = arith.constant 0.000000e+00 : f32
    %42 = vector.broadcast %cst_30 : f32 to vector<8x256xf32>
    %43 = vector.extract_strided_slice %41 {offsets = [0, 0], sizes = [8, 256], strides = [1, 1]} : vector<8x1280xbf16> to vector<8x256xbf16>
    %c0_31 = arith.constant 0 : index
    %c0_32 = arith.constant 0 : index
    %c0_33 = arith.constant 0 : index
    %44 = vector.load %arg11[%c0_31, %c0_32, %c0_33] : memref<5x256x256xbf16, #tpu.memory_space<vmem>>, vector<1x256x256xbf16>
    %45 = vector.shape_cast %44 : vector<1x256x256xbf16> to vector<256x256xbf16>
    %cst_34 = arith.constant dense<0.000000e+00> : vector<8x256xf32>
    %46 = tpu.matmul %43, %45, %cst_34 {dimension_numbers = #tpu.dot_dimension_numbers<[1], [0], [0], [1], [0, 0, 1, 1], [], []>} : vector<8x256xbf16>, vector<256x256xbf16>, vector<8x256xf32> -> vector<8x256xf32>
    %c0_35 = arith.constant 0 : index
    %c0_36 = arith.constant 0 : index
    %c0_37 = arith.constant 0 : index
    %47 = vector.load %arg12[%c0_35, %c0_36, %c0_37] : memref<5x1x256xf32, #tpu.memory_space<vmem>>, vector<1x1x256xf32>
    %48 = vector.shape_cast %47 : vector<1x1x256xf32> to vector<1x256xf32>
    %49 = vector.broadcast %48 : vector<1x256xf32> to vector<8x256xf32>
    %50 = arith.addf %46, %49 : vector<8x256xf32>
    %cst_38 = arith.constant 0.000000e+00 : f32
    %51 = vector.broadcast %cst_38 : f32 to vector<8x256xf32>
    %52 = arith.maximumf %50, %51 : vector<8x256xf32>
    %53 = arith.addf %42, %52 : vector<8x256xf32>
    %54 = vector.extract_strided_slice %41 {offsets = [0, 256], sizes = [8, 256], strides = [1, 1]} : vector<8x1280xbf16> to vector<8x256xbf16>
    %c1 = arith.constant 1 : index
    %c0_39 = arith.constant 0 : index
    %c0_40 = arith.constant 0 : index
    %55 = vector.load %arg11[%c1, %c0_39, %c0_40] : memref<5x256x256xbf16, #tpu.memory_space<vmem>>, vector<1x256x256xbf16>
    %56 = vector.shape_cast %55 : vector<1x256x256xbf16> to vector<256x256xbf16>
    %cst_41 = arith.constant dense<0.000000e+00> : vector<8x256xf32>
    %57 = tpu.matmul %54, %56, %cst_41 {dimension_numbers = #tpu.dot_dimension_numbers<[1], [0], [0], [1], [0, 0, 1, 1], [], []>} : vector<8x256xbf16>, vector<256x256xbf16>, vector<8x256xf32> -> vector<8x256xf32>
    %c1_42 = arith.constant 1 : index
    %c0_43 = arith.constant 0 : index
    %c0_44 = arith.constant 0 : index
    %58 = vector.load %arg12[%c1_42, %c0_43, %c0_44] : memref<5x1x256xf32, #tpu.memory_space<vmem>>, vector<1x1x256xf32>
    %59 = vector.shape_cast %58 : vector<1x1x256xf32> to vector<1x256xf32>
    %60 = vector.broadcast %59 : vector<1x256xf32> to vector<8x256xf32>
    %61 = arith.addf %57, %60 : vector<8x256xf32>
    %cst_45 = arith.constant 0.000000e+00 : f32
    %62 = vector.broadcast %cst_45 : f32 to vector<8x256xf32>
    %63 = arith.maximumf %61, %62 : vector<8x256xf32>
    %64 = arith.addf %53, %63 : vector<8x256xf32>
    %65 = vector.extract_strided_slice %41 {offsets = [0, 512], sizes = [8, 256], strides = [1, 1]} : vector<8x1280xbf16> to vector<8x256xbf16>
    %c2 = arith.constant 2 : index
    %c0_46 = arith.constant 0 : index
    %c0_47 = arith.constant 0 : index
    %66 = vector.load %arg11[%c2, %c0_46, %c0_47] : memref<5x256x256xbf16, #tpu.memory_space<vmem>>, vector<1x256x256xbf16>
    %67 = vector.shape_cast %66 : vector<1x256x256xbf16> to vector<256x256xbf16>
    %cst_48 = arith.constant dense<0.000000e+00> : vector<8x256xf32>
    %68 = tpu.matmul %65, %67, %cst_48 {dimension_numbers = #tpu.dot_dimension_numbers<[1], [0], [0], [1], [0, 0, 1, 1], [], []>} : vector<8x256xbf16>, vector<256x256xbf16>, vector<8x256xf32> -> vector<8x256xf32>
    %c2_49 = arith.constant 2 : index
    %c0_50 = arith.constant 0 : index
    %c0_51 = arith.constant 0 : index
    %69 = vector.load %arg12[%c2_49, %c0_50, %c0_51] : memref<5x1x256xf32, #tpu.memory_space<vmem>>, vector<1x1x256xf32>
    %70 = vector.shape_cast %69 : vector<1x1x256xf32> to vector<1x256xf32>
    %71 = vector.broadcast %70 : vector<1x256xf32> to vector<8x256xf32>
    %72 = arith.addf %68, %71 : vector<8x256xf32>
    %cst_52 = arith.constant 0.000000e+00 : f32
    %73 = vector.broadcast %cst_52 : f32 to vector<8x256xf32>
    %74 = arith.maximumf %72, %73 : vector<8x256xf32>
    %75 = arith.addf %64, %74 : vector<8x256xf32>
    %76 = vector.extract_strided_slice %41 {offsets = [0, 768], sizes = [8, 256], strides = [1, 1]} : vector<8x1280xbf16> to vector<8x256xbf16>
    %c3 = arith.constant 3 : index
    %c0_53 = arith.constant 0 : index
    %c0_54 = arith.constant 0 : index
    %77 = vector.load %arg11[%c3, %c0_53, %c0_54] : memref<5x256x256xbf16, #tpu.memory_space<vmem>>, vector<1x256x256xbf16>
    %78 = vector.shape_cast %77 : vector<1x256x256xbf16> to vector<256x256xbf16>
    %cst_55 = arith.constant dense<0.000000e+00> : vector<8x256xf32>
    %79 = tpu.matmul %76, %78, %cst_55 {dimension_numbers = #tpu.dot_dimension_numbers<[1], [0], [0], [1], [0, 0, 1, 1], [], []>} : vector<8x256xbf16>, vector<256x256xbf16>, vector<8x256xf32> -> vector<8x256xf32>
    %c3_56 = arith.constant 3 : index
    %c0_57 = arith.constant 0 : index
    %c0_58 = arith.constant 0 : index
    %80 = vector.load %arg12[%c3_56, %c0_57, %c0_58] : memref<5x1x256xf32, #tpu.memory_space<vmem>>, vector<1x1x256xf32>
    %81 = vector.shape_cast %80 : vector<1x1x256xf32> to vector<1x256xf32>
    %82 = vector.broadcast %81 : vector<1x256xf32> to vector<8x256xf32>
    %83 = arith.addf %79, %82 : vector<8x256xf32>
    %cst_59 = arith.constant 0.000000e+00 : f32
    %84 = vector.broadcast %cst_59 : f32 to vector<8x256xf32>
    %85 = arith.maximumf %83, %84 : vector<8x256xf32>
    %86 = arith.addf %75, %85 : vector<8x256xf32>
    %87 = vector.extract_strided_slice %41 {offsets = [0, 1024], sizes = [8, 256], strides = [1, 1]} : vector<8x1280xbf16> to vector<8x256xbf16>
    %c4 = arith.constant 4 : index
    %c0_60 = arith.constant 0 : index
    %c0_61 = arith.constant 0 : index
    %88 = vector.load %arg11[%c4, %c0_60, %c0_61] : memref<5x256x256xbf16, #tpu.memory_space<vmem>>, vector<1x256x256xbf16>
    %89 = vector.shape_cast %88 : vector<1x256x256xbf16> to vector<256x256xbf16>
    %cst_62 = arith.constant dense<0.000000e+00> : vector<8x256xf32>
    %90 = tpu.matmul %87, %89, %cst_62 {dimension_numbers = #tpu.dot_dimension_numbers<[1], [0], [0], [1], [0, 0, 1, 1], [], []>} : vector<8x256xbf16>, vector<256x256xbf16>, vector<8x256xf32> -> vector<8x256xf32>
    %c4_63 = arith.constant 4 : index
    %c0_64 = arith.constant 0 : index
    %c0_65 = arith.constant 0 : index
    %91 = vector.load %arg12[%c4_63, %c0_64, %c0_65] : memref<5x1x256xf32, #tpu.memory_space<vmem>>, vector<1x1x256xf32>
    %92 = vector.shape_cast %91 : vector<1x1x256xf32> to vector<1x256xf32>
    %93 = vector.broadcast %92 : vector<1x256xf32> to vector<8x256xf32>
    %94 = arith.addf %90, %93 : vector<8x256xf32>
    %cst_66 = arith.constant 0.000000e+00 : f32
    %95 = vector.broadcast %cst_66 : f32 to vector<8x256xf32>
    %96 = arith.maximumf %94, %95 : vector<8x256xf32>
    %97 = arith.addf %86, %96 : vector<8x256xf32>
    %98 = math.tanh %97 : vector<8x256xf32>
    %c0_67 = arith.constant 0 : index
    %c0_68 = arith.constant 0 : index
    %99 = vector.load %arg13[%c0_67, %c0_68] : memref<8x256xf32, #tpu.memory_space<vmem>>, vector<8x256xf32>
    tpu.vector_store %arg13[%c0_67, %c0_68], %98 {strides = array<i32>} : memref<8x256xf32, #tpu.memory_space<vmem>>, vector<8x256xf32>,
    return
  }
}

</mosaic_0001>

<llo_original>
// kernel: tpu_custom_call.1
$region0: #{tpu_custom_call.1}
  #allocation0 [shape = 'u32[]', space=smem, size = 0x4, offset = 0x4, fixed_abs, tag = 'smem constant byte address 0x4 - core index']
  #allocation1 [shape = 'u32[144,128]{1,0:T(1,128)}', space=vmem, size = 0x12000, scoped, tag = 'internal scratch']
  %s0 = inlined_call_operand.hbm [shape: f32[8,64], index: 0, kind: input, shape index: {}]
  %s1 = inlined_call_operand.hbm [shape: bf16[64,128], index: 1, kind: input, shape index: {}]
  %s2 = inlined_call_operand.hbm [shape: f32[1,128], index: 2, kind: input, shape index: {}]
  %s3 = inlined_call_operand.hbm [shape: bf16[128,256], index: 3, kind: input, shape index: {}]
  %s4 = inlined_call_operand.hbm [shape: f32[1,256], index: 4, kind: input, shape index: {}]
  %s5 = inlined_call_operand.hbm [shape: bf16[256,512], index: 5, kind: input, shape index: {}]
  %s6 = inlined_call_operand.hbm [shape: f32[1,512], index: 6, kind: input, shape index: {}]
  %s7 = inlined_call_operand.hbm [shape: bf16[512,1024], index: 7, kind: input, shape index: {}]
  %s8 = inlined_call_operand.hbm [shape: f32[1,1024], index: 8, kind: input, shape index: {}]
  %s9 = inlined_call_operand.hbm [shape: bf16[1024,1280], index: 9, kind: input, shape index: {}]
  %s10 = inlined_call_operand.hbm [shape: f32[1,1280], index: 10, kind: input, shape index: {}]
  %s11 = inlined_call_operand.hbm [shape: bf16[5,256,256], index: 11, kind: input, shape index: {}]
  %s12 = inlined_call_operand.hbm [shape: f32[5,1,256], index: 12, kind: input, shape index: {}]
  %s13 = inlined_call_operand.hbm [shape: f32[8,256], index: 13, kind: output, shape index: {}]
  %s14 = sld [smem:[#allocation0]]
  $region114: #{tpu_custom_call.1} parent=0
    _
  %s16 = ssub.s32 1, %s14
  %s17 = scalar_select 0, %s16, %s14
  $region1: #{tpu_custom_call.1} parent=0
    #allocation2 [shape = 'u8[4096]{0}', space=vmem, size = 0x1000, scoped, tag = 'input window, operand 0, single buffered']
    #allocation3 [shape = 's32[1]{0}', space=sflag, size = 0x4, scoped, tag = 'scoped memory for tpu_custom_call.1']
    #allocation4 [shape = 's32[1]{0}', space=sflag, size = 0x4, scoped, tag = 'scoped memory for tpu_custom_call.1']
    #allocation5 [shape = 'u8[16384]{0}', space=vmem, size = 0x4000, scoped, tag = 'input window, operand 1, single buffered']
    #allocation6 [shape = 's32[1]{0}', space=sflag, size = 0x4, scoped, tag = 'scoped memory for tpu_custom_call.1']
    #allocation7 [shape = 'u8[512]{0}', space=vmem, size = 0x400, scoped, tag = 'input window, operand 2, single buffered']
    #allocation8 [shape = 'u8[65536]{0}', space=vmem, size = 0x10000, scoped, tag = 'input window, operand 3, single buffered']
    #allocation9 [shape = 's32[1]{0}', space=sflag, size = 0x4, scoped, tag = 'scoped memory for tpu_custom_call.1']
    #allocation10 [shape = 'u8[1024]{0}', space=vmem, size = 0x400, scoped, tag = 'input window, operand 4, single buffered']
    #allocation11 [shape = 'u8[262144]{0}', space=vmem, size = 0x40000, scoped, tag = 'input window, operand 5, single buffered']
    #allocation12 [shape = 's32[1]{0}', space=sflag, size = 0x4, scoped, tag = 'scoped memory for tpu_custom_call.1']
    #allocation13 [shape = 'u8[2048]{0}', space=vmem, size = 0x800, scoped, tag = 'input window, operand 6, single buffered']
    #allocation14 [shape = 'u8[1048576]{0}', space=vmem, size = 0x100000, scoped, tag = 'input window, operand 7, single buffered']
    #allocation15 [shape = 's32[1]{0}', space=sflag, size = 0x4, scoped, tag = 'scoped memory for tpu_custom_call.1']
    #allocation16 [shape = 'u8[4096]{0}', space=vmem, size = 0x1000, scoped, tag = 'input window, operand 8, single buffered']
    #allocation17 [shape = 'u8[2621440]{0}', space=vmem, size = 0x280000, scoped, tag = 'input window, operand 9, single buffered']
    #allocation18 [shape = 's32[1]{0}', space=sflag, size = 0x4, scoped, tag = 'scoped memory for tpu_custom_call.1']
    #allocation19 [shape = 'u8[5120]{0}', space=vmem, size = 0x1400, scoped, tag = 'input window, operand 10, single buffered']
    #allocation20 [shape = 'u8[655360]{0}', space=vmem, size = 0xa0000, scoped, tag = 'input window, operand 11, single buffered']
    #allocation21 [shape = 's32[1]{0}', space=sflag, size = 0x4, scoped, tag = 'scoped memory for tpu_custom_call.1']
    #allocation22 [shape = 'u8[5120]{0}', space=vmem, size = 0x1400, scoped, tag = 'input window, operand 12, single buffered']
    #allocation23 [shape = 'u8[8192]{0}', space=vmem, size = 0x2000, scoped, tag = 'output window, operand 0, single buffered']
    %18 = vsyncpa [#allocation3], 0
    %19 = vsyncpa [#allocation6], 0
    %20 = vsyncpa [#allocation9], 0
    %21 = vsyncpa [#allocation12], 0
    %22 = vsyncpa [#allocation15], 0
    %23 = vsyncpa [#allocation18], 0
    %24 = vsyncpa [#allocation21], 0
    %25 = vsyncpa [#allocation4], 0
    // Predicated region
    $region2: #{tpu_custom_call.1} parent=1 // pred_check
      _
    $region3: #{tpu_custom_call.1} parent=1 // pred_check_branch
      %27 = sbr.rel (0) target = $region5
    $region4: #{tpu_custom_call.1} parent=1 // pred_region
      %s29 = ssub.s32 128, 128
      %30 = vsyncadd [#allocation3], %s29
      %s32 = sshll.u32 [#allocation2], 4
      %s33 = int_to_ptr.vmem [resolvable:$true] %s32
      %35 = dma.hbm_to_vmem [thread:$0]  %s0, 128, %s33, [#allocation3]
    $region5: #{tpu_custom_call.1} parent=1 // pred_fallthru
      _
    // Predicated region
    $region6: #{tpu_custom_call.1} parent=1 // pred_check
      _
    $region7: #{tpu_custom_call.1} parent=1 // pred_check_branch
      %37 = sbr.rel (0) target = $region9
    $region8: #{tpu_custom_call.1} parent=1 // pred_region
      %s39 = ssub.s32 512, 512
      %40 = vsyncadd [#allocation6], %s39
      %s41 = sshll.u32 [#allocation5], 4
      %s42 = int_to_ptr.vmem [resolvable:$true] %s41
      %47 = dma.hbm_to_vmem [thread:$0]  %s1, 512, %s42, [#allocation6], 64, 64, 4
    $region9: #{tpu_custom_call.1} parent=1 // pred_fallthru
      _
    // Predicated region
    $region10: #{tpu_custom_call.1} parent=1 // pred_check
      _
    $region11: #{tpu_custom_call.1} parent=1 // pred_check_branch
      %49 = sbr.rel (0) target = $region13
    $region12: #{tpu_custom_call.1} parent=1 // pred_region
      %s51 = ssub.s32 16, 16
      %52 = vsyncadd [#allocation6], %s51
      %s54 = sshll.u32 [#allocation7], 4
      %s55 = int_to_ptr.vmem [resolvable:$true] %s54
      %57 = dma.hbm_to_vmem [thread:$0]  %s2, 16, %s55, [#allocation6]
    $region13: #{tpu_custom_call.1} parent=1 // pred_fallthru
      _
    // Predicated region
    $region14: #{tpu_custom_call.1} parent=1 // pred_check
      _
    $region15: #{tpu_custom_call.1} parent=1 // pred_check_branch
      %59 = sbr.rel (0) target = $region17
    $region16: #{tpu_custom_call.1} parent=1 // pred_region
      %s61 = ssub.s32 2048, 2048
      %62 = vsyncadd [#allocation9], %s61
      %s63 = sshll.u32 [#allocation8], 4
      %s64 = int_to_ptr.vmem [resolvable:$true] %s63
      %69 = dma.hbm_to_vmem [thread:$0]  %s3, 2048, %s64, [#allocation9], 128, 128, 8
    $region17: #{tpu_custom_call.1} parent=1 // pred_fallthru
      _
    // Predicated region
    $region18: #{tpu_custom_call.1} parent=1 // pred_check
      _
    $region19: #{tpu_custom_call.1} parent=1 // pred_check_branch
      %71 = sbr.rel (0) target = $region21
    $region20: #{tpu_custom_call.1} parent=1 // pred_region
      %s73 = ssub.s32 32, 32
      %74 = vsyncadd [#allocation9], %s73
      %s76 = sshll.u32 [#allocation10], 4
      %s77 = int_to_ptr.vmem [resolvable:$true] %s76
      %79 = dma.hbm_to_vmem [thread:$0]  %s4, 32, %s77, [#allocation9]
    $region21: #{tpu_custom_call.1} parent=1 // pred_fallthru
      _
    // Predicated region
    $region22: #{tpu_custom_call.1} parent=1 // pred_check
      _
    $region23: #{tpu_custom_call.1} parent=1 // pred_check_branch
      %81 = sbr.rel (0) target = $region25
    $region24: #{tpu_custom_call.1} parent=1 // pred_region
      %s83 = ssub.s32 8192, 8192
      %84 = vsyncadd [#allocation12], %s83
      %s85 = sshll.u32 [#allocation11], 4
      %s86 = int_to_ptr.vmem [resolvable:$true] %s85
      %91 = dma.hbm_to_vmem [thread:$0]  %s5, 8192, %s86, [#allocation12], 256, 256, 16
    $region25: #{tpu_custom_call.1} parent=1 // pred_fallthru
      _
    // Predicated region
    $region26: #{tpu_custom_call.1} parent=1 // pred_check
      _
    $region27: #{tpu_custom_call.1} parent=1 // pred_check_branch
      %93 = sbr.rel (0) target = $region29
    $region28: #{tpu_custom_call.1} parent=1 // pred_region
      %s95 = ssub.s32 64, 64
      %96 = vsyncadd [#allocation12], %s95
      %s98 = sshll.u32 [#allocation13], 4
      %s99 = int_to_ptr.vmem [resolvable:$true] %s98
      %101 = dma.hbm_to_vmem [thread:$0]  %s6, 64, %s99, [#allocation12]
    $region29: #{tpu_custom_call.1} parent=1 // pred_fallthru
      _
    // Predicated region
    $region30: #{tpu_custom_call.1} parent=1 // pred_check
      _
    $region31: #{tpu_custom_call.1} parent=1 // pred_check_branch
      %103 = sbr.rel (0) target = $region33
    $region32: #{tpu_custom_call.1} parent=1 // pred_region
      %s105 = ssub.s32 32768, 32768
      %106 = vsyncadd [#allocation15], %s105
      %s107 = sshll.u32 [#allocation14], 4
      %s108 = int_to_ptr.vmem [resolvable:$true] %s107
      %113 = dma.hbm_to_vmem [thread:$0]  %s7, 32768, %s108, [#allocation15], 512, 512, 32
    $region33: #{tpu_custom_call.1} parent=1 // pred_fallthru
      _
    // Predicated region
    $region34: #{tpu_custom_call.1} parent=1 // pred_check
      _
    $region35: #{tpu_custom_call.1} parent=1 // pred_check_branch
      %115 = sbr.rel (0) target = $region37
    $region36: #{tpu_custom_call.1} parent=1 // pred_region
      %s117 = ssub.s32 128, 128
      %118 = vsyncadd [#allocation15], %s117
      %s120 = sshll.u32 [#allocation16], 4
      %s121 = int_to_ptr.vmem [resolvable:$true] %s120
      %123 = dma.hbm_to_vmem [thread:$0]  %s8, 128, %s121, [#allocation15]
    $region37: #{tpu_custom_call.1} parent=1 // pred_fallthru
      _
    // Predicated region
    $region38: #{tpu_custom_call.1} parent=1 // pred_check
      _
    $region39: #{tpu_custom_call.1} parent=1 // pred_check_branch
      %125 = sbr.rel (0) target = $region41
    $region40: #{tpu_custom_call.1} parent=1 // pred_region
      %s127 = ssub.s32 81920, 81920
      %128 = vsyncadd [#allocation18], %s127
      %s129 = sshll.u32 [#allocation17], 4
      %s130 = int_to_ptr.vmem [resolvable:$true] %s129
      %135 = dma.hbm_to_vmem [thread:$0]  %s9, 81920, %s130, [#allocation18], 640, 640, 40
    $region41: #{tpu_custom_call.1} parent=1 // pred_fallthru
      _
    // Predicated region
    $region42: #{tpu_custom_call.1} parent=1 // pred_check
      _
    $region43: #{tpu_custom_call.1} parent=1 // pred_check_branch
      %137 = sbr.rel (0) target = $region45
    $region44: #{tpu_custom_call.1} parent=1 // pred_region
      %s139 = ssub.s32 160, 160
      %140 = vsyncadd [#allocation18], %s139
      %s142 = sshll.u32 [#allocation19], 4
      %s143 = int_to_ptr.vmem [resolvable:$true] %s142
      %145 = dma.hbm_to_vmem [thread:$0]  %s10, 160, %s143, [#allocation18]
    $region45: #{tpu_custom_call.1} parent=1 // pred_fallthru
      _
    // Predicated region
    $region46: #{tpu_custom_call.1} parent=1 // pred_check
      _
    $region47: #{tpu_custom_call.1} parent=1 // pred_check_branch
      %147 = sbr.rel (0) target = $region49
    $region48: #{tpu_custom_call.1} parent=1 // pred_region
      %s149 = ssub.s32 20480, 20480
      %150 = vsyncadd [#allocation21], %s149
      %s151 = sshll.u32 [#allocation20], 4
      %s152 = int_to_ptr.vmem [resolvable:$true] %s151
      %157 = dma.hbm_to_vmem [thread:$0]  %s11, 20480, %s152, [#allocation21], 128, 128, 8
    $region49: #{tpu_custom_call.1} parent=1 // pred_fallthru
      _
    // Predicated region
    $region50: #{tpu_custom_call.1} parent=1 // pred_check
      _
    $region51: #{tpu_custom_call.1} parent=1 // pred_check_branch
      %159 = sbr.rel (0) target = $region53
    $region52: #{tpu_custom_call.1} parent=1 // pred_region
      %s161 = ssub.s32 160, 160
      %162 = vsyncadd [#allocation21], %s161
      %s163 = sshll.u32 [#allocation22], 4
      %s164 = int_to_ptr.vmem [resolvable:$true] %s163
      %169 = dma.hbm_to_vmem [thread:$0]  %s12, 160, %s164, [#allocation21], 32, 32, 2
    $region53: #{tpu_custom_call.1} parent=1 // pred_fallthru
      _
    // Predicated region
    $region54: #{tpu_custom_call.1} parent=1 // pred_check
      _
    $region55: #{tpu_custom_call.1} parent=1 // pred_check_branch
      %171 = sbr.rel (0) target = $region57
    $region56: #{tpu_custom_call.1} parent=1 // pred_region
      %172 = dma.done [#allocation3], 128
    $region57: #{tpu_custom_call.1} parent=1 // pred_fallthru
      _
    // Predicated region
    $region58: #{tpu_custom_call.1} parent=1 // pred_check
      _
    $region59: #{tpu_custom_call.1} parent=1 // pred_check_branch
      %174 = sbr.rel (0) target = $region61
    $region60: #{tpu_custom_call.1} parent=1 // pred_region
      %175 = dma.done [#allocation6], 512
    $region61: #{tpu_custom_call.1} parent=1 // pred_fallthru
      _
    // Predicated region
    $region62: #{tpu_custom_call.1} parent=1 // pred_check
      _
    $region63: #{tpu_custom_call.1} parent=1 // pred_check_branch
      %177 = sbr.rel (0) target = $region65
    $region64: #{tpu_custom_call.1} parent=1 // pred_region
      %178 = dma.done [#allocation6], 16
    $region65: #{tpu_custom_call.1} parent=1 // pred_fallthru
      _
    // Predicated region
    $region66: #{tpu_custom_call.1} parent=1 // pred_check
      _
    $region67: #{tpu_custom_call.1} parent=1 // pred_check_branch
      %180 = sbr.rel (0) target = $region69
    $region68: #{tpu_custom_call.1} parent=1 // pred_region
      %181 = dma.done [#allocation9], 2048
    $region69: #{tpu_custom_call.1} parent=1 // pred_fallthru
      _
    // Predicated region
    $region70: #{tpu_custom_call.1} parent=1 // pred_check
      _
    $region71: #{tpu_custom_call.1} parent=1 // pred_check_branch
      %183 = sbr.rel (0) target = $region73
    $region72: #{tpu_custom_call.1} parent=1 // pred_region
      %184 = dma.done [#allocation9], 32
    $region73: #{tpu_custom_call.1} parent=1 // pred_fallthru
      _
    // Predicated region
    $region74: #{tpu_custom_call.1} parent=1 // pred_check
      _
    $region75: #{tpu_custom_call.1} parent=1 // pred_check_branch
      %186 = sbr.rel (0) target = $region77
    $region76: #{tpu_custom_call.1} parent=1 // pred_region
      %187 = dma.done [#allocation12], 8192
    $region77: #{tpu_custom_call.1} parent=1 // pred_fallthru
      _
    // Predicated region
    $region78: #{tpu_custom_call.1} parent=1 // pred_check
      _
    $region79: #{tpu_custom_call.1} parent=1 // pred_check_branch
      %189 = sbr.rel (0) target = $region81
    $region80: #{tpu_custom_call.1} parent=1 // pred_region
      %190 = dma.done [#allocation12], 64
    $region81: #{tpu_custom_call.1} parent=1 // pred_fallthru
      _
    // Predicated region
    $region82: #{tpu_custom_call.1} parent=1 // pred_check
      _
    $region83: #{tpu_custom_call.1} parent=1 // pred_check_branch
      %192 = sbr.rel (0) target = $region85
    $region84: #{tpu_custom_call.1} parent=1 // pred_region
      %193 = dma.done [#allocation15], 32768
    $region85: #{tpu_custom_call.1} parent=1 // pred_fallthru
      _
    // Predicated region
    $region86: #{tpu_custom_call.1} parent=1 // pred_check
      _
    $region87: #{tpu_custom_call.1} parent=1 // pred_check_branch
      %195 = sbr.rel (0) target = $region89
    $region88: #{tpu_custom_call.1} parent=1 // pred_region
      %196 = dma.done [#allocation15], 128
    $region89: #{tpu_custom_call.1} parent=1 // pred_fallthru
      _
    // Predicated region
    $region90: #{tpu_custom_call.1} parent=1 // pred_check
      _
    $region91: #{tpu_custom_call.1} parent=1 // pred_check_branch
      %198 = sbr.rel (0) target = $region93
    $region92: #{tpu_custom_call.1} parent=1 // pred_region
      %199 = dma.done [#allocation18], 81920
    $region93: #{tpu_custom_call.1} parent=1 // pred_fallthru
      _
    // Predicated region
    $region94: #{tpu_custom_call.1} parent=1 // pred_check
      _
    $region95: #{tpu_custom_call.1} parent=1 // pred_check_branch
      %201 = sbr.rel (0) target = $region97
    $region96: #{tpu_custom_call.1} parent=1 // pred_region
      %202 = dma.done [#allocation18], 160
    $region97: #{tpu_custom_call.1} parent=1 // pred_fallthru
      _
    // Predicated region
    $region98: #{tpu_custom_call.1} parent=1 // pred_check
      _
    $region99: #{tpu_custom_call.1} parent=1 // pred_check_branch
      %204 = sbr.rel (0) target = $region101
    $region100: #{tpu_custom_call.1} parent=1 // pred_region
      %205 = dma.done [#allocation21], 20480
    $region101: #{tpu_custom_call.1} parent=1 // pred_fallthru
      _
    // Predicated region
    $region102: #{tpu_custom_call.1} parent=1 // pred_check
      _
    $region103: #{tpu_custom_call.1} parent=1 // pred_check_branch
      %207 = sbr.rel (0) target = $region105
    $region104: #{tpu_custom_call.1} parent=1 // pred_region
      %208 = dma.done [#allocation21], 160
    $region105: #{tpu_custom_call.1} parent=1 // pred_fallthru
      _
    %v210 = vld [vmem:[#allocation2] sm:$0xff]
    %v211 = vpack.c.bf16 %v210, %v210
    %v212 = vld [vmem:[#allocation5] sm:$0xf]
    %v213 = vld [vmem:[#allocation5 + $0x4] sm:$0xf]
    %v214 = vld [vmem:[#allocation5 + $0x8] sm:$0xf]
    %v215 = vld [vmem:[#allocation5 + $0xc] sm:$0xf]
    %v216 = vld [vmem:[#allocation5 + $0x10] sm:$0xf]
    %v217 = vld [vmem:[#allocation5 + $0x14] sm:$0xf]
    %v218 = vld [vmem:[#allocation5 + $0x18] sm:$0xf]
    %v219 = vld [vmem:[#allocation5 + $0x1c] sm:$0xf]
    %v220 = vld [vmem:[#allocation7] sm:$0x1]
    %v222 = vlaneseq
    %v223 = vshrl.u32 %v222, 7
    %v224 = vsub.s32 0, %v223
    %v225 = vrot.slane %v220, %v224
    %v235 = vunpack.c.l.b16 %v212
    %v236 = vunpack.c.l.b16 %v213
    %v237 = vunpack.c.l.b16 %v214
    %v238 = vunpack.c.l.b16 %v215
    %v239 = vunpack.c.l.b16 %v216
    %v240 = vunpack.c.l.b16 %v217
    %v241 = vunpack.c.l.b16 %v218
    %v242 = vunpack.c.l.b16 %v219
    %v243 = vpack.c.b16 %v236, %v235
    %v244 = vpack.c.b16 %v238, %v237
    %v245 = vpack.c.b16 %v240, %v239
    %v246 = vpack.c.b16 %v242, %v241
    %vm251 = vcmask 523264
    %v253 = vsel %vm251, %v211, 0
    %255 = vmatprep.subr.bf16.mxu0 0
    %256 = vmatpush1.bf16.msra.mxu0 0
    %257 = vmatprep.subr.bf16.mxu0 0
    %258 = vmatpush1.bf16.msra.mxu0 0
    %259 = vmatprep.subr.bf16.mxu0 0
    %260 = vmatpush1.bf16.msra.mxu0 0
    %261 = vmatprep.subr.bf16.mxu0 0
    %262 = vmatpush1.bf16.msra.mxu0 0
    %263 = vmatprep.subr.bf16.mxu0 0
    %264 = vmatpush1.bf16.msra.mxu0 %v246
    %265 = vmatprep.subr.bf16.mxu0 0
    %266 = vmatpush1.bf16.msra.mxu0 %v245
    %267 = vmatprep.subr.bf16.mxu0 0
    %268 = vmatpush1.bf16.msra.mxu0 %v244
    %269 = vmatprep.subr.bf16.mxu0 0
    %270 = vmatpush1.bf16.msra.mxu0 %v243
    %271 = vmatprep.subr.bf16.mxu0 0
    %272 = vmatpush2.bf16.msra.mxu0 0
    %273 = vmatprep.subr.bf16.mxu0 0
    %274 = vmatpush2.bf16.msra.mxu0 0
    %275 = vmatprep.subr.bf16.mxu0 0
    %276 = vmatpush2.bf16.msra.mxu0 0
    %277 = vmatprep.subr.bf16.mxu0 0
    %278 = vmatpush2.bf16.msra.mxu0 0
    %279 = vmatprep.subr.bf16.mxu0 0
    %280 = vmatpush2.bf16.msra.mxu0 0
    %281 = vmatprep.subr.bf16.mxu0 0
    %282 = vmatpush2.bf16.msra.mxu0 0
    %283 = vmatprep.subr.bf16.mxu0 0
    %284 = vmatpush2.bf16.msra.mxu0 0
    %285 = vmatprep.subr.bf16.mxu0 0
    %286 = vmatpush2.bf16.msra.mxu0 0
    %287 = vmatprep.mubr.bf16.mxu0 0
    %288 = vmatmul.mubr.bf16.gmra.mxu0 %v253
    %v289 = vpop.f32.mrf.mxu0
    %v290 = vadd.f32 %v225, %v289
    %v291 = vpop.f32.mrf.mxu0
    %v292 = vpop.f32.mrf.mxu0
    %v293 = vpop.f32.mrf.mxu0
    %294 = vdwg.mxu0
    %v295 = vmax.f32 %v290, 0.0
    %v296 = vpack.c.bf16 %v295, %v295
    %v297 = vld [vmem:[#allocation8] sm:$0xff]
    %v298 = vld [vmem:[#allocation8 + $0x8] sm:$0xff]
    %v299 = vld [vmem:[#allocation8 + $0x10] sm:$0xff]
    %v300 = vld [vmem:[#allocation8 + $0x18] sm:$0xff]
    %v301 = vld [vmem:[#allocation8 + $0x20] sm:$0xff]
    %v302 = vld [vmem:[#allocation8 + $0x28] sm:$0xff]
    %v303 = vld [vmem:[#allocation8 + $0x30] sm:$0xff]
    %v304 = vld [vmem:[#allocation8 + $0x38] sm:$0xff]
    %v305 = vld [vmem:[#allocation8 + $0x40] sm:$0xff]
    %v306 = vld [vmem:[#allocation8 + $0x48] sm:$0xff]
    %v307 = vld [vmem:[#allocation8 + $0x50] sm:$0xff]
    %v308 = vld [vmem:[#allocation8 + $0x58] sm:$0xff]
    %v309 = vld [vmem:[#allocation8 + $0x60] sm:$0xff]
    %v310 = vld [vmem:[#allocation8 + $0x68] sm:$0xff]
    %v311 = vld [vmem:[#allocation8 + $0x70] sm:$0xff]
    %v312 = vld [vmem:[#allocation8 + $0x78] sm:$0xff]
    %v313 = vld [vmem:[#allocation10] sm:$0x3]
    %v315 = vlaneseq
    %v316 = vshrl.u32 %v315, 7
    %v317 = vsub.s32 0, %v316
    %v318 = vrot.slane %v313, %v317
    %v319 = vlaneseq
    %v320 = vshrl.u32 %v319, 7
    %v321 = vsub.s32 1, %v320
    %v322 = vrot.slane %v313, %v321
    %v341 = vunpack.c.l.b16 %v297
    %v342 = vunpack.c.h.b16 %v297
    %v343 = vunpack.c.l.b16 %v298
    %v344 = vunpack.c.h.b16 %v298
    %v345 = vunpack.c.l.b16 %v299
    %v346 = vunpack.c.h.b16 %v299
    %v347 = vunpack.c.l.b16 %v300
    %v348 = vunpack.c.h.b16 %v300
    %v349 = vunpack.c.l.b16 %v301
    %v350 = vunpack.c.h.b16 %v301
    %v351 = vunpack.c.l.b16 %v302
    %v352 = vunpack.c.h.b16 %v302
    %v353 = vunpack.c.l.b16 %v303
    %v354 = vunpack.c.h.b16 %v303
    %v355 = vunpack.c.l.b16 %v304
    %v356 = vunpack.c.h.b16 %v304
    %v357 = vunpack.c.l.b16 %v305
    %v358 = vunpack.c.h.b16 %v305
    %v359 = vunpack.c.l.b16 %v306
    %v360 = vunpack.c.h.b16 %v306
    %v361 = vunpack.c.l.b16 %v307
    %v362 = vunpack.c.h.b16 %v307
    %v363 = vunpack.c.l.b16 %v308
    %v364 = vunpack.c.h.b16 %v308
    %v365 = vunpack.c.l.b16 %v309
    %v366 = vunpack.c.h.b16 %v309
    %v367 = vunpack.c.l.b16 %v310
    %v368 = vunpack.c.h.b16 %v310
    %v369 = vunpack.c.l.b16 %v311
    %v370 = vunpack.c.h.b16 %v311
    %v371 = vunpack.c.l.b16 %v312
    %v372 = vunpack.c.h.b16 %v312
    %v373 = vpack.c.b16 %v343, %v341
    %v374 = vpack.c.b16 %v344, %v342
    %v375 = vpack.c.b16 %v347, %v345
    %v376 = vpack.c.b16 %v348, %v346
    %v377 = vpack.c.b16 %v351, %v349
    %v378 = vpack.c.b16 %v352, %v350
    %v379 = vpack.c.b16 %v355, %v353
    %v380 = vpack.c.b16 %v356, %v354
    %v381 = vpack.c.b16 %v359, %v357
    %v382 = vpack.c.b16 %v360, %v358
    %v383 = vpack.c.b16 %v363, %v361
    %v384 = vpack.c.b16 %v364, %v362
    %v385 = vpack.c.b16 %v367, %v365
    %v386 = vpack.c.b16 %v368, %v366
    %v387 = vpack.c.b16 %v371, %v369
    %v388 = vpack.c.b16 %v372, %v370
    %405 = vmatprep.subr.bf16.mxu0 %v388
    %406 = vmatpush1.bf16.msra.mxu0 %v387
    %407 = vmatprep.subr.bf16.mxu0 %v386
    %408 = vmatpush1.bf16.msra.mxu0 %v385
    %409 = vmatprep.subr.bf16.mxu0 %v384
    %410 = vmatpush1.bf16.msra.mxu0 %v383
    %411 = vmatprep.subr.bf16.mxu0 %v382
    %412 = vmatpush1.bf16.msra.mxu0 %v381
    %413 = vmatprep.subr.bf16.mxu0 %v380
    %414 = vmatpush1.bf16.msra.mxu0 %v379
    %415 = vmatprep.subr.bf16.mxu0 %v378
    %416 = vmatpush1.bf16.msra.mxu0 %v377
    %417 = vmatprep.subr.bf16.mxu0 %v376
    %418 = vmatpush1.bf16.msra.mxu0 %v375
    %419 = vmatprep.subr.bf16.mxu0 %v374
    %420 = vmatpush1.bf16.msra.mxu0 %v373
    %421 = vmatprep.subr.bf16.mxu0 0
    %422 = vmatpush2.bf16.msra.mxu0 0
    %423 = vmatprep.subr.bf16.mxu0 0
    %424 = vmatpush2.bf16.msra.mxu0 0
    %425 = vmatprep.subr.bf16.mxu0 0
    %426 = vmatpush2.bf16.msra.mxu0 0
    %427 = vmatprep.subr.bf16.mxu0 0
    %428 = vmatpush2.bf16.msra.mxu0 0
    %429 = vmatprep.subr.bf16.mxu0 0
    %430 = vmatpush2.bf16.msra.mxu0 0
    %431 = vmatprep.subr.bf16.mxu0 0
    %432 = vmatpush2.bf16.msra.mxu0 0
    %433 = vmatprep.subr.bf16.mxu0 0
    %434 = vmatpush2.bf16.msra.mxu0 0
    %435 = vmatprep.subr.bf16.mxu0 0
    %436 = vmatpush2.bf16.msra.mxu0 0
    %437 = vmatprep.mubr.bf16.mxu0 0
    %438 = vmatmul.mubr.bf16.gmra.mxu0 %v296
    %v439 = vpop.f32.mrf.mxu0
    %v440 = vadd.f32 %v318, %v439
    %v441 = vpop.f32.mrf.mxu0
    %v442 = vadd.f32 %v322, %v441
    %v443 = vpop.f32.mrf.mxu0
    %v444 = vpop.f32.mrf.mxu0
    %445 = vdwg.mxu0
    %v446 = vmax.f32 %v440, 0.0
    %v447 = vmax.f32 %v442, 0.0
    %v448 = vpack.c.bf16 %v446, %v446
    %v449 = vpack.c.bf16 %v447, %v447
    %v450 = vld [vmem:[#allocation11] sm:$0xff]
    %v451 = vld [vmem:[#allocation11 + $0x8] sm:$0xff]
    %v452 = vld [vmem:[#allocation11 + $0x10] sm:$0xff]
    %v453 = vld [vmem:[#allocation11 + $0x18] sm:$0xff]
    %v454 = vld [vmem:[#allocation11 + $0x20] sm:$0xff]
    %v455 = vld [vmem:[#allocation11 + $0x28] sm:$0xff]
    %v456 = vld [vmem:[#allocation11 + $0x30] sm:$0xff]
    %v457 = vld [vmem:[#allocation11 + $0x38] sm:$0xff]
    %v458 = vld [vmem:[#allocation11 + $0x40] sm:$0xff]
    %v459 = vld [vmem:[#allocation11 + $0x48] sm:$0xff]
    %v460 = vld [vmem:[#allocation11 + $0x50] sm:$0xff]
    %v461 = vld [vmem:[#allocation11 + $0x58] sm:$0xff]
    %v462 = vld [vmem:[#allocation11 + $0x60] sm:$0xff]
    %v463 = vld [vmem:[#allocation11 + $0x68] sm:$0xff]
    %v464 = vld [vmem:[#allocation11 + $0x70] sm:$0xff]
    %v465 = vld [vmem:[#allocation11 + $0x78] sm:$0xff]
    %v466 = vld [vmem:[#allocation11 + $0x80] sm:$0xff]
    %v467 = vld [vmem:[#allocation11 + $0x88] sm:$0xff]
    %v468 = vld [vmem:[#allocation11 + $0x90] sm:$0xff]
    %v469 = vld [vmem:[#allocation11 + $0x98] sm:$0xff]
    %v470 = vld [vmem:[#allocation11 + $0xa0] sm:$0xff]
    %v471 = vld [vmem:[#allocation11 + $0xa8] sm:$0xff]
    %v472 = vld [vmem:[#allocation11 + $0xb0] sm:$0xff]
    %v473 = vld [vmem:[#allocation11 + $0xb8] sm:$0xff]
    %v474 = vld [vmem:[#allocation11 + $0xc0] sm:$0xff]
    %v475 = vld [vmem:[#allocation11 + $0xc8] sm:$0xff]
    %v476 = vld [vmem:[#allocation11 + $0xd0] sm:$0xff]
    %v477 = vld [vmem:[#allocation11 + $0xd8] sm:$0xff]
    %v478 = vld [vmem:[#allocation11 + $0xe0] sm:$0xff]
    %v479 = vld [vmem:[#allocation11 + $0xe8] sm:$0xff]
    %v480 = vld [vmem:[#allocation11 + $0xf0] sm:$0xff]
    %v481 = vld [vmem:[#allocation11 + $0xf8] sm:$0xff]
    %v482 = vld [vmem:[#allocation11 + $0x100] sm:$0xff]
    %v483 = vld [vmem:[#allocation11 + $0x108] sm:$0xff]
    %v484 = vld [vmem:[#allocation11 + $0x110] sm:$0xff]
    %v485 = vld [vmem:[#allocation11 + $0x118] sm:$0xff]
    %v486 = vld [vmem:[#allocation11 + $0x120] sm:$0xff]
    %v487 = vld [vmem:[#allocation11 + $0x128] sm:$0xff]
    %v488 = vld [vmem:[#allocation11 + $0x130] sm:$0xff]
    %v489 = vld [vmem:[#allocation11 + $0x138] sm:$0xff]
    %v490 = vld [vmem:[#allocation11 + $0x140] sm:$0xff]
    %v491 = vld [vmem:[#allocation11 + $0x148] sm:$0xff]
    %v492 = vld [vmem:[#allocation11 + $0x150] sm:$0xff]
    %v493 = vld [vmem:[#allocation11 + $0x158] sm:$0xff]
    %v494 = vld [vmem:[#allocation11 + $0x160] sm:$0xff]
    %v495 = vld [vmem:[#allocation11 + $0x168] sm:$0xff]
    %v496 = vld [vmem:[#allocation11 + $0x170] sm:$0xff]
    %v497 = vld [vmem:[#allocation11 + $0x178] sm:$0xff]
    %v498 = vld [vmem:[#allocation11 + $0x180] sm:$0xff]
    %v499 = vld [vmem:[#allocation11 + $0x188] sm:$0xff]
    %v500 = vld [vmem:[#allocation11 + $0x190] sm:$0xff]
    %v501 = vld [vmem:[#allocation11 + $0x198] sm:$0xff]
    %v502 = vld [vmem:[#allocation11 + $0x1a0] sm:$0xff]
    %v503 = vld [vmem:[#allocation11 + $0x1a8] sm:$0xff]
    %v504 = vld [vmem:[#allocation11 + $0x1b0] sm:$0xff]
    %v505 = vld [vmem:[#allocation11 + $0x1b8] sm:$0xff]
    %v506 = vld [vmem:[#allocation11 + $0x1c0] sm:$0xff]
    %v507 = vld [vmem:[#allocation11 + $0x1c8] sm:$0xff]
    %v508 = vld [vmem:[#allocation11 + $0x1d0] sm:$0xff]
    %v509 = vld [vmem:[#allocation11 + $0x1d8] sm:$0xff]
    %v510 = vld [vmem:[#allocation11 + $0x1e0] sm:$0xff]
    %v511 = vld [vmem:[#allocation11 + $0x1e8] sm:$0xff]
    %v512 = vld [vmem:[#allocation11 + $0x1f0] sm:$0xff]
    %v513 = vld [vmem:[#allocation11 + $0x1f8] sm:$0xff]
    %v514 = vld [vmem:[#allocation13] sm:$0xf]
    %v516 = vlaneseq
    %v517 = vshrl.u32 %v516, 7
    %v518 = vsub.s32 0, %v517
    %v519 = vrot.slane %v514, %v518
    %v520 = vlaneseq
    %v521 = vshrl.u32 %v520, 7
    %v522 = vsub.s32 1, %v521
    %v523 = vrot.slane %v514, %v522
    %v524 = vlaneseq
    %v525 = vshrl.u32 %v524, 7
    %v526 = vsub.s32 2, %v525
    %v527 = vrot.slane %v514, %v526
    %v528 = vlaneseq
    %v529 = vshrl.u32 %v528, 7
    %v530 = vsub.s32 3, %v529
    %v531 = vrot.slane %v514, %v530
    %v600 = vunpack.c.l.b16 %v450
    %v601 = vunpack.c.h.b16 %v450
    %v602 = vunpack.c.l.b16 %v451
    %v603 = vunpack.c.h.b16 %v451
    %v604 = vunpack.c.l.b16 %v452
    %v605 = vunpack.c.h.b16 %v452
    %v606 = vunpack.c.l.b16 %v453
    %v607 = vunpack.c.h.b16 %v453
    %v608 = vunpack.c.l.b16 %v454
    %v609 = vunpack.c.h.b16 %v454
    %v610 = vunpack.c.l.b16 %v455
    %v611 = vunpack.c.h.b16 %v455
    %v612 = vunpack.c.l.b16 %v456
    %v613 = vunpack.c.h.b16 %v456
    %v614 = vunpack.c.l.b16 %v457
    %v615 = vunpack.c.h.b16 %v457
    %v616 = vunpack.c.l.b16 %v458
    %v617 = vunpack.c.h.b16 %v458
    %v618 = vunpack.c.l.b16 %v459
    %v619 = vunpack.c.h.b16 %v459
    %v620 = vunpack.c.l.b16 %v460
    %v621 = vunpack.c.h.b16 %v460
    %v622 = vunpack.c.l.b16 %v461
    %v623 = vunpack.c.h.b16 %v461
    %v624 = vunpack.c.l.b16 %v462
    %v625 = vunpack.c.h.b16 %v462
    %v626 = vunpack.c.l.b16 %v463
    %v627 = vunpack.c.h.b16 %v463
    %v628 = vunpack.c.l.b16 %v464
    %v629 = vunpack.c.h.b16 %v464
    %v630 = vunpack.c.l.b16 %v465
    %v631 = vunpack.c.h.b16 %v465
    %v632 = vunpack.c.l.b16 %v466
    %v633 = vunpack.c.h.b16 %v466
    %v634 = vunpack.c.l.b16 %v467
    %v635 = vunpack.c.h.b16 %v467
    %v636 = vunpack.c.l.b16 %v468
    %v637 = vunpack.c.h.b16 %v468
    %v638 = vunpack.c.l.b16 %v469
    %v639 = vunpack.c.h.b16 %v469
    %v640 = vunpack.c.l.b16 %v470
    %v641 = vunpack.c.h.b16 %v470
    %v642 = vunpack.c.l.b16 %v471
    %v643 = vunpack.c.h.b16 %v471
    %v644 = vunpack.c.l.b16 %v472
    %v645 = vunpack.c.h.b16 %v472
    %v646 = vunpack.c.l.b16 %v473
    %v647 = vunpack.c.h.b16 %v473
    %v648 = vunpack.c.l.b16 %v474
    %v649 = vunpack.c.h.b16 %v474
    %v650 = vunpack.c.l.b16 %v475
    %v651 = vunpack.c.h.b16 %v475
    %v652 = vunpack.c.l.b16 %v476
    %v653 = vunpack.c.h.b16 %v476
    %v654 = vunpack.c.l.b16 %v477
    %v655 = vunpack.c.h.b16 %v477
    %v656 = vunpack.c.l.b16 %v478
    %v657 = vunpack.c.h.b16 %v478
    %v658 = vunpack.c.l.b16 %v479
    %v659 = vunpack.c.h.b16 %v479
    %v660 = vunpack.c.l.b16 %v480
    %v661 = vunpack.c.h.b16 %v480
    %v662 = vunpack.c.l.b16 %v481
    %v663 = vunpack.c.h.b16 %v481
    %v664 = vunpack.c.l.b16 %v482
    %v665 = vunpack.c.h.b16 %v482
    %v666 = vunpack.c.l.b16 %v483
    %v667 = vunpack.c.h.b16 %v483
    %v668 = vunpack.c.l.b16 %v484
    %v669 = vunpack.c.h.b16 %v484
    %v670 = vunpack.c.l.b16 %v485
    %v671 = vunpack.c.h.b16 %v485
    %v672 = vunpack.c.l.b16 %v486
    %v673 = vunpack.c.h.b16 %v486
    %v674 = vunpack.c.l.b16 %v487
    %v675 = vunpack.c.h.b16 %v487
    %v676 = vunpack.c.l.b16 %v488
    %v677 = vunpack.c.h.b16 %v488
    %v678 = vunpack.c.l.b16 %v489
    %v679 = vunpack.c.h.b16 %v489
    %v680 = vunpack.c.l.b16 %v490
    %v681 = vunpack.c.h.b16 %v490
    %v682 = vunpack.c.l.b16 %v491
    %v683 = vunpack.c.h.b16 %v491
    %v684 = vunpack.c.l.b16 %v492
    %v685 = vunpack.c.h.b16 %v492
    %v686 = vunpack.c.l.b16 %v493
    %v687 = vunpack.c.h.b16 %v493
    %v688 = vunpack.c.l.b16 %v494
    %v689 = vunpack.c.h.b16 %v494
    %v690 = vunpack.c.l.b16 %v495
    %v691 = vunpack.c.h.b16 %v495
    %v692 = vunpack.c.l.b16 %v496
    %v693 = vunpack.c.h.b16 %v496
    %v694 = vunpack.c.l.b16 %v497
    %v695 = vunpack.c.h.b16 %v497
    %v696 = vunpack.c.l.b16 %v498
    %v697 = vunpack.c.h.b16 %v498
    %v698 = vunpack.c.l.b16 %v499
    %v699 = vunpack.c.h.b16 %v499
    %v700 = vunpack.c.l.b16 %v500
    %v701 = vunpack.c.h.b16 %v500
    %v702 = vunpack.c.l.b16 %v501
    %v703 = vunpack.c.h.b16 %v501
    %v704 = vunpack.c.l.b16 %v502
    %v705 = vunpack.c.h.b16 %v502
    %v706 = vunpack.c.l.b16 %v503
    %v707 = vunpack.c.h.b16 %v503
    %v708 = vunpack.c.l.b16 %v504
    %v709 = vunpack.c.h.b16 %v504
    %v710 = vunpack.c.l.b16 %v505
    %v711 = vunpack.c.h.b16 %v505
    %v712 = vunpack.c.l.b16 %v506
    %v713 = vunpack.c.h.b16 %v506
    %v714 = vunpack.c.l.b16 %v507
    %v715 = vunpack.c.h.b16 %v507
    %v716 = vunpack.c.l.b16 %v508
    %v717 = vunpack.c.h.b16 %v508
    %v718 = vunpack.c.l.b16 %v509
    %v719 = vunpack.c.h.b16 %v509
    %v720 = vunpack.c.l.b16 %v510
    %v721 = vunpack.c.h.b16 %v510
    %v722 = vunpack.c.l.b16 %v511
    %v723 = vunpack.c.h.b16 %v511
    %v724 = vunpack.c.l.b16 %v512
    %v725 = vunpack.c.h.b16 %v512
    %v726 = vunpack.c.l.b16 %v513
    %v727 = vunpack.c.h.b16 %v513
    %v728 = vpack.c.b16 %v604, %v600
    %v729 = vpack.c.b16 %v605, %v601
    %v730 = vpack.c.b16 %v606, %v602
    %v731 = vpack.c.b16 %v607, %v603
    %v732 = vpack.c.b16 %v612, %v608
    %v733 = vpack.c.b16 %v613, %v609
    %v734 = vpack.c.b16 %v614, %v610
    %v735 = vpack.c.b16 %v615, %v611
    %v736 = vpack.c.b16 %v620, %v616
    %v737 = vpack.c.b16 %v621, %v617
    %v738 = vpack.c.b16 %v622, %v618
    %v739 = vpack.c.b16 %v623, %v619
    %v740 = vpack.c.b16 %v628, %v624
    %v741 = vpack.c.b16 %v629, %v625
    %v742 = vpack.c.b16 %v630, %v626
    %v743 = vpack.c.b16 %v631, %v627
    %v744 = vpack.c.b16 %v636, %v632
    %v745 = vpack.c.b16 %v637, %v633
    %v746 = vpack.c.b16 %v638, %v634
    %v747 = vpack.c.b16 %v639, %v635
    %v748 = vpack.c.b16 %v644, %v640
    %v749 = vpack.c.b16 %v645, %v641
    %v750 = vpack.c.b16 %v646, %v642
    %v751 = vpack.c.b16 %v647, %v643
    %v752 = vpack.c.b16 %v652, %v648
    %v753 = vpack.c.b16 %v653, %v649
    %v754 = vpack.c.b16 %v654, %v650
    %v755 = vpack.c.b16 %v655, %v651
    %v756 = vpack.c.b16 %v660, %v656
    %v757 = vpack.c.b16 %v661, %v657
    %v758 = vpack.c.b16 %v662, %v658
    %v759 = vpack.c.b16 %v663, %v659
    %v760 = vpack.c.b16 %v668, %v664
    %v761 = vpack.c.b16 %v669, %v665
    %v762 = vpack.c.b16 %v670, %v666
    %v763 = vpack.c.b16 %v671, %v667
    %v764 = vpack.c.b16 %v676, %v672
    %v765 = vpack.c.b16 %v677, %v673
    %v766 = vpack.c.b16 %v678, %v674
    %v767 = vpack.c.b16 %v679, %v675
    %v768 = vpack.c.b16 %v684, %v680
    %v769 = vpack.c.b16 %v685, %v681
    %v770 = vpack.c.b16 %v686, %v682
    %v771 = vpack.c.b16 %v687, %v683
    %v772 = vpack.c.b16 %v692, %v688
    %v773 = vpack.c.b16 %v693, %v689
    %v774 = vpack.c.b16 %v694, %v690
    %v775 = vpack.c.b16 %v695, %v691
    %v776 = vpack.c.b16 %v700, %v696
    %v777 = vpack.c.b16 %v701, %v697
    %v778 = vpack.c.b16 %v702, %v698
    %v779 = vpack.c.b16 %v703, %v699
    %v780 = vpack.c.b16 %v708, %v704
    %v781 = vpack.c.b16 %v709, %v705
    %v782 = vpack.c.b16 %v710, %v706
    %v783 = vpack.c.b16 %v711, %v707
    %v784 = vpack.c.b16 %v716, %v712
    %v785 = vpack.c.b16 %v717, %v713
    %v786 = vpack.c.b16 %v718, %v714
    %v787 = vpack.c.b16 %v719, %v715
    %v788 = vpack.c.b16 %v724, %v720
    %v789 = vpack.c.b16 %v725, %v721
    %v790 = vpack.c.b16 %v726, %v722
    %v791 = vpack.c.b16 %v727, %v723
    %856 = vmatprep.subr.bf16.mxu0 %v757
    %857 = vmatpush1.bf16.msra.mxu0 %v756
    %858 = vmatprep.subr.bf16.mxu0 %v753
    %859 = vmatpush1.bf16.msra.mxu0 %v752
    %860 = vmatprep.subr.bf16.mxu0 %v749
    %861 = vmatpush1.bf16.msra.mxu0 %v748
    %862 = vmatprep.subr.bf16.mxu0 %v745
    %863 = vmatpush1.bf16.msra.mxu0 %v744
    %864 = vmatprep.subr.bf16.mxu0 %v741
    %865 = vmatpush1.bf16.msra.mxu0 %v740
    %866 = vmatprep.subr.bf16.mxu0 %v737
    %867 = vmatpush1.bf16.msra.mxu0 %v736
    %868 = vmatprep.subr.bf16.mxu0 %v733
    %869 = vmatpush1.bf16.msra.mxu0 %v732
    %870 = vmatprep.subr.bf16.mxu0 %v729
    %871 = vmatpush1.bf16.msra.mxu0 %v728
    %872 = vmatprep.subr.bf16.mxu0 %v789
    %873 = vmatpush2.bf16.msra.mxu0 %v788
    %874 = vmatprep.subr.bf16.mxu0 %v785
    %875 = vmatpush2.bf16.msra.mxu0 %v784
    %876 = vmatprep.subr.bf16.mxu0 %v781
    %877 = vmatpush2.bf16.msra.mxu0 %v780
    %878 = vmatprep.subr.bf16.mxu0 %v777
    %879 = vmatpush2.bf16.msra.mxu0 %v776
    %880 = vmatprep.subr.bf16.mxu0 %v773
    %881 = vmatpush2.bf16.msra.mxu0 %v772
    %882 = vmatprep.subr.bf16.mxu0 %v769
    %883 = vmatpush2.bf16.msra.mxu0 %v768
    %884 = vmatprep.subr.bf16.mxu0 %v765
    %885 = vmatpush2.bf16.msra.mxu0 %v764
    %886 = vmatprep.subr.bf16.mxu0 %v761
    %887 = vmatpush2.bf16.msra.mxu0 %v760
    %888 = vmatprep.mubr.bf16.mxu0 %v449
    %889 = vmatmul.mubr.bf16.gmra.mxu0 %v448
    %v890 = vpop.f32.mrf.mxu0
    %v891 = vadd.f32 %v519, %v890
    %v892 = vpop.f32.mrf.mxu0
    %v893 = vadd.f32 %v523, %v892
    %v894 = vpop.f32.mrf.mxu0
    %v895 = vpop.f32.mrf.mxu0
    %896 = vdwg.mxu0
    %897 = vmatprep.subr.bf16.mxu0 %v759
    %898 = vmatpush1.bf16.msra.mxu0 %v758
    %899 = vmatprep.subr.bf16.mxu0 %v755
    %900 = vmatpush1.bf16.msra.mxu0 %v754
    %901 = vmatprep.subr.bf16.mxu0 %v751
    %902 = vmatpush1.bf16.msra.mxu0 %v750
    %903 = vmatprep.subr.bf16.mxu0 %v747
    %904 = vmatpush1.bf16.msra.mxu0 %v746
    %905 = vmatprep.subr.bf16.mxu0 %v743
    %906 = vmatpush1.bf16.msra.mxu0 %v742
    %907 = vmatprep.subr.bf16.mxu0 %v739
    %908 = vmatpush1.bf16.msra.mxu0 %v738
    %909 = vmatprep.subr.bf16.mxu0 %v735
    %910 = vmatpush1.bf16.msra.mxu0 %v734
    %911 = vmatprep.subr.bf16.mxu0 %v731
    %912 = vmatpush1.bf16.msra.mxu0 %v730
    %913 = vmatprep.subr.bf16.mxu0 %v791
    %914 = vmatpush2.bf16.msra.mxu0 %v790
    %915 = vmatprep.subr.bf16.mxu0 %v787
    %916 = vmatpush2.bf16.msra.mxu0 %v786
    %917 = vmatprep.subr.bf16.mxu0 %v783
    %918 = vmatpush2.bf16.msra.mxu0 %v782
    %919 = vmatprep.subr.bf16.mxu0 %v779
    %920 = vmatpush2.bf16.msra.mxu0 %v778
    %921 = vmatprep.subr.bf16.mxu0 %v775
    %922 = vmatpush2.bf16.msra.mxu0 %v774
    %923 = vmatprep.subr.bf16.mxu0 %v771
    %924 = vmatpush2.bf16.msra.mxu0 %v770
    %925 = vmatprep.subr.bf16.mxu0 %v767
    %926 = vmatpush2.bf16.msra.mxu0 %v766
    %927 = vmatprep.subr.bf16.mxu0 %v763
    %928 = vmatpush2.bf16.msra.mxu0 %v762
    %929 = vmatprep.mubr.bf16.mxu0 %v449
    %930 = vmatmul.mubr.bf16.gmra.mxu0 %v448
    %v931 = vpop.f32.mrf.mxu0
    %v932 = vadd.f32 %v527, %v931
    %v933 = vpop.f32.mrf.mxu0
    %v934 = vadd.f32 %v531, %v933
    %v935 = vpop.f32.mrf.mxu0
    %v936 = vpop.f32.mrf.mxu0
    %937 = vdwg.mxu0
    %v938 = vmax.f32 %v891, 0.0
    %v939 = vmax.f32 %v893, 0.0
    %v940 = vmax.f32 %v932, 0.0
    %v941 = vmax.f32 %v934, 0.0
    %v942 = vpack.c.bf16 %v938, %v938
    %v943 = vpack.c.bf16 %v939, %v939
    %v944 = vpack.c.bf16 %v940, %v940
    %v945 = vpack.c.bf16 %v941, %v941
    %v946 = vld [vmem:[#allocation14] sm:$0xff]
    %v947 = vld [vmem:[#allocation14 + $0x8] sm:$0xff]
    %v948 = vld [vmem:[#allocation14 + $0x10] sm:$0xff]
    %v949 = vld [vmem:[#allocation14 + $0x18] sm:$0xff]
    %v950 = vld [vmem:[#allocation14 + $0x20] sm:$0xff]
    %v951 = vld [vmem:[#allocation14 + $0x28] sm:$0xff]
    %v952 = vld [vmem:[#allocation14 + $0x30] sm:$0xff]
    %v953 = vld [vmem:[#allocation14 + $0x38] sm:$0xff]
    %v954 = vld [vmem:[#allocation14 + $0x40] sm:$0xff]
    %v955 = vld [vmem:[#allocation14 + $0x48] sm:$0xff]
    %v956 = vld [vmem:[#allocation14 + $0x50] sm:$0xff]
    %v957 = vld [vmem:[#allocation14 + $0x58] sm:$0xff]
    %v958 = vld [vmem:[#allocation14 + $0x60] sm:$0xff]
    %v959 = vld [vmem:[#allocation14 + $0x68] sm:$0xff]
    %v960 = vld [vmem:[#allocation14 + $0x70] sm:$0xff]
    %v961 = vld [vmem:[#allocation14 + $0x78] sm:$0xff]
    %v962 = vld [vmem:[#allocation14 + $0x80] sm:$0xff]
    %v963 = vld [vmem:[#allocation14 + $0x88] sm:$0xff]
    %v964 = vld [vmem:[#allocation14 + $0x90] sm:$0xff]
    %v965 = vld [vmem:[#allocation14 + $0x98] sm:$0xff]
    %v966 = vld [vmem:[#allocation14 + $0xa0] sm:$0xff]
    %v967 = vld [vmem:[#allocation14 + $0xa8] sm:$0xff]
    %v968 = vld [vmem:[#allocation14 + $0xb0] sm:$0xff]
    %v969 = vld [vmem:[#allocation14 + $0xb8] sm:$0xff]
    %v970 = vld [vmem:[#allocation14 + $0xc0] sm:$0xff]
    %v971 = vld [vmem:[#allocation14 + $0xc8] sm:$0xff]
    %v972 = vld [vmem:[#allocation14 + $0xd0] sm:$0xff]
    %v973 = vld [vmem:[#allocation14 + $0xd8] sm:$0xff]
    %v974 = vld [vmem:[#allocation14 + $0xe0] sm:$0xff]
    %v975 = vld [vmem:[#allocation14 + $0xe8] sm:$0xff]
    %v976 = vld [vmem:[#allocation14 + $0xf0] sm:$0xff]
    %v977 = vld [vmem:[#allocation14 + $0xf8] sm:$0xff]
    %v978 = vld [vmem:[#allocation14 + $0x100] sm:$0xff]
    %v979 = vld [vmem:[#allocation14 + $0x108] sm:$0xff]
    %v980 = vld [vmem:[#allocation14 + $0x110] sm:$0xff]
    %v981 = vld [vmem:[#allocation14 + $0x118] sm:$0xff]
    %v982 = vld [vmem:[#allocation14 + $0x120] sm:$0xff]
    %v983 = vld [vmem:[#allocation14 + $0x128] sm:$0xff]
    %v984 = vld [vmem:[#allocation14 + $0x130] sm:$0xff]
    %v985 = vld [vmem:[#allocation14 + $0x138] sm:$0xff]
    %v986 = vld [vmem:[#allocation14 + $0x140] sm:$0xff]
    %v987 = vld [vmem:[#allocation14 + $0x148] sm:$0xff]
    %v988 = vld [vmem:[#allocation14 + $0x150] sm:$0xff]
    %v989 = vld [vmem:[#allocation14 + $0x158] sm:$0xff]
    %v990 = vld [vmem:[#allocation14 + $0x160] sm:$0xff]
    %v991 = vld [vmem:[#allocation14 + $0x168] sm:$0xff]
    %v992 = vld [vmem:[#allocation14 + $0x170] sm:$0xff]
    %v993 = vld [vmem:[#allocation14 + $0x178] sm:$0xff]
    %v994 = vld [vmem:[#allocation14 + $0x180] sm:$0xff]
    %v995 = vld [vmem:[#allocation14 + $0x188] sm:$0xff]
    %v996 = vld [vmem:[#allocation14 + $0x190] sm:$0xff]
    %v997 = vld [vmem:[#allocation14 + $0x198] sm:$0xff]
    %v998 = vld [vmem:[#allocation14 + $0x1a0] sm:$0xff]
    %v999 = vld [vmem:[#allocation14 + $0x1a8] sm:$0xff]
    %v1000 = vld [vmem:[#allocation14 + $0x1b0] sm:$0xff]
    %v1001 = vld [vmem:[#allocation14 + $0x1b8] sm:$0xff]
    %v1002 = vld [vmem:[#allocation14 + $0x1c0] sm:$0xff]
    %v1003 = vld [vmem:[#allocation14 + $0x1c8] sm:$0xff]
    %v1004 = vld [vmem:[#allocation14 + $0x1d0] sm:$0xff]
    %v1005 = vld [vmem:[#allocation14 + $0x1d8] sm:$0xff]
    %v1006 = vld [vmem:[#allocation14 + $0x1e0] sm:$0xff]
    %v1007 = vld [vmem:[#allocation14 + $0x1e8] sm:$0xff]
    %v1008 = vld [vmem:[#allocation14 + $0x1f0] sm:$0xff]
    %v1009 = vld [vmem:[#allocation14 + $0x1f8] sm:$0xff]
    %v1010 = vld [vmem:[#allocation14 + $0x200] sm:$0xff]
    %v1011 = vld [vmem:[#allocation14 + $0x208] sm:$0xff]
    %v1012 = vld [vmem:[#allocation14 + $0x210] sm:$0xff]
    %v1013 = vld [vmem:[#allocation14 + $0x218] sm:$0xff]
    %v1014 = vld [vmem:[#allocation14 + $0x220] sm:$0xff]
    %v1015 = vld [vmem:[#allocation14 + $0x228] sm:$0xff]
    %v1016 = vld [vmem:[#allocation14 + $0x230] sm:$0xff]
    %v1017 = vld [vmem:[#allocation14 + $0x238] sm:$0xff]
    %v1018 = vld [vmem:[#allocation14 + $0x240] sm:$0xff]
    %v1019 = vld [vmem:[#allocation14 + $0x248] sm:$0xff]
    %v1020 = vld [vmem:[#allocation14 + $0x250] sm:$0xff]
    %v1021 = vld [vmem:[#allocation14 + $0x258] sm:$0xff]
    %v1022 = vld [vmem:[#allocation14 + $0x260] sm:$0xff]
    %v1023 = vld [vmem:[#allocation14 + $0x268] sm:$0xff]
    %v1024 = vld [vmem:[#allocation14 + $0x270] sm:$0xff]
    %v1025 = vld [vmem:[#allocation14 + $0x278] sm:$0xff]
    %v1026 = vld [vmem:[#allocation14 + $0x280] sm:$0xff]
    %v1027 = vld [vmem:[#allocation14 + $0x288] sm:$0xff]
    %v1028 = vld [vmem:[#allocation14 + $0x290] sm:$0xff]
    %v1029 = vld [vmem:[#allocation14 + $0x298] sm:$0xff]
    %v1030 = vld [vmem:[#allocation14 + $0x2a0] sm:$0xff]
    %v1031 = vld [vmem:[#allocation14 + $0x2a8] sm:$0xff]
    %v1032 = vld [vmem:[#allocation14 + $0x2b0] sm:$0xff]
    %v1033 = vld [vmem:[#allocation14 + $0x2b8] sm:$0xff]
    %v1034 = vld [vmem:[#allocation14 + $0x2c0] sm:$0xff]
    %v1035 = vld [vmem:[#allocation14 + $0x2c8] sm:$0xff]
    %v1036 = vld [vmem:[#allocation14 + $0x2d0] sm:$0xff]
    %v1037 = vld [vmem:[#allocation14 + $0x2d8] sm:$0xff]
    %v1038 = vld [vmem:[#allocation14 + $0x2e0] sm:$0xff]
    %v1039 = vld [vmem:[#allocation14 + $0x2e8] sm:$0xff]
    %v1040 = vld [vmem:[#allocation14 + $0x2f0] sm:$0xff]
    %v1041 = vld [vmem:[#allocation14 + $0x2f8] sm:$0xff]
    %v1042 = vld [vmem:[#allocation14 + $0x300] sm:$0xff]
    %v1043 = vld [vmem:[#allocation14 + $0x308] sm:$0xff]
    %v1044 = vld [vmem:[#allocation14 + $0x310] sm:$0xff]
    %v1045 = vld [vmem:[#allocation14 + $0x318] sm:$0xff]
    %v1046 = vld [vmem:[#allocation14 + $0x320] sm:$0xff]
    %v1047 = vld [vmem:[#allocation14 + $0x328] sm:$0xff]
    %v1048 = vld [vmem:[#allocation14 + $0x330] sm:$0xff]
    %v1049 = vld [vmem:[#allocation14 + $0x338] sm:$0xff]
    %v1050 = vld [vmem:[#allocation14 + $0x340] sm:$0xff]
    %v1051 = vld [vmem:[#allocation14 + $0x348] sm:$0xff]
    %v1052 = vld [vmem:[#allocation14 + $0x350] sm:$0xff]
    %v1053 = vld [vmem:[#allocation14 + $0x358] sm:$0xff]
    %v1054 = vld [vmem:[#allocation14 + $0x360] sm:$0xff]
    %v1055 = vld [vmem:[#allocation14 + $0x368] sm:$0xff]
    %v1056 = vld [vmem:[#allocation14 + $0x370] sm:$0xff]
    %v1057 = vld [vmem:[#allocation14 + $0x378] sm:$0xff]
    %v1058 = vld [vmem:[#allocation14 + $0x380] sm:$0xff]
    %v1059 = vld [vmem:[#allocation14 + $0x388] sm:$0xff]
    %v1060 = vld [vmem:[#allocation14 + $0x390] sm:$0xff]
    %v1061 = vld [vmem:[#allocation14 + $0x398] sm:$0xff]
    %v1062 = vld [vmem:[#allocation14 + $0x3a0] sm:$0xff]
    %v1063 = vld [vmem:[#allocation14 + $0x3a8] sm:$0xff]
    %v1064 = vld [vmem:[#allocation14 + $0x3b0] sm:$0xff]
    %v1065 = vld [vmem:[#allocation14 + $0x3b8] sm:$0xff]
    %v1066 = vld [vmem:[#allocation14 + $0x3c0] sm:$0xff]
    %v1067 = vld [vmem:[#allocation14 + $0x3c8] sm:$0xff]
    %v1068 = vld [vmem:[#allocation14 + $0x3d0] sm:$0xff]
    %v1069 = vld [vmem:[#allocation14 + $0x3d8] sm:$0xff]
    %v1070 = vld [vmem:[#allocation14 + $0x3e0] sm:$0xff]
    %v1071 = vld [vmem:[#allocation14 + $0x3e8] sm:$0xff]
    %v1072 = vld [vmem:[#allocation14 + $0x3f0] sm:$0xff]
    %v1073 = vld [vmem:[#allocation14 + $0x3f8] sm:$0xff]
    %v1074 = vld [vmem:[#allocation14 + $0x400] sm:$0xff]
    %v1075 = vld [vmem:[#allocation14 + $0x408] sm:$0xff]
    %v1076 = vld [vmem:[#allocation14 + $0x410] sm:$0xff]
    %v1077 = vld [vmem:[#allocation14 + $0x418] sm:$0xff]
    %v1078 = vld [vmem:[#allocation14 + $0x420] sm:$0xff]
    %v1079 = vld [vmem:[#allocation14 + $0x428] sm:$0xff]
    %v1080 = vld [vmem:[#allocation14 + $0x430] sm:$0xff]
    %v1081 = vld [vmem:[#allocation14 + $0x438] sm:$0xff]
    %v1082 = vld [vmem:[#allocation14 + $0x440] sm:$0xff]
    %v1083 = vld [vmem:[#allocation14 + $0x448] sm:$0xff]
    %v1084 = vld [vmem:[#allocation14 + $0x450] sm:$0xff]
    %v1085 = vld [vmem:[#allocation14 + $0x458] sm:$0xff]
    %v1086 = vld [vmem:[#allocation14 + $0x460] sm:$0xff]
    %v1087 = vld [vmem:[#allocation14 + $0x468] sm:$0xff]
    %v1088 = vld [vmem:[#allocation14 + $0x470] sm:$0xff]
    %v1089 = vld [vmem:[#allocation14 + $0x478] sm:$0xff]
    %v1090 = vld [vmem:[#allocation14 + $0x480] sm:$0xff]
    %v1091 = vld [vmem:[#allocation14 + $0x488] sm:$0xff]
    %v1092 = vld [vmem:[#allocation14 + $0x490] sm:$0xff]
    %v1093 = vld [vmem:[#allocation14 + $0x498] sm:$0xff]
    %v1094 = vld [vmem:[#allocation14 + $0x4a0] sm:$0xff]
    %v1095 = vld [vmem:[#allocation14 + $0x4a8] sm:$0xff]
    %v1096 = vld [vmem:[#allocation14 + $0x4b0] sm:$0xff]
    %v1097 = vld [vmem:[#allocation14 + $0x4b8] sm:$0xff]
    %v1098 = vld [vmem:[#allocation14 + $0x4c0] sm:$0xff]
    %v1099 = vld [vmem:[#allocation14 + $0x4c8] sm:$0xff]
    %v1100 = vld [vmem:[#allocation14 + $0x4d0] sm:$0xff]
    %v1101 = vld [vmem:[#allocation14 + $0x4d8] sm:$0xff]
    %v1102 = vld [vmem:[#allocation14 + $0x4e0] sm:$0xff]
    %v1103 = vld [vmem:[#allocation14 + $0x4e8] sm:$0xff]
    %v1104 = vld [vmem:[#allocation14 + $0x4f0] sm:$0xff]
    %v1105 = vld [vmem:[#allocation14 + $0x4f8] sm:$0xff]
    %v1106 = vld [vmem:[#allocation14 + $0x500] sm:$0xff]
    %v1107 = vld [vmem:[#allocation14 + $0x508] sm:$0xff]
    %v1108 = vld [vmem:[#allocation14 + $0x510] sm:$0xff]
    %v1109 = vld [vmem:[#allocation14 + $0x518] sm:$0xff]
    %v1110 = vld [vmem:[#allocation14 + $0x520] sm:$0xff]
    %v1111 = vld [vmem:[#allocation14 + $0x528] sm:$0xff]
    %v1112 = vld [vmem:[#allocation14 + $0x530] sm:$0xff]
    %v1113 = vld [vmem:[#allocation14 + $0x538] sm:$0xff]
    %v1114 = vld [vmem:[#allocation14 + $0x540] sm:$0xff]
    %v1115 = vld [vmem:[#allocation14 + $0x548] sm:$0xff]
    %v1116 = vld [vmem:[#allocation14 + $0x550] sm:$0xff]
    %v1117 = vld [vmem:[#allocation14 + $0x558] sm:$0xff]
    %v1118 = vld [vmem:[#allocation14 + $0x560] sm:$0xff]
    %v1119 = vld [vmem:[#allocation14 + $0x568] sm:$0xff]
    %v1120 = vld [vmem:[#allocation14 + $0x570] sm:$0xff]
    %v1121 = vld [vmem:[#allocation14 + $0x578] sm:$0xff]
    %v1122 = vld [vmem:[#allocation14 + $0x580] sm:$0xff]
    %v1123 = vld [vmem:[#allocation14 + $0x588] sm:$0xff]
    %v1124 = vld [vmem:[#allocation14 + $0x590] sm:$0xff]
    %v1125 = vld [vmem:[#allocation14 + $0x598] sm:$0xff]
    %v1126 = vld [vmem:[#allocation14 + $0x5a0] sm:$0xff]
    %v1127 = vld [vmem:[#allocation14 + $0x5a8] sm:$0xff]
    %v1128 = vld [vmem:[#allocation14 + $0x5b0] sm:$0xff]
    %v1129 = vld [vmem:[#allocation14 + $0x5b8] sm:$0xff]
    %v1130 = vld [vmem:[#allocation14 + $0x5c0] sm:$0xff]
    %v1131 = vld [vmem:[#allocation14 + $0x5c8] sm:$0xff]
    %v1132 = vld [vmem:[#allocation14 + $0x5d0] sm:$0xff]
    %v1133 = vld [vmem:[#allocation14 + $0x5d8] sm:$0xff]
    %v1134 = vld [vmem:[#allocation14 + $0x5e0] sm:$0xff]
    %v1135 = vld [vmem:[#allocation14 + $0x5e8] sm:$0xff]
    %v1136 = vld [vmem:[#allocation14 + $0x5f0] sm:$0xff]
    %v1137 = vld [vmem:[#allocation14 + $0x5f8] sm:$0xff]
    %v1138 = vld [vmem:[#allocation14 + $0x600] sm:$0xff]
    %v1139 = vld [vmem:[#allocation14 + $0x608] sm:$0xff]
    %v1140 = vld [vmem:[#allocation14 + $0x610] sm:$0xff]
    %v1141 = vld [vmem:[#allocation14 + $0x618] sm:$0xff]
    %v1142 = vld [vmem:[#allocation14 + $0x620] sm:$0xff]
    %v1143 = vld [vmem:[#allocation14 + $0x628] sm:$0xff]
    %v1144 = vld [vmem:[#allocation14 + $0x630] sm:$0xff]
    %v1145 = vld [vmem:[#allocation14 + $0x638] sm:$0xff]
    %v1146 = vld [vmem:[#allocation14 + $0x640] sm:$0xff]
    %v1147 = vld [vmem:[#allocation14 + $0x648] sm:$0xff]
    %v1148 = vld [vmem:[#allocation14 + $0x650] sm:$0xff]
    %v1149 = vld [vmem:[#allocation14 + $0x658] sm:$0xff]
    %v1150 = vld [vmem:[#allocation14 + $0x660] sm:$0xff]
    %v1151 = vld [vmem:[#allocation14 + $0x668] sm:$0xff]
    %v1152 = vld [vmem:[#allocation14 + $0x670] sm:$0xff]
    %v1153 = vld [vmem:[#allocation14 + $0x678] sm:$0xff]
    %v1154 = vld [vmem:[#allocation14 + $0x680] sm:$0xff]
    %v1155 = vld [vmem:[#allocation14 + $0x688] sm:$0xff]
    %v1156 = vld [vmem:[#allocation14 + $0x690] sm:$0xff]
    %v1157 = vld [vmem:[#allocation14 + $0x698] sm:$0xff]
    %v1158 = vld [vmem:[#allocation14 + $0x6a0] sm:$0xff]
    %v1159 = vld [vmem:[#allocation14 + $0x6a8] sm:$0xff]
    %v1160 = vld [vmem:[#allocation14 + $0x6b0] sm:$0xff]
    %v1161 = vld [vmem:[#allocation14 + $0x6b8] sm:$0xff]
    %v1162 = vld [vmem:[#allocation14 + $0x6c0] sm:$0xff]
    %v1163 = vld [vmem:[#allocation14 + $0x6c8] sm:$0xff]
    %v1164 = vld [vmem:[#allocation14 + $0x6d0] sm:$0xff]
    %v1165 = vld [vmem:[#allocation14 + $0x6d8] sm:$0xff]
    %v1166 = vld [vmem:[#allocation14 + $0x6e0] sm:$0xff]
    %v1167 = vld [vmem:[#allocation14 + $0x6e8] sm:$0xff]
    %v1168 = vld [vmem:[#allocation14 + $0x6f0] sm:$0xff]
    %v1169 = vld [vmem:[#allocation14 + $0x6f8] sm:$0xff]
    %v1170 = vld [vmem:[#allocation14 + $0x700] sm:$0xff]
    %v1171 = vld [vmem:[#allocation14 + $0x708] sm:$0xff]
    %v1172 = vld [vmem:[#allocation14 + $0x710] sm:$0xff]
    %v1173 = vld [vmem:[#allocation14 + $0x718] sm:$0xff]
    %v1174 = vld [vmem:[#allocation14 + $0x720] sm:$0xff]
    %v1175 = vld [vmem:[#allocation14 + $0x728] sm:$0xff]
    %v1176 = vld [vmem:[#allocation14 + $0x730] sm:$0xff]
    %v1177 = vld [vmem:[#allocation14 + $0x738] sm:$0xff]
    %v1178 = vld [vmem:[#allocation14 + $0x740] sm:$0xff]
    %v1179 = vld [vmem:[#allocation14 + $0x748] sm:$0xff]
    %v1180 = vld [vmem:[#allocation14 + $0x750] sm:$0xff]
    %v1181 = vld [vmem:[#allocation14 + $0x758] sm:$0xff]
    %v1182 = vld [vmem:[#allocation14 + $0x760] sm:$0xff]
    %v1183 = vld [vmem:[#allocation14 + $0x768] sm:$0xff]
    %v1184 = vld [vmem:[#allocation14 + $0x770] sm:$0xff]
    %v1185 = vld [vmem:[#allocation14 + $0x778] sm:$0xff]
    %v1186 = vld [vmem:[#allocation14 + $0x780] sm:$0xff]
    %v1187 = vld [vmem:[#allocation14 + $0x788] sm:$0xff]
    %v1188 = vld [vmem:[#allocation14 + $0x790] sm:$0xff]
    %v1189 = vld [vmem:[#allocation14 + $0x798] sm:$0xff]
    %v1190 = vld [vmem:[#allocation14 + $0x7a0] sm:$0xff]
    %v1191 = vld [vmem:[#allocation14 + $0x7a8] sm:$0xff]
    %v1192 = vld [vmem:[#allocation14 + $0x7b0] sm:$0xff]
    %v1193 = vld [vmem:[#allocation14 + $0x7b8] sm:$0xff]
    %v1194 = vld [vmem:[#allocation14 + $0x7c0] sm:$0xff]
    %v1195 = vld [vmem:[#allocation14 + $0x7c8] sm:$0xff]
    %v1196 = vld [vmem:[#allocation14 + $0x7d0] sm:$0xff]
    %v1197 = vld [vmem:[#allocation14 + $0x7d8] sm:$0xff]
    %v1198 = vld [vmem:[#allocation14 + $0x7e0] sm:$0xff]
    %v1199 = vld [vmem:[#allocation14 + $0x7e8] sm:$0xff]
    %v1200 = vld [vmem:[#allocation14 + $0x7f0] sm:$0xff]
    %v1201 = vld [vmem:[#allocation14 + $0x7f8] sm:$0xff]
    %v1202 = vld [vmem:[#allocation16] sm:$0xff]
    %v1204 = vlaneseq
    %v1205 = vshrl.u32 %v1204, 7
    %v1206 = vsub.s32 0, %v1205
    %v1207 = vrot.slane %v1202, %v1206
    %v1208 = vlaneseq
    %v1209 = vshrl.u32 %v1208, 7
    %v1210 = vsub.s32 1, %v1209
    %v1211 = vrot.slane %v1202, %v1210
    %v1212 = vlaneseq
    %v1213 = vshrl.u32 %v1212, 7
    %v1214 = vsub.s32 2, %v1213
    %v1215 = vrot.slane %v1202, %v1214
    %v1216 = vlaneseq
    %v1217 = vshrl.u32 %v1216, 7
    %v1218 = vsub.s32 3, %v1217
    %v1219 = vrot.slane %v1202, %v1218
    %v1220 = vlaneseq
    %v1221 = vshrl.u32 %v1220, 7
    %v1222 = vsub.s32 4, %v1221
    %v1223 = vrot.slane %v1202, %v1222
    %v1224 = vlaneseq
    %v1225 = vshrl.u32 %v1224, 7
    %v1226 = vsub.s32 5, %v1225
    %v1227 = vrot.slane %v1202, %v1226
    %v1228 = vlaneseq
    %v1229 = vshrl.u32 %v1228, 7
    %v1230 = vsub.s32 6, %v1229
    %v1231 = vrot.slane %v1202, %v1230
    %v1232 = vlaneseq
    %v1233 = vshrl.u32 %v1232, 7
    %v1234 = vsub.s32 7, %v1233
    %v1235 = vrot.slane %v1202, %v1234
    %v1500 = vunpack.c.l.b16 %v946
    %v1501 = vunpack.c.h.b16 %v946
    %v1502 = vunpack.c.l.b16 %v947
    %v1503 = vunpack.c.h.b16 %v947
    %v1504 = vunpack.c.l.b16 %v948
    %v1505 = vunpack.c.h.b16 %v948
    %v1506 = vunpack.c.l.b16 %v949
    %v1507 = vunpack.c.h.b16 %v949
    %v1508 = vunpack.c.l.b16 %v950
    %v1509 = vunpack.c.h.b16 %v950
    %v1510 = vunpack.c.l.b16 %v951
    %v1511 = vunpack.c.h.b16 %v951
    %v1512 = vunpack.c.l.b16 %v952
    %v1513 = vunpack.c.h.b16 %v952
    %v1514 = vunpack.c.l.b16 %v953
    %v1515 = vunpack.c.h.b16 %v953
    %v1516 = vunpack.c.l.b16 %v954
    %v1517 = vunpack.c.h.b16 %v954
    %v1518 = vunpack.c.l.b16 %v955
    %v1519 = vunpack.c.h.b16 %v955
    %v1520 = vunpack.c.l.b16 %v956
    %v1521 = vunpack.c.h.b16 %v956
    %v1522 = vunpack.c.l.b16 %v957
    %v1523 = vunpack.c.h.b16 %v957
    %v1524 = vunpack.c.l.b16 %v958
    %v1525 = vunpack.c.h.b16 %v958
    %v1526 = vunpack.c.l.b16 %v959
    %v1527 = vunpack.c.h.b16 %v959
    %v1528 = vunpack.c.l.b16 %v960
    %v1529 = vunpack.c.h.b16 %v960
    %v1530 = vunpack.c.l.b16 %v961
    %v1531 = vunpack.c.h.b16 %v961
    %v1532 = vunpack.c.l.b16 %v962
    %v1533 = vunpack.c.h.b16 %v962
    %v1534 = vunpack.c.l.b16 %v963
    %v1535 = vunpack.c.h.b16 %v963
    %v1536 = vunpack.c.l.b16 %v964
    %v1537 = vunpack.c.h.b16 %v964
    %v1538 = vunpack.c.l.b16 %v965
    %v1539 = vunpack.c.h.b16 %v965
    %v1540 = vunpack.c.l.b16 %v966
    %v1541 = vunpack.c.h.b16 %v966
    %v1542 = vunpack.c.l.b16 %v967
    %v1543 = vunpack.c.h.b16 %v967
    %v1544 = vunpack.c.l.b16 %v968
    %v1545 = vunpack.c.h.b16 %v968
    %v1546 = vunpack.c.l.b16 %v969
    %v1547 = vunpack.c.h.b16 %v969
    %v1548 = vunpack.c.l.b16 %v970
    %v1549 = vunpack.c.h.b16 %v970
    %v1550 = vunpack.c.l.b16 %v971
    %v1551 = vunpack.c.h.b16 %v971
    %v1552 = vunpack.c.l.b16 %v972
    %v1553 = vunpack.c.h.b16 %v972
    %v1554 = vunpack.c.l.b16 %v973
    %v1555 = vunpack.c.h.b16 %v973
    %v1556 = vunpack.c.l.b16 %v974
    %v1557 = vunpack.c.h.b16 %v974
    %v1558 = vunpack.c.l.b16 %v975
    %v1559 = vunpack.c.h.b16 %v975
    %v1560 = vunpack.c.l.b16 %v976
    %v1561 = vunpack.c.h.b16 %v976
    %v1562 = vunpack.c.l.b16 %v977
    %v1563 = vunpack.c.h.b16 %v977
    %v1564 = vunpack.c.l.b16 %v978
    %v1565 = vunpack.c.h.b16 %v978
    %v1566 = vunpack.c.l.b16 %v979
    %v1567 = vunpack.c.h.b16 %v979
    %v1568 = vunpack.c.l.b16 %v980
    %v1569 = vunpack.c.h.b16 %v980
    %v1570 = vunpack.c.l.b16 %v981
    %v1571 = vunpack.c.h.b16 %v981
    %v1572 = vunpack.c.l.b16 %v982
    %v1573 = vunpack.c.h.b16 %v982
    %v1574 = vunpack.c.l.b16 %v983
    %v1575 = vunpack.c.h.b16 %v983
    %v1576 = vunpack.c.l.b16 %v984
    %v1577 = vunpack.c.h.b16 %v984
    %v1578 = vunpack.c.l.b16 %v985
    %v1579 = vunpack.c.h.b16 %v985
    %v1580 = vunpack.c.l.b16 %v986
    %v1581 = vunpack.c.h.b16 %v986
    %v1582 = vunpack.c.l.b16 %v987
    %v1583 = vunpack.c.h.b16 %v987
    %v1584 = vunpack.c.l.b16 %v988
    %v1585 = vunpack.c.h.b16 %v988
    %v1586 = vunpack.c.l.b16 %v989
    %v1587 = vunpack.c.h.b16 %v989
    %v1588 = vunpack.c.l.b16 %v990
    %v1589 = vunpack.c.h.b16 %v990
    %v1590 = vunpack.c.l.b16 %v991
    %v1591 = vunpack.c.h.b16 %v991
    %v1592 = vunpack.c.l.b16 %v992
    %v1593 = vunpack.c.h.b16 %v992
    %v1594 = vunpack.c.l.b16 %v993
    %v1595 = vunpack.c.h.b16 %v993
    %v1596 = vunpack.c.l.b16 %v994
    %v1597 = vunpack.c.h.b16 %v994
    %v1598 = vunpack.c.l.b16 %v995
    %v1599 = vunpack.c.h.b16 %v995
    %v1600 = vunpack.c.l.b16 %v996
    %v1601 = vunpack.c.h.b16 %v996
    %v1602 = vunpack.c.l.b16 %v997
    %v1603 = vunpack.c.h.b16 %v997
    %v1604 = vunpack.c.l.b16 %v998
    %v1605 = vunpack.c.h.b16 %v998
    %v1606 = vunpack.c.l.b16 %v999
    %v1607 = vunpack.c.h.b16 %v999
    %v1608 = vunpack.c.l.b16 %v1000
    %v1609 = vunpack.c.h.b16 %v1000
    %v1610 = vunpack.c.l.b16 %v1001
    %v1611 = vunpack.c.h.b16 %v1001
    %v1612 = vunpack.c.l.b16 %v1002
    %v1613 = vunpack.c.h.b16 %v1002
    %v1614 = vunpack.c.l.b16 %v1003
    %v1615 = vunpack.c.h.b16 %v1003
    %v1616 = vunpack.c.l.b16 %v1004
    %v1617 = vunpack.c.h.b16 %v1004
    %v1618 = vunpack.c.l.b16 %v1005
    %v1619 = vunpack.c.h.b16 %v1005
    %v1620 = vunpack.c.l.b16 %v1006
    %v1621 = vunpack.c.h.b16 %v1006
    %v1622 = vunpack.c.l.b16 %v1007
    %v1623 = vunpack.c.h.b16 %v1007
    %v1624 = vunpack.c.l.b16 %v1008
    %v1625 = vunpack.c.h.b16 %v1008
    %v1626 = vunpack.c.l.b16 %v1009
    %v1627 = vunpack.c.h.b16 %v1009
    %v1628 = vunpack.c.l.b16 %v1010
    %v1629 = vunpack.c.h.b16 %v1010
    %v1630 = vunpack.c.l.b16 %v1011
    %v1631 = vunpack.c.h.b16 %v1011
    %v1632 = vunpack.c.l.b16 %v1012
    %v1633 = vunpack.c.h.b16 %v1012
    %v1634 = vunpack.c.l.b16 %v1013
    %v1635 = vunpack.c.h.b16 %v1013
    %v1636 = vunpack.c.l.b16 %v1014
    %v1637 = vunpack.c.h.b16 %v1014
    %v1638 = vunpack.c.l.b16 %v1015
    %v1639 = vunpack.c.h.b16 %v1015
    %v1640 = vunpack.c.l.b16 %v1016
    %v1641 = vunpack.c.h.b16 %v1016
    %v1642 = vunpack.c.l.b16 %v1017
    %v1643 = vunpack.c.h.b16 %v1017
    %v1644 = vunpack.c.l.b16 %v1018
    %v1645 = vunpack.c.h.b16 %v1018
    %v1646 = vunpack.c.l.b16 %v1019
    %v1647 = vunpack.c.h.b16 %v1019
    %v1648 = vunpack.c.l.b16 %v1020
    %v1649 = vunpack.c.h.b16 %v1020
    %v1650 = vunpack.c.l.b16 %v1021
    %v1651 = vunpack.c.h.b16 %v1021
    %v1652 = vunpack.c.l.b16 %v1022
    %v1653 = vunpack.c.h.b16 %v1022
    %v1654 = vunpack.c.l.b16 %v1023
    %v1655 = vunpack.c.h.b16 %v1023
    %v1656 = vunpack.c.l.b16 %v1024
    %v1657 = vunpack.c.h.b16 %v1024
    %v1658 = vunpack.c.l.b16 %v1025
    %v1659 = vunpack.c.h.b16 %v1025
    %v1660 = vunpack.c.l.b16 %v1026
    %v1661 = vunpack.c.h.b16 %v1026
    %v1662 = vunpack.c.l.b16 %v1027
    %v1663 = vunpack.c.h.b16 %v1027
    %v1664 = vunpack.c.l.b16 %v1028
    %v1665 = vunpack.c.h.b16 %v1028
    %v1666 = vunpack.c.l.b16 %v1029
    %v1667 = vunpack.c.h.b16 %v1029
    %v1668 = vunpack.c.l.b16 %v1030
    %v1669 = vunpack.c.h.b16 %v1030
    %v1670 = vunpack.c.l.b16 %v1031
    %v1671 = vunpack.c.h.b16 %v1031
    %v1672 = vunpack.c.l.b16 %v1032
    %v1673 = vunpack.c.h.b16 %v1032
    %v1674 = vunpack.c.l.b16 %v1033
    %v1675 = vunpack.c.h.b16 %v1033
    %v1676 = vunpack.c.l.b16 %v1034
    %v1677 = vunpack.c.h.b16 %v1034
    %v1678 = vunpack.c.l.b16 %v1035
    %v1679 = vunpack.c.h.b16 %v1035
    %v1680 = vunpack.c.l.b16 %v1036
    %v1681 = vunpack.c.h.b16 %v1036
    %v1682 = vunpack.c.l.b16 %v1037
    %v1683 = vunpack.c.h.b16 %v1037
    %v1684 = vunpack.c.l.b16 %v1038
    %v1685 = vunpack.c.h.b16 %v1038
    %v1686 = vunpack.c.l.b16 %v1039
    %v1687 = vunpack.c.h.b16 %v1039
    %v1688 = vunpack.c.l.b16 %v1040
    %v1689 = vunpack.c.h.b16 %v1040
    %v1690 = vunpack.c.l.b16 %v1041
    %v1691 = vunpack.c.h.b16 %v1041
    %v1692 = vunpack.c.l.b16 %v1042
    %v1693 = vunpack.c.h.b16 %v1042
    %v1694 = vunpack.c.l.b16 %v1043
    %v1695 = vunpack.c.h.b16 %v1043
    %v1696 = vunpack.c.l.b16 %v1044
    %v1697 = vunpack.c.h.b16 %v1044
    %v1698 = vunpack.c.l.b16 %v1045
    %v1699 = vunpack.c.h.b16 %v1045
    %v1700 = vunpack.c.l.b16 %v1046
    %v1701 = vunpack.c.h.b16 %v1046
    %v1702 = vunpack.c.l.b16 %v1047
    %v1703 = vunpack.c.h.b16 %v1047
    %v1704 = vunpack.c.l.b16 %v1048
    %v1705 = vunpack.c.h.b16 %v1048
    %v1706 = vunpack.c.l.b16 %v1049
    %v1707 = vunpack.c.h.b16 %v1049
    %v1708 = vunpack.c.l.b16 %v1050
    %v1709 = vunpack.c.h.b16 %v1050
    %v1710 = vunpack.c.l.b16 %v1051
    %v1711 = vunpack.c.h.b16 %v1051
    %v1712 = vunpack.c.l.b16 %v1052
    %v1713 = vunpack.c.h.b16 %v1052
    %v1714 = vunpack.c.l.b16 %v1053
    %v1715 = vunpack.c.h.b16 %v1053
    %v1716 = vunpack.c.l.b16 %v1054
    %v1717 = vunpack.c.h.b16 %v1054
    %v1718 = vunpack.c.l.b16 %v1055
    %v1719 = vunpack.c.h.b16 %v1055
    %v1720 = vunpack.c.l.b16 %v1056
    %v1721 = vunpack.c.h.b16 %v1056
    %v1722 = vunpack.c.l.b16 %v1057
    %v1723 = vunpack.c.h.b16 %v1057
    %v1724 = vunpack.c.l.b16 %v1058
    %v1725 = vunpack.c.h.b16 %v1058
    %v1726 = vunpack.c.l.b16 %v1059
    %v1727 = vunpack.c.h.b16 %v1059
    %v1728 = vunpack.c.l.b16 %v1060
    %v1729 = vunpack.c.h.b16 %v1060
    %v1730 = vunpack.c.l.b16 %v1061
    %v1731 = vunpack.c.h.b16 %v1061
    %v1732 = vunpack.c.l.b16 %v1062
    %v1733 = vunpack.c.h.b16 %v1062
    %v1734 = vunpack.c.l.b16 %v1063
    %v1735 = vunpack.c.h.b16 %v1063
    %v1736 = vunpack.c.l.b16 %v1064
    %v1737 = vunpack.c.h.b16 %v1064
    %v1738 = vunpack.c.l.b16 %v1065
    %v1739 = vunpack.c.h.b16 %v1065
    %v1740 = vunpack.c.l.b16 %v1066
    %v1741 = vunpack.c.h.b16 %v1066
    %v1742 = vunpack.c.l.b16 %v1067
    %v1743 = vunpack.c.h.b16 %v1067
    %v1744 = vunpack.c.l.b16 %v1068
    %v1745 = vunpack.c.h.b16 %v1068
    %v1746 = vunpack.c.l.b16 %v1069
    %v1747 = vunpack.c.h.b16 %v1069
    %v1748 = vunpack.c.l.b16 %v1070
    %v1749 = vunpack.c.h.b16 %v1070
    %v1750 = vunpack.c.l.b16 %v1071
    %v1751 = vunpack.c.h.b16 %v1071
    %v1752 = vunpack.c.l.b16 %v1072
    %v1753 = vunpack.c.h.b16 %v1072
    %v1754 = vunpack.c.l.b16 %v1073
    %v1755 = vunpack.c.h.b16 %v1073
    %v1756 = vunpack.c.l.b16 %v1074
    %v1757 = vunpack.c.h.b16 %v1074
    %v1758 = vunpack.c.l.b16 %v1075
    %v1759 = vunpack.c.h.b16 %v1075
    %v1760 = vunpack.c.l.b16 %v1076
    %v1761 = vunpack.c.h.b16 %v1076
    %v1762 = vunpack.c.l.b16 %v1077
    %v1763 = vunpack.c.h.b16 %v1077
    %v1764 = vunpack.c.l.b16 %v1078
    %v1765 = vunpack.c.h.b16 %v1078
    %v1766 = vunpack.c.l.b16 %v1079
    %v1767 = vunpack.c.h.b16 %v1079
    %v1768 = vunpack.c.l.b16 %v1080
    %v1769 = vunpack.c.h.b16 %v1080
    %v1770 = vunpack.c.l.b16 %v1081
    %v1771 = vunpack.c.h.b16 %v1081
    %v1772 = vunpack.c.l.b16 %v1082
    %v1773 = vunpack.c.h.b16 %v1082
    %v1774 = vunpack.c.l.b16 %v1083
    %v1775 = vunpack.c.h.b16 %v1083
    %v1776 = vunpack.c.l.b16 %v1084
    %v1777 = vunpack.c.h.b16 %v1084
    %v1778 = vunpack.c.l.b16 %v1085
    %v1779 = vunpack.c.h.b16 %v1085
    %v1780 = vunpack.c.l.b16 %v1086
    %v1781 = vunpack.c.h.b16 %v1086
    %v1782 = vunpack.c.l.b16 %v1087
    %v1783 = vunpack.c.h.b16 %v1087
    %v1784 = vunpack.c.l.b16 %v1088
    %v1785 = vunpack.c.h.b16 %v1088
    %v1786 = vunpack.c.l.b16 %v1089
    %v1787 = vunpack.c.h.b16 %v1089
    %v1788 = vunpack.c.l.b16 %v1090
    %v1789 = vunpack.c.h.b16 %v1090
    %v1790 = vunpack.c.l.b16 %v1091
    %v1791 = vunpack.c.h.b16 %v1091
    %v1792 = vunpack.c.l.b16 %v1092
    %v1793 = vunpack.c.h.b16 %v1092
    %v1794 = vunpack.c.l.b16 %v1093
    %v1795 = vunpack.c.h.b16 %v1093
    %v1796 = vunpack.c.l.b16 %v1094
    %v1797 = vunpack.c.h.b16 %v1094
    %v1798 = vunpack.c.l.b16 %v1095
    %v1799 = vunpack.c.h.b16 %v1095
    %v1800 = vunpack.c.l.b16 %v1096
    %v1801 = vunpack.c.h.b16 %v1096
    %v1802 = vunpack.c.l.b16 %v1097
    %v1803 = vunpack.c.h.b16 %v1097
    %v1804 = vunpack.c.l.b16 %v1098
    %v1805 = vunpack.c.h.b16 %v1098
    %v1806 = vunpack.c.l.b16 %v1099
    %v1807 = vunpack.c.h.b16 %v1099
    %v1808 = vunpack.c.l.b16 %v1100
    %v1809 = vunpack.c.h.b16 %v1100
    %v1810 = vunpack.c.l.b16 %v1101
    %v1811 = vunpack.c.h.b16 %v1101
    %v1812 = vunpack.c.l.b16 %v1102
    %v1813 = vunpack.c.h.b16 %v1102
    %v1814 = vunpack.c.l.b16 %v1103
    %v1815 = vunpack.c.h.b16 %v1103
    %v1816 = vunpack.c.l.b16 %v1104
    %v1817 = vunpack.c.h.b16 %v1104
    %v1818 = vunpack.c.l.b16 %v1105
    %v1819 = vunpack.c.h.b16 %v1105
    %v1820 = vunpack.c.l.b16 %v1106
    %v1821 = vunpack.c.h.b16 %v1106
    %v1822 = vunpack.c.l.b16 %v1107
    %v1823 = vunpack.c.h.b16 %v1107
    %v1824 = vunpack.c.l.b16 %v1108
    %v1825 = vunpack.c.h.b16 %v1108
    %v1826 = vunpack.c.l.b16 %v1109
    %v1827 = vunpack.c.h.b16 %v1109
    %v1828 = vunpack.c.l.b16 %v1110
    %v1829 = vunpack.c.h.b16 %v1110
    %v1830 = vunpack.c.l.b16 %v1111
    %v1831 = vunpack.c.h.b16 %v1111
    %v1832 = vunpack.c.l.b16 %v1112
    %v1833 = vunpack.c.h.b16 %v1112
    %v1834 = vunpack.c.l.b16 %v1113
    %v1835 = vunpack.c.h.b16 %v1113
    %v1836 = vunpack.c.l.b16 %v1114
    %v1837 = vunpack.c.h.b16 %v1114
    %v1838 = vunpack.c.l.b16 %v1115
    %v1839 = vunpack.c.h.b16 %v1115
    %v1840 = vunpack.c.l.b16 %v1116
    %v1841 = vunpack.c.h.b16 %v1116
    %v1842 = vunpack.c.l.b16 %v1117
    %v1843 = vunpack.c.h.b16 %v1117
    %v1844 = vunpack.c.l.b16 %v1118
    %v1845 = vunpack.c.h.b16 %v1118
    %v1846 = vunpack.c.l.b16 %v1119
    %v1847 = vunpack.c.h.b16 %v1119
    %v1848 = vunpack.c.l.b16 %v1120
    %v1849 = vunpack.c.h.b16 %v1120
    %v1850 = vunpack.c.l.b16 %v1121
    %v1851 = vunpack.c.h.b16 %v1121
    %v1852 = vunpack.c.l.b16 %v1122
    %v1853 = vunpack.c.h.b16 %v1122
    %v1854 = vunpack.c.l.b16 %v1123
    %v1855 = vunpack.c.h.b16 %v1123
    %v1856 = vunpack.c.l.b16 %v1124
    %v1857 = vunpack.c.h.b16 %v1124
    %v1858 = vunpack.c.l.b16 %v1125
    %v1859 = vunpack.c.h.b16 %v1125
    %v1860 = vunpack.c.l.b16 %v1126
    %v1861 = vunpack.c.h.b16 %v1126
    %v1862 = vunpack.c.l.b16 %v1127
    %v1863 = vunpack.c.h.b16 %v1127
    %v1864 = vunpack.c.l.b16 %v1128
    %v1865 = vunpack.c.h.b16 %v1128
    %v1866 = vunpack.c.l.b16 %v1129
    %v1867 = vunpack.c.h.b16 %v1129
    %v1868 = vunpack.c.l.b16 %v1130
    %v1869 = vunpack.c.h.b16 %v1130
    %v1870 = vunpack.c.l.b16 %v1131
    %v1871 = vunpack.c.h.b16 %v1131
    %v1872 = vunpack.c.l.b16 %v1132
    %v1873 = vunpack.c.h.b16 %v1132
    %v1874 = vunpack.c.l.b16 %v1133
    %v1875 = vunpack.c.h.b16 %v1133
    %v1876 = vunpack.c.l.b16 %v1134
    %v1877 = vunpack.c.h.b16 %v1134
    %v1878 = vunpack.c.l.b16 %v1135
    %v1879 = vunpack.c.h.b16 %v1135
    %v1880 = vunpack.c.l.b16 %v1136
    %v1881 = vunpack.c.h.b16 %v1136
    %v1882 = vunpack.c.l.b16 %v1137
    %v1883 = vunpack.c.h.b16 %v1137
    %v1884 = vunpack.c.l.b16 %v1138
    %v1885 = vunpack.c.h.b16 %v1138
    %v1886 = vunpack.c.l.b16 %v1139
    %v1887 = vunpack.c.h.b16 %v1139
    %v1888 = vunpack.c.l.b16 %v1140
    %v1889 = vunpack.c.h.b16 %v1140
    %v1890 = vunpack.c.l.b16 %v1141
    %v1891 = vunpack.c.h.b16 %v1141
    %v1892 = vunpack.c.l.b16 %v1142
    %v1893 = vunpack.c.h.b16 %v1142
    %v1894 = vunpack.c.l.b16 %v1143
    %v1895 = vunpack.c.h.b16 %v1143
    %v1896 = vunpack.c.l.b16 %v1144
    %v1897 = vunpack.c.h.b16 %v1144
    %v1898 = vunpack.c.l.b16 %v1145
    %v1899 = vunpack.c.h.b16 %v1145
    %v1900 = vunpack.c.l.b16 %v1146
    %v1901 = vunpack.c.h.b16 %v1146
    %v1902 = vunpack.c.l.b16 %v1147
    %v1903 = vunpack.c.h.b16 %v1147
    %v1904 = vunpack.c.l.b16 %v1148
    %v1905 = vunpack.c.h.b16 %v1148
    %v1906 = vunpack.c.l.b16 %v1149
    %v1907 = vunpack.c.h.b16 %v1149
    %v1908 = vunpack.c.l.b16 %v1150
    %v1909 = vunpack.c.h.b16 %v1150
    %v1910 = vunpack.c.l.b16 %v1151
    %v1911 = vunpack.c.h.b16 %v1151
    %v1912 = vunpack.c.l.b16 %v1152
    %v1913 = vunpack.c.h.b16 %v1152
    %v1914 = vunpack.c.l.b16 %v1153
    %v1915 = vunpack.c.h.b16 %v1153
    %v1916 = vunpack.c.l.b16 %v1154
    %v1917 = vunpack.c.h.b16 %v1154
    %v1918 = vunpack.c.l.b16 %v1155
    %v1919 = vunpack.c.h.b16 %v1155
    %v1920 = vunpack.c.l.b16 %v1156
    %v1921 = vunpack.c.h.b16 %v1156
    %v1922 = vunpack.c.l.b16 %v1157
    %v1923 = vunpack.c.h.b16 %v1157
    %v1924 = vunpack.c.l.b16 %v1158
    %v1925 = vunpack.c.h.b16 %v1158
    %v1926 = vunpack.c.l.b16 %v1159
    %v1927 = vunpack.c.h.b16 %v1159
    %v1928 = vunpack.c.l.b16 %v1160
    %v1929 = vunpack.c.h.b16 %v1160
    %v1930 = vunpack.c.l.b16 %v1161
    %v1931 = vunpack.c.h.b16 %v1161
    %v1932 = vunpack.c.l.b16 %v1162
    %v1933 = vunpack.c.h.b16 %v1162
    %v1934 = vunpack.c.l.b16 %v1163
    %v1935 = vunpack.c.h.b16 %v1163
    %v1936 = vunpack.c.l.b16 %v1164
    %v1937 = vunpack.c.h.b16 %v1164
    %v1938 = vunpack.c.l.b16 %v1165
    %v1939 = vunpack.c.h.b16 %v1165
    %v1940 = vunpack.c.l.b16 %v1166
    %v1941 = vunpack.c.h.b16 %v1166
    %v1942 = vunpack.c.l.b16 %v1167
    %v1943 = vunpack.c.h.b16 %v1167
    %v1944 = vunpack.c.l.b16 %v1168
    %v1945 = vunpack.c.h.b16 %v1168
    %v1946 = vunpack.c.l.b16 %v1169
    %v1947 = vunpack.c.h.b16 %v1169
    %v1948 = vunpack.c.l.b16 %v1170
    %v1949 = vunpack.c.h.b16 %v1170
    %v1950 = vunpack.c.l.b16 %v1171
    %v1951 = vunpack.c.h.b16 %v1171
    %v1952 = vunpack.c.l.b16 %v1172
    %v1953 = vunpack.c.h.b16 %v1172
    %v1954 = vunpack.c.l.b16 %v1173
    %v1955 = vunpack.c.h.b16 %v1173
    %v1956 = vunpack.c.l.b16 %v1174
    %v1957 = vunpack.c.h.b16 %v1174
    %v1958 = vunpack.c.l.b16 %v1175
    %v1959 = vunpack.c.h.b16 %v1175
    %v1960 = vunpack.c.l.b16 %v1176
    %v1961 = vunpack.c.h.b16 %v1176
    %v1962 = vunpack.c.l.b16 %v1177
    %v1963 = vunpack.c.h.b16 %v1177
    %v1964 = vunpack.c.l.b16 %v1178
    %v1965 = vunpack.c.h.b16 %v1178
    %v1966 = vunpack.c.l.b16 %v1179
    %v1967 = vunpack.c.h.b16 %v1179
    %v1968 = vunpack.c.l.b16 %v1180
    %v1969 = vunpack.c.h.b16 %v1180
    %v1970 = vunpack.c.l.b16 %v1181
    %v1971 = vunpack.c.h.b16 %v1181
    %v1972 = vunpack.c.l.b16 %v1182
    %v1973 = vunpack.c.h.b16 %v1182
    %v1974 = vunpack.c.l.b16 %v1183
    %v1975 = vunpack.c.h.b16 %v1183
    %v1976 = vunpack.c.l.b16 %v1184
    %v1977 = vunpack.c.h.b16 %v1184
    %v1978 = vunpack.c.l.b16 %v1185
    %v1979 = vunpack.c.h.b16 %v1185
    %v1980 = vunpack.c.l.b16 %v1186
    %v1981 = vunpack.c.h.b16 %v1186
    %v1982 = vunpack.c.l.b16 %v1187
    %v1983 = vunpack.c.h.b16 %v1187
    %v1984 = vunpack.c.l.b16 %v1188
    %v1985 = vunpack.c.h.b16 %v1188
    %v1986 = vunpack.c.l.b16 %v1189
    %v1987 = vunpack.c.h.b16 %v1189
    %v1988 = vunpack.c.l.b16 %v1190
    %v1989 = vunpack.c.h.b16 %v1190
    %v1990 = vunpack.c.l.b16 %v1191
    %v1991 = vunpack.c.h.b16 %v1191
    %v1992 = vunpack.c.l.b16 %v1192
    %v1993 = vunpack.c.h.b16 %v1192
    %v1994 = vunpack.c.l.b16 %v1193
    %v1995 = vunpack.c.h.b16 %v1193
    %v1996 = vunpack.c.l.b16 %v1194
    %v1997 = vunpack.c.h.b16 %v1194
    %v1998 = vunpack.c.l.b16 %v1195
    %v1999 = vunpack.c.h.b16 %v1195
    %v2000 = vunpack.c.l.b16 %v1196
    %v2001 = vunpack.c.h.b16 %v1196
    %v2002 = vunpack.c.l.b16 %v1197
    %v2003 = vunpack.c.h.b16 %v1197
    %v2004 = vunpack.c.l.b16 %v1198
    %v2005 = vunpack.c.h.b16 %v1198
    %v2006 = vunpack.c.l.b16 %v1199
    %v2007 = vunpack.c.h.b16 %v1199
    %v2008 = vunpack.c.l.b16 %v1200
    %v2009 = vunpack.c.h.b16 %v1200
    %v2010 = vunpack.c.l.b16 %v1201
    %v2011 = vunpack.c.h.b16 %v1201
    %v2012 = vpack.c.b16 %v1508, %v1500
    %v2013 = vpack.c.b16 %v1509, %v1501
    %v2014 = vpack.c.b16 %v1510, %v1502
    %v2015 = vpack.c.b16 %v1511, %v1503
    %v2016 = vpack.c.b16 %v1512, %v1504
    %v2017 = vpack.c.b16 %v1513, %v1505
    %v2018 = vpack.c.b16 %v1514, %v1506
    %v2019 = vpack.c.b16 %v1515, %v1507
    %v2020 = vpack.c.b16 %v1524, %v1516
    %v2021 = vpack.c.b16 %v1525, %v1517
    %v2022 = vpack.c.b16 %v1526, %v1518
    %v2023 = vpack.c.b16 %v1527, %v1519
    %v2024 = vpack.c.b16 %v1528, %v1520
    %v2025 = vpack.c.b16 %v1529, %v1521
    %v2026 = vpack.c.b16 %v1530, %v1522
    %v2027 = vpack.c.b16 %v1531, %v1523
    %v2028 = vpack.c.b16 %v1540, %v1532
    %v2029 = vpack.c.b16 %v1541, %v1533
    %v2030 = vpack.c.b16 %v1542, %v1534
    %v2031 = vpack.c.b16 %v1543, %v1535
    %v2032 = vpack.c.b16 %v1544, %v1536
    %v2033 = vpack.c.b16 %v1545, %v1537
    %v2034 = vpack.c.b16 %v1546, %v1538
    %v2035 = vpack.c.b16 %v1547, %v1539
    %v2036 = vpack.c.b16 %v1556, %v1548
    %v2037 = vpack.c.b16 %v1557, %v1549
    %v2038 = vpack.c.b16 %v1558, %v1550
    %v2039 = vpack.c.b16 %v1559, %v1551
    %v2040 = vpack.c.b16 %v1560, %v1552
    %v2041 = vpack.c.b16 %v1561, %v1553
    %v2042 = vpack.c.b16 %v1562, %v1554
    %v2043 = vpack.c.b16 %v1563, %v1555
    %v2044 = vpack.c.b16 %v1572, %v1564
    %v2045 = vpack.c.b16 %v1573, %v1565
    %v2046 = vpack.c.b16 %v1574, %v1566
    %v2047 = vpack.c.b16 %v1575, %v1567
    %v2048 = vpack.c.b16 %v1576, %v1568
    %v2049 = vpack.c.b16 %v1577, %v1569
    %v2050 = vpack.c.b16 %v1578, %v1570
    %v2051 = vpack.c.b16 %v1579, %v1571
    %v2052 = vpack.c.b16 %v1588, %v1580
    %v2053 = vpack.c.b16 %v1589, %v1581
    %v2054 = vpack.c.b16 %v1590, %v1582
    %v2055 = vpack.c.b16 %v1591, %v1583
    %v2056 = vpack.c.b16 %v1592, %v1584
    %v2057 = vpack.c.b16 %v1593, %v1585
    %v2058 = vpack.c.b16 %v1594, %v1586
    %v2059 = vpack.c.b16 %v1595, %v1587
    %v2060 = vpack.c.b16 %v1604, %v1596
    %v2061 = vpack.c.b16 %v1605, %v1597
    %v2062 = vpack.c.b16 %v1606, %v1598
    %v2063 = vpack.c.b16 %v1607, %v1599
    %v2064 = vpack.c.b16 %v1608, %v1600
    %v2065 = vpack.c.b16 %v1609, %v1601
    %v2066 = vpack.c.b16 %v1610, %v1602
    %v2067 = vpack.c.b16 %v1611, %v1603
    %v2068 = vpack.c.b16 %v1620, %v1612
    %v2069 = vpack.c.b16 %v1621, %v1613
    %v2070 = vpack.c.b16 %v1622, %v1614
    %v2071 = vpack.c.b16 %v1623, %v1615
    %v2072 = vpack.c.b16 %v1624, %v1616
    %v2073 = vpack.c.b16 %v1625, %v1617
    %v2074 = vpack.c.b16 %v1626, %v1618
    %v2075 = vpack.c.b16 %v1627, %v1619
    %v2076 = vpack.c.b16 %v1636, %v1628
    %v2077 = vpack.c.b16 %v1637, %v1629
    %v2078 = vpack.c.b16 %v1638, %v1630
    %v2079 = vpack.c.b16 %v1639, %v1631
    %v2080 = vpack.c.b16 %v1640, %v1632
    %v2081 = vpack.c.b16 %v1641, %v1633
    %v2082 = vpack.c.b16 %v1642, %v1634
    %v2083 = vpack.c.b16 %v1643, %v1635
    %v2084 = vpack.c.b16 %v1652, %v1644
    %v2085 = vpack.c.b16 %v1653, %v1645
    %v2086 = vpack.c.b16 %v1654, %v1646
    %v2087 = vpack.c.b16 %v1655, %v1647
    %v2088 = vpack.c.b16 %v1656, %v1648
    %v2089 = vpack.c.b16 %v1657, %v1649
    %v2090 = vpack.c.b16 %v1658, %v1650
    %v2091 = vpack.c.b16 %v1659, %v1651
    %v2092 = vpack.c.b16 %v1668, %v1660
    %v2093 = vpack.c.b16 %v1669, %v1661
    %v2094 = vpack.c.b16 %v1670, %v1662
    %v2095 = vpack.c.b16 %v1671, %v1663
    %v2096 = vpack.c.b16 %v1672, %v1664
    %v2097 = vpack.c.b16 %v1673, %v1665
    %v2098 = vpack.c.b16 %v1674, %v1666
    %v2099 = vpack.c.b16 %v1675, %v1667
    %v2100 = vpack.c.b16 %v1684, %v1676
    %v2101 = vpack.c.b16 %v1685, %v1677
    %v2102 = vpack.c.b16 %v1686, %v1678
    %v2103 = vpack.c.b16 %v1687, %v1679
    %v2104 = vpack.c.b16 %v1688, %v1680
    %v2105 = vpack.c.b16 %v1689, %v1681
    %v2106 = vpack.c.b16 %v1690, %v1682
    %v2107 = vpack.c.b16 %v1691, %v1683
    %v2108 = vpack.c.b16 %v1700, %v1692
    %v2109 = vpack.c.b16 %v1701, %v1693
    %v2110 = vpack.c.b16 %v1702, %v1694
    %v2111 = vpack.c.b16 %v1703, %v1695
    %v2112 = vpack.c.b16 %v1704, %v1696
    %v2113 = vpack.c.b16 %v1705, %v1697
    %v2114 = vpack.c.b16 %v1706, %v1698
    %v2115 = vpack.c.b16 %v1707, %v1699
    %v2116 = vpack.c.b16 %v1716, %v1708
    %v2117 = vpack.c.b16 %v1717, %v1709
    %v2118 = vpack.c.b16 %v1718, %v1710
    %v2119 = vpack.c.b16 %v1719, %v1711
    %v2120 = vpack.c.b16 %v1720, %v1712
    %v2121 = vpack.c.b16 %v1721, %v1713
    %v2122 = vpack.c.b16 %v1722, %v1714
    %v2123 = vpack.c.b16 %v1723, %v1715
    %v2124 = vpack.c.b16 %v1732, %v1724
    %v2125 = vpack.c.b16 %v1733, %v1725
    %v2126 = vpack.c.b16 %v1734, %v1726
    %v2127 = vpack.c.b16 %v1735, %v1727
    %v2128 = vpack.c.b16 %v1736, %v1728
    %v2129 = vpack.c.b16 %v1737, %v1729
    %v2130 = vpack.c.b16 %v1738, %v1730
    %v2131 = vpack.c.b16 %v1739, %v1731
    %v2132 = vpack.c.b16 %v1748, %v1740
    %v2133 = vpack.c.b16 %v1749, %v1741
    %v2134 = vpack.c.b16 %v1750, %v1742
    %v2135 = vpack.c.b16 %v1751, %v1743
    %v2136 = vpack.c.b16 %v1752, %v1744
    %v2137 = vpack.c.b16 %v1753, %v1745
    %v2138 = vpack.c.b16 %v1754, %v1746
    %v2139 = vpack.c.b16 %v1755, %v1747
    %v2140 = vpack.c.b16 %v1764, %v1756
    %v2141 = vpack.c.b16 %v1765, %v1757
    %v2142 = vpack.c.b16 %v1766, %v1758
    %v2143 = vpack.c.b16 %v1767, %v1759
    %v2144 = vpack.c.b16 %v1768, %v1760
    %v2145 = vpack.c.b16 %v1769, %v1761
    %v2146 = vpack.c.b16 %v1770, %v1762
    %v2147 = vpack.c.b16 %v1771, %v1763
    %v2148 = vpack.c.b16 %v1780, %v1772
    %v2149 = vpack.c.b16 %v1781, %v1773
    %v2150 = vpack.c.b16 %v1782, %v1774
    %v2151 = vpack.c.b16 %v1783, %v1775
    %v2152 = vpack.c.b16 %v1784, %v1776
    %v2153 = vpack.c.b16 %v1785, %v1777
    %v2154 = vpack.c.b16 %v1786, %v1778
    %v2155 = vpack.c.b16 %v1787, %v1779
    %v2156 = vpack.c.b16 %v1796, %v1788
    %v2157 = vpack.c.b16 %v1797, %v1789
    %v2158 = vpack.c.b16 %v1798, %v1790
    %v2159 = vpack.c.b16 %v1799, %v1791
    %v2160 = vpack.c.b16 %v1800, %v1792
    %v2161 = vpack.c.b16 %v1801, %v1793
    %v2162 = vpack.c.b16 %v1802, %v1794
    %v2163 = vpack.c.b16 %v1803, %v1795
    %v2164 = vpack.c.b16 %v1812, %v1804
    %v2165 = vpack.c.b16 %v1813, %v1805
    %v2166 = vpack.c.b16 %v1814, %v1806
    %v2167 = vpack.c.b16 %v1815, %v1807
    %v2168 = vpack.c.b16 %v1816, %v1808
    %v2169 = vpack.c.b16 %v1817, %v1809
    %v2170 = vpack.c.b16 %v1818, %v1810
    %v2171 = vpack.c.b16 %v1819, %v1811
    %v2172 = vpack.c.b16 %v1828, %v1820
    %v2173 = vpack.c.b16 %v1829, %v1821
    %v2174 = vpack.c.b16 %v1830, %v1822
    %v2175 = vpack.c.b16 %v1831, %v1823
    %v2176 = vpack.c.b16 %v1832, %v1824
    %v2177 = vpack.c.b16 %v1833, %v1825
    %v2178 = vpack.c.b16 %v1834, %v1826
    %v2179 = vpack.c.b16 %v1835, %v1827
    %v2180 = vpack.c.b16 %v1844, %v1836
    %v2181 = vpack.c.b16 %v1845, %v1837
    %v2182 = vpack.c.b16 %v1846, %v1838
    %v2183 = vpack.c.b16 %v1847, %v1839
    %v2184 = vpack.c.b16 %v1848, %v1840
    %v2185 = vpack.c.b16 %v1849, %v1841
    %v2186 = vpack.c.b16 %v1850, %v1842
    %v2187 = vpack.c.b16 %v1851, %v1843
    %v2188 = vpack.c.b16 %v1860, %v1852
    %v2189 = vpack.c.b16 %v1861, %v1853
    %v2190 = vpack.c.b16 %v1862, %v1854
    %v2191 = vpack.c.b16 %v1863, %v1855
    %v2192 = vpack.c.b16 %v1864, %v1856
    %v2193 = vpack.c.b16 %v1865, %v1857
    %v2194 = vpack.c.b16 %v1866, %v1858
    %v2195 = vpack.c.b16 %v1867, %v1859
    %v2196 = vpack.c.b16 %v1876, %v1868
    %v2197 = vpack.c.b16 %v1877, %v1869
    %v2198 = vpack.c.b16 %v1878, %v1870
    %v2199 = vpack.c.b16 %v1879, %v1871
    %v2200 = vpack.c.b16 %v1880, %v1872
    %v2201 = vpack.c.b16 %v1881, %v1873
    %v2202 = vpack.c.b16 %v1882, %v1874
    %v2203 = vpack.c.b16 %v1883, %v1875
    %v2204 = vpack.c.b16 %v1892, %v1884
    %v2205 = vpack.c.b16 %v1893, %v1885
    %v2206 = vpack.c.b16 %v1894, %v1886
    %v2207 = vpack.c.b16 %v1895, %v1887
    %v2208 = vpack.c.b16 %v1896, %v1888
    %v2209 = vpack.c.b16 %v1897, %v1889
    %v2210 = vpack.c.b16 %v1898, %v1890
    %v2211 = vpack.c.b16 %v1899, %v1891
    %v2212 = vpack.c.b16 %v1908, %v1900
    %v2213 = vpack.c.b16 %v1909, %v1901
    %v2214 = vpack.c.b16 %v1910, %v1902
    %v2215 = vpack.c.b16 %v1911, %v1903
    %v2216 = vpack.c.b16 %v1912, %v1904
    %v2217 = vpack.c.b16 %v1913, %v1905
    %v2218 = vpack.c.b16 %v1914, %v1906
    %v2219 = vpack.c.b16 %v1915, %v1907
    %v2220 = vpack.c.b16 %v1924, %v1916
    %v2221 = vpack.c.b16 %v1925, %v1917
    %v2222 = vpack.c.b16 %v1926, %v1918
    %v2223 = vpack.c.b16 %v1927, %v1919
    %v2224 = vpack.c.b16 %v1928, %v1920
    %v2225 = vpack.c.b16 %v1929, %v1921
    %v2226 = vpack.c.b16 %v1930, %v1922
    %v2227 = vpack.c.b16 %v1931, %v1923
    %v2228 = vpack.c.b16 %v1940, %v1932
    %v2229 = vpack.c.b16 %v1941, %v1933
    %v2230 = vpack.c.b16 %v1942, %v1934
    %v2231 = vpack.c.b16 %v1943, %v1935
    %v2232 = vpack.c.b16 %v1944, %v1936
    %v2233 = vpack.c.b16 %v1945, %v1937
    %v2234 = vpack.c.b16 %v1946, %v1938
    %v2235 = vpack.c.b16 %v1947, %v1939
    %v2236 = vpack.c.b16 %v1956, %v1948
    %v2237 = vpack.c.b16 %v1957, %v1949
    %v2238 = vpack.c.b16 %v1958, %v1950
    %v2239 = vpack.c.b16 %v1959, %v1951
    %v2240 = vpack.c.b16 %v1960, %v1952
    %v2241 = vpack.c.b16 %v1961, %v1953
    %v2242 = vpack.c.b16 %v1962, %v1954
    %v2243 = vpack.c.b16 %v1963, %v1955
    %v2244 = vpack.c.b16 %v1972, %v1964
    %v2245 = vpack.c.b16 %v1973, %v1965
    %v2246 = vpack.c.b16 %v1974, %v1966
    %v2247 = vpack.c.b16 %v1975, %v1967
    %v2248 = vpack.c.b16 %v1976, %v1968
    %v2249 = vpack.c.b16 %v1977, %v1969
    %v2250 = vpack.c.b16 %v1978, %v1970
    %v2251 = vpack.c.b16 %v1979, %v1971
    %v2252 = vpack.c.b16 %v1988, %v1980
    %v2253 = vpack.c.b16 %v1989, %v1981
    %v2254 = vpack.c.b16 %v1990, %v1982
    %v2255 = vpack.c.b16 %v1991, %v1983
    %v2256 = vpack.c.b16 %v1992, %v1984
    %v2257 = vpack.c.b16 %v1993, %v1985
    %v2258 = vpack.c.b16 %v1994, %v1986
    %v2259 = vpack.c.b16 %v1995, %v1987
    %v2260 = vpack.c.b16 %v2004, %v1996
    %v2261 = vpack.c.b16 %v2005, %v1997
    %v2262 = vpack.c.b16 %v2006, %v1998
    %v2263 = vpack.c.b16 %v2007, %v1999
    %v2264 = vpack.c.b16 %v2008, %v2000
    %v2265 = vpack.c.b16 %v2009, %v2001
    %v2266 = vpack.c.b16 %v2010, %v2002
    %v2267 = vpack.c.b16 %v2011, %v2003
    %2524 = vmatprep.subr.bf16.mxu0 %v2069
    %2525 = vmatpush1.bf16.msra.mxu0 %v2068
    %2526 = vmatprep.subr.bf16.mxu0 %v2061
    %2527 = vmatpush1.bf16.msra.mxu0 %v2060
    %2528 = vmatprep.subr.bf16.mxu0 %v2053
    %2529 = vmatpush1.bf16.msra.mxu0 %v2052
    %2530 = vmatprep.subr.bf16.mxu0 %v2045
    %2531 = vmatpush1.bf16.msra.mxu0 %v2044
    %2532 = vmatprep.subr.bf16.mxu0 %v2037
    %2533 = vmatpush1.bf16.msra.mxu0 %v2036
    %2534 = vmatprep.subr.bf16.mxu0 %v2029
    %2535 = vmatpush1.bf16.msra.mxu0 %v2028
    %2536 = vmatprep.subr.bf16.mxu0 %v2021
    %2537 = vmatpush1.bf16.msra.mxu0 %v2020
    %2538 = vmatprep.subr.bf16.mxu0 %v2013
    %2539 = vmatpush1.bf16.msra.mxu0 %v2012
    %2540 = vmatprep.subr.bf16.mxu0 %v2133
    %2541 = vmatpush2.bf16.msra.mxu0 %v2132
    %2542 = vmatprep.subr.bf16.mxu0 %v2125
    %2543 = vmatpush2.bf16.msra.mxu0 %v2124
    %2544 = vmatprep.subr.bf16.mxu0 %v2117
    %2545 = vmatpush2.bf16.msra.mxu0 %v2116
    %2546 = vmatprep.subr.bf16.mxu0 %v2109
    %2547 = vmatpush2.bf16.msra.mxu0 %v2108
    %2548 = vmatprep.subr.bf16.mxu0 %v2101
    %2549 = vmatpush2.bf16.msra.mxu0 %v2100
    %2550 = vmatprep.subr.bf16.mxu0 %v2093
    %2551 = vmatpush2.bf16.msra.mxu0 %v2092
    %2552 = vmatprep.subr.bf16.mxu0 %v2085
    %2553 = vmatpush2.bf16.msra.mxu0 %v2084
    %2554 = vmatprep.subr.bf16.mxu0 %v2077
    %2555 = vmatpush2.bf16.msra.mxu0 %v2076
    %2556 = vmatprep.mubr.bf16.mxu0 %v943
    %2557 = vmatmul.mubr.bf16.gmra.mxu0 %v942
    %v2558 = vpop.f32.mrf.mxu0
    %v2559 = vadd.f32 %v1207, %v2558
    %v2560 = vpop.f32.mrf.mxu0
    %v2561 = vadd.f32 %v1211, %v2560
    %v2562 = vpop.f32.mrf.mxu0
    %v2563 = vpop.f32.mrf.mxu0
    %2564 = vdwg.mxu0
    %2565 = vmatprep.subr.bf16.mxu0 %v2197
    %2566 = vmatpush1.bf16.msra.mxu0 %v2196
    %2567 = vmatprep.subr.bf16.mxu0 %v2189
    %2568 = vmatpush1.bf16.msra.mxu0 %v2188
    %2569 = vmatprep.subr.bf16.mxu0 %v2181
    %2570 = vmatpush1.bf16.msra.mxu0 %v2180
    %2571 = vmatprep.subr.bf16.mxu0 %v2173
    %2572 = vmatpush1.bf16.msra.mxu0 %v2172
    %2573 = vmatprep.subr.bf16.mxu0 %v2165
    %2574 = vmatpush1.bf16.msra.mxu0 %v2164
    %2575 = vmatprep.subr.bf16.mxu0 %v2157
    %2576 = vmatpush1.bf16.msra.mxu0 %v2156
    %2577 = vmatprep.subr.bf16.mxu0 %v2149
    %2578 = vmatpush1.bf16.msra.mxu0 %v2148
    %2579 = vmatprep.subr.bf16.mxu0 %v2141
    %2580 = vmatpush1.bf16.msra.mxu0 %v2140
    %2581 = vmatprep.subr.bf16.mxu0 %v2261
    %2582 = vmatpush2.bf16.msra.mxu0 %v2260
    %2583 = vmatprep.subr.bf16.mxu0 %v2253
    %2584 = vmatpush2.bf16.msra.mxu0 %v2252
    %2585 = vmatprep.subr.bf16.mxu0 %v2245
    %2586 = vmatpush2.bf16.msra.mxu0 %v2244
    %2587 = vmatprep.subr.bf16.mxu0 %v2237
    %2588 = vmatpush2.bf16.msra.mxu0 %v2236
    %2589 = vmatprep.subr.bf16.mxu0 %v2229
    %2590 = vmatpush2.bf16.msra.mxu0 %v2228
    %2591 = vmatprep.subr.bf16.mxu0 %v2221
    %2592 = vmatpush2.bf16.msra.mxu0 %v2220
    %2593 = vmatprep.subr.bf16.mxu0 %v2213
    %2594 = vmatpush2.bf16.msra.mxu0 %v2212
    %2595 = vmatprep.subr.bf16.mxu0 %v2205
    %2596 = vmatpush2.bf16.msra.mxu0 %v2204
    %2597 = vmatprep.mubr.bf16.mxu0 %v945
    %2598 = vmatmul.mubr.bf16.gmra.mxu0 %v944
    %v2599 = vpop.f32.mrf.mxu0
    %v2600 = vadd.f32 %v2559, %v2599
    %v2601 = vpop.f32.mrf.mxu0
    %v2602 = vadd.f32 %v2561, %v2601
    %v2603 = vpop.f32.mrf.mxu0
    %v2604 = vpop.f32.mrf.mxu0
    %2605 = vdwg.mxu0
    %2606 = vmatprep.subr.bf16.mxu0 %v2071
    %2607 = vmatpush1.bf16.msra.mxu0 %v2070
    %2608 = vmatprep.subr.bf16.mxu0 %v2063
    %2609 = vmatpush1.bf16.msra.mxu0 %v2062
    %2610 = vmatprep.subr.bf16.mxu0 %v2055
    %2611 = vmatpush1.bf16.msra.mxu0 %v2054
    %2612 = vmatprep.subr.bf16.mxu0 %v2047
    %2613 = vmatpush1.bf16.msra.mxu0 %v2046
    %2614 = vmatprep.subr.bf16.mxu0 %v2039
    %2615 = vmatpush1.bf16.msra.mxu0 %v2038
    %2616 = vmatprep.subr.bf16.mxu0 %v2031
    %2617 = vmatpush1.bf16.msra.mxu0 %v2030
    %2618 = vmatprep.subr.bf16.mxu0 %v2023
    %2619 = vmatpush1.bf16.msra.mxu0 %v2022
    %2620 = vmatprep.subr.bf16.mxu0 %v2015
    %2621 = vmatpush1.bf16.msra.mxu0 %v2014
    %2622 = vmatprep.subr.bf16.mxu0 %v2135
    %2623 = vmatpush2.bf16.msra.mxu0 %v2134
    %2624 = vmatprep.subr.bf16.mxu0 %v2127
    %2625 = vmatpush2.bf16.msra.mxu0 %v2126
    %2626 = vmatprep.subr.bf16.mxu0 %v2119
    %2627 = vmatpush2.bf16.msra.mxu0 %v2118
    %2628 = vmatprep.subr.bf16.mxu0 %v2111
    %2629 = vmatpush2.bf16.msra.mxu0 %v2110
    %2630 = vmatprep.subr.bf16.mxu0 %v2103
    %2631 = vmatpush2.bf16.msra.mxu0 %v2102
    %2632 = vmatprep.subr.bf16.mxu0 %v2095
    %2633 = vmatpush2.bf16.msra.mxu0 %v2094
    %2634 = vmatprep.subr.bf16.mxu0 %v2087
    %2635 = vmatpush2.bf16.msra.mxu0 %v2086
    %2636 = vmatprep.subr.bf16.mxu0 %v2079
    %2637 = vmatpush2.bf16.msra.mxu0 %v2078
    %2638 = vmatprep.mubr.bf16.mxu0 %v943
    %2639 = vmatmul.mubr.bf16.gmra.mxu0 %v942
    %v2640 = vpop.f32.mrf.mxu0
    %v2641 = vadd.f32 %v1215, %v2640
    %v2642 = vpop.f32.mrf.mxu0
    %v2643 = vadd.f32 %v1219, %v2642
    %v2644 = vpop.f32.mrf.mxu0
    %v2645 = vpop.f32.mrf.mxu0
    %2646 = vdwg.mxu0
    %2647 = vmatprep.subr.bf16.mxu0 %v2199
    %2648 = vmatpush1.bf16.msra.mxu0 %v2198
    %2649 = vmatprep.subr.bf16.mxu0 %v2191
    %2650 = vmatpush1.bf16.msra.mxu0 %v2190
    %2651 = vmatprep.subr.bf16.mxu0 %v2183
    %2652 = vmatpush1.bf16.msra.mxu0 %v2182
    %2653 = vmatprep.subr.bf16.mxu0 %v2175
    %2654 = vmatpush1.bf16.msra.mxu0 %v2174
    %2655 = vmatprep.subr.bf16.mxu0 %v2167
    %2656 = vmatpush1.bf16.msra.mxu0 %v2166
    %2657 = vmatprep.subr.bf16.mxu0 %v2159
    %2658 = vmatpush1.bf16.msra.mxu0 %v2158
    %2659 = vmatprep.subr.bf16.mxu0 %v2151
    %2660 = vmatpush1.bf16.msra.mxu0 %v2150
    %2661 = vmatprep.subr.bf16.mxu0 %v2143
    %2662 = vmatpush1.bf16.msra.mxu0 %v2142
    %2663 = vmatprep.subr.bf16.mxu0 %v2263
    %2664 = vmatpush2.bf16.msra.mxu0 %v2262
    %2665 = vmatprep.subr.bf16.mxu0 %v2255
    %2666 = vmatpush2.bf16.msra.mxu0 %v2254
    %2667 = vmatprep.subr.bf16.mxu0 %v2247
    %2668 = vmatpush2.bf16.msra.mxu0 %v2246
    %2669 = vmatprep.subr.bf16.mxu0 %v2239
    %2670 = vmatpush2.bf16.msra.mxu0 %v2238
    %2671 = vmatprep.subr.bf16.mxu0 %v2231
    %2672 = vmatpush2.bf16.msra.mxu0 %v2230
    %2673 = vmatprep.subr.bf16.mxu0 %v2223
    %2674 = vmatpush2.bf16.msra.mxu0 %v2222
    %2675 = vmatprep.subr.bf16.mxu0 %v2215
    %2676 = vmatpush2.bf16.msra.mxu0 %v2214
    %2677 = vmatprep.subr.bf16.mxu0 %v2207
    %2678 = vmatpush2.bf16.msra.mxu0 %v2206
    %2679 = vmatprep.mubr.bf16.mxu0 %v945
    %2680 = vmatmul.mubr.bf16.gmra.mxu0 %v944
    %v2681 = vpop.f32.mrf.mxu0
    %v2682 = vadd.f32 %v2641, %v2681
    %v2683 = vpop.f32.mrf.mxu0
    %v2684 = vadd.f32 %v2643, %v2683
    %v2685 = vpop.f32.mrf.mxu0
    %v2686 = vpop.f32.mrf.mxu0
    %2687 = vdwg.mxu0
    %2688 = vmatprep.subr.bf16.mxu0 %v2073
    %2689 = vmatpush1.bf16.msra.mxu0 %v2072
    %2690 = vmatprep.subr.bf16.mxu0 %v2065
    %2691 = vmatpush1.bf16.msra.mxu0 %v2064
    %2692 = vmatprep.subr.bf16.mxu0 %v2057
    %2693 = vmatpush1.bf16.msra.mxu0 %v2056
    %2694 = vmatprep.subr.bf16.mxu0 %v2049
    %2695 = vmatpush1.bf16.msra.mxu0 %v2048
    %2696 = vmatprep.subr.bf16.mxu0 %v2041
    %2697 = vmatpush1.bf16.msra.mxu0 %v2040
    %2698 = vmatprep.subr.bf16.mxu0 %v2033
    %2699 = vmatpush1.bf16.msra.mxu0 %v2032
    %2700 = vmatprep.subr.bf16.mxu0 %v2025
    %2701 = vmatpush1.bf16.msra.mxu0 %v2024
    %2702 = vmatprep.subr.bf16.mxu0 %v2017
    %2703 = vmatpush1.bf16.msra.mxu0 %v2016
    %2704 = vmatprep.subr.bf16.mxu0 %v2137
    %2705 = vmatpush2.bf16.msra.mxu0 %v2136
    %2706 = vmatprep.subr.bf16.mxu0 %v2129
    %2707 = vmatpush2.bf16.msra.mxu0 %v2128
    %2708 = vmatprep.subr.bf16.mxu0 %v2121
    %2709 = vmatpush2.bf16.msra.mxu0 %v2120
    %2710 = vmatprep.subr.bf16.mxu0 %v2113
    %2711 = vmatpush2.bf16.msra.mxu0 %v2112
    %2712 = vmatprep.subr.bf16.mxu0 %v2105
    %2713 = vmatpush2.bf16.msra.mxu0 %v2104
    %2714 = vmatprep.subr.bf16.mxu0 %v2097
    %2715 = vmatpush2.bf16.msra.mxu0 %v2096
    %2716 = vmatprep.subr.bf16.mxu0 %v2089
    %2717 = vmatpush2.bf16.msra.mxu0 %v2088
    %2718 = vmatprep.subr.bf16.mxu0 %v2081
    %2719 = vmatpush2.bf16.msra.mxu0 %v2080
    %2720 = vmatprep.mubr.bf16.mxu0 %v943
    %2721 = vmatmul.mubr.bf16.gmra.mxu0 %v942
    %v2722 = vpop.f32.mrf.mxu0
    %v2723 = vadd.f32 %v1223, %v2722
    %v2724 = vpop.f32.mrf.mxu0
    %v2725 = vadd.f32 %v1227, %v2724
    %v2726 = vpop.f32.mrf.mxu0
    %v2727 = vpop.f32.mrf.mxu0
    %2728 = vdwg.mxu0
    %2729 = vmatprep.subr.bf16.mxu0 %v2201
    %2730 = vmatpush1.bf16.msra.mxu0 %v2200
    %2731 = vmatprep.subr.bf16.mxu0 %v2193
    %2732 = vmatpush1.bf16.msra.mxu0 %v2192
    %2733 = vmatprep.subr.bf16.mxu0 %v2185
    %2734 = vmatpush1.bf16.msra.mxu0 %v2184
    %2735 = vmatprep.subr.bf16.mxu0 %v2177
    %2736 = vmatpush1.bf16.msra.mxu0 %v2176
    %2737 = vmatprep.subr.bf16.mxu0 %v2169
    %2738 = vmatpush1.bf16.msra.mxu0 %v2168
    %2739 = vmatprep.subr.bf16.mxu0 %v2161
    %2740 = vmatpush1.bf16.msra.mxu0 %v2160
    %2741 = vmatprep.subr.bf16.mxu0 %v2153
    %2742 = vmatpush1.bf16.msra.mxu0 %v2152
    %2743 = vmatprep.subr.bf16.mxu0 %v2145
    %2744 = vmatpush1.bf16.msra.mxu0 %v2144
    %2745 = vmatprep.subr.bf16.mxu0 %v2265
    %2746 = vmatpush2.bf16.msra.mxu0 %v2264
    %2747 = vmatprep.subr.bf16.mxu0 %v2257
    %2748 = vmatpush2.bf16.msra.mxu0 %v2256
    %2749 = vmatprep.subr.bf16.mxu0 %v2249
    %2750 = vmatpush2.bf16.msra.mxu0 %v2248
    %2751 = vmatprep.subr.bf16.mxu0 %v2241
    %2752 = vmatpush2.bf16.msra.mxu0 %v2240
    %2753 = vmatprep.subr.bf16.mxu0 %v2233
    %2754 = vmatpush2.bf16.msra.mxu0 %v2232
    %2755 = vmatprep.subr.bf16.mxu0 %v2225
    %2756 = vmatpush2.bf16.msra.mxu0 %v2224
    %2757 = vmatprep.subr.bf16.mxu0 %v2217
    %2758 = vmatpush2.bf16.msra.mxu0 %v2216
    %2759 = vmatprep.subr.bf16.mxu0 %v2209
    %2760 = vmatpush2.bf16.msra.mxu0 %v2208
    %2761 = vmatprep.mubr.bf16.mxu0 %v945
    %2762 = vmatmul.mubr.bf16.gmra.mxu0 %v944
    %v2763 = vpop.f32.mrf.mxu0
    %v2764 = vadd.f32 %v2723, %v2763
    %v2765 = vpop.f32.mrf.mxu0
    %v2766 = vadd.f32 %v2725, %v2765
    %v2767 = vpop.f32.mrf.mxu0
    %v2768 = vpop.f32.mrf.mxu0
    %2769 = vdwg.mxu0
    %2770 = vmatprep.subr.bf16.mxu0 %v2075
    %2771 = vmatpush1.bf16.msra.mxu0 %v2074
    %2772 = vmatprep.subr.bf16.mxu0 %v2067
    %2773 = vmatpush1.bf16.msra.mxu0 %v2066
    %2774 = vmatprep.subr.bf16.mxu0 %v2059
    %2775 = vmatpush1.bf16.msra.mxu0 %v2058
    %2776 = vmatprep.subr.bf16.mxu0 %v2051
    %2777 = vmatpush1.bf16.msra.mxu0 %v2050
    %2778 = vmatprep.subr.bf16.mxu0 %v2043
    %2779 = vmatpush1.bf16.msra.mxu0 %v2042
    %2780 = vmatprep.subr.bf16.mxu0 %v2035
    %2781 = vmatpush1.bf16.msra.mxu0 %v2034
    %2782 = vmatprep.subr.bf16.mxu0 %v2027
    %2783 = vmatpush1.bf16.msra.mxu0 %v2026
    %2784 = vmatprep.subr.bf16.mxu0 %v2019
    %2785 = vmatpush1.bf16.msra.mxu0 %v2018
    %2786 = vmatprep.subr.bf16.mxu0 %v2139
    %2787 = vmatpush2.bf16.msra.mxu0 %v2138
    %2788 = vmatprep.subr.bf16.mxu0 %v2131
    %2789 = vmatpush2.bf16.msra.mxu0 %v2130
    %2790 = vmatprep.subr.bf16.mxu0 %v2123
    %2791 = vmatpush2.bf16.msra.mxu0 %v2122
    %2792 = vmatprep.subr.bf16.mxu0 %v2115
    %2793 = vmatpush2.bf16.msra.mxu0 %v2114
    %2794 = vmatprep.subr.bf16.mxu0 %v2107
    %2795 = vmatpush2.bf16.msra.mxu0 %v2106
    %2796 = vmatprep.subr.bf16.mxu0 %v2099
    %2797 = vmatpush2.bf16.msra.mxu0 %v2098
    %2798 = vmatprep.subr.bf16.mxu0 %v2091
    %2799 = vmatpush2.bf16.msra.mxu0 %v2090
    %2800 = vmatprep.subr.bf16.mxu0 %v2083
    %2801 = vmatpush2.bf16.msra.mxu0 %v2082
    %2802 = vmatprep.mubr.bf16.mxu0 %v943
    %2803 = vmatmul.mubr.bf16.gmra.mxu0 %v942
    %v2804 = vpop.f32.mrf.mxu0
    %v2805 = vadd.f32 %v1231, %v2804
    %v2806 = vpop.f32.mrf.mxu0
    %v2807 = vadd.f32 %v1235, %v2806
    %v2808 = vpop.f32.mrf.mxu0
    %v2809 = vpop.f32.mrf.mxu0
    %2810 = vdwg.mxu0
    %2811 = vmatprep.subr.bf16.mxu0 %v2203
    %2812 = vmatpush1.bf16.msra.mxu0 %v2202
    %2813 = vmatprep.subr.bf16.mxu0 %v2195
    %2814 = vmatpush1.bf16.msra.mxu0 %v2194
    %2815 = vmatprep.subr.bf16.mxu0 %v2187
    %2816 = vmatpush1.bf16.msra.mxu0 %v2186
    %2817 = vmatprep.subr.bf16.mxu0 %v2179
    %2818 = vmatpush1.bf16.msra.mxu0 %v2178
    %2819 = vmatprep.subr.bf16.mxu0 %v2171
    %2820 = vmatpush1.bf16.msra.mxu0 %v2170
    %2821 = vmatprep.subr.bf16.mxu0 %v2163
    %2822 = vmatpush1.bf16.msra.mxu0 %v2162
    %2823 = vmatprep.subr.bf16.mxu0 %v2155
    %2824 = vmatpush1.bf16.msra.mxu0 %v2154
    %2825 = vmatprep.subr.bf16.mxu0 %v2147
    %2826 = vmatpush1.bf16.msra.mxu0 %v2146
    %2827 = vmatprep.subr.bf16.mxu0 %v2267
    %2828 = vmatpush2.bf16.msra.mxu0 %v2266
    %2829 = vmatprep.subr.bf16.mxu0 %v2259
    %2830 = vmatpush2.bf16.msra.mxu0 %v2258
    %2831 = vmatprep.subr.bf16.mxu0 %v2251
    %2832 = vmatpush2.bf16.msra.mxu0 %v2250
    %2833 = vmatprep.subr.bf16.mxu0 %v2243
    %2834 = vmatpush2.bf16.msra.mxu0 %v2242
    %2835 = vmatprep.subr.bf16.mxu0 %v2235
    %2836 = vmatpush2.bf16.msra.mxu0 %v2234
    %2837 = vmatprep.subr.bf16.mxu0 %v2227
    %2838 = vmatpush2.bf16.msra.mxu0 %v2226
    %2839 = vmatprep.subr.bf16.mxu0 %v2219
    %2840 = vmatpush2.bf16.msra.mxu0 %v2218
    %2841 = vmatprep.subr.bf16.mxu0 %v2211
    %2842 = vmatpush2.bf16.msra.mxu0 %v2210
    %2843 = vmatprep.mubr.bf16.mxu0 %v945
    %2844 = vmatmul.mubr.bf16.gmra.mxu0 %v944
    %v2845 = vpop.f32.mrf.mxu0
    %v2846 = vadd.f32 %v2805, %v2845
    %v2847 = vpop.f32.mrf.mxu0
    %v2848 = vadd.f32 %v2807, %v2847
    %v2849 = vpop.f32.mrf.mxu0
    %v2850 = vpop.f32.mrf.mxu0
    %2851 = vdwg.mxu0
    %v2852 = vmax.f32 %v2600, 0.0
    %v2853 = vmax.f32 %v2602, 0.0
    %v2854 = vmax.f32 %v2682, 0.0
    %v2855 = vmax.f32 %v2684, 0.0
    %v2856 = vmax.f32 %v2764, 0.0
    %v2857 = vmax.f32 %v2766, 0.0
    %v2858 = vmax.f32 %v2846, 0.0
    %v2859 = vmax.f32 %v2848, 0.0
    %v2860 = vpack.c.bf16 %v2852, %v2852
    %v2861 = vpack.c.bf16 %v2853, %v2853
    %v2862 = vpack.c.bf16 %v2854, %v2854
    %v2863 = vpack.c.bf16 %v2855, %v2855
    %v2864 = vpack.c.bf16 %v2856, %v2856
    %v2865 = vpack.c.bf16 %v2857, %v2857
    %v2866 = vpack.c.bf16 %v2858, %v2858
    %v2867 = vpack.c.bf16 %v2859, %v2859
    %v2868 = vld [vmem:[#allocation17] sm:$0xff]
    %v2869 = vld [vmem:[#allocation17 + $0x8] sm:$0xff]
    %v2870 = vld [vmem:[#allocation17 + $0x10] sm:$0xff]
    %v2871 = vld [vmem:[#allocation17 + $0x18] sm:$0xff]
    %v2872 = vld [vmem:[#allocation17 + $0x20] sm:$0xff]
    %v2873 = vld [vmem:[#allocation17 + $0x28] sm:$0xff]
    %v2874 = vld [vmem:[#allocation17 + $0x30] sm:$0xff]
    %v2875 = vld [vmem:[#allocation17 + $0x38] sm:$0xff]
    %v2876 = vld [vmem:[#allocation17 + $0x40] sm:$0xff]
    %v2877 = vld [vmem:[#allocation17 + $0x48] sm:$0xff]
    %v2878 = vld [vmem:[#allocation17 + $0x50] sm:$0xff]
    %v2879 = vld [vmem:[#allocation17 + $0x58] sm:$0xff]
    %v2880 = vld [vmem:[#allocation17 + $0x60] sm:$0xff]
    %v2881 = vld [vmem:[#allocation17 + $0x68] sm:$0xff]
    %v2882 = vld [vmem:[#allocation17 + $0x70] sm:$0xff]
    %v2883 = vld [vmem:[#allocation17 + $0x78] sm:$0xff]
    %v2884 = vld [vmem:[#allocation17 + $0x80] sm:$0xff]
    %v2885 = vld [vmem:[#allocation17 + $0x88] sm:$0xff]
    %v2886 = vld [vmem:[#allocation17 + $0x90] sm:$0xff]
    %v2887 = vld [vmem:[#allocation17 + $0x98] sm:$0xff]
    %v2888 = vld [vmem:[#allocation17 + $0xa0] sm:$0xff]
    %v2889 = vld [vmem:[#allocation17 + $0xa8] sm:$0xff]
    %v2890 = vld [vmem:[#allocation17 + $0xb0] sm:$0xff]
    %v2891 = vld [vmem:[#allocation17 + $0xb8] sm:$0xff]
    %v2892 = vld [vmem:[#allocation17 + $0xc0] sm:$0xff]
    %v2893 = vld [vmem:[#allocation17 + $0xc8] sm:$0xff]
    %v2894 = vld [vmem:[#allocation17 + $0xd0] sm:$0xff]
    %v2895 = vld [vmem:[#allocation17 + $0xd8] sm:$0xff]
    %v2896 = vld [vmem:[#allocation17 + $0xe0] sm:$0xff]
    %v2897 = vld [vmem:[#allocation17 + $0xe8] sm:$0xff]
    %v2898 = vld [vmem:[#allocation17 + $0xf0] sm:$0xff]
    %v2899 = vld [vmem:[#allocation17 + $0xf8] sm:$0xff]
    %v2900 = vld [vmem:[#allocation17 + $0x100] sm:$0xff]
    %v2901 = vld [vmem:[#allocation17 + $0x108] sm:$0xff]
    %v2902 = vld [vmem:[#allocation17 + $0x110] sm:$0xff]
    %v2903 = vld [vmem:[#allocation17 + $0x118] sm:$0xff]
    %v2904 = vld [vmem:[#allocation17 + $0x120] sm:$0xff]
    %v2905 = vld [vmem:[#allocation17 + $0x128] sm:$0xff]
    %v2906 = vld [vmem:[#allocation17 + $0x130] sm:$0xff]
    %v2907 = vld [vmem:[#allocation17 + $0x138] sm:$0xff]
    %v2908 = vld [vmem:[#allocation17 + $0x140] sm:$0xff]
    %v2909 = vld [vmem:[#allocation17 + $0x148] sm:$0xff]
    %v2910 = vld [vmem:[#allocation17 + $0x150] sm:$0xff]
    %v2911 = vld [vmem:[#allocation17 + $0x158] sm:$0xff]
    %v2912 = vld [vmem:[#allocation17 + $0x160] sm:$0xff]
    %v2913 = vld [vmem:[#allocation17 + $0x168] sm:$0xff]
    %v2914 = vld [vmem:[#allocation17 + $0x170] sm:$0xff]
    %v2915 = vld [vmem:[#allocation17 + $0x178] sm:$0xff]
    %v2916 = vld [vmem:[#allocation17 + $0x180] sm:$0xff]
    %v2917 = vld [vmem:[#allocation17 + $0x188] sm:$0xff]
    %v2918 = vld [vmem:[#allocation17 + $0x190] sm:$0xff]
    %v2919 = vld [vmem:[#allocation17 + $0x198] sm:$0xff]
    %v2920 = vld [vmem:[#allocation17 + $0x1a0] sm:$0xff]
    %v2921 = vld [vmem:[#allocation17 + $0x1a8] sm:$0xff]
    %v2922 = vld [vmem:[#allocation17 + $0x1b0] sm:$0xff]
    %v2923 = vld [vmem:[#allocation17 + $0x1b8] sm:$0xff]
    %v2924 = vld [vmem:[#allocation17 + $0x1c0] sm:$0xff]
    %v2925 = vld [vmem:[#allocation17 + $0x1c8] sm:$0xff]
    %v2926 = vld [vmem:[#allocation17 + $0x1d0] sm:$0xff]
    %v2927 = vld [vmem:[#allocation17 + $0x1d8] sm:$0xff]
    %v2928 = vld [vmem:[#allocation17 + $0x1e0] sm:$0xff]
    %v2929 = vld [vmem:[#allocation17 + $0x1e8] sm:$0xff]
    %v2930 = vld [vmem:[#allocation17 + $0x1f0] sm:$0xff]
    %v2931 = vld [vmem:[#allocation17 + $0x1f8] sm:$0xff]
    %v2932 = vld [vmem:[#allocation17 + $0x200] sm:$0xff]
    %v2933 = vld [vmem:[#allocation17 + $0x208] sm:$0xff]
    %v2934 = vld [vmem:[#allocation17 + $0x210] sm:$0xff]
    %v2935 = vld [vmem:[#allocation17 + $0x218] sm:$0xff]
    %v2936 = vld [vmem:[#allocation17 + $0x220] sm:$0xff]
    %v2937 = vld [vmem:[#allocation17 + $0x228] sm:$0xff]
    %v2938 = vld [vmem:[#allocation17 + $0x230] sm:$0xff]
    %v2939 = vld [vmem:[#allocation17 + $0x238] sm:$0xff]
    %v2940 = vld [vmem:[#allocation17 + $0x240] sm:$0xff]
    %v2941 = vld [vmem:[#allocation17 + $0x248] sm:$0xff]
    %v2942 = vld [vmem:[#allocation17 + $0x250] sm:$0xff]
    %v2943 = vld [vmem:[#allocation17 + $0x258] sm:$0xff]
    %v2944 = vld [vmem:[#allocation17 + $0x260] sm:$0xff]
    %v2945 = vld [vmem:[#allocation17 + $0x268] sm:$0xff]
    %v2946 = vld [vmem:[#allocation17 + $0x270] sm:$0xff]
    %v2947 = vld [vmem:[#allocation17 + $0x278] sm:$0xff]
    %v2948 = vld [vmem:[#allocation17 + $0x280] sm:$0xff]
    %v2949 = vld [vmem:[#allocation17 + $0x288] sm:$0xff]
    %v2950 = vld [vmem:[#allocation17 + $0x290] sm:$0xff]
    %v2951 = vld [vmem:[#allocation17 + $0x298] sm:$0xff]
    %v2952 = vld [vmem:[#allocation17 + $0x2a0] sm:$0xff]
    %v2953 = vld [vmem:[#allocation17 + $0x2a8] sm:$0xff]
    %v2954 = vld [vmem:[#allocation17 + $0x2b0] sm:$0xff]
    %v2955 = vld [vmem:[#allocation17 + $0x2b8] sm:$0xff]
    %v2956 = vld [vmem:[#allocation17 + $0x2c0] sm:$0xff]
    %v2957 = vld [vmem:[#allocation17 + $0x2c8] sm:$0xff]
    %v2958 = vld [vmem:[#allocation17 + $0x2d0] sm:$0xff]
    %v2959 = vld [vmem:[#allocation17 + $0x2d8] sm:$0xff]
    %v2960 = vld [vmem:[#allocation17 + $0x2e0] sm:$0xff]
    %v2961 = vld [vmem:[#allocation17 + $0x2e8] sm:$0xff]
    %v2962 = vld [vmem:[#allocation17 + $0x2f0] sm:$0xff]
    %v2963 = vld [vmem:[#allocation17 + $0x2f8] sm:$0xff]
    %v2964 = vld [vmem:[#allocation17 + $0x300] sm:$0xff]
    %v2965 = vld [vmem:[#allocation17 + $0x308] sm:$0xff]
    %v2966 = vld [vmem:[#allocation17 + $0x310] sm:$0xff]
    %v2967 = vld [vmem:[#allocation17 + $0x318] sm:$0xff]
    %v2968 = vld [vmem:[#allocation17 + $0x320] sm:$0xff]
    %v2969 = vld [vmem:[#allocation17 + $0x328] sm:$0xff]
    %v2970 = vld [vmem:[#allocation17 + $0x330] sm:$0xff]
    %v2971 = vld [vmem:[#allocation17 + $0x338] sm:$0xff]
    %v2972 = vld [vmem:[#allocation17 + $0x340] sm:$0xff]
    %v2973 = vld [vmem:[#allocation17 + $0x348] sm:$0xff]
    %v2974 = vld [vmem:[#allocation17 + $0x350] sm:$0xff]
    %v2975 = vld [vmem:[#allocation17 + $0x358] sm:$0xff]
    %v2976 = vld [vmem:[#allocation17 + $0x360] sm:$0xff]
    %v2977 = vld [vmem:[#allocation17 + $0x368] sm:$0xff]
    %v2978 = vld [vmem:[#allocation17 + $0x370] sm:$0xff]
    %v2979 = vld [vmem:[#allocation17 + $0x378] sm:$0xff]
    %v2980 = vld [vmem:[#allocation17 + $0x380] sm:$0xff]
    %v2981 = vld [vmem:[#allocation17 + $0x388] sm:$0xff]
    %v2982 = vld [vmem:[#allocation17 + $0x390] sm:$0xff]
    %v2983 = vld [vmem:[#allocation17 + $0x398] sm:$0xff]
    %v2984 = vld [vmem:[#allocation17 + $0x3a0] sm:$0xff]
    %v2985 = vld [vmem:[#allocation17 + $0x3a8] sm:$0xff]
    %v2986 = vld [vmem:[#allocation17 + $0x3b0] sm:$0xff]
    %v2987 = vld [vmem:[#allocation17 + $0x3b8] sm:$0xff]
    %v2988 = vld [vmem:[#allocation17 + $0x3c0] sm:$0xff]
    %v2989 = vld [vmem:[#allocation17 + $0x3c8] sm:$0xff]
    %v2990 = vld [vmem:[#allocation17 + $0x3d0] sm:$0xff]
    %v2991 = vld [vmem:[#allocation17 + $0x3d8] sm:$0xff]
    %v2992 = vld [vmem:[#allocation17 + $0x3e0] sm:$0xff]
    %v2993 = vld [vmem:[#allocation17 + $0x3e8] sm:$0xff]
    %v2994 = vld [vmem:[#allocation17 + $0x3f0] sm:$0xff]
    %v2995 = vld [vmem:[#allocation17 + $0x3f8] sm:$0xff]
    %v2996 = vld [vmem:[#allocation17 + $0x400] sm:$0xff]
    %v2997 = vld [vmem:[#allocation17 + $0x408] sm:$0xff]
    %v2998 = vld [vmem:[#allocation17 + $0x410] sm:$0xff]
    %v2999 = vld [vmem:[#allocation17 + $0x418] sm:$0xff]
    %v3000 = vld [vmem:[#allocation17 + $0x420] sm:$0xff]
    %v3001 = vld [vmem:[#allocation17 + $0x428] sm:$0xff]
    %v3002 = vld [vmem:[#allocation17 + $0x430] sm:$0xff]
    %v3003 = vld [vmem:[#allocation17 + $0x438] sm:$0xff]
    %v3004 = vld [vmem:[#allocation17 + $0x440] sm:$0xff]
    %v3005 = vld [vmem:[#allocation17 + $0x448] sm:$0xff]
    %v3006 = vld [vmem:[#allocation17 + $0x450] sm:$0xff]
    %v3007 = vld [vmem:[#allocation17 + $0x458] sm:$0xff]
    %v3008 = vld [vmem:[#allocation17 + $0x460] sm:$0xff]
    %v3009 = vld [vmem:[#allocation17 + $0x468] sm:$0xff]
    %v3010 = vld [vmem:[#allocation17 + $0x470] sm:$0xff]
    %v3011 = vld [vmem:[#allocation17 + $0x478] sm:$0xff]
    %v3012 = vld [vmem:[#allocation17 + $0x480] sm:$0xff]
    %v3013 = vld [vmem:[#allocation17 + $0x488] sm:$0xff]
    %v3014 = vld [vmem:[#allocation17 + $0x490] sm:$0xff]
    %v3015 = vld [vmem:[#allocation17 + $0x498] sm:$0xff]
    %v3016 = vld [vmem:[#allocation17 + $0x4a0] sm:$0xff]
    %v3017 = vld [vmem:[#allocation17 + $0x4a8] sm:$0xff]
    %v3018 = vld [vmem:[#allocation17 + $0x4b0] sm:$0xff]
    %v3019 = vld [vmem:[#allocation17 + $0x4b8] sm:$0xff]
    %v3020 = vld [vmem:[#allocation17 + $0x4c0] sm:$0xff]
    %v3021 = vld [vmem:[#allocation17 + $0x4c8] sm:$0xff]
    %v3022 = vld [vmem:[#allocation17 + $0x4d0] sm:$0xff]
    %v3023 = vld [vmem:[#allocation17 + $0x4d8] sm:$0xff]
    %v3024 = vld [vmem:[#allocation17 + $0x4e0] sm:$0xff]
    %v3025 = vld [vmem:[#allocation17 + $0x4e8] sm:$0xff]
    %v3026 = vld [vmem:[#allocation17 + $0x4f0] sm:$0xff]
    %v3027 = vld [vmem:[#allocation17 + $0x4f8] sm:$0xff]
    %v3028 = vld [vmem:[#allocation17 + $0x500] sm:$0xff]
    %v3029 = vld [vmem:[#allocation17 + $0x508] sm:$0xff]
    %v3030 = vld [vmem:[#allocation17 + $0x510] sm:$0xff]
    %v3031 = vld [vmem:[#allocation17 + $0x518] sm:$0xff]
    %v3032 = vld [vmem:[#allocation17 + $0x520] sm:$0xff]
    %v3033 = vld [vmem:[#allocation17 + $0x528] sm:$0xff]
    %v3034 = vld [vmem:[#allocation17 + $0x530] sm:$0xff]
    %v3035 = vld [vmem:[#allocation17 + $0x538] sm:$0xff]
    %v3036 = vld [vmem:[#allocation17 + $0x540] sm:$0xff]
    %v3037 = vld [vmem:[#allocation17 + $0x548] sm:$0xff]
    %v3038 = vld [vmem:[#allocation17 + $0x550] sm:$0xff]
    %v3039 = vld [vmem:[#allocation17 + $0x558] sm:$0xff]
    %v3040 = vld [vmem:[#allocation17 + $0x560] sm:$0xff]
    %v3041 = vld [vmem:[#allocation17 + $0x568] sm:$0xff]
    %v3042 = vld [vmem:[#allocation17 + $0x570] sm:$0xff]
    %v3043 = vld [vmem:[#allocation17 + $0x578] sm:$0xff]
    %v3044 = vld [vmem:[#allocation17 + $0x580] sm:$0xff]
    %v3045 = vld [vmem:[#allocation17 + $0x588] sm:$0xff]
    %v3046 = vld [vmem:[#allocation17 + $0x590] sm:$0xff]
    %v3047 = vld [vmem:[#allocation17 + $0x598] sm:$0xff]
    %v3048 = vld [vmem:[#allocation17 + $0x5a0] sm:$0xff]
    %v3049 = vld [vmem:[#allocation17 + $0x5a8] sm:$0xff]
    %v3050 = vld [vmem:[#allocation17 + $0x5b0] sm:$0xff]
    %v3051 = vld [vmem:[#allocation17 + $0x5b8] sm:$0xff]
    %v3052 = vld [vmem:[#allocation17 + $0x5c0] sm:$0xff]
    %v3053 = vld [vmem:[#allocation17 + $0x5c8] sm:$0xff]
    %v3054 = vld [vmem:[#allocation17 + $0x5d0] sm:$0xff]
    %v3055 = vld [vmem:[#allocation17 + $0x5d8] sm:$0xff]
    %v3056 = vld [vmem:[#allocation17 + $0x5e0] sm:$0xff]
    %v3057 = vld [vmem:[#allocation17 + $0x5e8] sm:$0xff]
    %v3058 = vld [vmem:[#allocation17 + $0x5f0] sm:$0xff]
    %v3059 = vld [vmem:[#allocation17 + $0x5f8] sm:$0xff]
    %v3060 = vld [vmem:[#allocation17 + $0x600] sm:$0xff]
    %v3061 = vld [vmem:[#allocation17 + $0x608] sm:$0xff]
    %v3062 = vld [vmem:[#allocation17 + $0x610] sm:$0xff]
    %v3063 = vld [vmem:[#allocation17 + $0x618] sm:$0xff]
    %v3064 = vld [vmem:[#allocation17 + $0x620] sm:$0xff]
    %v3065 = vld [vmem:[#allocation17 + $0x628] sm:$0xff]
    %v3066 = vld [vmem:[#allocation17 + $0x630] sm:$0xff]
    %v3067 = vld [vmem:[#allocation17 + $0x638] sm:$0xff]
    %v3068 = vld [vmem:[#allocation17 + $0x640] sm:$0xff]
    %v3069 = vld [vmem:[#allocation17 + $0x648] sm:$0xff]
    %v3070 = vld [vmem:[#allocation17 + $0x650] sm:$0xff]
    %v3071 = vld [vmem:[#allocation17 + $0x658] sm:$0xff]
    %v3072 = vld [vmem:[#allocation17 + $0x660] sm:$0xff]
    %v3073 = vld [vmem:[#allocation17 + $0x668] sm:$0xff]
    %v3074 = vld [vmem:[#allocation17 + $0x670] sm:$0xff]
    %v3075 = vld [vmem:[#allocation17 + $0x678] sm:$0xff]
    %v3076 = vld [vmem:[#allocation17 + $0x680] sm:$0xff]
    %v3077 = vld [vmem:[#allocation17 + $0x688] sm:$0xff]
    %v3078 = vld [vmem:[#allocation17 + $0x690] sm:$0xff]
    %v3079 = vld [vmem:[#allocation17 + $0x698] sm:$0xff]
    %v3080 = vld [vmem:[#allocation17 + $0x6a0] sm:$0xff]
    %v3081 = vld [vmem:[#allocation17 + $0x6a8] sm:$0xff]
    %v3082 = vld [vmem:[#allocation17 + $0x6b0] sm:$0xff]
    %v3083 = vld [vmem:[#allocation17 + $0x6b8] sm:$0xff]
    %v3084 = vld [vmem:[#allocation17 + $0x6c0] sm:$0xff]
    %v3085 = vld [vmem:[#allocation17 + $0x6c8] sm:$0xff]
    %v3086 = vld [vmem:[#allocation17 + $0x6d0] sm:$0xff]
    %v3087 = vld [vmem:[#allocation17 + $0x6d8] sm:$0xff]
    %v3088 = vld [vmem:[#allocation17 + $0x6e0] sm:$0xff]
    %v3089 = vld [vmem:[#allocation17 + $0x6e8] sm:$0xff]
    %v3090 = vld [vmem:[#allocation17 + $0x6f0] sm:$0xff]
    %v3091 = vld [vmem:[#allocation17 + $0x6f8] sm:$0xff]
    %v3092 = vld [vmem:[#allocation17 + $0x700] sm:$0xff]
    %v3093 = vld [vmem:[#allocation17 + $0x708] sm:$0xff]
    %v3094 = vld [vmem:[#allocation17 + $0x710] sm:$0xff]
    %v3095 = vld [vmem:[#allocation17 + $0x718] sm:$0xff]
    %v3096 = vld [vmem:[#allocation17 + $0x720] sm:$0xff]
    %v3097 = vld [vmem:[#allocation17 + $0x728] sm:$0xff]
    %v3098 = vld [vmem:[#allocation17 + $0x730] sm:$0xff]
    %v3099 = vld [vmem:[#allocation17 + $0x738] sm:$0xff]
    %v3100 = vld [vmem:[#allocation17 + $0x740] sm:$0xff]
    %v3101 = vld [vmem:[#allocation17 + $0x748] sm:$0xff]
    %v3102 = vld [vmem:[#allocation17 + $0x750] sm:$0xff]
    %v3103 = vld [vmem:[#allocation17 + $0x758] sm:$0xff]
    %v3104 = vld [vmem:[#allocation17 + $0x760] sm:$0xff]
    %v3105 = vld [vmem:[#allocation17 + $0x768] sm:$0xff]
    %v3106 = vld [vmem:[#allocation17 + $0x770] sm:$0xff]
    %v3107 = vld [vmem:[#allocation17 + $0x778] sm:$0xff]
    %v3108 = vld [vmem:[#allocation17 + $0x780] sm:$0xff]
    %v3109 = vld [vmem:[#allocation17 + $0x788] sm:$0xff]
    %v3110 = vld [vmem:[#allocation17 + $0x790] sm:$0xff]
    %v3111 = vld [vmem:[#allocation17 + $0x798] sm:$0xff]
    %v3112 = vld [vmem:[#allocation17 + $0x7a0] sm:$0xff]
    %v3113 = vld [vmem:[#allocation17 + $0x7a8] sm:$0xff]
    %v3114 = vld [vmem:[#allocation17 + $0x7b0] sm:$0xff]
    %v3115 = vld [vmem:[#allocation17 + $0x7b8] sm:$0xff]
    %v3116 = vld [vmem:[#allocation17 + $0x7c0] sm:$0xff]
    %v3117 = vld [vmem:[#allocation17 + $0x7c8] sm:$0xff]
    %v3118 = vld [vmem:[#allocation17 + $0x7d0] sm:$0xff]
    %v3119 = vld [vmem:[#allocation17 + $0x7d8] sm:$0xff]
    %v3120 = vld [vmem:[#allocation17 + $0x7e0] sm:$0xff]
    %v3121 = vld [vmem:[#allocation17 + $0x7e8] sm:$0xff]
    %v3122 = vld [vmem:[#allocation17 + $0x7f0] sm:$0xff]
    %v3123 = vld [vmem:[#allocation17 + $0x7f8] sm:$0xff]
    %v3124 = vld [vmem:[#allocation17 + $0x800] sm:$0xff]
    %v3125 = vld [vmem:[#allocation17 + $0x808] sm:$0xff]
    %v3126 = vld [vmem:[#allocation17 + $0x810] sm:$0xff]
    %v3127 = vld [vmem:[#allocation17 + $0x818] sm:$0xff]
    %v3128 = vld [vmem:[#allocation17 + $0x820] sm:$0xff]
    %v3129 = vld [vmem:[#allocation17 + $0x828] sm:$0xff]
    %v3130 = vld [vmem:[#allocation17 + $0x830] sm:$0xff]
    %v3131 = vld [vmem:[#allocation17 + $0x838] sm:$0xff]
    %v3132 = vld [vmem:[#allocation17 + $0x840] sm:$0xff]
    %v3133 = vld [vmem:[#allocation17 + $0x848] sm:$0xff]
    %v3134 = vld [vmem:[#allocation17 + $0x850] sm:$0xff]
    %v3135 = vld [vmem:[#allocation17 + $0x858] sm:$0xff]
    %v3136 = vld [vmem:[#allocation17 + $0x860] sm:$0xff]
    %v3137 = vld [vmem:[#allocation17 + $0x868] sm:$0xff]
    %v3138 = vld [vmem:[#allocation17 + $0x870] sm:$0xff]
    %v3139 = vld [vmem:[#allocation17 + $0x878] sm:$0xff]
    %v3140 = vld [vmem:[#allocation17 + $0x880] sm:$0xff]
    %v3141 = vld [vmem:[#allocation17 + $0x888] sm:$0xff]
    %v3142 = vld [vmem:[#allocation17 + $0x890] sm:$0xff]
    %v3143 = vld [vmem:[#allocation17 + $0x898] sm:$0xff]
    %v3144 = vld [vmem:[#allocation17 + $0x8a0] sm:$0xff]
    %v3145 = vld [vmem:[#allocation17 + $0x8a8] sm:$0xff]
    %v3146 = vld [vmem:[#allocation17 + $0x8b0] sm:$0xff]
    %v3147 = vld [vmem:[#allocation17 + $0x8b8] sm:$0xff]
    %v3148 = vld [vmem:[#allocation17 + $0x8c0] sm:$0xff]
    %v3149 = vld [vmem:[#allocation17 + $0x8c8] sm:$0xff]
    %v3150 = vld [vmem:[#allocation17 + $0x8d0] sm:$0xff]
    %v3151 = vld [vmem:[#allocation17 + $0x8d8] sm:$0xff]
    %v3152 = vld [vmem:[#allocation17 + $0x8e0] sm:$0xff]
    %v3153 = vld [vmem:[#allocation17 + $0x8e8] sm:$0xff]
    %v3154 = vld [vmem:[#allocation17 + $0x8f0] sm:$0xff]
    %v3155 = vld [vmem:[#allocation17 + $0x8f8] sm:$0xff]
    %v3156 = vld [vmem:[#allocation17 + $0x900] sm:$0xff]
    %v3157 = vld [vmem:[#allocation17 + $0x908] sm:$0xff]
    %v3158 = vld [vmem:[#allocation17 + $0x910] sm:$0xff]
    %v3159 = vld [vmem:[#allocation17 + $0x918] sm:$0xff]
    %v3160 = vld [vmem:[#allocation17 + $0x920] sm:$0xff]
    %v3161 = vld [vmem:[#allocation17 + $0x928] sm:$0xff]
    %v3162 = vld [vmem:[#allocation17 + $0x930] sm:$0xff]
    %v3163 = vld [vmem:[#allocation17 + $0x938] sm:$0xff]
    %v3164 = vld [vmem:[#allocation17 + $0x940] sm:$0xff]
    %v3165 = vld [vmem:[#allocation17 + $0x948] sm:$0xff]
    %v3166 = vld [vmem:[#allocation17 + $0x950] sm:$0xff]
    %v3167 = vld [vmem:[#allocation17 + $0x958] sm:$0xff]
    %v3168 = vld [vmem:[#allocation17 + $0x960] sm:$0xff]
    %v3169 = vld [vmem:[#allocation17 + $0x968] sm:$0xff]
    %v3170 = vld [vmem:[#allocation17 + $0x970] sm:$0xff]
    %v3171 = vld [vmem:[#allocation17 + $0x978] sm:$0xff]
    %v3172 = vld [vmem:[#allocation17 + $0x980] sm:$0xff]
    %v3173 = vld [vmem:[#allocation17 + $0x988] sm:$0xff]
    %v3174 = vld [vmem:[#allocation17 + $0x990] sm:$0xff]
    %v3175 = vld [vmem:[#allocation17 + $0x998] sm:$0xff]
    %v3176 = vld [vmem:[#allocation17 + $0x9a0] sm:$0xff]
    %v3177 = vld [vmem:[#allocation17 + $0x9a8] sm:$0xff]
    %v3178 = vld [vmem:[#allocation17 + $0x9b0] sm:$0xff]
    %v3179 = vld [vmem:[#allocation17 + $0x9b8] sm:$0xff]
    %v3180 = vld [vmem:[#allocation17 + $0x9c0] sm:$0xff]
    %v3181 = vld [vmem:[#allocation17 + $0x9c8] sm:$0xff]
    %v3182 = vld [vmem:[#allocation17 + $0x9d0] sm:$0xff]
    %v3183 = vld [vmem:[#allocation17 + $0x9d8] sm:$0xff]
    %v3184 = vld [vmem:[#allocation17 + $0x9e0] sm:$0xff]
    %v3185 = vld [vmem:[#allocation17 + $0x9e8] sm:$0xff]
    %v3186 = vld [vmem:[#allocation17 + $0x9f0] sm:$0xff]
    %v3187 = vld [vmem:[#allocation17 + $0x9f8] sm:$0xff]
    %v3188 = vld [vmem:[#allocation17 + $0xa00] sm:$0xff]
    %v3189 = vld [vmem:[#allocation17 + $0xa08] sm:$0xff]
    %v3190 = vld [vmem:[#allocation17 + $0xa10] sm:$0xff]
    %v3191 = vld [vmem:[#allocation17 + $0xa18] sm:$0xff]
    %v3192 = vld [vmem:[#allocation17 + $0xa20] sm:$0xff]
    %v3193 = vld [vmem:[#allocation17 + $0xa28] sm:$0xff]
    %v3194 = vld [vmem:[#allocation17 + $0xa30] sm:$0xff]
    %v3195 = vld [vmem:[#allocation17 + $0xa38] sm:$0xff]
    %v3196 = vld [vmem:[#allocation17 + $0xa40] sm:$0xff]
    %v3197 = vld [vmem:[#allocation17 + $0xa48] sm:$0xff]
    %v3198 = vld [vmem:[#allocation17 + $0xa50] sm:$0xff]
    %v3199 = vld [vmem:[#allocation17 + $0xa58] sm:$0xff]
    %v3200 = vld [vmem:[#allocation17 + $0xa60] sm:$0xff]
    %v3201 = vld [vmem:[#allocation17 + $0xa68] sm:$0xff]
    %v3202 = vld [vmem:[#allocation17 + $0xa70] sm:$0xff]
    %v3203 = vld [vmem:[#allocation17 + $0xa78] sm:$0xff]
    %v3204 = vld [vmem:[#allocation17 + $0xa80] sm:$0xff]
    %v3205 = vld [vmem:[#allocation17 + $0xa88] sm:$0xff]
    %v3206 = vld [vmem:[#allocation17 + $0xa90] sm:$0xff]
    %v3207 = vld [vmem:[#allocation17 + $0xa98] sm:$0xff]
    %v3208 = vld [vmem:[#allocation17 + $0xaa0] sm:$0xff]
    %v3209 = vld [vmem:[#allocation17 + $0xaa8] sm:$0xff]
    %v3210 = vld [vmem:[#allocation17 + $0xab0] sm:$0xff]
    %v3211 = vld [vmem:[#allocation17 + $0xab8] sm:$0xff]
    %v3212 = vld [vmem:[#allocation17 + $0xac0] sm:$0xff]
    %v3213 = vld [vmem:[#allocation17 + $0xac8] sm:$0xff]
    %v3214 = vld [vmem:[#allocation17 + $0xad0] sm:$0xff]
    %v3215 = vld [vmem:[#allocation17 + $0xad8] sm:$0xff]
    %v3216 = vld [vmem:[#allocation17 + $0xae0] sm:$0xff]
    %v3217 = vld [vmem:[#allocation17 + $0xae8] sm:$0xff]
    %v3218 = vld [vmem:[#allocation17 + $0xaf0] sm:$0xff]
    %v3219 = vld [vmem:[#allocation17 + $0xaf8] sm:$0xff]
    %v3220 = vld [vmem:[#allocation17 + $0xb00] sm:$0xff]
    %v3221 = vld [vmem:[#allocation17 + $0xb08] sm:$0xff]
    %v3222 = vld [vmem:[#allocation17 + $0xb10] sm:$0xff]
    %v3223 = vld [vmem:[#allocation17 + $0xb18] sm:$0xff]
    %v3224 = vld [vmem:[#allocation17 + $0xb20] sm:$0xff]
    %v3225 = vld [vmem:[#allocation17 + $0xb28] sm:$0xff]
    %v3226 = vld [vmem:[#allocation17 + $0xb30] sm:$0xff]
    %v3227 = vld [vmem:[#allocation17 + $0xb38] sm:$0xff]
    %v3228 = vld [vmem:[#allocation17 + $0xb40] sm:$0xff]
    %v3229 = vld [vmem:[#allocation17 + $0xb48] sm:$0xff]
    %v3230 = vld [vmem:[#allocation17 + $0xb50] sm:$0xff]
    %v3231 = vld [vmem:[#allocation17 + $0xb58] sm:$0xff]
    %v3232 = vld [vmem:[#allocation17 + $0xb60] sm:$0xff]
    %v3233 = vld [vmem:[#allocation17 + $0xb68] sm:$0xff]
    %v3234 = vld [vmem:[#allocation17 + $0xb70] sm:$0xff]
    %v3235 = vld [vmem:[#allocation17 + $0xb78] sm:$0xff]
    %v3236 = vld [vmem:[#allocation17 + $0xb80] sm:$0xff]
    %v3237 = vld [vmem:[#allocation17 + $0xb88] sm:$0xff]
    %v3238 = vld [vmem:[#allocation17 + $0xb90] sm:$0xff]
    %v3239 = vld [vmem:[#allocation17 + $0xb98] sm:$0xff]
    %v3240 = vld [vmem:[#allocation17 + $0xba0] sm:$0xff]
    %v3241 = vld [vmem:[#allocation17 + $0xba8] sm:$0xff]
    %v3242 = vld [vmem:[#allocation17 + $0xbb0] sm:$0xff]
    %v3243 = vld [vmem:[#allocation17 + $0xbb8] sm:$0xff]
    %v3244 = vld [vmem:[#allocation17 + $0xbc0] sm:$0xff]
    %v3245 = vld [vmem:[#allocation17 + $0xbc8] sm:$0xff]
    %v3246 = vld [vmem:[#allocation17 + $0xbd0] sm:$0xff]
    %v3247 = vld [vmem:[#allocation17 + $0xbd8] sm:$0xff]
    %v3248 = vld [vmem:[#allocation17 + $0xbe0] sm:$0xff]
    %v3249 = vld [vmem:[#allocation17 + $0xbe8] sm:$0xff]
    %v3250 = vld [vmem:[#allocation17 + $0xbf0] sm:$0xff]
    %v3251 = vld [vmem:[#allocation17 + $0xbf8] sm:$0xff]
    %v3252 = vld [vmem:[#allocation17 + $0xc00] sm:$0xff]
    %v3253 = vld [vmem:[#allocation17 + $0xc08] sm:$0xff]
    %v3254 = vld [vmem:[#allocation17 + $0xc10] sm:$0xff]
    %v3255 = vld [vmem:[#allocation17 + $0xc18] sm:$0xff]
    %v3256 = vld [vmem:[#allocation17 + $0xc20] sm:$0xff]
    %v3257 = vld [vmem:[#allocation17 + $0xc28] sm:$0xff]
    %v3258 = vld [vmem:[#allocation17 + $0xc30] sm:$0xff]
    %v3259 = vld [vmem:[#allocation17 + $0xc38] sm:$0xff]
    %v3260 = vld [vmem:[#allocation17 + $0xc40] sm:$0xff]
    %v3261 = vld [vmem:[#allocation17 + $0xc48] sm:$0xff]
    %v3262 = vld [vmem:[#allocation17 + $0xc50] sm:$0xff]
    %v3263 = vld [vmem:[#allocation17 + $0xc58] sm:$0xff]
    %v3264 = vld [vmem:[#allocation17 + $0xc60] sm:$0xff]
    %v3265 = vld [vmem:[#allocation17 + $0xc68] sm:$0xff]
    %v3266 = vld [vmem:[#allocation17 + $0xc70] sm:$0xff]
    %v3267 = vld [vmem:[#allocation17 + $0xc78] sm:$0xff]
    %v3268 = vld [vmem:[#allocation17 + $0xc80] sm:$0xff]
    %v3269 = vld [vmem:[#allocation17 + $0xc88] sm:$0xff]
    %v3270 = vld [vmem:[#allocation17 + $0xc90] sm:$0xff]
    %v3271 = vld [vmem:[#allocation17 + $0xc98] sm:$0xff]
    %v3272 = vld [vmem:[#allocation17 + $0xca0] sm:$0xff]
    %v3273 = vld [vmem:[#allocation17 + $0xca8] sm:$0xff]
    %v3274 = vld [vmem:[#allocation17 + $0xcb0] sm:$0xff]
    %v3275 = vld [vmem:[#allocation17 + $0xcb8] sm:$0xff]
    %v3276 = vld [vmem:[#allocation17 + $0xcc0] sm:$0xff]
    %v3277 = vld [vmem:[#allocation17 + $0xcc8] sm:$0xff]
    %v3278 = vld [vmem:[#allocation17 + $0xcd0] sm:$0xff]
    %v3279 = vld [vmem:[#allocation17 + $0xcd8] sm:$0xff]
    %v3280 = vld [vmem:[#allocation17 + $0xce0] sm:$0xff]
    %v3281 = vld [vmem:[#allocation17 + $0xce8] sm:$0xff]
    %v3282 = vld [vmem:[#allocation17 + $0xcf0] sm:$0xff]
    %v3283 = vld [vmem:[#allocation17 + $0xcf8] sm:$0xff]
    %v3284 = vld [vmem:[#allocation17 + $0xd00] sm:$0xff]
    %v3285 = vld [vmem:[#allocation17 + $0xd08] sm:$0xff]
    %v3286 = vld [vmem:[#allocation17 + $0xd10] sm:$0xff]
    %v3287 = vld [vmem:[#allocation17 + $0xd18] sm:$0xff]
    %v3288 = vld [vmem:[#allocation17 + $0xd20] sm:$0xff]
    %v3289 = vld [vmem:[#allocation17 + $0xd28] sm:$0xff]
    %v3290 = vld [vmem:[#allocation17 + $0xd30] sm:$0xff]
    %v3291 = vld [vmem:[#allocation17 + $0xd38] sm:$0xff]
    %v3292 = vld [vmem:[#allocation17 + $0xd40] sm:$0xff]
    %v3293 = vld [vmem:[#allocation17 + $0xd48] sm:$0xff]
    %v3294 = vld [vmem:[#allocation17 + $0xd50] sm:$0xff]
    %v3295 = vld [vmem:[#allocation17 + $0xd58] sm:$0xff]
    %v3296 = vld [vmem:[#allocation17 + $0xd60] sm:$0xff]
    %v3297 = vld [vmem:[#allocation17 + $0xd68] sm:$0xff]
    %v3298 = vld [vmem:[#allocation17 + $0xd70] sm:$0xff]
    %v3299 = vld [vmem:[#allocation17 + $0xd78] sm:$0xff]
    %v3300 = vld [vmem:[#allocation17 + $0xd80] sm:$0xff]
    %v3301 = vld [vmem:[#allocation17 + $0xd88] sm:$0xff]
    %v3302 = vld [vmem:[#allocation17 + $0xd90] sm:$0xff]
    %v3303 = vld [vmem:[#allocation17 + $0xd98] sm:$0xff]
    %v3304 = vld [vmem:[#allocation17 + $0xda0] sm:$0xff]
    %v3305 = vld [vmem:[#allocation17 + $0xda8] sm:$0xff]
    %v3306 = vld [vmem:[#allocation17 + $0xdb0] sm:$0xff]
    %v3307 = vld [vmem:[#allocation17 + $0xdb8] sm:$0xff]
    %v3308 = vld [vmem:[#allocation17 + $0xdc0] sm:$0xff]
    %v3309 = vld [vmem:[#allocation17 + $0xdc8] sm:$0xff]
    %v3310 = vld [vmem:[#allocation17 + $0xdd0] sm:$0xff]
    %v3311 = vld [vmem:[#allocation17 + $0xdd8] sm:$0xff]
    %v3312 = vld [vmem:[#allocation17 + $0xde0] sm:$0xff]
    %v3313 = vld [vmem:[#allocation17 + $0xde8] sm:$0xff]
    %v3314 = vld [vmem:[#allocation17 + $0xdf0] sm:$0xff]
    %v3315 = vld [vmem:[#allocation17 + $0xdf8] sm:$0xff]
    %v3316 = vld [vmem:[#allocation17 + $0xe00] sm:$0xff]
    %v3317 = vld [vmem:[#allocation17 + $0xe08] sm:$0xff]
    %v3318 = vld [vmem:[#allocation17 + $0xe10] sm:$0xff]
    %v3319 = vld [vmem:[#allocation17 + $0xe18] sm:$0xff]
    %v3320 = vld [vmem:[#allocation17 + $0xe20] sm:$0xff]
    %v3321 = vld [vmem:[#allocation17 + $0xe28] sm:$0xff]
    %v3322 = vld [vmem:[#allocation17 + $0xe30] sm:$0xff]
    %v3323 = vld [vmem:[#allocation17 + $0xe38] sm:$0xff]
    %v3324 = vld [vmem:[#allocation17 + $0xe40] sm:$0xff]
    %v3325 = vld [vmem:[#allocation17 + $0xe48] sm:$0xff]
    %v3326 = vld [vmem:[#allocation17 + $0xe50] sm:$0xff]
    %v3327 = vld [vmem:[#allocation17 + $0xe58] sm:$0xff]
    %v3328 = vld [vmem:[#allocation17 + $0xe60] sm:$0xff]
    %v3329 = vld [vmem:[#allocation17 + $0xe68] sm:$0xff]
    %v3330 = vld [vmem:[#allocation17 + $0xe70] sm:$0xff]
    %v3331 = vld [vmem:[#allocation17 + $0xe78] sm:$0xff]
    %v3332 = vld [vmem:[#allocation17 + $0xe80] sm:$0xff]
    %v3333 = vld [vmem:[#allocation17 + $0xe88] sm:$0xff]
    %v3334 = vld [vmem:[#allocation17 + $0xe90] sm:$0xff]
    %v3335 = vld [vmem:[#allocation17 + $0xe98] sm:$0xff]
    %v3336 = vld [vmem:[#allocation17 + $0xea0] sm:$0xff]
    %v3337 = vld [vmem:[#allocation17 + $0xea8] sm:$0xff]
    %v3338 = vld [vmem:[#allocation17 + $0xeb0] sm:$0xff]
    %v3339 = vld [vmem:[#allocation17 + $0xeb8] sm:$0xff]
    %v3340 = vld [vmem:[#allocation17 + $0xec0] sm:$0xff]
    %v3341 = vld [vmem:[#allocation17 + $0xec8] sm:$0xff]
    %v3342 = vld [vmem:[#allocation17 + $0xed0] sm:$0xff]
    %v3343 = vld [vmem:[#allocation17 + $0xed8] sm:$0xff]
    %v3344 = vld [vmem:[#allocation17 + $0xee0] sm:$0xff]
    %v3345 = vld [vmem:[#allocation17 + $0xee8] sm:$0xff]
    %v3346 = vld [vmem:[#allocation17 + $0xef0] sm:$0xff]
    %v3347 = vld [vmem:[#allocation17 + $0xef8] sm:$0xff]
    %v3348 = vld [vmem:[#allocation17 + $0xf00] sm:$0xff]
    %v3349 = vld [vmem:[#allocation17 + $0xf08] sm:$0xff]
    %v3350 = vld [vmem:[#allocation17 + $0xf10] sm:$0xff]
    %v3351 = vld [vmem:[#allocation17 + $0xf18] sm:$0xff]
    %v3352 = vld [vmem:[#allocation17 + $0xf20] sm:$0xff]
    %v3353 = vld [vmem:[#allocation17 + $0xf28] sm:$0xff]
    %v3354 = vld [vmem:[#allocation17 + $0xf30] sm:$0xff]
    %v3355 = vld [vmem:[#allocation17 + $0xf38] sm:$0xff]
    %v3356 = vld [vmem:[#allocation17 + $0xf40] sm:$0xff]
    %v3357 = vld [vmem:[#allocation17 + $0xf48] sm:$0xff]
    %v3358 = vld [vmem:[#allocation17 + $0xf50] sm:$0xff]
    %v3359 = vld [vmem:[#allocation17 + $0xf58] sm:$0xff]
    %v3360 = vld [vmem:[#allocation17 + $0xf60] sm:$0xff]
    %v3361 = vld [vmem:[#allocation17 + $0xf68] sm:$0xff]
    %v3362 = vld [vmem:[#allocation17 + $0xf70] sm:$0xff]
    %v3363 = vld [vmem:[#allocation17 + $0xf78] sm:$0xff]
    %v3364 = vld [vmem:[#allocation17 + $0xf80] sm:$0xff]
    %v3365 = vld [vmem:[#allocation17 + $0xf88] sm:$0xff]
    %v3366 = vld [vmem:[#allocation17 + $0xf90] sm:$0xff]
    %v3367 = vld [vmem:[#allocation17 + $0xf98] sm:$0xff]
    %v3368 = vld [vmem:[#allocation17 + $0xfa0] sm:$0xff]
    %v3369 = vld [vmem:[#allocation17 + $0xfa8] sm:$0xff]
    %v3370 = vld [vmem:[#allocation17 + $0xfb0] sm:$0xff]
    %v3371 = vld [vmem:[#allocation17 + $0xfb8] sm:$0xff]
    %v3372 = vld [vmem:[#allocation17 + $0xfc0] sm:$0xff]
    %v3373 = vld [vmem:[#allocation17 + $0xfc8] sm:$0xff]
    %v3374 = vld [vmem:[#allocation17 + $0xfd0] sm:$0xff]
    %v3375 = vld [vmem:[#allocation17 + $0xfd8] sm:$0xff]
    %v3376 = vld [vmem:[#allocation17 + $0xfe0] sm:$0xff]
    %v3377 = vld [vmem:[#allocation17 + $0xfe8] sm:$0xff]
    %v3378 = vld [vmem:[#allocation17 + $0xff0] sm:$0xff]
    %v3379 = vld [vmem:[#allocation17 + $0xff8] sm:$0xff]
    %v3380 = vld [vmem:[#allocation17 + $0x1000] sm:$0xff]
    %v3381 = vld [vmem:[#allocation17 + $0x1008] sm:$0xff]
    %v3382 = vld [vmem:[#allocation17 + $0x1010] sm:$0xff]
    %v3383 = vld [vmem:[#allocation17 + $0x1018] sm:$0xff]
    %v3384 = vld [vmem:[#allocation17 + $0x1020] sm:$0xff]
    %v3385 = vld [vmem:[#allocation17 + $0x1028] sm:$0xff]
    %v3386 = vld [vmem:[#allocation17 + $0x1030] sm:$0xff]
    %v3387 = vld [vmem:[#allocation17 + $0x1038] sm:$0xff]
    %v3388 = vld [vmem:[#allocation17 + $0x1040] sm:$0xff]
    %v3389 = vld [vmem:[#allocation17 + $0x1048] sm:$0xff]
    %v3390 = vld [vmem:[#allocation17 + $0x1050] sm:$0xff]
    %v3391 = vld [vmem:[#allocation17 + $0x1058] sm:$0xff]
    %v3392 = vld [vmem:[#allocation17 + $0x1060] sm:$0xff]
    %v3393 = vld [vmem:[#allocation17 + $0x1068] sm:$0xff]
    %v3394 = vld [vmem:[#allocation17 + $0x1070] sm:$0xff]
    %v3395 = vld [vmem:[#allocation17 + $0x1078] sm:$0xff]
    %v3396 = vld [vmem:[#allocation17 + $0x1080] sm:$0xff]
    %v3397 = vld [vmem:[#allocation17 + $0x1088] sm:$0xff]
    %v3398 = vld [vmem:[#allocation17 + $0x1090] sm:$0xff]
    %v3399 = vld [vmem:[#allocation17 + $0x1098] sm:$0xff]
    %v3400 = vld [vmem:[#allocation17 + $0x10a0] sm:$0xff]
    %v3401 = vld [vmem:[#allocation17 + $0x10a8] sm:$0xff]
    %v3402 = vld [vmem:[#allocation17 + $0x10b0] sm:$0xff]
    %v3403 = vld [vmem:[#allocation17 + $0x10b8] sm:$0xff]
    %v3404 = vld [vmem:[#allocation17 + $0x10c0] sm:$0xff]
    %v3405 = vld [vmem:[#allocation17 + $0x10c8] sm:$0xff]
    %v3406 = vld [vmem:[#allocation17 + $0x10d0] sm:$0xff]
    %v3407 = vld [vmem:[#allocation17 + $0x10d8] sm:$0xff]
    %v3408 = vld [vmem:[#allocation17 + $0x10e0] sm:$0xff]
    %v3409 = vld [vmem:[#allocation17 + $0x10e8] sm:$0xff]
    %v3410 = vld [vmem:[#allocation17 + $0x10f0] sm:$0xff]
    %v3411 = vld [vmem:[#allocation17 + $0x10f8] sm:$0xff]
    %v3412 = vld [vmem:[#allocation17 + $0x1100] sm:$0xff]
    %v3413 = vld [vmem:[#allocation17 + $0x1108] sm:$0xff]
    %v3414 = vld [vmem:[#allocation17 + $0x1110] sm:$0xff]
    %v3415 = vld [vmem:[#allocation17 + $0x1118] sm:$0xff]
    %v3416 = vld [vmem:[#allocation17 + $0x1120] sm:$0xff]
    %v3417 = vld [vmem:[#allocation17 + $0x1128] sm:$0xff]
    %v3418 = vld [vmem:[#allocation17 + $0x1130] sm:$0xff]
    %v3419 = vld [vmem:[#allocation17 + $0x1138] sm:$0xff]
    %v3420 = vld [vmem:[#allocation17 + $0x1140] sm:$0xff]
    %v3421 = vld [vmem:[#allocation17 + $0x1148] sm:$0xff]
    %v3422 = vld [vmem:[#allocation17 + $0x1150] sm:$0xff]
    %v3423 = vld [vmem:[#allocation17 + $0x1158] sm:$0xff]
    %v3424 = vld [vmem:[#allocation17 + $0x1160] sm:$0xff]
    %v3425 = vld [vmem:[#allocation17 + $0x1168] sm:$0xff]
    %v3426 = vld [vmem:[#allocation17 + $0x1170] sm:$0xff]
    %v3427 = vld [vmem:[#allocation17 + $0x1178] sm:$0xff]
    %v3428 = vld [vmem:[#allocation17 + $0x1180] sm:$0xff]
    %v3429 = vld [vmem:[#allocation17 + $0x1188] sm:$0xff]
    %v3430 = vld [vmem:[#allocation17 + $0x1190] sm:$0xff]
    %v3431 = vld [vmem:[#allocation17 + $0x1198] sm:$0xff]
    %v3432 = vld [vmem:[#allocation17 + $0x11a0] sm:$0xff]
    %v3433 = vld [vmem:[#allocation17 + $0x11a8] sm:$0xff]
    %v3434 = vld [vmem:[#allocation17 + $0x11b0] sm:$0xff]
    %v3435 = vld [vmem:[#allocation17 + $0x11b8] sm:$0xff]
    %v3436 = vld [vmem:[#allocation17 + $0x11c0] sm:$0xff]
    %v3437 = vld [vmem:[#allocation17 + $0x11c8] sm:$0xff]
    %v3438 = vld [vmem:[#allocation17 + $0x11d0] sm:$0xff]
    %v3439 = vld [vmem:[#allocation17 + $0x11d8] sm:$0xff]
    %v3440 = vld [vmem:[#allocation17 + $0x11e0] sm:$0xff]
    %v3441 = vld [vmem:[#allocation17 + $0x11e8] sm:$0xff]
    %v3442 = vld [vmem:[#allocation17 + $0x11f0] sm:$0xff]
    %v3443 = vld [vmem:[#allocation17 + $0x11f8] sm:$0xff]
    %v3444 = vld [vmem:[#allocation17 + $0x1200] sm:$0xff]
    %v3445 = vld [vmem:[#allocation17 + $0x1208] sm:$0xff]
    %v3446 = vld [vmem:[#allocation17 + $0x1210] sm:$0xff]
    %v3447 = vld [vmem:[#allocation17 + $0x1218] sm:$0xff]
    %v3448 = vld [vmem:[#allocation17 + $0x1220] sm:$0xff]
    %v3449 = vld [vmem:[#allocation17 + $0x1228] sm:$0xff]
    %v3450 = vld [vmem:[#allocation17 + $0x1230] sm:$0xff]
    %v3451 = vld [vmem:[#allocation17 + $0x1238] sm:$0xff]
    %v3452 = vld [vmem:[#allocation17 + $0x1240] sm:$0xff]
    %v3453 = vld [vmem:[#allocation17 + $0x1248] sm:$0xff]
    %v3454 = vld [vmem:[#allocation17 + $0x1250] sm:$0xff]
    %v3455 = vld [vmem:[#allocation17 + $0x1258] sm:$0xff]
    %v3456 = vld [vmem:[#allocation17 + $0x1260] sm:$0xff]
    %v3457 = vld [vmem:[#allocation17 + $0x1268] sm:$0xff]
    %v3458 = vld [vmem:[#allocation17 + $0x1270] sm:$0xff]
    %v3459 = vld [vmem:[#allocation17 + $0x1278] sm:$0xff]
    %v3460 = vld [vmem:[#allocation17 + $0x1280] sm:$0xff]
    %v3461 = vld [vmem:[#allocation17 + $0x1288] sm:$0xff]
    %v3462 = vld [vmem:[#allocation17 + $0x1290] sm:$0xff]
    %v3463 = vld [vmem:[#allocation17 + $0x1298] sm:$0xff]
    %v3464 = vld [vmem:[#allocation17 + $0x12a0] sm:$0xff]
    %v3465 = vld [vmem:[#allocation17 + $0x12a8] sm:$0xff]
    %v3466 = vld [vmem:[#allocation17 + $0x12b0] sm:$0xff]
    %v3467 = vld [vmem:[#allocation17 + $0x12b8] sm:$0xff]
    %v3468 = vld [vmem:[#allocation17 + $0x12c0] sm:$0xff]
    %v3469 = vld [vmem:[#allocation17 + $0x12c8] sm:$0xff]
    %v3470 = vld [vmem:[#allocation17 + $0x12d0] sm:$0xff]
    %v3471 = vld [vmem:[#allocation17 + $0x12d8] sm:$0xff]
    %v3472 = vld [vmem:[#allocation17 + $0x12e0] sm:$0xff]
    %v3473 = vld [vmem:[#allocation17 + $0x12e8] sm:$0xff]
    %v3474 = vld [vmem:[#allocation17 + $0x12f0] sm:$0xff]
    %v3475 = vld [vmem:[#allocation17 + $0x12f8] sm:$0xff]
    %v3476 = vld [vmem:[#allocation17 + $0x1300] sm:$0xff]
    %v3477 = vld [vmem:[#allocation17 + $0x1308] sm:$0xff]
    %v3478 = vld [vmem:[#allocation17 + $0x1310] sm:$0xff]
    %v3479 = vld [vmem:[#allocation17 + $0x1318] sm:$0xff]
    %v3480 = vld [vmem:[#allocation17 + $0x1320] sm:$0xff]
    %v3481 = vld [vmem:[#allocation17 + $0x1328] sm:$0xff]
    %v3482 = vld [vmem:[#allocation17 + $0x1330] sm:$0xff]
    %v3483 = vld [vmem:[#allocation17 + $0x1338] sm:$0xff]
    %v3484 = vld [vmem:[#allocation17 + $0x1340] sm:$0xff]
    %v3485 = vld [vmem:[#allocation17 + $0x1348] sm:$0xff]
    %v3486 = vld [vmem:[#allocation17 + $0x1350] sm:$0xff]
    %v3487 = vld [vmem:[#allocation17 + $0x1358] sm:$0xff]
    %v3488 = vld [vmem:[#allocation17 + $0x1360] sm:$0xff]
    %v3489 = vld [vmem:[#allocation17 + $0x1368] sm:$0xff]
    %v3490 = vld [vmem:[#allocation17 + $0x1370] sm:$0xff]
    %v3491 = vld [vmem:[#allocation17 + $0x1378] sm:$0xff]
    %v3492 = vld [vmem:[#allocation17 + $0x1380] sm:$0xff]
    %v3493 = vld [vmem:[#allocation17 + $0x1388] sm:$0xff]
    %v3494 = vld [vmem:[#allocation17 + $0x1390] sm:$0xff]
    %v3495 = vld [vmem:[#allocation17 + $0x1398] sm:$0xff]
    %v3496 = vld [vmem:[#allocation17 + $0x13a0] sm:$0xff]
    %v3497 = vld [vmem:[#allocation17 + $0x13a8] sm:$0xff]
    %v3498 = vld [vmem:[#allocation17 + $0x13b0] sm:$0xff]
    %v3499 = vld [vmem:[#allocation17 + $0x13b8] sm:$0xff]
    %v3500 = vld [vmem:[#allocation17 + $0x13c0] sm:$0xff]
    %v3501 = vld [vmem:[#allocation17 + $0x13c8] sm:$0xff]
    %v3502 = vld [vmem:[#allocation17 + $0x13d0] sm:$0xff]
    %v3503 = vld [vmem:[#allocation17 + $0x13d8] sm:$0xff]
    %v3504 = vld [vmem:[#allocation17 + $0x13e0] sm:$0xff]
    %v3505 = vld [vmem:[#allocation17 + $0x13e8] sm:$0xff]
    %v3506 = vld [vmem:[#allocation17 + $0x13f0] sm:$0xff]
    %v3507 = vld [vmem:[#allocation17 + $0x13f8] sm:$0xff]
    %v3508 = vld [vmem:[#allocation19] sm:$0xff]
    %v3509 = vld [vmem:[#allocation19 + $0x8] sm:$0x3]
    %v3512 = vlaneseq
    %v3513 = vshrl.u32 %v3512, 7
    %v3514 = vsub.s32 0, %v3513
    %v3515 = vrot.slane %v3508, %v3514
    %v3516 = vlaneseq
    %v3517 = vshrl.u32 %v3516, 7
    %v3518 = vsub.s32 1, %v3517
    %v3519 = vrot.slane %v3508, %v3518
    %v3520 = vlaneseq
    %v3521 = vshrl.u32 %v3520, 7
    %v3522 = vsub.s32 2, %v3521
    %v3523 = vrot.slane %v3508, %v3522
    %v3524 = vlaneseq
    %v3525 = vshrl.u32 %v3524, 7
    %v3526 = vsub.s32 3, %v3525
    %v3527 = vrot.slane %v3508, %v3526
    %v3528 = vlaneseq
    %v3529 = vshrl.u32 %v3528, 7
    %v3530 = vsub.s32 4, %v3529
    %v3531 = vrot.slane %v3508, %v3530
    %v3532 = vlaneseq
    %v3533 = vshrl.u32 %v3532, 7
    %v3534 = vsub.s32 5, %v3533
    %v3535 = vrot.slane %v3508, %v3534
    %v3536 = vlaneseq
    %v3537 = vshrl.u32 %v3536, 7
    %v3538 = vsub.s32 6, %v3537
    %v3539 = vrot.slane %v3508, %v3538
    %v3540 = vlaneseq
    %v3541 = vshrl.u32 %v3540, 7
    %v3542 = vsub.s32 7, %v3541
    %v3543 = vrot.slane %v3508, %v3542
    %v3544 = vlaneseq
    %v3545 = vshrl.u32 %v3544, 7
    %v3546 = vsub.s32 0, %v3545
    %v3547 = vrot.slane %v3509, %v3546
    %v3548 = vlaneseq
    %v3549 = vshrl.u32 %v3548, 7
    %v3550 = vsub.s32 1, %v3549
    %v3551 = vrot.slane %v3509, %v3550
    %v4202 = vunpack.c.l.b16 %v2868
    %v4203 = vunpack.c.h.b16 %v2868
    %v4204 = vunpack.c.l.b16 %v2869
    %v4205 = vunpack.c.h.b16 %v2869
    %v4206 = vunpack.c.l.b16 %v2870
    %v4207 = vunpack.c.h.b16 %v2870
    %v4208 = vunpack.c.l.b16 %v2871
    %v4209 = vunpack.c.h.b16 %v2871
    %v4210 = vunpack.c.l.b16 %v2872
    %v4211 = vunpack.c.h.b16 %v2872
    %v4212 = vunpack.c.l.b16 %v2873
    %v4213 = vunpack.c.h.b16 %v2873
    %v4214 = vunpack.c.l.b16 %v2874
    %v4215 = vunpack.c.h.b16 %v2874
    %v4216 = vunpack.c.l.b16 %v2875
    %v4217 = vunpack.c.h.b16 %v2875
    %v4218 = vunpack.c.l.b16 %v2876
    %v4219 = vunpack.c.h.b16 %v2876
    %v4220 = vunpack.c.l.b16 %v2877
    %v4221 = vunpack.c.h.b16 %v2877
    %v4222 = vunpack.c.l.b16 %v2878
    %v4223 = vunpack.c.h.b16 %v2878
    %v4224 = vunpack.c.l.b16 %v2879
    %v4225 = vunpack.c.h.b16 %v2879
    %v4226 = vunpack.c.l.b16 %v2880
    %v4227 = vunpack.c.h.b16 %v2880
    %v4228 = vunpack.c.l.b16 %v2881
    %v4229 = vunpack.c.h.b16 %v2881
    %v4230 = vunpack.c.l.b16 %v2882
    %v4231 = vunpack.c.h.b16 %v2882
    %v4232 = vunpack.c.l.b16 %v2883
    %v4233 = vunpack.c.h.b16 %v2883
    %v4234 = vunpack.c.l.b16 %v2884
    %v4235 = vunpack.c.h.b16 %v2884
    %v4236 = vunpack.c.l.b16 %v2885
    %v4237 = vunpack.c.h.b16 %v2885
    %v4238 = vunpack.c.l.b16 %v2886
    %v4239 = vunpack.c.h.b16 %v2886
    %v4240 = vunpack.c.l.b16 %v2887
    %v4241 = vunpack.c.h.b16 %v2887
    %v4242 = vunpack.c.l.b16 %v2888
    %v4243 = vunpack.c.h.b16 %v2888
    %v4244 = vunpack.c.l.b16 %v2889
    %v4245 = vunpack.c.h.b16 %v2889
    %v4246 = vunpack.c.l.b16 %v2890
    %v4247 = vunpack.c.h.b16 %v2890
    %v4248 = vunpack.c.l.b16 %v2891
    %v4249 = vunpack.c.h.b16 %v2891
    %v4250 = vunpack.c.l.b16 %v2892
    %v4251 = vunpack.c.h.b16 %v2892
    %v4252 = vunpack.c.l.b16 %v2893
    %v4253 = vunpack.c.h.b16 %v2893
    %v4254 = vunpack.c.l.b16 %v2894
    %v4255 = vunpack.c.h.b16 %v2894
    %v4256 = vunpack.c.l.b16 %v2895
    %v4257 = vunpack.c.h.b16 %v2895
    %v4258 = vunpack.c.l.b16 %v2896
    %v4259 = vunpack.c.h.b16 %v2896
    %v4260 = vunpack.c.l.b16 %v2897
    %v4261 = vunpack.c.h.b16 %v2897
    %v4262 = vunpack.c.l.b16 %v2898
    %v4263 = vunpack.c.h.b16 %v2898
    %v4264 = vunpack.c.l.b16 %v2899
    %v4265 = vunpack.c.h.b16 %v2899
    %v4266 = vunpack.c.l.b16 %v2900
    %v4267 = vunpack.c.h.b16 %v2900
    %v4268 = vunpack.c.l.b16 %v2901
    %v4269 = vunpack.c.h.b16 %v2901
    %v4270 = vunpack.c.l.b16 %v2902
    %v4271 = vunpack.c.h.b16 %v2902
    %v4272 = vunpack.c.l.b16 %v2903
    %v4273 = vunpack.c.h.b16 %v2903
    %v4274 = vunpack.c.l.b16 %v2904
    %v4275 = vunpack.c.h.b16 %v2904
    %v4276 = vunpack.c.l.b16 %v2905
    %v4277 = vunpack.c.h.b16 %v2905
    %v4278 = vunpack.c.l.b16 %v2906
    %v4279 = vunpack.c.h.b16 %v2906
    %v4280 = vunpack.c.l.b16 %v2907
    %v4281 = vunpack.c.h.b16 %v2907
    %v4282 = vunpack.c.l.b16 %v2908
    %v4283 = vunpack.c.h.b16 %v2908
    %v4284 = vunpack.c.l.b16 %v2909
    %v4285 = vunpack.c.h.b16 %v2909
    %v4286 = vunpack.c.l.b16 %v2910
    %v4287 = vunpack.c.h.b16 %v2910
    %v4288 = vunpack.c.l.b16 %v2911
    %v4289 = vunpack.c.h.b16 %v2911
    %v4290 = vunpack.c.l.b16 %v2912
    %v4291 = vunpack.c.h.b16 %v2912
    %v4292 = vunpack.c.l.b16 %v2913
    %v4293 = vunpack.c.h.b16 %v2913
    %v4294 = vunpack.c.l.b16 %v2914
    %v4295 = vunpack.c.h.b16 %v2914
    %v4296 = vunpack.c.l.b16 %v2915
    %v4297 = vunpack.c.h.b16 %v2915
    %v4298 = vunpack.c.l.b16 %v2916
    %v4299 = vunpack.c.h.b16 %v2916
    %v4300 = vunpack.c.l.b16 %v2917
    %v4301 = vunpack.c.h.b16 %v2917
    %v4302 = vunpack.c.l.b16 %v2918
    %v4303 = vunpack.c.h.b16 %v2918
    %v4304 = vunpack.c.l.b16 %v2919
    %v4305 = vunpack.c.h.b16 %v2919
    %v4306 = vunpack.c.l.b16 %v2920
    %v4307 = vunpack.c.h.b16 %v2920
    %v4308 = vunpack.c.l.b16 %v2921
    %v4309 = vunpack.c.h.b16 %v2921
    %v4310 = vunpack.c.l.b16 %v2922
    %v4311 = vunpack.c.h.b16 %v2922
    %v4312 = vunpack.c.l.b16 %v2923
    %v4313 = vunpack.c.h.b16 %v2923
    %v4314 = vunpack.c.l.b16 %v2924
    %v4315 = vunpack.c.h.b16 %v2924
    %v4316 = vunpack.c.l.b16 %v2925
    %v4317 = vunpack.c.h.b16 %v2925
    %v4318 = vunpack.c.l.b16 %v2926
    %v4319 = vunpack.c.h.b16 %v2926
    %v4320 = vunpack.c.l.b16 %v2927
    %v4321 = vunpack.c.h.b16 %v2927
    %v4322 = vunpack.c.l.b16 %v2928
    %v4323 = vunpack.c.h.b16 %v2928
    %v4324 = vunpack.c.l.b16 %v2929
    %v4325 = vunpack.c.h.b16 %v2929
    %v4326 = vunpack.c.l.b16 %v2930
    %v4327 = vunpack.c.h.b16 %v2930
    %v4328 = vunpack.c.l.b16 %v2931
    %v4329 = vunpack.c.h.b16 %v2931
    %v4330 = vunpack.c.l.b16 %v2932
    %v4331 = vunpack.c.h.b16 %v2932
    %v4332 = vunpack.c.l.b16 %v2933
    %v4333 = vunpack.c.h.b16 %v2933
    %v4334 = vunpack.c.l.b16 %v2934
    %v4335 = vunpack.c.h.b16 %v2934
    %v4336 = vunpack.c.l.b16 %v2935
    %v4337 = vunpack.c.h.b16 %v2935
    %v4338 = vunpack.c.l.b16 %v2936
    %v4339 = vunpack.c.h.b16 %v2936
    %v4340 = vunpack.c.l.b16 %v2937
    %v4341 = vunpack.c.h.b16 %v2937
    %v4342 = vunpack.c.l.b16 %v2938
    %v4343 = vunpack.c.h.b16 %v2938
    %v4344 = vunpack.c.l.b16 %v2939
    %v4345 = vunpack.c.h.b16 %v2939
    %v4346 = vunpack.c.l.b16 %v2940
    %v4347 = vunpack.c.h.b16 %v2940
    %v4348 = vunpack.c.l.b16 %v2941
    %v4349 = vunpack.c.h.b16 %v2941
    %v4350 = vunpack.c.l.b16 %v2942
    %v4351 = vunpack.c.h.b16 %v2942
    %v4352 = vunpack.c.l.b16 %v2943
    %v4353 = vunpack.c.h.b16 %v2943
    %v4354 = vunpack.c.l.b16 %v2944
    %v4355 = vunpack.c.h.b16 %v2944
    %v4356 = vunpack.c.l.b16 %v2945
    %v4357 = vunpack.c.h.b16 %v2945
    %v4358 = vunpack.c.l.b16 %v2946
    %v4359 = vunpack.c.h.b16 %v2946
    %v4360 = vunpack.c.l.b16 %v2947
    %v4361 = vunpack.c.h.b16 %v2947
    %v4362 = vunpack.c.l.b16 %v2948
    %v4363 = vunpack.c.h.b16 %v2948
    %v4364 = vunpack.c.l.b16 %v2949
    %v4365 = vunpack.c.h.b16 %v2949
    %v4366 = vunpack.c.l.b16 %v2950
    %v4367 = vunpack.c.h.b16 %v2950
    %v4368 = vunpack.c.l.b16 %v2951
    %v4369 = vunpack.c.h.b16 %v2951
    %v4370 = vunpack.c.l.b16 %v2952
    %v4371 = vunpack.c.h.b16 %v2952
    %v4372 = vunpack.c.l.b16 %v2953
    %v4373 = vunpack.c.h.b16 %v2953
    %v4374 = vunpack.c.l.b16 %v2954
    %v4375 = vunpack.c.h.b16 %v2954
    %v4376 = vunpack.c.l.b16 %v2955
    %v4377 = vunpack.c.h.b16 %v2955
    %v4378 = vunpack.c.l.b16 %v2956
    %v4379 = vunpack.c.h.b16 %v2956
    %v4380 = vunpack.c.l.b16 %v2957
    %v4381 = vunpack.c.h.b16 %v2957
    %v4382 = vunpack.c.l.b16 %v2958
    %v4383 = vunpack.c.h.b16 %v2958
    %v4384 = vunpack.c.l.b16 %v2959
    %v4385 = vunpack.c.h.b16 %v2959
    %v4386 = vunpack.c.l.b16 %v2960
    %v4387 = vunpack.c.h.b16 %v2960
    %v4388 = vunpack.c.l.b16 %v2961
    %v4389 = vunpack.c.h.b16 %v2961
    %v4390 = vunpack.c.l.b16 %v2962
    %v4391 = vunpack.c.h.b16 %v2962
    %v4392 = vunpack.c.l.b16 %v2963
    %v4393 = vunpack.c.h.b16 %v2963
    %v4394 = vunpack.c.l.b16 %v2964
    %v4395 = vunpack.c.h.b16 %v2964
    %v4396 = vunpack.c.l.b16 %v2965
    %v4397 = vunpack.c.h.b16 %v2965
    %v4398 = vunpack.c.l.b16 %v2966
    %v4399 = vunpack.c.h.b16 %v2966
    %v4400 = vunpack.c.l.b16 %v2967
    %v4401 = vunpack.c.h.b16 %v2967
    %v4402 = vunpack.c.l.b16 %v2968
    %v4403 = vunpack.c.h.b16 %v2968
    %v4404 = vunpack.c.l.b16 %v2969
    %v4405 = vunpack.c.h.b16 %v2969
    %v4406 = vunpack.c.l.b16 %v2970
    %v4407 = vunpack.c.h.b16 %v2970
    %v4408 = vunpack.c.l.b16 %v2971
    %v4409 = vunpack.c.h.b16 %v2971
    %v4410 = vunpack.c.l.b16 %v2972
    %v4411 = vunpack.c.h.b16 %v2972
    %v4412 = vunpack.c.l.b16 %v2973
    %v4413 = vunpack.c.h.b16 %v2973
    %v4414 = vunpack.c.l.b16 %v2974
    %v4415 = vunpack.c.h.b16 %v2974
    %v4416 = vunpack.c.l.b16 %v2975
    %v4417 = vunpack.c.h.b16 %v2975
    %v4418 = vunpack.c.l.b16 %v2976
    %v4419 = vunpack.c.h.b16 %v2976
    %v4420 = vunpack.c.l.b16 %v2977
    %v4421 = vunpack.c.h.b16 %v2977
    %v4422 = vunpack.c.l.b16 %v2978
    %v4423 = vunpack.c.h.b16 %v2978
    %v4424 = vunpack.c.l.b16 %v2979
    %v4425 = vunpack.c.h.b16 %v2979
    %v4426 = vunpack.c.l.b16 %v2980
    %v4427 = vunpack.c.h.b16 %v2980
    %v4428 = vunpack.c.l.b16 %v2981
    %v4429 = vunpack.c.h.b16 %v2981
    %v4430 = vunpack.c.l.b16 %v2982
    %v4431 = vunpack.c.h.b16 %v2982
    %v4432 = vunpack.c.l.b16 %v2983
    %v4433 = vunpack.c.h.b16 %v2983
    %v4434 = vunpack.c.l.b16 %v2984
    %v4435 = vunpack.c.h.b16 %v2984
    %v4436 = vunpack.c.l.b16 %v2985
    %v4437 = vunpack.c.h.b16 %v2985
    %v4438 = vunpack.c.l.b16 %v2986
    %v4439 = vunpack.c.h.b16 %v2986
    %v4440 = vunpack.c.l.b16 %v2987
    %v4441 = vunpack.c.h.b16 %v2987
    %v4442 = vunpack.c.l.b16 %v2988
    %v4443 = vunpack.c.h.b16 %v2988
    %v4444 = vunpack.c.l.b16 %v2989
    %v4445 = vunpack.c.h.b16 %v2989
    %v4446 = vunpack.c.l.b16 %v2990
    %v4447 = vunpack.c.h.b16 %v2990
    %v4448 = vunpack.c.l.b16 %v2991
    %v4449 = vunpack.c.h.b16 %v2991
    %v4450 = vunpack.c.l.b16 %v2992
    %v4451 = vunpack.c.h.b16 %v2992
    %v4452 = vunpack.c.l.b16 %v2993
    %v4453 = vunpack.c.h.b16 %v2993
    %v4454 = vunpack.c.l.b16 %v2994
    %v4455 = vunpack.c.h.b16 %v2994
    %v4456 = vunpack.c.l.b16 %v2995
    %v4457 = vunpack.c.h.b16 %v2995
    %v4458 = vunpack.c.l.b16 %v2996
    %v4459 = vunpack.c.h.b16 %v2996
    %v4460 = vunpack.c.l.b16 %v2997
    %v4461 = vunpack.c.h.b16 %v2997
    %v4462 = vunpack.c.l.b16 %v2998
    %v4463 = vunpack.c.h.b16 %v2998
    %v4464 = vunpack.c.l.b16 %v2999
    %v4465 = vunpack.c.h.b16 %v2999
    %v4466 = vunpack.c.l.b16 %v3000
    %v4467 = vunpack.c.h.b16 %v3000
    %v4468 = vunpack.c.l.b16 %v3001
    %v4469 = vunpack.c.h.b16 %v3001
    %v4470 = vunpack.c.l.b16 %v3002
    %v4471 = vunpack.c.h.b16 %v3002
    %v4472 = vunpack.c.l.b16 %v3003
    %v4473 = vunpack.c.h.b16 %v3003
    %v4474 = vunpack.c.l.b16 %v3004
    %v4475 = vunpack.c.h.b16 %v3004
    %v4476 = vunpack.c.l.b16 %v3005
    %v4477 = vunpack.c.h.b16 %v3005
    %v4478 = vunpack.c.l.b16 %v3006
    %v4479 = vunpack.c.h.b16 %v3006
    %v4480 = vunpack.c.l.b16 %v3007
    %v4481 = vunpack.c.h.b16 %v3007
    %v4482 = vunpack.c.l.b16 %v3008
    %v4483 = vunpack.c.h.b16 %v3008
    %v4484 = vunpack.c.l.b16 %v3009
    %v4485 = vunpack.c.h.b16 %v3009
    %v4486 = vunpack.c.l.b16 %v3010
    %v4487 = vunpack.c.h.b16 %v3010
    %v4488 = vunpack.c.l.b16 %v3011
    %v4489 = vunpack.c.h.b16 %v3011
    %v4490 = vunpack.c.l.b16 %v3012
    %v4491 = vunpack.c.h.b16 %v3012
    %v4492 = vunpack.c.l.b16 %v3013
    %v4493 = vunpack.c.h.b16 %v3013
    %v4494 = vunpack.c.l.b16 %v3014
    %v4495 = vunpack.c.h.b16 %v3014
    %v4496 = vunpack.c.l.b16 %v3015
    %v4497 = vunpack.c.h.b16 %v3015
    %v4498 = vunpack.c.l.b16 %v3016
    %v4499 = vunpack.c.h.b16 %v3016
    %v4500 = vunpack.c.l.b16 %v3017
    %v4501 = vunpack.c.h.b16 %v3017
    %v4502 = vunpack.c.l.b16 %v3018
    %v4503 = vunpack.c.h.b16 %v3018
    %v4504 = vunpack.c.l.b16 %v3019
    %v4505 = vunpack.c.h.b16 %v3019
    %v4506 = vunpack.c.l.b16 %v3020
    %v4507 = vunpack.c.h.b16 %v3020
    %v4508 = vunpack.c.l.b16 %v3021
    %v4509 = vunpack.c.h.b16 %v3021
    %v4510 = vunpack.c.l.b16 %v3022
    %v4511 = vunpack.c.h.b16 %v3022
    %v4512 = vunpack.c.l.b16 %v3023
    %v4513 = vunpack.c.h.b16 %v3023
    %v4514 = vunpack.c.l.b16 %v3024
    %v4515 = vunpack.c.h.b16 %v3024
    %v4516 = vunpack.c.l.b16 %v3025
    %v4517 = vunpack.c.h.b16 %v3025
    %v4518 = vunpack.c.l.b16 %v3026
    %v4519 = vunpack.c.h.b16 %v3026
    %v4520 = vunpack.c.l.b16 %v3027
    %v4521 = vunpack.c.h.b16 %v3027
    %v4522 = vunpack.c.l.b16 %v3028
    %v4523 = vunpack.c.h.b16 %v3028
    %v4524 = vunpack.c.l.b16 %v3029
    %v4525 = vunpack.c.h.b16 %v3029
    %v4526 = vunpack.c.l.b16 %v3030
    %v4527 = vunpack.c.h.b16 %v3030
    %v4528 = vunpack.c.l.b16 %v3031
    %v4529 = vunpack.c.h.b16 %v3031
    %v4530 = vunpack.c.l.b16 %v3032
    %v4531 = vunpack.c.h.b16 %v3032
    %v4532 = vunpack.c.l.b16 %v3033
    %v4533 = vunpack.c.h.b16 %v3033
    %v4534 = vunpack.c.l.b16 %v3034
    %v4535 = vunpack.c.h.b16 %v3034
    %v4536 = vunpack.c.l.b16 %v3035
    %v4537 = vunpack.c.h.b16 %v3035
    %v4538 = vunpack.c.l.b16 %v3036
    %v4539 = vunpack.c.h.b16 %v3036
    %v4540 = vunpack.c.l.b16 %v3037
    %v4541 = vunpack.c.h.b16 %v3037
    %v4542 = vunpack.c.l.b16 %v3038
    %v4543 = vunpack.c.h.b16 %v3038
    %v4544 = vunpack.c.l.b16 %v3039
    %v4545 = vunpack.c.h.b16 %v3039
    %v4546 = vunpack.c.l.b16 %v3040
    %v4547 = vunpack.c.h.b16 %v3040
    %v4548 = vunpack.c.l.b16 %v3041
    %v4549 = vunpack.c.h.b16 %v3041
    %v4550 = vunpack.c.l.b16 %v3042
    %v4551 = vunpack.c.h.b16 %v3042
    %v4552 = vunpack.c.l.b16 %v3043
    %v4553 = vunpack.c.h.b16 %v3043
    %v4554 = vunpack.c.l.b16 %v3044
    %v4555 = vunpack.c.h.b16 %v3044
    %v4556 = vunpack.c.l.b16 %v3045
    %v4557 = vunpack.c.h.b16 %v3045
    %v4558 = vunpack.c.l.b16 %v3046
    %v4559 = vunpack.c.h.b16 %v3046
    %v4560 = vunpack.c.l.b16 %v3047
    %v4561 = vunpack.c.h.b16 %v3047
    %v4562 = vunpack.c.l.b16 %v3048
    %v4563 = vunpack.c.h.b16 %v3048
    %v4564 = vunpack.c.l.b16 %v3049
    %v4565 = vunpack.c.h.b16 %v3049
    %v4566 = vunpack.c.l.b16 %v3050
    %v4567 = vunpack.c.h.b16 %v3050
    %v4568 = vunpack.c.l.b16 %v3051
    %v4569 = vunpack.c.h.b16 %v3051
    %v4570 = vunpack.c.l.b16 %v3052
    %v4571 = vunpack.c.h.b16 %v3052
    %v4572 = vunpack.c.l.b16 %v3053
    %v4573 = vunpack.c.h.b16 %v3053
    %v4574 = vunpack.c.l.b16 %v3054
    %v4575 = vunpack.c.h.b16 %v3054
    %v4576 = vunpack.c.l.b16 %v3055
    %v4577 = vunpack.c.h.b16 %v3055
    %v4578 = vunpack.c.l.b16 %v3056
    %v4579 = vunpack.c.h.b16 %v3056
    %v4580 = vunpack.c.l.b16 %v3057
    %v4581 = vunpack.c.h.b16 %v3057
    %v4582 = vunpack.c.l.b16 %v3058
    %v4583 = vunpack.c.h.b16 %v3058
    %v4584 = vunpack.c.l.b16 %v3059
    %v4585 = vunpack.c.h.b16 %v3059
    %v4586 = vunpack.c.l.b16 %v3060
    %v4587 = vunpack.c.h.b16 %v3060
    %v4588 = vunpack.c.l.b16 %v3061
    %v4589 = vunpack.c.h.b16 %v3061
    %v4590 = vunpack.c.l.b16 %v3062
    %v4591 = vunpack.c.h.b16 %v3062
    %v4592 = vunpack.c.l.b16 %v3063
    %v4593 = vunpack.c.h.b16 %v3063
    %v4594 = vunpack.c.l.b16 %v3064
    %v4595 = vunpack.c.h.b16 %v3064
    %v4596 = vunpack.c.l.b16 %v3065
    %v4597 = vunpack.c.h.b16 %v3065
    %v4598 = vunpack.c.l.b16 %v3066
    %v4599 = vunpack.c.h.b16 %v3066
    %v4600 = vunpack.c.l.b16 %v3067
    %v4601 = vunpack.c.h.b16 %v3067
    %v4602 = vunpack.c.l.b16 %v3068
    %v4603 = vunpack.c.h.b16 %v3068
    %v4604 = vunpack.c.l.b16 %v3069
    %v4605 = vunpack.c.h.b16 %v3069
    %v4606 = vunpack.c.l.b16 %v3070
    %v4607 = vunpack.c.h.b16 %v3070
    %v4608 = vunpack.c.l.b16 %v3071
    %v4609 = vunpack.c.h.b16 %v3071
    %v4610 = vunpack.c.l.b16 %v3072
    %v4611 = vunpack.c.h.b16 %v3072
    %v4612 = vunpack.c.l.b16 %v3073
    %v4613 = vunpack.c.h.b16 %v3073
    %v4614 = vunpack.c.l.b16 %v3074
    %v4615 = vunpack.c.h.b16 %v3074
    %v4616 = vunpack.c.l.b16 %v3075
    %v4617 = vunpack.c.h.b16 %v3075
    %v4618 = vunpack.c.l.b16 %v3076
    %v4619 = vunpack.c.h.b16 %v3076
    %v4620 = vunpack.c.l.b16 %v3077
    %v4621 = vunpack.c.h.b16 %v3077
    %v4622 = vunpack.c.l.b16 %v3078
    %v4623 = vunpack.c.h.b16 %v3078
    %v4624 = vunpack.c.l.b16 %v3079
    %v4625 = vunpack.c.h.b16 %v3079
    %v4626 = vunpack.c.l.b16 %v3080
    %v4627 = vunpack.c.h.b16 %v3080
    %v4628 = vunpack.c.l.b16 %v3081
    %v4629 = vunpack.c.h.b16 %v3081
    %v4630 = vunpack.c.l.b16 %v3082
    %v4631 = vunpack.c.h.b16 %v3082
    %v4632 = vunpack.c.l.b16 %v3083
    %v4633 = vunpack.c.h.b16 %v3083
    %v4634 = vunpack.c.l.b16 %v3084
    %v4635 = vunpack.c.h.b16 %v3084
    %v4636 = vunpack.c.l.b16 %v3085
    %v4637 = vunpack.c.h.b16 %v3085
    %v4638 = vunpack.c.l.b16 %v3086
    %v4639 = vunpack.c.h.b16 %v3086
    %v4640 = vunpack.c.l.b16 %v3087
    %v4641 = vunpack.c.h.b16 %v3087
    %v4642 = vunpack.c.l.b16 %v3088
    %v4643 = vunpack.c.h.b16 %v3088
    %v4644 = vunpack.c.l.b16 %v3089
    %v4645 = vunpack.c.h.b16 %v3089
    %v4646 = vunpack.c.l.b16 %v3090
    %v4647 = vunpack.c.h.b16 %v3090
    %v4648 = vunpack.c.l.b16 %v3091
    %v4649 = vunpack.c.h.b16 %v3091
    %v4650 = vunpack.c.l.b16 %v3092
    %v4651 = vunpack.c.h.b16 %v3092
    %v4652 = vunpack.c.l.b16 %v3093
    %v4653 = vunpack.c.h.b16 %v3093
    %v4654 = vunpack.c.l.b16 %v3094
    %v4655 = vunpack.c.h.b16 %v3094
    %v4656 = vunpack.c.l.b16 %v3095
    %v4657 = vunpack.c.h.b16 %v3095
    %v4658 = vunpack.c.l.b16 %v3096
    %v4659 = vunpack.c.h.b16 %v3096
    %v4660 = vunpack.c.l.b16 %v3097
    %v4661 = vunpack.c.h.b16 %v3097
    %v4662 = vunpack.c.l.b16 %v3098
    %v4663 = vunpack.c.h.b16 %v3098
    %v4664 = vunpack.c.l.b16 %v3099
    %v4665 = vunpack.c.h.b16 %v3099
    %v4666 = vunpack.c.l.b16 %v3100
    %v4667 = vunpack.c.h.b16 %v3100
    %v4668 = vunpack.c.l.b16 %v3101
    %v4669 = vunpack.c.h.b16 %v3101
    %v4670 = vunpack.c.l.b16 %v3102
    %v4671 = vunpack.c.h.b16 %v3102
    %v4672 = vunpack.c.l.b16 %v3103
    %v4673 = vunpack.c.h.b16 %v3103
    %v4674 = vunpack.c.l.b16 %v3104
    %v4675 = vunpack.c.h.b16 %v3104
    %v4676 = vunpack.c.l.b16 %v3105
    %v4677 = vunpack.c.h.b16 %v3105
    %v4678 = vunpack.c.l.b16 %v3106
    %v4679 = vunpack.c.h.b16 %v3106
    %v4680 = vunpack.c.l.b16 %v3107
    %v4681 = vunpack.c.h.b16 %v3107
    %v4682 = vunpack.c.l.b16 %v3108
    %v4683 = vunpack.c.h.b16 %v3108
    %v4684 = vunpack.c.l.b16 %v3109
    %v4685 = vunpack.c.h.b16 %v3109
    %v4686 = vunpack.c.l.b16 %v3110
    %v4687 = vunpack.c.h.b16 %v3110
    %v4688 = vunpack.c.l.b16 %v3111
    %v4689 = vunpack.c.h.b16 %v3111
    %v4690 = vunpack.c.l.b16 %v3112
    %v4691 = vunpack.c.h.b16 %v3112
    %v4692 = vunpack.c.l.b16 %v3113
    %v4693 = vunpack.c.h.b16 %v3113
    %v4694 = vunpack.c.l.b16 %v3114
    %v4695 = vunpack.c.h.b16 %v3114
    %v4696 = vunpack.c.l.b16 %v3115
    %v4697 = vunpack.c.h.b16 %v3115
    %v4698 = vunpack.c.l.b16 %v3116
    %v4699 = vunpack.c.h.b16 %v3116
    %v4700 = vunpack.c.l.b16 %v3117
    %v4701 = vunpack.c.h.b16 %v3117
    %v4702 = vunpack.c.l.b16 %v3118
    %v4703 = vunpack.c.h.b16 %v3118
    %v4704 = vunpack.c.l.b16 %v3119
    %v4705 = vunpack.c.h.b16 %v3119
    %v4706 = vunpack.c.l.b16 %v3120
    %v4707 = vunpack.c.h.b16 %v3120
    %v4708 = vunpack.c.l.b16 %v3121
    %v4709 = vunpack.c.h.b16 %v3121
    %v4710 = vunpack.c.l.b16 %v3122
    %v4711 = vunpack.c.h.b16 %v3122
    %v4712 = vunpack.c.l.b16 %v3123
    %v4713 = vunpack.c.h.b16 %v3123
    %v4714 = vunpack.c.l.b16 %v3124
    %v4715 = vunpack.c.h.b16 %v3124
    %v4716 = vunpack.c.l.b16 %v3125
    %v4717 = vunpack.c.h.b16 %v3125
    %v4718 = vunpack.c.l.b16 %v3126
    %v4719 = vunpack.c.h.b16 %v3126
    %v4720 = vunpack.c.l.b16 %v3127
    %v4721 = vunpack.c.h.b16 %v3127
    %v4722 = vunpack.c.l.b16 %v3128
    %v4723 = vunpack.c.h.b16 %v3128
    %v4724 = vunpack.c.l.b16 %v3129
    %v4725 = vunpack.c.h.b16 %v3129
    %v4726 = vunpack.c.l.b16 %v3130
    %v4727 = vunpack.c.h.b16 %v3130
    %v4728 = vunpack.c.l.b16 %v3131
    %v4729 = vunpack.c.h.b16 %v3131
    %v4730 = vunpack.c.l.b16 %v3132
    %v4731 = vunpack.c.h.b16 %v3132
    %v4732 = vunpack.c.l.b16 %v3133
    %v4733 = vunpack.c.h.b16 %v3133
    %v4734 = vunpack.c.l.b16 %v3134
    %v4735 = vunpack.c.h.b16 %v3134
    %v4736 = vunpack.c.l.b16 %v3135
    %v4737 = vunpack.c.h.b16 %v3135
    %v4738 = vunpack.c.l.b16 %v3136
    %v4739 = vunpack.c.h.b16 %v3136
    %v4740 = vunpack.c.l.b16 %v3137
    %v4741 = vunpack.c.h.b16 %v3137
    %v4742 = vunpack.c.l.b16 %v3138
    %v4743 = vunpack.c.h.b16 %v3138
    %v4744 = vunpack.c.l.b16 %v3139
    %v4745 = vunpack.c.h.b16 %v3139
    %v4746 = vunpack.c.l.b16 %v3140
    %v4747 = vunpack.c.h.b16 %v3140
    %v4748 = vunpack.c.l.b16 %v3141
    %v4749 = vunpack.c.h.b16 %v3141
    %v4750 = vunpack.c.l.b16 %v3142
    %v4751 = vunpack.c.h.b16 %v3142
    %v4752 = vunpack.c.l.b16 %v3143
    %v4753 = vunpack.c.h.b16 %v3143
    %v4754 = vunpack.c.l.b16 %v3144
    %v4755 = vunpack.c.h.b16 %v3144
    %v4756 = vunpack.c.l.b16 %v3145
    %v4757 = vunpack.c.h.b16 %v3145
    %v4758 = vunpack.c.l.b16 %v3146
    %v4759 = vunpack.c.h.b16 %v3146
    %v4760 = vunpack.c.l.b16 %v3147
    %v4761 = vunpack.c.h.b16 %v3147
    %v4762 = vunpack.c.l.b16 %v3148
    %v4763 = vunpack.c.h.b16 %v3148
    %v4764 = vunpack.c.l.b16 %v3149
    %v4765 = vunpack.c.h.b16 %v3149
    %v4766 = vunpack.c.l.b16 %v3150
    %v4767 = vunpack.c.h.b16 %v3150
    %v4768 = vunpack.c.l.b16 %v3151
    %v4769 = vunpack.c.h.b16 %v3151
    %v4770 = vunpack.c.l.b16 %v3152
    %v4771 = vunpack.c.h.b16 %v3152
    %v4772 = vunpack.c.l.b16 %v3153
    %v4773 = vunpack.c.h.b16 %v3153
    %v4774 = vunpack.c.l.b16 %v3154
    %v4775 = vunpack.c.h.b16 %v3154
    %v4776 = vunpack.c.l.b16 %v3155
    %v4777 = vunpack.c.h.b16 %v3155
    %v4778 = vunpack.c.l.b16 %v3156
    %v4779 = vunpack.c.h.b16 %v3156
    %v4780 = vunpack.c.l.b16 %v3157
    %v4781 = vunpack.c.h.b16 %v3157
    %v4782 = vunpack.c.l.b16 %v3158
    %v4783 = vunpack.c.h.b16 %v3158
    %v4784 = vunpack.c.l.b16 %v3159
    %v4785 = vunpack.c.h.b16 %v3159
    %v4786 = vunpack.c.l.b16 %v3160
    %v4787 = vunpack.c.h.b16 %v3160
    %v4788 = vunpack.c.l.b16 %v3161
    %v4789 = vunpack.c.h.b16 %v3161
    %v4790 = vunpack.c.l.b16 %v3162
    %v4791 = vunpack.c.h.b16 %v3162
    %v4792 = vunpack.c.l.b16 %v3163
    %v4793 = vunpack.c.h.b16 %v3163
    %v4794 = vunpack.c.l.b16 %v3164
    %v4795 = vunpack.c.h.b16 %v3164
    %v4796 = vunpack.c.l.b16 %v3165
    %v4797 = vunpack.c.h.b16 %v3165
    %v4798 = vunpack.c.l.b16 %v3166
    %v4799 = vunpack.c.h.b16 %v3166
    %v4800 = vunpack.c.l.b16 %v3167
    %v4801 = vunpack.c.h.b16 %v3167
    %v4802 = vunpack.c.l.b16 %v3168
    %v4803 = vunpack.c.h.b16 %v3168
    %v4804 = vunpack.c.l.b16 %v3169
    %v4805 = vunpack.c.h.b16 %v3169
    %v4806 = vunpack.c.l.b16 %v3170
    %v4807 = vunpack.c.h.b16 %v3170
    %v4808 = vunpack.c.l.b16 %v3171
    %v4809 = vunpack.c.h.b16 %v3171
    %v4810 = vunpack.c.l.b16 %v3172
    %v4811 = vunpack.c.h.b16 %v3172
    %v4812 = vunpack.c.l.b16 %v3173
    %v4813 = vunpack.c.h.b16 %v3173
    %v4814 = vunpack.c.l.b16 %v3174
    %v4815 = vunpack.c.h.b16 %v3174
    %v4816 = vunpack.c.l.b16 %v3175
    %v4817 = vunpack.c.h.b16 %v3175
    %v4818 = vunpack.c.l.b16 %v3176
    %v4819 = vunpack.c.h.b16 %v3176
    %v4820 = vunpack.c.l.b16 %v3177
    %v4821 = vunpack.c.h.b16 %v3177
    %v4822 = vunpack.c.l.b16 %v3178
    %v4823 = vunpack.c.h.b16 %v3178
    %v4824 = vunpack.c.l.b16 %v3179
    %v4825 = vunpack.c.h.b16 %v3179
    %v4826 = vunpack.c.l.b16 %v3180
    %v4827 = vunpack.c.h.b16 %v3180
    %v4828 = vunpack.c.l.b16 %v3181
    %v4829 = vunpack.c.h.b16 %v3181
    %v4830 = vunpack.c.l.b16 %v3182
    %v4831 = vunpack.c.h.b16 %v3182
    %v4832 = vunpack.c.l.b16 %v3183
    %v4833 = vunpack.c.h.b16 %v3183
    %v4834 = vunpack.c.l.b16 %v3184
    %v4835 = vunpack.c.h.b16 %v3184
    %v4836 = vunpack.c.l.b16 %v3185
    %v4837 = vunpack.c.h.b16 %v3185
    %v4838 = vunpack.c.l.b16 %v3186
    %v4839 = vunpack.c.h.b16 %v3186
    %v4840 = vunpack.c.l.b16 %v3187
    %v4841 = vunpack.c.h.b16 %v3187
    %v4842 = vunpack.c.l.b16 %v3188
    %v4843 = vunpack.c.h.b16 %v3188
    %v4844 = vunpack.c.l.b16 %v3189
    %v4845 = vunpack.c.h.b16 %v3189
    %v4846 = vunpack.c.l.b16 %v3190
    %v4847 = vunpack.c.h.b16 %v3190
    %v4848 = vunpack.c.l.b16 %v3191
    %v4849 = vunpack.c.h.b16 %v3191
    %v4850 = vunpack.c.l.b16 %v3192
    %v4851 = vunpack.c.h.b16 %v3192
    %v4852 = vunpack.c.l.b16 %v3193
    %v4853 = vunpack.c.h.b16 %v3193
    %v4854 = vunpack.c.l.b16 %v3194
    %v4855 = vunpack.c.h.b16 %v3194
    %v4856 = vunpack.c.l.b16 %v3195
    %v4857 = vunpack.c.h.b16 %v3195
    %v4858 = vunpack.c.l.b16 %v3196
    %v4859 = vunpack.c.h.b16 %v3196
    %v4860 = vunpack.c.l.b16 %v3197
    %v4861 = vunpack.c.h.b16 %v3197
    %v4862 = vunpack.c.l.b16 %v3198
    %v4863 = vunpack.c.h.b16 %v3198
    %v4864 = vunpack.c.l.b16 %v3199
    %v4865 = vunpack.c.h.b16 %v3199
    %v4866 = vunpack.c.l.b16 %v3200
    %v4867 = vunpack.c.h.b16 %v3200
    %v4868 = vunpack.c.l.b16 %v3201
    %v4869 = vunpack.c.h.b16 %v3201
    %v4870 = vunpack.c.l.b16 %v3202
    %v4871 = vunpack.c.h.b16 %v3202
    %v4872 = vunpack.c.l.b16 %v3203
    %v4873 = vunpack.c.h.b16 %v3203
    %v4874 = vunpack.c.l.b16 %v3204
    %v4875 = vunpack.c.h.b16 %v3204
    %v4876 = vunpack.c.l.b16 %v3205
    %v4877 = vunpack.c.h.b16 %v3205
    %v4878 = vunpack.c.l.b16 %v3206
    %v4879 = vunpack.c.h.b16 %v3206
    %v4880 = vunpack.c.l.b16 %v3207
    %v4881 = vunpack.c.h.b16 %v3207
    %v4882 = vunpack.c.l.b16 %v3208
    %v4883 = vunpack.c.h.b16 %v3208
    %v4884 = vunpack.c.l.b16 %v3209
    %v4885 = vunpack.c.h.b16 %v3209
    %v4886 = vunpack.c.l.b16 %v3210
    %v4887 = vunpack.c.h.b16 %v3210
    %v4888 = vunpack.c.l.b16 %v3211
    %v4889 = vunpack.c.h.b16 %v3211
    %v4890 = vunpack.c.l.b16 %v3212
    %v4891 = vunpack.c.h.b16 %v3212
    %v4892 = vunpack.c.l.b16 %v3213
    %v4893 = vunpack.c.h.b16 %v3213
    %v4894 = vunpack.c.l.b16 %v3214
    %v4895 = vunpack.c.h.b16 %v3214
    %v4896 = vunpack.c.l.b16 %v3215
    %v4897 = vunpack.c.h.b16 %v3215
    %v4898 = vunpack.c.l.b16 %v3216
    %v4899 = vunpack.c.h.b16 %v3216
    %v4900 = vunpack.c.l.b16 %v3217
    %v4901 = vunpack.c.h.b16 %v3217
    %v4902 = vunpack.c.l.b16 %v3218
    %v4903 = vunpack.c.h.b16 %v3218
    %v4904 = vunpack.c.l.b16 %v3219
    %v4905 = vunpack.c.h.b16 %v3219
    %v4906 = vunpack.c.l.b16 %v3220
    %v4907 = vunpack.c.h.b16 %v3220
    %v4908 = vunpack.c.l.b16 %v3221
    %v4909 = vunpack.c.h.b16 %v3221
    %v4910 = vunpack.c.l.b16 %v3222
    %v4911 = vunpack.c.h.b16 %v3222
    %v4912 = vunpack.c.l.b16 %v3223
    %v4913 = vunpack.c.h.b16 %v3223
    %v4914 = vunpack.c.l.b16 %v3224
    %v4915 = vunpack.c.h.b16 %v3224
    %v4916 = vunpack.c.l.b16 %v3225
    %v4917 = vunpack.c.h.b16 %v3225
    %v4918 = vunpack.c.l.b16 %v3226
    %v4919 = vunpack.c.h.b16 %v3226
    %v4920 = vunpack.c.l.b16 %v3227
    %v4921 = vunpack.c.h.b16 %v3227
    %v4922 = vunpack.c.l.b16 %v3228
    %v4923 = vunpack.c.h.b16 %v3228
    %v4924 = vunpack.c.l.b16 %v3229
    %v4925 = vunpack.c.h.b16 %v3229
    %v4926 = vunpack.c.l.b16 %v3230
    %v4927 = vunpack.c.h.b16 %v3230
    %v4928 = vunpack.c.l.b16 %v3231
    %v4929 = vunpack.c.h.b16 %v3231
    %v4930 = vunpack.c.l.b16 %v3232
    %v4931 = vunpack.c.h.b16 %v3232
    %v4932 = vunpack.c.l.b16 %v3233
    %v4933 = vunpack.c.h.b16 %v3233
    %v4934 = vunpack.c.l.b16 %v3234
    %v4935 = vunpack.c.h.b16 %v3234
    %v4936 = vunpack.c.l.b16 %v3235
    %v4937 = vunpack.c.h.b16 %v3235
    %v4938 = vunpack.c.l.b16 %v3236
    %v4939 = vunpack.c.h.b16 %v3236
    %v4940 = vunpack.c.l.b16 %v3237
    %v4941 = vunpack.c.h.b16 %v3237
    %v4942 = vunpack.c.l.b16 %v3238
    %v4943 = vunpack.c.h.b16 %v3238
    %v4944 = vunpack.c.l.b16 %v3239
    %v4945 = vunpack.c.h.b16 %v3239
    %v4946 = vunpack.c.l.b16 %v3240
    %v4947 = vunpack.c.h.b16 %v3240
    %v4948 = vunpack.c.l.b16 %v3241
    %v4949 = vunpack.c.h.b16 %v3241
    %v4950 = vunpack.c.l.b16 %v3242
    %v4951 = vunpack.c.h.b16 %v3242
    %v4952 = vunpack.c.l.b16 %v3243
    %v4953 = vunpack.c.h.b16 %v3243
    %v4954 = vunpack.c.l.b16 %v3244
    %v4955 = vunpack.c.h.b16 %v3244
    %v4956 = vunpack.c.l.b16 %v3245
    %v4957 = vunpack.c.h.b16 %v3245
    %v4958 = vunpack.c.l.b16 %v3246
    %v4959 = vunpack.c.h.b16 %v3246
    %v4960 = vunpack.c.l.b16 %v3247
    %v4961 = vunpack.c.h.b16 %v3247
    %v4962 = vunpack.c.l.b16 %v3248
    %v4963 = vunpack.c.h.b16 %v3248
    %v4964 = vunpack.c.l.b16 %v3249
    %v4965 = vunpack.c.h.b16 %v3249
    %v4966 = vunpack.c.l.b16 %v3250
    %v4967 = vunpack.c.h.b16 %v3250
    %v4968 = vunpack.c.l.b16 %v3251
    %v4969 = vunpack.c.h.b16 %v3251
    %v4970 = vunpack.c.l.b16 %v3252
    %v4971 = vunpack.c.h.b16 %v3252
    %v4972 = vunpack.c.l.b16 %v3253
    %v4973 = vunpack.c.h.b16 %v3253
    %v4974 = vunpack.c.l.b16 %v3254
    %v4975 = vunpack.c.h.b16 %v3254
    %v4976 = vunpack.c.l.b16 %v3255
    %v4977 = vunpack.c.h.b16 %v3255
    %v4978 = vunpack.c.l.b16 %v3256
    %v4979 = vunpack.c.h.b16 %v3256
    %v4980 = vunpack.c.l.b16 %v3257
    %v4981 = vunpack.c.h.b16 %v3257
    %v4982 = vunpack.c.l.b16 %v3258
    %v4983 = vunpack.c.h.b16 %v3258
    %v4984 = vunpack.c.l.b16 %v3259
    %v4985 = vunpack.c.h.b16 %v3259
    %v4986 = vunpack.c.l.b16 %v3260
    %v4987 = vunpack.c.h.b16 %v3260
    %v4988 = vunpack.c.l.b16 %v3261
    %v4989 = vunpack.c.h.b16 %v3261
    %v4990 = vunpack.c.l.b16 %v3262
    %v4991 = vunpack.c.h.b16 %v3262
    %v4992 = vunpack.c.l.b16 %v3263
    %v4993 = vunpack.c.h.b16 %v3263
    %v4994 = vunpack.c.l.b16 %v3264
    %v4995 = vunpack.c.h.b16 %v3264
    %v4996 = vunpack.c.l.b16 %v3265
    %v4997 = vunpack.c.h.b16 %v3265
    %v4998 = vunpack.c.l.b16 %v3266
    %v4999 = vunpack.c.h.b16 %v3266
    %v5000 = vunpack.c.l.b16 %v3267
    %v5001 = vunpack.c.h.b16 %v3267
    %v5002 = vunpack.c.l.b16 %v3268
    %v5003 = vunpack.c.h.b16 %v3268
    %v5004 = vunpack.c.l.b16 %v3269
    %v5005 = vunpack.c.h.b16 %v3269
    %v5006 = vunpack.c.l.b16 %v3270
    %v5007 = vunpack.c.h.b16 %v3270
    %v5008 = vunpack.c.l.b16 %v3271
    %v5009 = vunpack.c.h.b16 %v3271
    %v5010 = vunpack.c.l.b16 %v3272
    %v5011 = vunpack.c.h.b16 %v3272
    %v5012 = vunpack.c.l.b16 %v3273
    %v5013 = vunpack.c.h.b16 %v3273
    %v5014 = vunpack.c.l.b16 %v3274
    %v5015 = vunpack.c.h.b16 %v3274
    %v5016 = vunpack.c.l.b16 %v3275
    %v5017 = vunpack.c.h.b16 %v3275
    %v5018 = vunpack.c.l.b16 %v3276
    %v5019 = vunpack.c.h.b16 %v3276
    %v5020 = vunpack.c.l.b16 %v3277
    %v5021 = vunpack.c.h.b16 %v3277
    %v5022 = vunpack.c.l.b16 %v3278
    %v5023 = vunpack.c.h.b16 %v3278
    %v5024 = vunpack.c.l.b16 %v3279
    %v5025 = vunpack.c.h.b16 %v3279
    %v5026 = vunpack.c.l.b16 %v3280
    %v5027 = vunpack.c.h.b16 %v3280
    %v5028 = vunpack.c.l.b16 %v3281
    %v5029 = vunpack.c.h.b16 %v3281
    %v5030 = vunpack.c.l.b16 %v3282
    %v5031 = vunpack.c.h.b16 %v3282
    %v5032 = vunpack.c.l.b16 %v3283
    %v5033 = vunpack.c.h.b16 %v3283
    %v5034 = vunpack.c.l.b16 %v3284
    %v5035 = vunpack.c.h.b16 %v3284
    %v5036 = vunpack.c.l.b16 %v3285
    %v5037 = vunpack.c.h.b16 %v3285
    %v5038 = vunpack.c.l.b16 %v3286
    %v5039 = vunpack.c.h.b16 %v3286
    %v5040 = vunpack.c.l.b16 %v3287
    %v5041 = vunpack.c.h.b16 %v3287
    %v5042 = vunpack.c.l.b16 %v3288
    %v5043 = vunpack.c.h.b16 %v3288
    %v5044 = vunpack.c.l.b16 %v3289
    %v5045 = vunpack.c.h.b16 %v3289
    %v5046 = vunpack.c.l.b16 %v3290
    %v5047 = vunpack.c.h.b16 %v3290
    %v5048 = vunpack.c.l.b16 %v3291
    %v5049 = vunpack.c.h.b16 %v3291
    %v5050 = vunpack.c.l.b16 %v3292
    %v5051 = vunpack.c.h.b16 %v3292
    %v5052 = vunpack.c.l.b16 %v3293
    %v5053 = vunpack.c.h.b16 %v3293
    %v5054 = vunpack.c.l.b16 %v3294
    %v5055 = vunpack.c.h.b16 %v3294
    %v5056 = vunpack.c.l.b16 %v3295
    %v5057 = vunpack.c.h.b16 %v3295
    %v5058 = vunpack.c.l.b16 %v3296
    %v5059 = vunpack.c.h.b16 %v3296
    %v5060 = vunpack.c.l.b16 %v3297
    %v5061 = vunpack.c.h.b16 %v3297
    %v5062 = vunpack.c.l.b16 %v3298
    %v5063 = vunpack.c.h.b16 %v3298
    %v5064 = vunpack.c.l.b16 %v3299
    %v5065 = vunpack.c.h.b16 %v3299
    %v5066 = vunpack.c.l.b16 %v3300
    %v5067 = vunpack.c.h.b16 %v3300
    %v5068 = vunpack.c.l.b16 %v3301
    %v5069 = vunpack.c.h.b16 %v3301
    %v5070 = vunpack.c.l.b16 %v3302
    %v5071 = vunpack.c.h.b16 %v3302
    %v5072 = vunpack.c.l.b16 %v3303
    %v5073 = vunpack.c.h.b16 %v3303
    %v5074 = vunpack.c.l.b16 %v3304
    %v5075 = vunpack.c.h.b16 %v3304
    %v5076 = vunpack.c.l.b16 %v3305
    %v5077 = vunpack.c.h.b16 %v3305
    %v5078 = vunpack.c.l.b16 %v3306
    %v5079 = vunpack.c.h.b16 %v3306
    %v5080 = vunpack.c.l.b16 %v3307
    %v5081 = vunpack.c.h.b16 %v3307
    %v5082 = vunpack.c.l.b16 %v3308
    %v5083 = vunpack.c.h.b16 %v3308
    %v5084 = vunpack.c.l.b16 %v3309
    %v5085 = vunpack.c.h.b16 %v3309
    %v5086 = vunpack.c.l.b16 %v3310
    %v5087 = vunpack.c.h.b16 %v3310
    %v5088 = vunpack.c.l.b16 %v3311
    %v5089 = vunpack.c.h.b16 %v3311
    %v5090 = vunpack.c.l.b16 %v3312
    %v5091 = vunpack.c.h.b16 %v3312
    %v5092 = vunpack.c.l.b16 %v3313
    %v5093 = vunpack.c.h.b16 %v3313
    %v5094 = vunpack.c.l.b16 %v3314
    %v5095 = vunpack.c.h.b16 %v3314
    %v5096 = vunpack.c.l.b16 %v3315
    %v5097 = vunpack.c.h.b16 %v3315
    %v5098 = vunpack.c.l.b16 %v3316
    %v5099 = vunpack.c.h.b16 %v3316
    %v5100 = vunpack.c.l.b16 %v3317
    %v5101 = vunpack.c.h.b16 %v3317
    %v5102 = vunpack.c.l.b16 %v3318
    %v5103 = vunpack.c.h.b16 %v3318
    %v5104 = vunpack.c.l.b16 %v3319
    %v5105 = vunpack.c.h.b16 %v3319
    %v5106 = vunpack.c.l.b16 %v3320
    %v5107 = vunpack.c.h.b16 %v3320
    %v5108 = vunpack.c.l.b16 %v3321
    %v5109 = vunpack.c.h.b16 %v3321
    %v5110 = vunpack.c.l.b16 %v3322
    %v5111 = vunpack.c.h.b16 %v3322
    %v5112 = vunpack.c.l.b16 %v3323
    %v5113 = vunpack.c.h.b16 %v3323
    %v5114 = vunpack.c.l.b16 %v3324
    %v5115 = vunpack.c.h.b16 %v3324
    %v5116 = vunpack.c.l.b16 %v3325
    %v5117 = vunpack.c.h.b16 %v3325
    %v5118 = vunpack.c.l.b16 %v3326
    %v5119 = vunpack.c.h.b16 %v3326
    %v5120 = vunpack.c.l.b16 %v3327
    %v5121 = vunpack.c.h.b16 %v3327
    %v5122 = vunpack.c.l.b16 %v3328
    %v5123 = vunpack.c.h.b16 %v3328
    %v5124 = vunpack.c.l.b16 %v3329
    %v5125 = vunpack.c.h.b16 %v3329
    %v5126 = vunpack.c.l.b16 %v3330
    %v5127 = vunpack.c.h.b16 %v3330
    %v5128 = vunpack.c.l.b16 %v3331
    %v5129 = vunpack.c.h.b16 %v3331
    %v5130 = vunpack.c.l.b16 %v3332
    %v5131 = vunpack.c.h.b16 %v3332
    %v5132 = vunpack.c.l.b16 %v3333
    %v5133 = vunpack.c.h.b16 %v3333
    %v5134 = vunpack.c.l.b16 %v3334
    %v5135 = vunpack.c.h.b16 %v3334
    %v5136 = vunpack.c.l.b16 %v3335
    %v5137 = vunpack.c.h.b16 %v3335
    %v5138 = vunpack.c.l.b16 %v3336
    %v5139 = vunpack.c.h.b16 %v3336
    %v5140 = vunpack.c.l.b16 %v3337
    %v5141 = vunpack.c.h.b16 %v3337
    %v5142 = vunpack.c.l.b16 %v3338
    %v5143 = vunpack.c.h.b16 %v3338
    %v5144 = vunpack.c.l.b16 %v3339
    %v5145 = vunpack.c.h.b16 %v3339
    %v5146 = vunpack.c.l.b16 %v3340
    %v5147 = vunpack.c.h.b16 %v3340
    %v5148 = vunpack.c.l.b16 %v3341
    %v5149 = vunpack.c.h.b16 %v3341
    %v5150 = vunpack.c.l.b16 %v3342
    %v5151 = vunpack.c.h.b16 %v3342
    %v5152 = vunpack.c.l.b16 %v3343
    %v5153 = vunpack.c.h.b16 %v3343
    %v5154 = vunpack.c.l.b16 %v3344
    %v5155 = vunpack.c.h.b16 %v3344
    %v5156 = vunpack.c.l.b16 %v3345
    %v5157 = vunpack.c.h.b16 %v3345
    %v5158 = vunpack.c.l.b16 %v3346
    %v5159 = vunpack.c.h.b16 %v3346
    %v5160 = vunpack.c.l.b16 %v3347
    %v5161 = vunpack.c.h.b16 %v3347
    %v5162 = vunpack.c.l.b16 %v3348
    %v5163 = vunpack.c.h.b16 %v3348
    %v5164 = vunpack.c.l.b16 %v3349
    %v5165 = vunpack.c.h.b16 %v3349
    %v5166 = vunpack.c.l.b16 %v3350
    %v5167 = vunpack.c.h.b16 %v3350
    %v5168 = vunpack.c.l.b16 %v3351
    %v5169 = vunpack.c.h.b16 %v3351
    %v5170 = vunpack.c.l.b16 %v3352
    %v5171 = vunpack.c.h.b16 %v3352
    %v5172 = vunpack.c.l.b16 %v3353
    %v5173 = vunpack.c.h.b16 %v3353
    %v5174 = vunpack.c.l.b16 %v3354
    %v5175 = vunpack.c.h.b16 %v3354
    %v5176 = vunpack.c.l.b16 %v3355
    %v5177 = vunpack.c.h.b16 %v3355
    %v5178 = vunpack.c.l.b16 %v3356
    %v5179 = vunpack.c.h.b16 %v3356
    %v5180 = vunpack.c.l.b16 %v3357
    %v5181 = vunpack.c.h.b16 %v3357
    %v5182 = vunpack.c.l.b16 %v3358
    %v5183 = vunpack.c.h.b16 %v3358
    %v5184 = vunpack.c.l.b16 %v3359
    %v5185 = vunpack.c.h.b16 %v3359
    %v5186 = vunpack.c.l.b16 %v3360
    %v5187 = vunpack.c.h.b16 %v3360
    %v5188 = vunpack.c.l.b16 %v3361
    %v5189 = vunpack.c.h.b16 %v3361
    %v5190 = vunpack.c.l.b16 %v3362
    %v5191 = vunpack.c.h.b16 %v3362
    %v5192 = vunpack.c.l.b16 %v3363
    %v5193 = vunpack.c.h.b16 %v3363
    %v5194 = vunpack.c.l.b16 %v3364
    %v5195 = vunpack.c.h.b16 %v3364
    %v5196 = vunpack.c.l.b16 %v3365
    %v5197 = vunpack.c.h.b16 %v3365
    %v5198 = vunpack.c.l.b16 %v3366
    %v5199 = vunpack.c.h.b16 %v3366
    %v5200 = vunpack.c.l.b16 %v3367
    %v5201 = vunpack.c.h.b16 %v3367
    %v5202 = vunpack.c.l.b16 %v3368
    %v5203 = vunpack.c.h.b16 %v3368
    %v5204 = vunpack.c.l.b16 %v3369
    %v5205 = vunpack.c.h.b16 %v3369
    %v5206 = vunpack.c.l.b16 %v3370
    %v5207 = vunpack.c.h.b16 %v3370
    %v5208 = vunpack.c.l.b16 %v3371
    %v5209 = vunpack.c.h.b16 %v3371
    %v5210 = vunpack.c.l.b16 %v3372
    %v5211 = vunpack.c.h.b16 %v3372
    %v5212 = vunpack.c.l.b16 %v3373
    %v5213 = vunpack.c.h.b16 %v3373
    %v5214 = vunpack.c.l.b16 %v3374
    %v5215 = vunpack.c.h.b16 %v3374
    %v5216 = vunpack.c.l.b16 %v3375
    %v5217 = vunpack.c.h.b16 %v3375
    %v5218 = vunpack.c.l.b16 %v3376
    %v5219 = vunpack.c.h.b16 %v3376
    %v5220 = vunpack.c.l.b16 %v3377
    %v5221 = vunpack.c.h.b16 %v3377
    %v5222 = vunpack.c.l.b16 %v3378
    %v5223 = vunpack.c.h.b16 %v3378
    %v5224 = vunpack.c.l.b16 %v3379
    %v5225 = vunpack.c.h.b16 %v3379
    %v5226 = vunpack.c.l.b16 %v3380
    %v5227 = vunpack.c.h.b16 %v3380
    %v5228 = vunpack.c.l.b16 %v3381
    %v5229 = vunpack.c.h.b16 %v3381
    %v5230 = vunpack.c.l.b16 %v3382
    %v5231 = vunpack.c.h.b16 %v3382
    %v5232 = vunpack.c.l.b16 %v3383
    %v5233 = vunpack.c.h.b16 %v3383
    %v5234 = vunpack.c.l.b16 %v3384
    %v5235 = vunpack.c.h.b16 %v3384
    %v5236 = vunpack.c.l.b16 %v3385
    %v5237 = vunpack.c.h.b16 %v3385
    %v5238 = vunpack.c.l.b16 %v3386
    %v5239 = vunpack.c.h.b16 %v3386
    %v5240 = vunpack.c.l.b16 %v3387
    %v5241 = vunpack.c.h.b16 %v3387
    %v5242 = vunpack.c.l.b16 %v3388
    %v5243 = vunpack.c.h.b16 %v3388
    %v5244 = vunpack.c.l.b16 %v3389
    %v5245 = vunpack.c.h.b16 %v3389
    %v5246 = vunpack.c.l.b16 %v3390
    %v5247 = vunpack.c.h.b16 %v3390
    %v5248 = vunpack.c.l.b16 %v3391
    %v5249 = vunpack.c.h.b16 %v3391
    %v5250 = vunpack.c.l.b16 %v3392
    %v5251 = vunpack.c.h.b16 %v3392
    %v5252 = vunpack.c.l.b16 %v3393
    %v5253 = vunpack.c.h.b16 %v3393
    %v5254 = vunpack.c.l.b16 %v3394
    %v5255 = vunpack.c.h.b16 %v3394
    %v5256 = vunpack.c.l.b16 %v3395
    %v5257 = vunpack.c.h.b16 %v3395
    %v5258 = vunpack.c.l.b16 %v3396
    %v5259 = vunpack.c.h.b16 %v3396
    %v5260 = vunpack.c.l.b16 %v3397
    %v5261 = vunpack.c.h.b16 %v3397
    %v5262 = vunpack.c.l.b16 %v3398
    %v5263 = vunpack.c.h.b16 %v3398
    %v5264 = vunpack.c.l.b16 %v3399
    %v5265 = vunpack.c.h.b16 %v3399
    %v5266 = vunpack.c.l.b16 %v3400
    %v5267 = vunpack.c.h.b16 %v3400
    %v5268 = vunpack.c.l.b16 %v3401
    %v5269 = vunpack.c.h.b16 %v3401
    %v5270 = vunpack.c.l.b16 %v3402
    %v5271 = vunpack.c.h.b16 %v3402
    %v5272 = vunpack.c.l.b16 %v3403
    %v5273 = vunpack.c.h.b16 %v3403
    %v5274 = vunpack.c.l.b16 %v3404
    %v5275 = vunpack.c.h.b16 %v3404
    %v5276 = vunpack.c.l.b16 %v3405
    %v5277 = vunpack.c.h.b16 %v3405
    %v5278 = vunpack.c.l.b16 %v3406
    %v5279 = vunpack.c.h.b16 %v3406
    %v5280 = vunpack.c.l.b16 %v3407
    %v5281 = vunpack.c.h.b16 %v3407
    %v5282 = vunpack.c.l.b16 %v3408
    %v5283 = vunpack.c.h.b16 %v3408
    %v5284 = vunpack.c.l.b16 %v3409
    %v5285 = vunpack.c.h.b16 %v3409
    %v5286 = vunpack.c.l.b16 %v3410
    %v5287 = vunpack.c.h.b16 %v3410
    %v5288 = vunpack.c.l.b16 %v3411
    %v5289 = vunpack.c.h.b16 %v3411
    %v5290 = vunpack.c.l.b16 %v3412
    %v5291 = vunpack.c.h.b16 %v3412
    %v5292 = vunpack.c.l.b16 %v3413
    %v5293 = vunpack.c.h.b16 %v3413
    %v5294 = vunpack.c.l.b16 %v3414
    %v5295 = vunpack.c.h.b16 %v3414
    %v5296 = vunpack.c.l.b16 %v3415
    %v5297 = vunpack.c.h.b16 %v3415
    %v5298 = vunpack.c.l.b16 %v3416
    %v5299 = vunpack.c.h.b16 %v3416
    %v5300 = vunpack.c.l.b16 %v3417
    %v5301 = vunpack.c.h.b16 %v3417
    %v5302 = vunpack.c.l.b16 %v3418
    %v5303 = vunpack.c.h.b16 %v3418
    %v5304 = vunpack.c.l.b16 %v3419
    %v5305 = vunpack.c.h.b16 %v3419
    %v5306 = vunpack.c.l.b16 %v3420
    %v5307 = vunpack.c.h.b16 %v3420
    %v5308 = vunpack.c.l.b16 %v3421
    %v5309 = vunpack.c.h.b16 %v3421
    %v5310 = vunpack.c.l.b16 %v3422
    %v5311 = vunpack.c.h.b16 %v3422
    %v5312 = vunpack.c.l.b16 %v3423
    %v5313 = vunpack.c.h.b16 %v3423
    %v5314 = vunpack.c.l.b16 %v3424
    %v5315 = vunpack.c.h.b16 %v3424
    %v5316 = vunpack.c.l.b16 %v3425
    %v5317 = vunpack.c.h.b16 %v3425
    %v5318 = vunpack.c.l.b16 %v3426
    %v5319 = vunpack.c.h.b16 %v3426
    %v5320 = vunpack.c.l.b16 %v3427
    %v5321 = vunpack.c.h.b16 %v3427
    %v5322 = vunpack.c.l.b16 %v3428
    %v5323 = vunpack.c.h.b16 %v3428
    %v5324 = vunpack.c.l.b16 %v3429
    %v5325 = vunpack.c.h.b16 %v3429
    %v5326 = vunpack.c.l.b16 %v3430
    %v5327 = vunpack.c.h.b16 %v3430
    %v5328 = vunpack.c.l.b16 %v3431
    %v5329 = vunpack.c.h.b16 %v3431
    %v5330 = vunpack.c.l.b16 %v3432
    %v5331 = vunpack.c.h.b16 %v3432
    %v5332 = vunpack.c.l.b16 %v3433
    %v5333 = vunpack.c.h.b16 %v3433
    %v5334 = vunpack.c.l.b16 %v3434
    %v5335 = vunpack.c.h.b16 %v3434
    %v5336 = vunpack.c.l.b16 %v3435
    %v5337 = vunpack.c.h.b16 %v3435
    %v5338 = vunpack.c.l.b16 %v3436
    %v5339 = vunpack.c.h.b16 %v3436
    %v5340 = vunpack.c.l.b16 %v3437
    %v5341 = vunpack.c.h.b16 %v3437
    %v5342 = vunpack.c.l.b16 %v3438
    %v5343 = vunpack.c.h.b16 %v3438
    %v5344 = vunpack.c.l.b16 %v3439
    %v5345 = vunpack.c.h.b16 %v3439
    %v5346 = vunpack.c.l.b16 %v3440
    %v5347 = vunpack.c.h.b16 %v3440
    %v5348 = vunpack.c.l.b16 %v3441
    %v5349 = vunpack.c.h.b16 %v3441
    %v5350 = vunpack.c.l.b16 %v3442
    %v5351 = vunpack.c.h.b16 %v3442
    %v5352 = vunpack.c.l.b16 %v3443
    %v5353 = vunpack.c.h.b16 %v3443
    %v5354 = vunpack.c.l.b16 %v3444
    %v5355 = vunpack.c.h.b16 %v3444
    %v5356 = vunpack.c.l.b16 %v3445
    %v5357 = vunpack.c.h.b16 %v3445
    %v5358 = vunpack.c.l.b16 %v3446
    %v5359 = vunpack.c.h.b16 %v3446
    %v5360 = vunpack.c.l.b16 %v3447
    %v5361 = vunpack.c.h.b16 %v3447
    %v5362 = vunpack.c.l.b16 %v3448
    %v5363 = vunpack.c.h.b16 %v3448
    %v5364 = vunpack.c.l.b16 %v3449
    %v5365 = vunpack.c.h.b16 %v3449
    %v5366 = vunpack.c.l.b16 %v3450
    %v5367 = vunpack.c.h.b16 %v3450
    %v5368 = vunpack.c.l.b16 %v3451
    %v5369 = vunpack.c.h.b16 %v3451
    %v5370 = vunpack.c.l.b16 %v3452
    %v5371 = vunpack.c.h.b16 %v3452
    %v5372 = vunpack.c.l.b16 %v3453
    %v5373 = vunpack.c.h.b16 %v3453
    %v5374 = vunpack.c.l.b16 %v3454
    %v5375 = vunpack.c.h.b16 %v3454
    %v5376 = vunpack.c.l.b16 %v3455
    %v5377 = vunpack.c.h.b16 %v3455
    %v5378 = vunpack.c.l.b16 %v3456
    %v5379 = vunpack.c.h.b16 %v3456
    %v5380 = vunpack.c.l.b16 %v3457
    %v5381 = vunpack.c.h.b16 %v3457
    %v5382 = vunpack.c.l.b16 %v3458
    %v5383 = vunpack.c.h.b16 %v3458
    %v5384 = vunpack.c.l.b16 %v3459
    %v5385 = vunpack.c.h.b16 %v3459
    %v5386 = vunpack.c.l.b16 %v3460
    %v5387 = vunpack.c.h.b16 %v3460
    %v5388 = vunpack.c.l.b16 %v3461
    %v5389 = vunpack.c.h.b16 %v3461
    %v5390 = vunpack.c.l.b16 %v3462
    %v5391 = vunpack.c.h.b16 %v3462
    %v5392 = vunpack.c.l.b16 %v3463
    %v5393 = vunpack.c.h.b16 %v3463
    %v5394 = vunpack.c.l.b16 %v3464
    %v5395 = vunpack.c.h.b16 %v3464
    %v5396 = vunpack.c.l.b16 %v3465
    %v5397 = vunpack.c.h.b16 %v3465
    %v5398 = vunpack.c.l.b16 %v3466
    %v5399 = vunpack.c.h.b16 %v3466
    %v5400 = vunpack.c.l.b16 %v3467
    %v5401 = vunpack.c.h.b16 %v3467
    %v5402 = vunpack.c.l.b16 %v3468
    %v5403 = vunpack.c.h.b16 %v3468
    %v5404 = vunpack.c.l.b16 %v3469
    %v5405 = vunpack.c.h.b16 %v3469
    %v5406 = vunpack.c.l.b16 %v3470
    %v5407 = vunpack.c.h.b16 %v3470
    %v5408 = vunpack.c.l.b16 %v3471
    %v5409 = vunpack.c.h.b16 %v3471
    %v5410 = vunpack.c.l.b16 %v3472
    %v5411 = vunpack.c.h.b16 %v3472
    %v5412 = vunpack.c.l.b16 %v3473
    %v5413 = vunpack.c.h.b16 %v3473
    %v5414 = vunpack.c.l.b16 %v3474
    %v5415 = vunpack.c.h.b16 %v3474
    %v5416 = vunpack.c.l.b16 %v3475
    %v5417 = vunpack.c.h.b16 %v3475
    %v5418 = vunpack.c.l.b16 %v3476
    %v5419 = vunpack.c.h.b16 %v3476
    %v5420 = vunpack.c.l.b16 %v3477
    %v5421 = vunpack.c.h.b16 %v3477
    %v5422 = vunpack.c.l.b16 %v3478
    %v5423 = vunpack.c.h.b16 %v3478
    %v5424 = vunpack.c.l.b16 %v3479
    %v5425 = vunpack.c.h.b16 %v3479
    %v5426 = vunpack.c.l.b16 %v3480
    %v5427 = vunpack.c.h.b16 %v3480
    %v5428 = vunpack.c.l.b16 %v3481
    %v5429 = vunpack.c.h.b16 %v3481
    %v5430 = vunpack.c.l.b16 %v3482
    %v5431 = vunpack.c.h.b16 %v3482
    %v5432 = vunpack.c.l.b16 %v3483
    %v5433 = vunpack.c.h.b16 %v3483
    %v5434 = vunpack.c.l.b16 %v3484
    %v5435 = vunpack.c.h.b16 %v3484
    %v5436 = vunpack.c.l.b16 %v3485
    %v5437 = vunpack.c.h.b16 %v3485
    %v5438 = vunpack.c.l.b16 %v3486
    %v5439 = vunpack.c.h.b16 %v3486
    %v5440 = vunpack.c.l.b16 %v3487
    %v5441 = vunpack.c.h.b16 %v3487
    %v5442 = vunpack.c.l.b16 %v3488
    %v5443 = vunpack.c.h.b16 %v3488
    %v5444 = vunpack.c.l.b16 %v3489
    %v5445 = vunpack.c.h.b16 %v3489
    %v5446 = vunpack.c.l.b16 %v3490
    %v5447 = vunpack.c.h.b16 %v3490
    %v5448 = vunpack.c.l.b16 %v3491
    %v5449 = vunpack.c.h.b16 %v3491
    %v5450 = vunpack.c.l.b16 %v3492
    %v5451 = vunpack.c.h.b16 %v3492
    %v5452 = vunpack.c.l.b16 %v3493
    %v5453 = vunpack.c.h.b16 %v3493
    %v5454 = vunpack.c.l.b16 %v3494
    %v5455 = vunpack.c.h.b16 %v3494
    %v5456 = vunpack.c.l.b16 %v3495
    %v5457 = vunpack.c.h.b16 %v3495
    %v5458 = vunpack.c.l.b16 %v3496
    %v5459 = vunpack.c.h.b16 %v3496
    %v5460 = vunpack.c.l.b16 %v3497
    %v5461 = vunpack.c.h.b16 %v3497
    %v5462 = vunpack.c.l.b16 %v3498
    %v5463 = vunpack.c.h.b16 %v3498
    %v5464 = vunpack.c.l.b16 %v3499
    %v5465 = vunpack.c.h.b16 %v3499
    %v5466 = vunpack.c.l.b16 %v3500
    %v5467 = vunpack.c.h.b16 %v3500
    %v5468 = vunpack.c.l.b16 %v3501
    %v5469 = vunpack.c.h.b16 %v3501
    %v5470 = vunpack.c.l.b16 %v3502
    %v5471 = vunpack.c.h.b16 %v3502
    %v5472 = vunpack.c.l.b16 %v3503
    %v5473 = vunpack.c.h.b16 %v3503
    %v5474 = vunpack.c.l.b16 %v3504
    %v5475 = vunpack.c.h.b16 %v3504
    %v5476 = vunpack.c.l.b16 %v3505
    %v5477 = vunpack.c.h.b16 %v3505
    %v5478 = vunpack.c.l.b16 %v3506
    %v5479 = vunpack.c.h.b16 %v3506
    %v5480 = vunpack.c.l.b16 %v3507
    %v5481 = vunpack.c.h.b16 %v3507
    %v5482 = vpack.c.b16 %v4212, %v4202
    %v5483 = vpack.c.b16 %v4213, %v4203
    %v5484 = vpack.c.b16 %v4214, %v4204
    %v5485 = vpack.c.b16 %v4215, %v4205
    %v5486 = vpack.c.b16 %v4216, %v4206
    %v5487 = vpack.c.b16 %v4217, %v4207
    %v5488 = vpack.c.b16 %v4218, %v4208
    %v5489 = vpack.c.b16 %v4219, %v4209
    %v5490 = vpack.c.b16 %v4220, %v4210
    %v5491 = vpack.c.b16 %v4221, %v4211
    %v5492 = vpack.c.b16 %v4232, %v4222
    %v5493 = vpack.c.b16 %v4233, %v4223
    %v5494 = vpack.c.b16 %v4234, %v4224
    %v5495 = vpack.c.b16 %v4235, %v4225
    %v5496 = vpack.c.b16 %v4236, %v4226
    %v5497 = vpack.c.b16 %v4237, %v4227
    %v5498 = vpack.c.b16 %v4238, %v4228
    %v5499 = vpack.c.b16 %v4239, %v4229
    %v5500 = vpack.c.b16 %v4240, %v4230
    %v5501 = vpack.c.b16 %v4241, %v4231
    %v5502 = vpack.c.b16 %v4252, %v4242
    %v5503 = vpack.c.b16 %v4253, %v4243
    %v5504 = vpack.c.b16 %v4254, %v4244
    %v5505 = vpack.c.b16 %v4255, %v4245
    %v5506 = vpack.c.b16 %v4256, %v4246
    %v5507 = vpack.c.b16 %v4257, %v4247
    %v5508 = vpack.c.b16 %v4258, %v4248
    %v5509 = vpack.c.b16 %v4259, %v4249
    %v5510 = vpack.c.b16 %v4260, %v4250
    %v5511 = vpack.c.b16 %v4261, %v4251
    %v5512 = vpack.c.b16 %v4272, %v4262
    %v5513 = vpack.c.b16 %v4273, %v4263
    %v5514 = vpack.c.b16 %v4274, %v4264
    %v5515 = vpack.c.b16 %v4275, %v4265
    %v5516 = vpack.c.b16 %v4276, %v4266
    %v5517 = vpack.c.b16 %v4277, %v4267
    %v5518 = vpack.c.b16 %v4278, %v4268
    %v5519 = vpack.c.b16 %v4279, %v4269
    %v5520 = vpack.c.b16 %v4280, %v4270
    %v5521 = vpack.c.b16 %v4281, %v4271
    %v5522 = vpack.c.b16 %v4292, %v4282
    %v5523 = vpack.c.b16 %v4293, %v4283
    %v5524 = vpack.c.b16 %v4294, %v4284
    %v5525 = vpack.c.b16 %v4295, %v4285
    %v5526 = vpack.c.b16 %v4296, %v4286
    %v5527 = vpack.c.b16 %v4297, %v4287
    %v5528 = vpack.c.b16 %v4298, %v4288
    %v5529 = vpack.c.b16 %v4299, %v4289
    %v5530 = vpack.c.b16 %v4300, %v4290
    %v5531 = vpack.c.b16 %v4301, %v4291
    %v5532 = vpack.c.b16 %v4312, %v4302
    %v5533 = vpack.c.b16 %v4313, %v4303
    %v5534 = vpack.c.b16 %v4314, %v4304
    %v5535 = vpack.c.b16 %v4315, %v4305
    %v5536 = vpack.c.b16 %v4316, %v4306
    %v5537 = vpack.c.b16 %v4317, %v4307
    %v5538 = vpack.c.b16 %v4318, %v4308
    %v5539 = vpack.c.b16 %v4319, %v4309
    %v5540 = vpack.c.b16 %v4320, %v4310
    %v5541 = vpack.c.b16 %v4321, %v4311
    %v5542 = vpack.c.b16 %v4332, %v4322
    %v5543 = vpack.c.b16 %v4333, %v4323
    %v5544 = vpack.c.b16 %v4334, %v4324
    %v5545 = vpack.c.b16 %v4335, %v4325
    %v5546 = vpack.c.b16 %v4336, %v4326
    %v5547 = vpack.c.b16 %v4337, %v4327
    %v5548 = vpack.c.b16 %v4338, %v4328
    %v5549 = vpack.c.b16 %v4339, %v4329
    %v5550 = vpack.c.b16 %v4340, %v4330
    %v5551 = vpack.c.b16 %v4341, %v4331
    %v5552 = vpack.c.b16 %v4352, %v4342
    %v5553 = vpack.c.b16 %v4353, %v4343
    %v5554 = vpack.c.b16 %v4354, %v4344
    %v5555 = vpack.c.b16 %v4355, %v4345
    %v5556 = vpack.c.b16 %v4356, %v4346
    %v5557 = vpack.c.b16 %v4357, %v4347
    %v5558 = vpack.c.b16 %v4358, %v4348
    %v5559 = vpack.c.b16 %v4359, %v4349
    %v5560 = vpack.c.b16 %v4360, %v4350
    %v5561 = vpack.c.b16 %v4361, %v4351
    %v5562 = vpack.c.b16 %v4372, %v4362
    %v5563 = vpack.c.b16 %v4373, %v4363
    %v5564 = vpack.c.b16 %v4374, %v4364
    %v5565 = vpack.c.b16 %v4375, %v4365
    %v5566 = vpack.c.b16 %v4376, %v4366
    %v5567 = vpack.c.b16 %v4377, %v4367
    %v5568 = vpack.c.b16 %v4378, %v4368
    %v5569 = vpack.c.b16 %v4379, %v4369
    %v5570 = vpack.c.b16 %v4380, %v4370
    %v5571 = vpack.c.b16 %v4381, %v4371
    %v5572 = vpack.c.b16 %v4392, %v4382
    %v5573 = vpack.c.b16 %v4393, %v4383
    %v5574 = vpack.c.b16 %v4394, %v4384
    %v5575 = vpack.c.b16 %v4395, %v4385
    %v5576 = vpack.c.b16 %v4396, %v4386
    %v5577 = vpack.c.b16 %v4397, %v4387
    %v5578 = vpack.c.b16 %v4398, %v4388
    %v5579 = vpack.c.b16 %v4399, %v4389
    %v5580 = vpack.c.b16 %v4400, %v4390
    %v5581 = vpack.c.b16 %v4401, %v4391
    %v5582 = vpack.c.b16 %v4412, %v4402
    %v5583 = vpack.c.b16 %v4413, %v4403
    %v5584 = vpack.c.b16 %v4414, %v4404
    %v5585 = vpack.c.b16 %v4415, %v4405
    %v5586 = vpack.c.b16 %v4416, %v4406
    %v5587 = vpack.c.b16 %v4417, %v4407
    %v5588 = vpack.c.b16 %v4418, %v4408
    %v5589 = vpack.c.b16 %v4419, %v4409
    %v5590 = vpack.c.b16 %v4420, %v4410
    %v5591 = vpack.c.b16 %v4421, %v4411
    %v5592 = vpack.c.b16 %v4432, %v4422
    %v5593 = vpack.c.b16 %v4433, %v4423
    %v5594 = vpack.c.b16 %v4434, %v4424
    %v5595 = vpack.c.b16 %v4435, %v4425
    %v5596 = vpack.c.b16 %v4436, %v4426
    %v5597 = vpack.c.b16 %v4437, %v4427
    %v5598 = vpack.c.b16 %v4438, %v4428
    %v5599 = vpack.c.b16 %v4439, %v4429
    %v5600 = vpack.c.b16 %v4440, %v4430
    %v5601 = vpack.c.b16 %v4441, %v4431
    %v5602 = vpack.c.b16 %v4452, %v4442
    %v5603 = vpack.c.b16 %v4453, %v4443
    %v5604 = vpack.c.b16 %v4454, %v4444
    %v5605 = vpack.c.b16 %v4455, %v4445
    %v5606 = vpack.c.b16 %v4456, %v4446
    %v5607 = vpack.c.b16 %v4457, %v4447
    %v5608 = vpack.c.b16 %v4458, %v4448
    %v5609 = vpack.c.b16 %v4459, %v4449
    %v5610 = vpack.c.b16 %v4460, %v4450
    %v5611 = vpack.c.b16 %v4461, %v4451
    %v5612 = vpack.c.b16 %v4472, %v4462
    %v5613 = vpack.c.b16 %v4473, %v4463
    %v5614 = vpack.c.b16 %v4474, %v4464
    %v5615 = vpack.c.b16 %v4475, %v4465
    %v5616 = vpack.c.b16 %v4476, %v4466
    %v5617 = vpack.c.b16 %v4477, %v4467
    %v5618 = vpack.c.b16 %v4478, %v4468
    %v5619 = vpack.c.b16 %v4479, %v4469
    %v5620 = vpack.c.b16 %v4480, %v4470
    %v5621 = vpack.c.b16 %v4481, %v4471
    %v5622 = vpack.c.b16 %v4492, %v4482
    %v5623 = vpack.c.b16 %v4493, %v4483
    %v5624 = vpack.c.b16 %v4494, %v4484
    %v5625 = vpack.c.b16 %v4495, %v4485
    %v5626 = vpack.c.b16 %v4496, %v4486
    %v5627 = vpack.c.b16 %v4497, %v4487
    %v5628 = vpack.c.b16 %v4498, %v4488
    %v5629 = vpack.c.b16 %v4499, %v4489
    %v5630 = vpack.c.b16 %v4500, %v4490
    %v5631 = vpack.c.b16 %v4501, %v4491
    %v5632 = vpack.c.b16 %v4512, %v4502
    %v5633 = vpack.c.b16 %v4513, %v4503
    %v5634 = vpack.c.b16 %v4514, %v4504
    %v5635 = vpack.c.b16 %v4515, %v4505
    %v5636 = vpack.c.b16 %v4516, %v4506
    %v5637 = vpack.c.b16 %v4517, %v4507
    %v5638 = vpack.c.b16 %v4518, %v4508
    %v5639 = vpack.c.b16 %v4519, %v4509
    %v5640 = vpack.c.b16 %v4520, %v4510
    %v5641 = vpack.c.b16 %v4521, %v4511
    %v5642 = vpack.c.b16 %v4532, %v4522
    %v5643 = vpack.c.b16 %v4533, %v4523
    %v5644 = vpack.c.b16 %v4534, %v4524
    %v5645 = vpack.c.b16 %v4535, %v4525
    %v5646 = vpack.c.b16 %v4536, %v4526
    %v5647 = vpack.c.b16 %v4537, %v4527
    %v5648 = vpack.c.b16 %v4538, %v4528
    %v5649 = vpack.c.b16 %v4539, %v4529
    %v5650 = vpack.c.b16 %v4540, %v4530
    %v5651 = vpack.c.b16 %v4541, %v4531
    %v5652 = vpack.c.b16 %v4552, %v4542
    %v5653 = vpack.c.b16 %v4553, %v4543
    %v5654 = vpack.c.b16 %v4554, %v4544
    %v5655 = vpack.c.b16 %v4555, %v4545
    %v5656 = vpack.c.b16 %v4556, %v4546
    %v5657 = vpack.c.b16 %v4557, %v4547
    %v5658 = vpack.c.b16 %v4558, %v4548
    %v5659 = vpack.c.b16 %v4559, %v4549
    %v5660 = vpack.c.b16 %v4560, %v4550
    %v5661 = vpack.c.b16 %v4561, %v4551
    %v5662 = vpack.c.b16 %v4572, %v4562
    %v5663 = vpack.c.b16 %v4573, %v4563
    %v5664 = vpack.c.b16 %v4574, %v4564
    %v5665 = vpack.c.b16 %v4575, %v4565
    %v5666 = vpack.c.b16 %v4576, %v4566
    %v5667 = vpack.c.b16 %v4577, %v4567
    %v5668 = vpack.c.b16 %v4578, %v4568
    %v5669 = vpack.c.b16 %v4579, %v4569
    %v5670 = vpack.c.b16 %v4580, %v4570
    %v5671 = vpack.c.b16 %v4581, %v4571
    %v5672 = vpack.c.b16 %v4592, %v4582
    %v5673 = vpack.c.b16 %v4593, %v4583
    %v5674 = vpack.c.b16 %v4594, %v4584
    %v5675 = vpack.c.b16 %v4595, %v4585
    %v5676 = vpack.c.b16 %v4596, %v4586
    %v5677 = vpack.c.b16 %v4597, %v4587
    %v5678 = vpack.c.b16 %v4598, %v4588
    %v5679 = vpack.c.b16 %v4599, %v4589
    %v5680 = vpack.c.b16 %v4600, %v4590
    %v5681 = vpack.c.b16 %v4601, %v4591
    %v5682 = vpack.c.b16 %v4612, %v4602
    %v5683 = vpack.c.b16 %v4613, %v4603
    %v5684 = vpack.c.b16 %v4614, %v4604
    %v5685 = vpack.c.b16 %v4615, %v4605
    %v5686 = vpack.c.b16 %v4616, %v4606
    %v5687 = vpack.c.b16 %v4617, %v4607
    %v5688 = vpack.c.b16 %v4618, %v4608
    %v5689 = vpack.c.b16 %v4619, %v4609
    %v5690 = vpack.c.b16 %v4620, %v4610
    %v5691 = vpack.c.b16 %v4621, %v4611
    %v5692 = vpack.c.b16 %v4632, %v4622
    %v5693 = vpack.c.b16 %v4633, %v4623
    %v5694 = vpack.c.b16 %v4634, %v4624
    %v5695 = vpack.c.b16 %v4635, %v4625
    %v5696 = vpack.c.b16 %v4636, %v4626
    %v5697 = vpack.c.b16 %v4637, %v4627
    %v5698 = vpack.c.b16 %v4638, %v4628
    %v5699 = vpack.c.b16 %v4639, %v4629
    %v5700 = vpack.c.b16 %v4640, %v4630
    %v5701 = vpack.c.b16 %v4641, %v4631
    %v5702 = vpack.c.b16 %v4652, %v4642
    %v5703 = vpack.c.b16 %v4653, %v4643
    %v5704 = vpack.c.b16 %v4654, %v4644
    %v5705 = vpack.c.b16 %v4655, %v4645
    %v5706 = vpack.c.b16 %v4656, %v4646
    %v5707 = vpack.c.b16 %v4657, %v4647
    %v5708 = vpack.c.b16 %v4658, %v4648
    %v5709 = vpack.c.b16 %v4659, %v4649
    %v5710 = vpack.c.b16 %v4660, %v4650
    %v5711 = vpack.c.b16 %v4661, %v4651
    %v5712 = vpack.c.b16 %v4672, %v4662
    %v5713 = vpack.c.b16 %v4673, %v4663
    %v5714 = vpack.c.b16 %v4674, %v4664
    %v5715 = vpack.c.b16 %v4675, %v4665
    %v5716 = vpack.c.b16 %v4676, %v4666
    %v5717 = vpack.c.b16 %v4677, %v4667
    %v5718 = vpack.c.b16 %v4678, %v4668
    %v5719 = vpack.c.b16 %v4679, %v4669
    %v5720 = vpack.c.b16 %v4680, %v4670
    %v5721 = vpack.c.b16 %v4681, %v4671
    %v5722 = vpack.c.b16 %v4692, %v4682
    %v5723 = vpack.c.b16 %v4693, %v4683
    %v5724 = vpack.c.b16 %v4694, %v4684
    %v5725 = vpack.c.b16 %v4695, %v4685
    %v5726 = vpack.c.b16 %v4696, %v4686
    %v5727 = vpack.c.b16 %v4697, %v4687
    %v5728 = vpack.c.b16 %v4698, %v4688
    %v5729 = vpack.c.b16 %v4699, %v4689
    %v5730 = vpack.c.b16 %v4700, %v4690
    %v5731 = vpack.c.b16 %v4701, %v4691
    %v5732 = vpack.c.b16 %v4712, %v4702
    %v5733 = vpack.c.b16 %v4713, %v4703
    %v5734 = vpack.c.b16 %v4714, %v4704
    %v5735 = vpack.c.b16 %v4715, %v4705
    %v5736 = vpack.c.b16 %v4716, %v4706
    %v5737 = vpack.c.b16 %v4717, %v4707
    %v5738 = vpack.c.b16 %v4718, %v4708
    %v5739 = vpack.c.b16 %v4719, %v4709
    %v5740 = vpack.c.b16 %v4720, %v4710
    %v5741 = vpack.c.b16 %v4721, %v4711
    %v5742 = vpack.c.b16 %v4732, %v4722
    %v5743 = vpack.c.b16 %v4733, %v4723
    %v5744 = vpack.c.b16 %v4734, %v4724
    %v5745 = vpack.c.b16 %v4735, %v4725
    %v5746 = vpack.c.b16 %v4736, %v4726
    %v5747 = vpack.c.b16 %v4737, %v4727
    %v5748 = vpack.c.b16 %v4738, %v4728
    %v5749 = vpack.c.b16 %v4739, %v4729
    %v5750 = vpack.c.b16 %v4740, %v4730
    %v5751 = vpack.c.b16 %v4741, %v4731
    %v5752 = vpack.c.b16 %v4752, %v4742
    %v5753 = vpack.c.b16 %v4753, %v4743
    %v5754 = vpack.c.b16 %v4754, %v4744
    %v5755 = vpack.c.b16 %v4755, %v4745
    %v5756 = vpack.c.b16 %v4756, %v4746
    %v5757 = vpack.c.b16 %v4757, %v4747
    %v5758 = vpack.c.b16 %v4758, %v4748
    %v5759 = vpack.c.b16 %v4759, %v4749
    %v5760 = vpack.c.b16 %v4760, %v4750
    %v5761 = vpack.c.b16 %v4761, %v4751
    %v5762 = vpack.c.b16 %v4772, %v4762
    %v5763 = vpack.c.b16 %v4773, %v4763
    %v5764 = vpack.c.b16 %v4774, %v4764
    %v5765 = vpack.c.b16 %v4775, %v4765
    %v5766 = vpack.c.b16 %v4776, %v4766
    %v5767 = vpack.c.b16 %v4777, %v4767
    %v5768 = vpack.c.b16 %v4778, %v4768
    %v5769 = vpack.c.b16 %v4779, %v4769
    %v5770 = vpack.c.b16 %v4780, %v4770
    %v5771 = vpack.c.b16 %v4781, %v4771
    %v5772 = vpack.c.b16 %v4792, %v4782
    %v5773 = vpack.c.b16 %v4793, %v4783
    %v5774 = vpack.c.b16 %v4794, %v4784
    %v5775 = vpack.c.b16 %v4795, %v4785
    %v5776 = vpack.c.b16 %v4796, %v4786
    %v5777 = vpack.c.b16 %v4797, %v4787
    %v5778 = vpack.c.b16 %v4798, %v4788
    %v5779 = vpack.c.b16 %v4799, %v4789
    %v5780 = vpack.c.b16 %v4800, %v4790
    %v5781 = vpack.c.b16 %v4801, %v4791
    %v5782 = vpack.c.b16 %v4812, %v4802
    %v5783 = vpack.c.b16 %v4813, %v4803
    %v5784 = vpack.c.b16 %v4814, %v4804
    %v5785 = vpack.c.b16 %v4815, %v4805
    %v5786 = vpack.c.b16 %v4816, %v4806
    %v5787 = vpack.c.b16 %v4817, %v4807
    %v5788 = vpack.c.b16 %v4818, %v4808
    %v5789 = vpack.c.b16 %v4819, %v4809
    %v5790 = vpack.c.b16 %v4820, %v4810
    %v5791 = vpack.c.b16 %v4821, %v4811
    %v5792 = vpack.c.b16 %v4832, %v4822
    %v5793 = vpack.c.b16 %v4833, %v4823
    %v5794 = vpack.c.b16 %v4834, %v4824
    %v5795 = vpack.c.b16 %v4835, %v4825
    %v5796 = vpack.c.b16 %v4836, %v4826
    %v5797 = vpack.c.b16 %v4837, %v4827
    %v5798 = vpack.c.b16 %v4838, %v4828
    %v5799 = vpack.c.b16 %v4839, %v4829
    %v5800 = vpack.c.b16 %v4840, %v4830
    %v5801 = vpack.c.b16 %v4841, %v4831
    %v5802 = vpack.c.b16 %v4852, %v4842
    %v5803 = vpack.c.b16 %v4853, %v4843
    %v5804 = vpack.c.b16 %v4854, %v4844
    %v5805 = vpack.c.b16 %v4855, %v4845
    %v5806 = vpack.c.b16 %v4856, %v4846
    %v5807 = vpack.c.b16 %v4857, %v4847
    %v5808 = vpack.c.b16 %v4858, %v4848
    %v5809 = vpack.c.b16 %v4859, %v4849
    %v5810 = vpack.c.b16 %v4860, %v4850
    %v5811 = vpack.c.b16 %v4861, %v4851
    %v5812 = vpack.c.b16 %v4872, %v4862
    %v5813 = vpack.c.b16 %v4873, %v4863
    %v5814 = vpack.c.b16 %v4874, %v4864
    %v5815 = vpack.c.b16 %v4875, %v4865
    %v5816 = vpack.c.b16 %v4876, %v4866
    %v5817 = vpack.c.b16 %v4877, %v4867
    %v5818 = vpack.c.b16 %v4878, %v4868
    %v5819 = vpack.c.b16 %v4879, %v4869
    %v5820 = vpack.c.b16 %v4880, %v4870
    %v5821 = vpack.c.b16 %v4881, %v4871
    %v5822 = vpack.c.b16 %v4892, %v4882
    %v5823 = vpack.c.b16 %v4893, %v4883
    %v5824 = vpack.c.b16 %v4894, %v4884
    %v5825 = vpack.c.b16 %v4895, %v4885
    %v5826 = vpack.c.b16 %v4896, %v4886
    %v5827 = vpack.c.b16 %v4897, %v4887
    %v5828 = vpack.c.b16 %v4898, %v4888
    %v5829 = vpack.c.b16 %v4899, %v4889
    %v5830 = vpack.c.b16 %v4900, %v4890
    %v5831 = vpack.c.b16 %v4901, %v4891
    %v5832 = vpack.c.b16 %v4912, %v4902
    %v5833 = vpack.c.b16 %v4913, %v4903
    %v5834 = vpack.c.b16 %v4914, %v4904
    %v5835 = vpack.c.b16 %v4915, %v4905
    %v5836 = vpack.c.b16 %v4916, %v4906
    %v5837 = vpack.c.b16 %v4917, %v4907
    %v5838 = vpack.c.b16 %v4918, %v4908
    %v5839 = vpack.c.b16 %v4919, %v4909
    %v5840 = vpack.c.b16 %v4920, %v4910
    %v5841 = vpack.c.b16 %v4921, %v4911
    %v5842 = vpack.c.b16 %v4932, %v4922
    %v5843 = vpack.c.b16 %v4933, %v4923
    %v5844 = vpack.c.b16 %v4934, %v4924
    %v5845 = vpack.c.b16 %v4935, %v4925
    %v5846 = vpack.c.b16 %v4936, %v4926
    %v5847 = vpack.c.b16 %v4937, %v4927
    %v5848 = vpack.c.b16 %v4938, %v4928
    %v5849 = vpack.c.b16 %v4939, %v4929
    %v5850 = vpack.c.b16 %v4940, %v4930
    %v5851 = vpack.c.b16 %v4941, %v4931
    %v5852 = vpack.c.b16 %v4952, %v4942
    %v5853 = vpack.c.b16 %v4953, %v4943
    %v5854 = vpack.c.b16 %v4954, %v4944
    %v5855 = vpack.c.b16 %v4955, %v4945
    %v5856 = vpack.c.b16 %v4956, %v4946
    %v5857 = vpack.c.b16 %v4957, %v4947
    %v5858 = vpack.c.b16 %v4958, %v4948
    %v5859 = vpack.c.b16 %v4959, %v4949
    %v5860 = vpack.c.b16 %v4960, %v4950
    %v5861 = vpack.c.b16 %v4961, %v4951
    %v5862 = vpack.c.b16 %v4972, %v4962
    %v5863 = vpack.c.b16 %v4973, %v4963
    %v5864 = vpack.c.b16 %v4974, %v4964
    %v5865 = vpack.c.b16 %v4975, %v4965
    %v5866 = vpack.c.b16 %v4976, %v4966
    %v5867 = vpack.c.b16 %v4977, %v4967
    %v5868 = vpack.c.b16 %v4978, %v4968
    %v5869 = vpack.c.b16 %v4979, %v4969
    %v5870 = vpack.c.b16 %v4980, %v4970
    %v5871 = vpack.c.b16 %v4981, %v4971
    %v5872 = vpack.c.b16 %v4992, %v4982
    %v5873 = vpack.c.b16 %v4993, %v4983
    %v5874 = vpack.c.b16 %v4994, %v4984
    %v5875 = vpack.c.b16 %v4995, %v4985
    %v5876 = vpack.c.b16 %v4996, %v4986
    %v5877 = vpack.c.b16 %v4997, %v4987
    %v5878 = vpack.c.b16 %v4998, %v4988
    %v5879 = vpack.c.b16 %v4999, %v4989
    %v5880 = vpack.c.b16 %v5000, %v4990
    %v5881 = vpack.c.b16 %v5001, %v4991
    %v5882 = vpack.c.b16 %v5012, %v5002
    %v5883 = vpack.c.b16 %v5013, %v5003
    %v5884 = vpack.c.b16 %v5014, %v5004
    %v5885 = vpack.c.b16 %v5015, %v5005
    %v5886 = vpack.c.b16 %v5016, %v5006
    %v5887 = vpack.c.b16 %v5017, %v5007
    %v5888 = vpack.c.b16 %v5018, %v5008
    %v5889 = vpack.c.b16 %v5019, %v5009
    %v5890 = vpack.c.b16 %v5020, %v5010
    %v5891 = vpack.c.b16 %v5021, %v5011
    %v5892 = vpack.c.b16 %v5032, %v5022
    %v5893 = vpack.c.b16 %v5033, %v5023
    %v5894 = vpack.c.b16 %v5034, %v5024
    %v5895 = vpack.c.b16 %v5035, %v5025
    %v5896 = vpack.c.b16 %v5036, %v5026
    %v5897 = vpack.c.b16 %v5037, %v5027
    %v5898 = vpack.c.b16 %v5038, %v5028
    %v5899 = vpack.c.b16 %v5039, %v5029
    %v5900 = vpack.c.b16 %v5040, %v5030
    %v5901 = vpack.c.b16 %v5041, %v5031
    %v5902 = vpack.c.b16 %v5052, %v5042
    %v5903 = vpack.c.b16 %v5053, %v5043
    %v5904 = vpack.c.b16 %v5054, %v5044
    %v5905 = vpack.c.b16 %v5055, %v5045
    %v5906 = vpack.c.b16 %v5056, %v5046
    %v5907 = vpack.c.b16 %v5057, %v5047
    %v5908 = vpack.c.b16 %v5058, %v5048
    %v5909 = vpack.c.b16 %v5059, %v5049
    %v5910 = vpack.c.b16 %v5060, %v5050
    %v5911 = vpack.c.b16 %v5061, %v5051
    %v5912 = vpack.c.b16 %v5072, %v5062
    %v5913 = vpack.c.b16 %v5073, %v5063
    %v5914 = vpack.c.b16 %v5074, %v5064
    %v5915 = vpack.c.b16 %v5075, %v5065
    %v5916 = vpack.c.b16 %v5076, %v5066
    %v5917 = vpack.c.b16 %v5077, %v5067
    %v5918 = vpack.c.b16 %v5078, %v5068
    %v5919 = vpack.c.b16 %v5079, %v5069
    %v5920 = vpack.c.b16 %v5080, %v5070
    %v5921 = vpack.c.b16 %v5081, %v5071
    %v5922 = vpack.c.b16 %v5092, %v5082
    %v5923 = vpack.c.b16 %v5093, %v5083
    %v5924 = vpack.c.b16 %v5094, %v5084
    %v5925 = vpack.c.b16 %v5095, %v5085
    %v5926 = vpack.c.b16 %v5096, %v5086
    %v5927 = vpack.c.b16 %v5097, %v5087
    %v5928 = vpack.c.b16 %v5098, %v5088
    %v5929 = vpack.c.b16 %v5099, %v5089
    %v5930 = vpack.c.b16 %v5100, %v5090
    %v5931 = vpack.c.b16 %v5101, %v5091
    %v5932 = vpack.c.b16 %v5112, %v5102
    %v5933 = vpack.c.b16 %v5113, %v5103
    %v5934 = vpack.c.b16 %v5114, %v5104
    %v5935 = vpack.c.b16 %v5115, %v5105
    %v5936 = vpack.c.b16 %v5116, %v5106
    %v5937 = vpack.c.b16 %v5117, %v5107
    %v5938 = vpack.c.b16 %v5118, %v5108
    %v5939 = vpack.c.b16 %v5119, %v5109
    %v5940 = vpack.c.b16 %v5120, %v5110
    %v5941 = vpack.c.b16 %v5121, %v5111
    %v5942 = vpack.c.b16 %v5132, %v5122
    %v5943 = vpack.c.b16 %v5133, %v5123
    %v5944 = vpack.c.b16 %v5134, %v5124
    %v5945 = vpack.c.b16 %v5135, %v5125
    %v5946 = vpack.c.b16 %v5136, %v5126
    %v5947 = vpack.c.b16 %v5137, %v5127
    %v5948 = vpack.c.b16 %v5138, %v5128
    %v5949 = vpack.c.b16 %v5139, %v5129
    %v5950 = vpack.c.b16 %v5140, %v5130
    %v5951 = vpack.c.b16 %v5141, %v5131
    %v5952 = vpack.c.b16 %v5152, %v5142
    %v5953 = vpack.c.b16 %v5153, %v5143
    %v5954 = vpack.c.b16 %v5154, %v5144
    %v5955 = vpack.c.b16 %v5155, %v5145
    %v5956 = vpack.c.b16 %v5156, %v5146
    %v5957 = vpack.c.b16 %v5157, %v5147
    %v5958 = vpack.c.b16 %v5158, %v5148
    %v5959 = vpack.c.b16 %v5159, %v5149
    %v5960 = vpack.c.b16 %v5160, %v5150
    %v5961 = vpack.c.b16 %v5161, %v5151
    %v5962 = vpack.c.b16 %v5172, %v5162
    %v5963 = vpack.c.b16 %v5173, %v5163
    %v5964 = vpack.c.b16 %v5174, %v5164
    %v5965 = vpack.c.b16 %v5175, %v5165
    %v5966 = vpack.c.b16 %v5176, %v5166
    %v5967 = vpack.c.b16 %v5177, %v5167
    %v5968 = vpack.c.b16 %v5178, %v5168
    %v5969 = vpack.c.b16 %v5179, %v5169
    %v5970 = vpack.c.b16 %v5180, %v5170
    %v5971 = vpack.c.b16 %v5181, %v5171
    %v5972 = vpack.c.b16 %v5192, %v5182
    %v5973 = vpack.c.b16 %v5193, %v5183
    %v5974 = vpack.c.b16 %v5194, %v5184
    %v5975 = vpack.c.b16 %v5195, %v5185
    %v5976 = vpack.c.b16 %v5196, %v5186
    %v5977 = vpack.c.b16 %v5197, %v5187
    %v5978 = vpack.c.b16 %v5198, %v5188
    %v5979 = vpack.c.b16 %v5199, %v5189
    %v5980 = vpack.c.b16 %v5200, %v5190
    %v5981 = vpack.c.b16 %v5201, %v5191
    %v5982 = vpack.c.b16 %v5212, %v5202
    %v5983 = vpack.c.b16 %v5213, %v5203
    %v5984 = vpack.c.b16 %v5214, %v5204
    %v5985 = vpack.c.b16 %v5215, %v5205
    %v5986 = vpack.c.b16 %v5216, %v5206
    %v5987 = vpack.c.b16 %v5217, %v5207
    %v5988 = vpack.c.b16 %v5218, %v5208
    %v5989 = vpack.c.b16 %v5219, %v5209
    %v5990 = vpack.c.b16 %v5220, %v5210
    %v5991 = vpack.c.b16 %v5221, %v5211
    %v5992 = vpack.c.b16 %v5232, %v5222
    %v5993 = vpack.c.b16 %v5233, %v5223
    %v5994 = vpack.c.b16 %v5234, %v5224
    %v5995 = vpack.c.b16 %v5235, %v5225
    %v5996 = vpack.c.b16 %v5236, %v5226
    %v5997 = vpack.c.b16 %v5237, %v5227
    %v5998 = vpack.c.b16 %v5238, %v5228
    %v5999 = vpack.c.b16 %v5239, %v5229
    %v6000 = vpack.c.b16 %v5240, %v5230
    %v6001 = vpack.c.b16 %v5241, %v5231
    %v6002 = vpack.c.b16 %v5252, %v5242
    %v6003 = vpack.c.b16 %v5253, %v5243
    %v6004 = vpack.c.b16 %v5254, %v5244
    %v6005 = vpack.c.b16 %v5255, %v5245
    %v6006 = vpack.c.b16 %v5256, %v5246
    %v6007 = vpack.c.b16 %v5257, %v5247
    %v6008 = vpack.c.b16 %v5258, %v5248
    %v6009 = vpack.c.b16 %v5259, %v5249
    %v6010 = vpack.c.b16 %v5260, %v5250
    %v6011 = vpack.c.b16 %v5261, %v5251
    %v6012 = vpack.c.b16 %v5272, %v5262
    %v6013 = vpack.c.b16 %v5273, %v5263
    %v6014 = vpack.c.b16 %v5274, %v5264
    %v6015 = vpack.c.b16 %v5275, %v5265
    %v6016 = vpack.c.b16 %v5276, %v5266
    %v6017 = vpack.c.b16 %v5277, %v5267
    %v6018 = vpack.c.b16 %v5278, %v5268
    %v6019 = vpack.c.b16 %v5279, %v5269
    %v6020 = vpack.c.b16 %v5280, %v5270
    %v6021 = vpack.c.b16 %v5281, %v5271
    %v6022 = vpack.c.b16 %v5292, %v5282
    %v6023 = vpack.c.b16 %v5293, %v5283
    %v6024 = vpack.c.b16 %v5294, %v5284
    %v6025 = vpack.c.b16 %v5295, %v5285
    %v6026 = vpack.c.b16 %v5296, %v5286
    %v6027 = vpack.c.b16 %v5297, %v5287
    %v6028 = vpack.c.b16 %v5298, %v5288
    %v6029 = vpack.c.b16 %v5299, %v5289
    %v6030 = vpack.c.b16 %v5300, %v5290
    %v6031 = vpack.c.b16 %v5301, %v5291
    %v6032 = vpack.c.b16 %v5312, %v5302
    %v6033 = vpack.c.b16 %v5313, %v5303
    %v6034 = vpack.c.b16 %v5314, %v5304
    %v6035 = vpack.c.b16 %v5315, %v5305
    %v6036 = vpack.c.b16 %v5316, %v5306
    %v6037 = vpack.c.b16 %v5317, %v5307
    %v6038 = vpack.c.b16 %v5318, %v5308
    %v6039 = vpack.c.b16 %v5319, %v5309
    %v6040 = vpack.c.b16 %v5320, %v5310
    %v6041 = vpack.c.b16 %v5321, %v5311
    %v6042 = vpack.c.b16 %v5332, %v5322
    %v6043 = vpack.c.b16 %v5333, %v5323
    %v6044 = vpack.c.b16 %v5334, %v5324
    %v6045 = vpack.c.b16 %v5335, %v5325
    %v6046 = vpack.c.b16 %v5336, %v5326
    %v6047 = vpack.c.b16 %v5337, %v5327
    %v6048 = vpack.c.b16 %v5338, %v5328
    %v6049 = vpack.c.b16 %v5339, %v5329
    %v6050 = vpack.c.b16 %v5340, %v5330
    %v6051 = vpack.c.b16 %v5341, %v5331
    %v6052 = vpack.c.b16 %v5352, %v5342
    %v6053 = vpack.c.b16 %v5353, %v5343
    %v6054 = vpack.c.b16 %v5354, %v5344
    %v6055 = vpack.c.b16 %v5355, %v5345
    %v6056 = vpack.c.b16 %v5356, %v5346
    %v6057 = vpack.c.b16 %v5357, %v5347
    %v6058 = vpack.c.b16 %v5358, %v5348
    %v6059 = vpack.c.b16 %v5359, %v5349
    %v6060 = vpack.c.b16 %v5360, %v5350
    %v6061 = vpack.c.b16 %v5361, %v5351
    %v6062 = vpack.c.b16 %v5372, %v5362
    %v6063 = vpack.c.b16 %v5373, %v5363
    %v6064 = vpack.c.b16 %v5374, %v5364
    %v6065 = vpack.c.b16 %v5375, %v5365
    %v6066 = vpack.c.b16 %v5376, %v5366
    %v6067 = vpack.c.b16 %v5377, %v5367
    %v6068 = vpack.c.b16 %v5378, %v5368
    %v6069 = vpack.c.b16 %v5379, %v5369
    %v6070 = vpack.c.b16 %v5380, %v5370
    %v6071 = vpack.c.b16 %v5381, %v5371
    %v6072 = vpack.c.b16 %v5392, %v5382
    %v6073 = vpack.c.b16 %v5393, %v5383
    %v6074 = vpack.c.b16 %v5394, %v5384
    %v6075 = vpack.c.b16 %v5395, %v5385
    %v6076 = vpack.c.b16 %v5396, %v5386
    %v6077 = vpack.c.b16 %v5397, %v5387
    %v6078 = vpack.c.b16 %v5398, %v5388
    %v6079 = vpack.c.b16 %v5399, %v5389
    %v6080 = vpack.c.b16 %v5400, %v5390
    %v6081 = vpack.c.b16 %v5401, %v5391
    %v6082 = vpack.c.b16 %v5412, %v5402
    %v6083 = vpack.c.b16 %v5413, %v5403
    %v6084 = vpack.c.b16 %v5414, %v5404
    %v6085 = vpack.c.b16 %v5415, %v5405
    %v6086 = vpack.c.b16 %v5416, %v5406
    %v6087 = vpack.c.b16 %v5417, %v5407
    %v6088 = vpack.c.b16 %v5418, %v5408
    %v6089 = vpack.c.b16 %v5419, %v5409
    %v6090 = vpack.c.b16 %v5420, %v5410
    %v6091 = vpack.c.b16 %v5421, %v5411
    %v6092 = vpack.c.b16 %v5432, %v5422
    %v6093 = vpack.c.b16 %v5433, %v5423
    %v6094 = vpack.c.b16 %v5434, %v5424
    %v6095 = vpack.c.b16 %v5435, %v5425
    %v6096 = vpack.c.b16 %v5436, %v5426
    %v6097 = vpack.c.b16 %v5437, %v5427
    %v6098 = vpack.c.b16 %v5438, %v5428
    %v6099 = vpack.c.b16 %v5439, %v5429
    %v6100 = vpack.c.b16 %v5440, %v5430
    %v6101 = vpack.c.b16 %v5441, %v5431
    %v6102 = vpack.c.b16 %v5452, %v5442
    %v6103 = vpack.c.b16 %v5453, %v5443
    %v6104 = vpack.c.b16 %v5454, %v5444
    %v6105 = vpack.c.b16 %v5455, %v5445
    %v6106 = vpack.c.b16 %v5456, %v5446
    %v6107 = vpack.c.b16 %v5457, %v5447
    %v6108 = vpack.c.b16 %v5458, %v5448
    %v6109 = vpack.c.b16 %v5459, %v5449
    %v6110 = vpack.c.b16 %v5460, %v5450
    %v6111 = vpack.c.b16 %v5461, %v5451
    %v6112 = vpack.c.b16 %v5472, %v5462
    %v6113 = vpack.c.b16 %v5473, %v5463
    %v6114 = vpack.c.b16 %v5474, %v5464
    %v6115 = vpack.c.b16 %v5475, %v5465
    %v6116 = vpack.c.b16 %v5476, %v5466
    %v6117 = vpack.c.b16 %v5477, %v5467
    %v6118 = vpack.c.b16 %v5478, %v5468
    %v6119 = vpack.c.b16 %v5479, %v5469
    %v6120 = vpack.c.b16 %v5480, %v5470
    %v6121 = vpack.c.b16 %v5481, %v5471
    %6762 = vmatprep.subr.bf16.mxu0 %v5553
    %6763 = vmatpush1.bf16.msra.mxu0 %v5552
    %6764 = vmatprep.subr.bf16.mxu0 %v5543
    %6765 = vmatpush1.bf16.msra.mxu0 %v5542
    %6766 = vmatprep.subr.bf16.mxu0 %v5533
    %6767 = vmatpush1.bf16.msra.mxu0 %v5532
    %6768 = vmatprep.subr.bf16.mxu0 %v5523
    %6769 = vmatpush1.bf16.msra.mxu0 %v5522
    %6770 = vmatprep.subr.bf16.mxu0 %v5513
    %6771 = vmatpush1.bf16.msra.mxu0 %v5512
    %6772 = vmatprep.subr.bf16.mxu0 %v5503
    %6773 = vmatpush1.bf16.msra.mxu0 %v5502
    %6774 = vmatprep.subr.bf16.mxu0 %v5493
    %6775 = vmatpush1.bf16.msra.mxu0 %v5492
    %6776 = vmatprep.subr.bf16.mxu0 %v5483
    %6777 = vmatpush1.bf16.msra.mxu0 %v5482
    %6778 = vmatprep.subr.bf16.mxu0 %v5633
    %6779 = vmatpush2.bf16.msra.mxu0 %v5632
    %6780 = vmatprep.subr.bf16.mxu0 %v5623
    %6781 = vmatpush2.bf16.msra.mxu0 %v5622
    %6782 = vmatprep.subr.bf16.mxu0 %v5613
    %6783 = vmatpush2.bf16.msra.mxu0 %v5612
    %6784 = vmatprep.subr.bf16.mxu0 %v5603
    %6785 = vmatpush2.bf16.msra.mxu0 %v5602
    %6786 = vmatprep.subr.bf16.mxu0 %v5593
    %6787 = vmatpush2.bf16.msra.mxu0 %v5592
    %6788 = vmatprep.subr.bf16.mxu0 %v5583
    %6789 = vmatpush2.bf16.msra.mxu0 %v5582
    %6790 = vmatprep.subr.bf16.mxu0 %v5573
    %6791 = vmatpush2.bf16.msra.mxu0 %v5572
    %6792 = vmatprep.subr.bf16.mxu0 %v5563
    %6793 = vmatpush2.bf16.msra.mxu0 %v5562
    %6794 = vmatprep.mubr.bf16.mxu0 %v2861
    %6795 = vmatmul.mubr.bf16.gmra.mxu0 %v2860
    %v6796 = vpop.f32.mrf.mxu0
    %v6797 = vadd.f32 %v3515, %v6796
    %v6798 = vpop.f32.mrf.mxu0
    %v6799 = vadd.f32 %v3519, %v6798
    %v6800 = vpop.f32.mrf.mxu0
    %v6801 = vpop.f32.mrf.mxu0
    %6802 = vdwg.mxu0
    %6803 = vmatprep.subr.bf16.mxu0 %v5713
    %6804 = vmatpush1.bf16.msra.mxu0 %v5712
    %6805 = vmatprep.subr.bf16.mxu0 %v5703
    %6806 = vmatpush1.bf16.msra.mxu0 %v5702
    %6807 = vmatprep.subr.bf16.mxu0 %v5693
    %6808 = vmatpush1.bf16.msra.mxu0 %v5692
    %6809 = vmatprep.subr.bf16.mxu0 %v5683
    %6810 = vmatpush1.bf16.msra.mxu0 %v5682
    %6811 = vmatprep.subr.bf16.mxu0 %v5673
    %6812 = vmatpush1.bf16.msra.mxu0 %v5672
    %6813 = vmatprep.subr.bf16.mxu0 %v5663
    %6814 = vmatpush1.bf16.msra.mxu0 %v5662
    %6815 = vmatprep.subr.bf16.mxu0 %v5653
    %6816 = vmatpush1.bf16.msra.mxu0 %v5652
    %6817 = vmatprep.subr.bf16.mxu0 %v5643
    %6818 = vmatpush1.bf16.msra.mxu0 %v5642
    %6819 = vmatprep.subr.bf16.mxu0 %v5793
    %6820 = vmatpush2.bf16.msra.mxu0 %v5792
    %6821 = vmatprep.subr.bf16.mxu0 %v5783
    %6822 = vmatpush2.bf16.msra.mxu0 %v5782
    %6823 = vmatprep.subr.bf16.mxu0 %v5773
    %6824 = vmatpush2.bf16.msra.mxu0 %v5772
    %6825 = vmatprep.subr.bf16.mxu0 %v5763
    %6826 = vmatpush2.bf16.msra.mxu0 %v5762
    %6827 = vmatprep.subr.bf16.mxu0 %v5753
    %6828 = vmatpush2.bf16.msra.mxu0 %v5752
    %6829 = vmatprep.subr.bf16.mxu0 %v5743
    %6830 = vmatpush2.bf16.msra.mxu0 %v5742
    %6831 = vmatprep.subr.bf16.mxu0 %v5733
    %6832 = vmatpush2.bf16.msra.mxu0 %v5732
    %6833 = vmatprep.subr.bf16.mxu0 %v5723
    %6834 = vmatpush2.bf16.msra.mxu0 %v5722
    %6835 = vmatprep.mubr.bf16.mxu0 %v2863
    %6836 = vmatmul.mubr.bf16.gmra.mxu0 %v2862
    %v6837 = vpop.f32.mrf.mxu0
    %v6838 = vadd.f32 %v6797, %v6837
    %v6839 = vpop.f32.mrf.mxu0
    %v6840 = vadd.f32 %v6799, %v6839
    %v6841 = vpop.f32.mrf.mxu0
    %v6842 = vpop.f32.mrf.mxu0
    %6843 = vdwg.mxu0
    %6844 = vmatprep.subr.bf16.mxu0 %v5873
    %6845 = vmatpush1.bf16.msra.mxu0 %v5872
    %6846 = vmatprep.subr.bf16.mxu0 %v5863
    %6847 = vmatpush1.bf16.msra.mxu0 %v5862
    %6848 = vmatprep.subr.bf16.mxu0 %v5853
    %6849 = vmatpush1.bf16.msra.mxu0 %v5852
    %6850 = vmatprep.subr.bf16.mxu0 %v5843
    %6851 = vmatpush1.bf16.msra.mxu0 %v5842
    %6852 = vmatprep.subr.bf16.mxu0 %v5833
    %6853 = vmatpush1.bf16.msra.mxu0 %v5832
    %6854 = vmatprep.subr.bf16.mxu0 %v5823
    %6855 = vmatpush1.bf16.msra.mxu0 %v5822
    %6856 = vmatprep.subr.bf16.mxu0 %v5813
    %6857 = vmatpush1.bf16.msra.mxu0 %v5812
    %6858 = vmatprep.subr.bf16.mxu0 %v5803
    %6859 = vmatpush1.bf16.msra.mxu0 %v5802
    %6860 = vmatprep.subr.bf16.mxu0 %v5953
    %6861 = vmatpush2.bf16.msra.mxu0 %v5952
    %6862 = vmatprep.subr.bf16.mxu0 %v5943
    %6863 = vmatpush2.bf16.msra.mxu0 %v5942
    %6864 = vmatprep.subr.bf16.mxu0 %v5933
    %6865 = vmatpush2.bf16.msra.mxu0 %v5932
    %6866 = vmatprep.subr.bf16.mxu0 %v5923
    %6867 = vmatpush2.bf16.msra.mxu0 %v5922
    %6868 = vmatprep.subr.bf16.mxu0 %v5913
    %6869 = vmatpush2.bf16.msra.mxu0 %v5912
    %6870 = vmatprep.subr.bf16.mxu0 %v5903
    %6871 = vmatpush2.bf16.msra.mxu0 %v5902
    %6872 = vmatprep.subr.bf16.mxu0 %v5893
    %6873 = vmatpush2.bf16.msra.mxu0 %v5892
    %6874 = vmatprep.subr.bf16.mxu0 %v5883
    %6875 = vmatpush2.bf16.msra.mxu0 %v5882
    %6876 = vmatprep.mubr.bf16.mxu0 %v2865
    %6877 = vmatmul.mubr.bf16.gmra.mxu0 %v2864
    %v6878 = vpop.f32.mrf.mxu0
    %v6879 = vadd.f32 %v6838, %v6878
    %v6880 = vpop.f32.mrf.mxu0
    %v6881 = vadd.f32 %v6840, %v6880
    %v6882 = vpop.f32.mrf.mxu0
    %v6883 = vpop.f32.mrf.mxu0
    %6884 = vdwg.mxu0
    %6885 = vmatprep.subr.bf16.mxu0 %v6033
    %6886 = vmatpush1.bf16.msra.mxu0 %v6032
    %6887 = vmatprep.subr.bf16.mxu0 %v6023
    %6888 = vmatpush1.bf16.msra.mxu0 %v6022
    %6889 = vmatprep.subr.bf16.mxu0 %v6013
    %6890 = vmatpush1.bf16.msra.mxu0 %v6012
    %6891 = vmatprep.subr.bf16.mxu0 %v6003
    %6892 = vmatpush1.bf16.msra.mxu0 %v6002
    %6893 = vmatprep.subr.bf16.mxu0 %v5993
    %6894 = vmatpush1.bf16.msra.mxu0 %v5992
    %6895 = vmatprep.subr.bf16.mxu0 %v5983
    %6896 = vmatpush1.bf16.msra.mxu0 %v5982
    %6897 = vmatprep.subr.bf16.mxu0 %v5973
    %6898 = vmatpush1.bf16.msra.mxu0 %v5972
    %6899 = vmatprep.subr.bf16.mxu0 %v5963
    %6900 = vmatpush1.bf16.msra.mxu0 %v5962
    %6901 = vmatprep.subr.bf16.mxu0 %v6113
    %6902 = vmatpush2.bf16.msra.mxu0 %v6112
    %6903 = vmatprep.subr.bf16.mxu0 %v6103
    %6904 = vmatpush2.bf16.msra.mxu0 %v6102
    %6905 = vmatprep.subr.bf16.mxu0 %v6093
    %6906 = vmatpush2.bf16.msra.mxu0 %v6092
    %6907 = vmatprep.subr.bf16.mxu0 %v6083
    %6908 = vmatpush2.bf16.msra.mxu0 %v6082
    %6909 = vmatprep.subr.bf16.mxu0 %v6073
    %6910 = vmatpush2.bf16.msra.mxu0 %v6072
    %6911 = vmatprep.subr.bf16.mxu0 %v6063
    %6912 = vmatpush2.bf16.msra.mxu0 %v6062
    %6913 = vmatprep.subr.bf16.mxu0 %v6053
    %6914 = vmatpush2.bf16.msra.mxu0 %v6052
    %6915 = vmatprep.subr.bf16.mxu0 %v6043
    %6916 = vmatpush2.bf16.msra.mxu0 %v6042
    %6917 = vmatprep.mubr.bf16.mxu0 %v2867
    %6918 = vmatmul.mubr.bf16.gmra.mxu0 %v2866
    %v6919 = vpop.f32.mrf.mxu0
    %v6920 = vadd.f32 %v6879, %v6919
    %v6921 = vpop.f32.mrf.mxu0
    %v6922 = vadd.f32 %v6881, %v6921
    %v6923 = vpop.f32.mrf.mxu0
    %v6924 = vpop.f32.mrf.mxu0
    %6925 = vdwg.mxu0
    %6926 = vmatprep.subr.bf16.mxu0 %v5555
    %6927 = vmatpush1.bf16.msra.mxu0 %v5554
    %6928 = vmatprep.subr.bf16.mxu0 %v5545
    %6929 = vmatpush1.bf16.msra.mxu0 %v5544
    %6930 = vmatprep.subr.bf16.mxu0 %v5535
    %6931 = vmatpush1.bf16.msra.mxu0 %v5534
    %6932 = vmatprep.subr.bf16.mxu0 %v5525
    %6933 = vmatpush1.bf16.msra.mxu0 %v5524
    %6934 = vmatprep.subr.bf16.mxu0 %v5515
    %6935 = vmatpush1.bf16.msra.mxu0 %v5514
    %6936 = vmatprep.subr.bf16.mxu0 %v5505
    %6937 = vmatpush1.bf16.msra.mxu0 %v5504
    %6938 = vmatprep.subr.bf16.mxu0 %v5495
    %6939 = vmatpush1.bf16.msra.mxu0 %v5494
    %6940 = vmatprep.subr.bf16.mxu0 %v5485
    %6941 = vmatpush1.bf16.msra.mxu0 %v5484
    %6942 = vmatprep.subr.bf16.mxu0 %v5635
    %6943 = vmatpush2.bf16.msra.mxu0 %v5634
    %6944 = vmatprep.subr.bf16.mxu0 %v5625
    %6945 = vmatpush2.bf16.msra.mxu0 %v5624
    %6946 = vmatprep.subr.bf16.mxu0 %v5615
    %6947 = vmatpush2.bf16.msra.mxu0 %v5614
    %6948 = vmatprep.subr.bf16.mxu0 %v5605
    %6949 = vmatpush2.bf16.msra.mxu0 %v5604
    %6950 = vmatprep.subr.bf16.mxu0 %v5595
    %6951 = vmatpush2.bf16.msra.mxu0 %v5594
    %6952 = vmatprep.subr.bf16.mxu0 %v5585
    %6953 = vmatpush2.bf16.msra.mxu0 %v5584
    %6954 = vmatprep.subr.bf16.mxu0 %v5575
    %6955 = vmatpush2.bf16.msra.mxu0 %v5574
    %6956 = vmatprep.subr.bf16.mxu0 %v5565
    %6957 = vmatpush2.bf16.msra.mxu0 %v5564
    %6958 = vmatprep.mubr.bf16.mxu0 %v2861
    %6959 = vmatmul.mubr.bf16.gmra.mxu0 %v2860
    %v6960 = vpop.f32.mrf.mxu0
    %v6961 = vadd.f32 %v3523, %v6960
    %v6962 = vpop.f32.mrf.mxu0
    %v6963 = vadd.f32 %v3527, %v6962
    %v6964 = vpop.f32.mrf.mxu0
    %v6965 = vpop.f32.mrf.mxu0
    %6966 = vdwg.mxu0
    %6967 = vmatprep.subr.bf16.mxu0 %v5715
    %6968 = vmatpush1.bf16.msra.mxu0 %v5714
    %6969 = vmatprep.subr.bf16.mxu0 %v5705
    %6970 = vmatpush1.bf16.msra.mxu0 %v5704
    %6971 = vmatprep.subr.bf16.mxu0 %v5695
    %6972 = vmatpush1.bf16.msra.mxu0 %v5694
    %6973 = vmatprep.subr.bf16.mxu0 %v5685
    %6974 = vmatpush1.bf16.msra.mxu0 %v5684
    %6975 = vmatprep.subr.bf16.mxu0 %v5675
    %6976 = vmatpush1.bf16.msra.mxu0 %v5674
    %6977 = vmatprep.subr.bf16.mxu0 %v5665
    %6978 = vmatpush1.bf16.msra.mxu0 %v5664
    %6979 = vmatprep.subr.bf16.mxu0 %v5655
    %6980 = vmatpush1.bf16.msra.mxu0 %v5654
    %6981 = vmatprep.subr.bf16.mxu0 %v5645
    %6982 = vmatpush1.bf16.msra.mxu0 %v5644
    %6983 = vmatprep.subr.bf16.mxu0 %v5795
    %6984 = vmatpush2.bf16.msra.mxu0 %v5794
    %6985 = vmatprep.subr.bf16.mxu0 %v5785
    %6986 = vmatpush2.bf16.msra.mxu0 %v5784
    %6987 = vmatprep.subr.bf16.mxu0 %v5775
    %6988 = vmatpush2.bf16.msra.mxu0 %v5774
    %6989 = vmatprep.subr.bf16.mxu0 %v5765
    %6990 = vmatpush2.bf16.msra.mxu0 %v5764
    %6991 = vmatprep.subr.bf16.mxu0 %v5755
    %6992 = vmatpush2.bf16.msra.mxu0 %v5754
    %6993 = vmatprep.subr.bf16.mxu0 %v5745
    %6994 = vmatpush2.bf16.msra.mxu0 %v5744
    %6995 = vmatprep.subr.bf16.mxu0 %v5735
    %6996 = vmatpush2.bf16.msra.mxu0 %v5734
    %6997 = vmatprep.subr.bf16.mxu0 %v5725
    %6998 = vmatpush2.bf16.msra.mxu0 %v5724
    %6999 = vmatprep.mubr.bf16.mxu0 %v2863
    %7000 = vmatmul.mubr.bf16.gmra.mxu0 %v2862
    %v7001 = vpop.f32.mrf.mxu0
    %v7002 = vadd.f32 %v6961, %v7001
    %v7003 = vpop.f32.mrf.mxu0
    %v7004 = vadd.f32 %v6963, %v7003
    %v7005 = vpop.f32.mrf.mxu0
    %v7006 = vpop.f32.mrf.mxu0
    %7007 = vdwg.mxu0
    %7008 = vmatprep.subr.bf16.mxu0 %v5875
    %7009 = vmatpush1.bf16.msra.mxu0 %v5874
    %7010 = vmatprep.subr.bf16.mxu0 %v5865
    %7011 = vmatpush1.bf16.msra.mxu0 %v5864
    %7012 = vmatprep.subr.bf16.mxu0 %v5855
    %7013 = vmatpush1.bf16.msra.mxu0 %v5854
    %7014 = vmatprep.subr.bf16.mxu0 %v5845
    %7015 = vmatpush1.bf16.msra.mxu0 %v5844
    %7016 = vmatprep.subr.bf16.mxu0 %v5835
    %7017 = vmatpush1.bf16.msra.mxu0 %v5834
    %7018 = vmatprep.subr.bf16.mxu0 %v5825
    %7019 = vmatpush1.bf16.msra.mxu0 %v5824
    %7020 = vmatprep.subr.bf16.mxu0 %v5815
    %7021 = vmatpush1.bf16.msra.mxu0 %v5814
    %7022 = vmatprep.subr.bf16.mxu0 %v5805
    %7023 = vmatpush1.bf16.msra.mxu0 %v5804
    %7024 = vmatprep.subr.bf16.mxu0 %v5955
    %7025 = vmatpush2.bf16.msra.mxu0 %v5954
    %7026 = vmatprep.subr.bf16.mxu0 %v5945
    %7027 = vmatpush2.bf16.msra.mxu0 %v5944
    %7028 = vmatprep.subr.bf16.mxu0 %v5935
    %7029 = vmatpush2.bf16.msra.mxu0 %v5934
    %7030 = vmatprep.subr.bf16.mxu0 %v5925
    %7031 = vmatpush2.bf16.msra.mxu0 %v5924
    %7032 = vmatprep.subr.bf16.mxu0 %v5915
    %7033 = vmatpush2.bf16.msra.mxu0 %v5914
    %7034 = vmatprep.subr.bf16.mxu0 %v5905
    %7035 = vmatpush2.bf16.msra.mxu0 %v5904
    %7036 = vmatprep.subr.bf16.mxu0 %v5895
    %7037 = vmatpush2.bf16.msra.mxu0 %v5894
    %7038 = vmatprep.subr.bf16.mxu0 %v5885
    %7039 = vmatpush2.bf16.msra.mxu0 %v5884
    %7040 = vmatprep.mubr.bf16.mxu0 %v2865
    %7041 = vmatmul.mubr.bf16.gmra.mxu0 %v2864
    %v7042 = vpop.f32.mrf.mxu0
    %v7043 = vadd.f32 %v7002, %v7042
    %v7044 = vpop.f32.mrf.mxu0
    %v7045 = vadd.f32 %v7004, %v7044
    %v7046 = vpop.f32.mrf.mxu0
    %v7047 = vpop.f32.mrf.mxu0
    %7048 = vdwg.mxu0
    %7049 = vmatprep.subr.bf16.mxu0 %v6035
    %7050 = vmatpush1.bf16.msra.mxu0 %v6034
    %7051 = vmatprep.subr.bf16.mxu0 %v6025
    %7052 = vmatpush1.bf16.msra.mxu0 %v6024
    %7053 = vmatprep.subr.bf16.mxu0 %v6015
    %7054 = vmatpush1.bf16.msra.mxu0 %v6014
    %7055 = vmatprep.subr.bf16.mxu0 %v6005
    %7056 = vmatpush1.bf16.msra.mxu0 %v6004
    %7057 = vmatprep.subr.bf16.mxu0 %v5995
    %7058 = vmatpush1.bf16.msra.mxu0 %v5994
    %7059 = vmatprep.subr.bf16.mxu0 %v5985
    %7060 = vmatpush1.bf16.msra.mxu0 %v5984
    %7061 = vmatprep.subr.bf16.mxu0 %v5975
    %7062 = vmatpush1.bf16.msra.mxu0 %v5974
    %7063 = vmatprep.subr.bf16.mxu0 %v5965
    %7064 = vmatpush1.bf16.msra.mxu0 %v5964
    %7065 = vmatprep.subr.bf16.mxu0 %v6115
    %7066 = vmatpush2.bf16.msra.mxu0 %v6114
    %7067 = vmatprep.subr.bf16.mxu0 %v6105
    %7068 = vmatpush2.bf16.msra.mxu0 %v6104
    %7069 = vmatprep.subr.bf16.mxu0 %v6095
    %7070 = vmatpush2.bf16.msra.mxu0 %v6094
    %7071 = vmatprep.subr.bf16.mxu0 %v6085
    %7072 = vmatpush2.bf16.msra.mxu0 %v6084
    %7073 = vmatprep.subr.bf16.mxu0 %v6075
    %7074 = vmatpush2.bf16.msra.mxu0 %v6074
    %7075 = vmatprep.subr.bf16.mxu0 %v6065
    %7076 = vmatpush2.bf16.msra.mxu0 %v6064
    %7077 = vmatprep.subr.bf16.mxu0 %v6055
    %7078 = vmatpush2.bf16.msra.mxu0 %v6054
    %7079 = vmatprep.subr.bf16.mxu0 %v6045
    %7080 = vmatpush2.bf16.msra.mxu0 %v6044
    %7081 = vmatprep.mubr.bf16.mxu0 %v2867
    %7082 = vmatmul.mubr.bf16.gmra.mxu0 %v2866
    %v7083 = vpop.f32.mrf.mxu0
    %v7084 = vadd.f32 %v7043, %v7083
    %v7085 = vpop.f32.mrf.mxu0
    %v7086 = vadd.f32 %v7045, %v7085
    %v7087 = vpop.f32.mrf.mxu0
    %v7088 = vpop.f32.mrf.mxu0
    %7089 = vdwg.mxu0
    %7090 = vmatprep.subr.bf16.mxu0 %v5557
    %7091 = vmatpush1.bf16.msra.mxu0 %v5556
    %7092 = vmatprep.subr.bf16.mxu0 %v5547
    %7093 = vmatpush1.bf16.msra.mxu0 %v5546
    %7094 = vmatprep.subr.bf16.mxu0 %v5537
    %7095 = vmatpush1.bf16.msra.mxu0 %v5536
    %7096 = vmatprep.subr.bf16.mxu0 %v5527
    %7097 = vmatpush1.bf16.msra.mxu0 %v5526
    %7098 = vmatprep.subr.bf16.mxu0 %v5517
    %7099 = vmatpush1.bf16.msra.mxu0 %v5516
    %7100 = vmatprep.subr.bf16.mxu0 %v5507
    %7101 = vmatpush1.bf16.msra.mxu0 %v5506
    %7102 = vmatprep.subr.bf16.mxu0 %v5497
    %7103 = vmatpush1.bf16.msra.mxu0 %v5496
    %7104 = vmatprep.subr.bf16.mxu0 %v5487
    %7105 = vmatpush1.bf16.msra.mxu0 %v5486
    %7106 = vmatprep.subr.bf16.mxu0 %v5637
    %7107 = vmatpush2.bf16.msra.mxu0 %v5636
    %7108 = vmatprep.subr.bf16.mxu0 %v5627
    %7109 = vmatpush2.bf16.msra.mxu0 %v5626
    %7110 = vmatprep.subr.bf16.mxu0 %v5617
    %7111 = vmatpush2.bf16.msra.mxu0 %v5616
    %7112 = vmatprep.subr.bf16.mxu0 %v5607
    %7113 = vmatpush2.bf16.msra.mxu0 %v5606
    %7114 = vmatprep.subr.bf16.mxu0 %v5597
    %7115 = vmatpush2.bf16.msra.mxu0 %v5596
    %7116 = vmatprep.subr.bf16.mxu0 %v5587
    %7117 = vmatpush2.bf16.msra.mxu0 %v5586
    %7118 = vmatprep.subr.bf16.mxu0 %v5577
    %7119 = vmatpush2.bf16.msra.mxu0 %v5576
    %7120 = vmatprep.subr.bf16.mxu0 %v5567
    %7121 = vmatpush2.bf16.msra.mxu0 %v5566
    %7122 = vmatprep.mubr.bf16.mxu0 %v2861
    %7123 = vmatmul.mubr.bf16.gmra.mxu0 %v2860
    %v7124 = vpop.f32.mrf.mxu0
    %v7125 = vadd.f32 %v3531, %v7124
    %v7126 = vpop.f32.mrf.mxu0
    %v7127 = vadd.f32 %v3535, %v7126
    %v7128 = vpop.f32.mrf.mxu0
    %v7129 = vpop.f32.mrf.mxu0
    %7130 = vdwg.mxu0
    %7131 = vmatprep.subr.bf16.mxu0 %v5717
    %7132 = vmatpush1.bf16.msra.mxu0 %v5716
    %7133 = vmatprep.subr.bf16.mxu0 %v5707
    %7134 = vmatpush1.bf16.msra.mxu0 %v5706
    %7135 = vmatprep.subr.bf16.mxu0 %v5697
    %7136 = vmatpush1.bf16.msra.mxu0 %v5696
    %7137 = vmatprep.subr.bf16.mxu0 %v5687
    %7138 = vmatpush1.bf16.msra.mxu0 %v5686
    %7139 = vmatprep.subr.bf16.mxu0 %v5677
    %7140 = vmatpush1.bf16.msra.mxu0 %v5676
    %7141 = vmatprep.subr.bf16.mxu0 %v5667
    %7142 = vmatpush1.bf16.msra.mxu0 %v5666
    %7143 = vmatprep.subr.bf16.mxu0 %v5657
    %7144 = vmatpush1.bf16.msra.mxu0 %v5656
    %7145 = vmatprep.subr.bf16.mxu0 %v5647
    %7146 = vmatpush1.bf16.msra.mxu0 %v5646
    %7147 = vmatprep.subr.bf16.mxu0 %v5797
    %7148 = vmatpush2.bf16.msra.mxu0 %v5796
    %7149 = vmatprep.subr.bf16.mxu0 %v5787
    %7150 = vmatpush2.bf16.msra.mxu0 %v5786
    %7151 = vmatprep.subr.bf16.mxu0 %v5777
    %7152 = vmatpush2.bf16.msra.mxu0 %v5776
    %7153 = vmatprep.subr.bf16.mxu0 %v5767
    %7154 = vmatpush2.bf16.msra.mxu0 %v5766
    %7155 = vmatprep.subr.bf16.mxu0 %v5757
    %7156 = vmatpush2.bf16.msra.mxu0 %v5756
    %7157 = vmatprep.subr.bf16.mxu0 %v5747
    %7158 = vmatpush2.bf16.msra.mxu0 %v5746
    %7159 = vmatprep.subr.bf16.mxu0 %v5737
    %7160 = vmatpush2.bf16.msra.mxu0 %v5736
    %7161 = vmatprep.subr.bf16.mxu0 %v5727
    %7162 = vmatpush2.bf16.msra.mxu0 %v5726
    %7163 = vmatprep.mubr.bf16.mxu0 %v2863
    %7164 = vmatmul.mubr.bf16.gmra.mxu0 %v2862
    %v7165 = vpop.f32.mrf.mxu0
    %v7166 = vadd.f32 %v7125, %v7165
    %v7167 = vpop.f32.mrf.mxu0
    %v7168 = vadd.f32 %v7127, %v7167
    %v7169 = vpop.f32.mrf.mxu0
    %v7170 = vpop.f32.mrf.mxu0
    %7171 = vdwg.mxu0
    %7172 = vmatprep.subr.bf16.mxu0 %v5877
    %7173 = vmatpush1.bf16.msra.mxu0 %v5876
    %7174 = vmatprep.subr.bf16.mxu0 %v5867
    %7175 = vmatpush1.bf16.msra.mxu0 %v5866
    %7176 = vmatprep.subr.bf16.mxu0 %v5857
    %7177 = vmatpush1.bf16.msra.mxu0 %v5856
    %7178 = vmatprep.subr.bf16.mxu0 %v5847
    %7179 = vmatpush1.bf16.msra.mxu0 %v5846
    %7180 = vmatprep.subr.bf16.mxu0 %v5837
    %7181 = vmatpush1.bf16.msra.mxu0 %v5836
    %7182 = vmatprep.subr.bf16.mxu0 %v5827
    %7183 = vmatpush1.bf16.msra.mxu0 %v5826
    %7184 = vmatprep.subr.bf16.mxu0 %v5817
    %7185 = vmatpush1.bf16.msra.mxu0 %v5816
    %7186 = vmatprep.subr.bf16.mxu0 %v5807
    %7187 = vmatpush1.bf16.msra.mxu0 %v5806
    %7188 = vmatprep.subr.bf16.mxu0 %v5957
    %7189 = vmatpush2.bf16.msra.mxu0 %v5956
    %7190 = vmatprep.subr.bf16.mxu0 %v5947
    %7191 = vmatpush2.bf16.msra.mxu0 %v5946
    %7192 = vmatprep.subr.bf16.mxu0 %v5937
    %7193 = vmatpush2.bf16.msra.mxu0 %v5936
    %7194 = vmatprep.subr.bf16.mxu0 %v5927
    %7195 = vmatpush2.bf16.msra.mxu0 %v5926
    %7196 = vmatprep.subr.bf16.mxu0 %v5917
    %7197 = vmatpush2.bf16.msra.mxu0 %v5916
    %7198 = vmatprep.subr.bf16.mxu0 %v5907
    %7199 = vmatpush2.bf16.msra.mxu0 %v5906
    %7200 = vmatprep.subr.bf16.mxu0 %v5897
    %7201 = vmatpush2.bf16.msra.mxu0 %v5896
    %7202 = vmatprep.subr.bf16.mxu0 %v5887
    %7203 = vmatpush2.bf16.msra.mxu0 %v5886
    %7204 = vmatprep.mubr.bf16.mxu0 %v2865
    %7205 = vmatmul.mubr.bf16.gmra.mxu0 %v2864
    %v7206 = vpop.f32.mrf.mxu0
    %v7207 = vadd.f32 %v7166, %v7206
    %v7208 = vpop.f32.mrf.mxu0
    %v7209 = vadd.f32 %v7168, %v7208
    %v7210 = vpop.f32.mrf.mxu0
    %v7211 = vpop.f32.mrf.mxu0
    %7212 = vdwg.mxu0
    %7213 = vmatprep.subr.bf16.mxu0 %v6037
    %7214 = vmatpush1.bf16.msra.mxu0 %v6036
    %7215 = vmatprep.subr.bf16.mxu0 %v6027
    %7216 = vmatpush1.bf16.msra.mxu0 %v6026
    %7217 = vmatprep.subr.bf16.mxu0 %v6017
    %7218 = vmatpush1.bf16.msra.mxu0 %v6016
    %7219 = vmatprep.subr.bf16.mxu0 %v6007
    %7220 = vmatpush1.bf16.msra.mxu0 %v6006
    %7221 = vmatprep.subr.bf16.mxu0 %v5997
    %7222 = vmatpush1.bf16.msra.mxu0 %v5996
    %7223 = vmatprep.subr.bf16.mxu0 %v5987
    %7224 = vmatpush1.bf16.msra.mxu0 %v5986
    %7225 = vmatprep.subr.bf16.mxu0 %v5977
    %7226 = vmatpush1.bf16.msra.mxu0 %v5976
    %7227 = vmatprep.subr.bf16.mxu0 %v5967
    %7228 = vmatpush1.bf16.msra.mxu0 %v5966
    %7229 = vmatprep.subr.bf16.mxu0 %v6117
    %7230 = vmatpush2.bf16.msra.mxu0 %v6116
    %7231 = vmatprep.subr.bf16.mxu0 %v6107
    %7232 = vmatpush2.bf16.msra.mxu0 %v6106
    %7233 = vmatprep.subr.bf16.mxu0 %v6097
    %7234 = vmatpush2.bf16.msra.mxu0 %v6096
    %7235 = vmatprep.subr.bf16.mxu0 %v6087
    %7236 = vmatpush2.bf16.msra.mxu0 %v6086
    %7237 = vmatprep.subr.bf16.mxu0 %v6077
    %7238 = vmatpush2.bf16.msra.mxu0 %v6076
    %7239 = vmatprep.subr.bf16.mxu0 %v6067
    %7240 = vmatpush2.bf16.msra.mxu0 %v6066
    %7241 = vmatprep.subr.bf16.mxu0 %v6057
    %7242 = vmatpush2.bf16.msra.mxu0 %v6056
    %7243 = vmatprep.subr.bf16.mxu0 %v6047
    %7244 = vmatpush2.bf16.msra.mxu0 %v6046
    %7245 = vmatprep.mubr.bf16.mxu0 %v2867
    %7246 = vmatmul.mubr.bf16.gmra.mxu0 %v2866
    %v7247 = vpop.f32.mrf.mxu0
    %v7248 = vadd.f32 %v7207, %v7247
    %v7249 = vpop.f32.mrf.mxu0
    %v7250 = vadd.f32 %v7209, %v7249
    %v7251 = vpop.f32.mrf.mxu0
    %v7252 = vpop.f32.mrf.mxu0
    %7253 = vdwg.mxu0
    %7254 = vmatprep.subr.bf16.mxu0 %v5559
    %7255 = vmatpush1.bf16.msra.mxu0 %v5558
    %7256 = vmatprep.subr.bf16.mxu0 %v5549
    %7257 = vmatpush1.bf16.msra.mxu0 %v5548
    %7258 = vmatprep.subr.bf16.mxu0 %v5539
    %7259 = vmatpush1.bf16.msra.mxu0 %v5538
    %7260 = vmatprep.subr.bf16.mxu0 %v5529
    %7261 = vmatpush1.bf16.msra.mxu0 %v5528
    %7262 = vmatprep.subr.bf16.mxu0 %v5519
    %7263 = vmatpush1.bf16.msra.mxu0 %v5518
    %7264 = vmatprep.subr.bf16.mxu0 %v5509
    %7265 = vmatpush1.bf16.msra.mxu0 %v5508
    %7266 = vmatprep.subr.bf16.mxu0 %v5499
    %7267 = vmatpush1.bf16.msra.mxu0 %v5498
    %7268 = vmatprep.subr.bf16.mxu0 %v5489
    %7269 = vmatpush1.bf16.msra.mxu0 %v5488
    %7270 = vmatprep.subr.bf16.mxu0 %v5639
    %7271 = vmatpush2.bf16.msra.mxu0 %v5638
    %7272 = vmatprep.subr.bf16.mxu0 %v5629
    %7273 = vmatpush2.bf16.msra.mxu0 %v5628
    %7274 = vmatprep.subr.bf16.mxu0 %v5619
    %7275 = vmatpush2.bf16.msra.mxu0 %v5618
    %7276 = vmatprep.subr.bf16.mxu0 %v5609
    %7277 = vmatpush2.bf16.msra.mxu0 %v5608
    %7278 = vmatprep.subr.bf16.mxu0 %v5599
    %7279 = vmatpush2.bf16.msra.mxu0 %v5598
    %7280 = vmatprep.subr.bf16.mxu0 %v5589
    %7281 = vmatpush2.bf16.msra.mxu0 %v5588
    %7282 = vmatprep.subr.bf16.mxu0 %v5579
    %7283 = vmatpush2.bf16.msra.mxu0 %v5578
    %7284 = vmatprep.subr.bf16.mxu0 %v5569
    %7285 = vmatpush2.bf16.msra.mxu0 %v5568
    %7286 = vmatprep.mubr.bf16.mxu0 %v2861
    %7287 = vmatmul.mubr.bf16.gmra.mxu0 %v2860
    %v7288 = vpop.f32.mrf.mxu0
    %v7289 = vadd.f32 %v3539, %v7288
    %v7290 = vpop.f32.mrf.mxu0
    %v7291 = vadd.f32 %v3543, %v7290
    %v7292 = vpop.f32.mrf.mxu0
    %v7293 = vpop.f32.mrf.mxu0
    %7294 = vdwg.mxu0
    %7295 = vmatprep.subr.bf16.mxu0 %v5719
    %7296 = vmatpush1.bf16.msra.mxu0 %v5718
    %7297 = vmatprep.subr.bf16.mxu0 %v5709
    %7298 = vmatpush1.bf16.msra.mxu0 %v5708
    %7299 = vmatprep.subr.bf16.mxu0 %v5699
    %7300 = vmatpush1.bf16.msra.mxu0 %v5698
    %7301 = vmatprep.subr.bf16.mxu0 %v5689
    %7302 = vmatpush1.bf16.msra.mxu0 %v5688
    %7303 = vmatprep.subr.bf16.mxu0 %v5679
    %7304 = vmatpush1.bf16.msra.mxu0 %v5678
    %7305 = vmatprep.subr.bf16.mxu0 %v5669
    %7306 = vmatpush1.bf16.msra.mxu0 %v5668
    %7307 = vmatprep.subr.bf16.mxu0 %v5659
    %7308 = vmatpush1.bf16.msra.mxu0 %v5658
    %7309 = vmatprep.subr.bf16.mxu0 %v5649
    %7310 = vmatpush1.bf16.msra.mxu0 %v5648
    %7311 = vmatprep.subr.bf16.mxu0 %v5799
    %7312 = vmatpush2.bf16.msra.mxu0 %v5798
    %7313 = vmatprep.subr.bf16.mxu0 %v5789
    %7314 = vmatpush2.bf16.msra.mxu0 %v5788
    %7315 = vmatprep.subr.bf16.mxu0 %v5779
    %7316 = vmatpush2.bf16.msra.mxu0 %v5778
    %7317 = vmatprep.subr.bf16.mxu0 %v5769
    %7318 = vmatpush2.bf16.msra.mxu0 %v5768
    %7319 = vmatprep.subr.bf16.mxu0 %v5759
    %7320 = vmatpush2.bf16.msra.mxu0 %v5758
    %7321 = vmatprep.subr.bf16.mxu0 %v5749
    %7322 = vmatpush2.bf16.msra.mxu0 %v5748
    %7323 = vmatprep.subr.bf16.mxu0 %v5739
    %7324 = vmatpush2.bf16.msra.mxu0 %v5738
    %7325 = vmatprep.subr.bf16.mxu0 %v5729
    %7326 = vmatpush2.bf16.msra.mxu0 %v5728
    %7327 = vmatprep.mubr.bf16.mxu0 %v2863
    %7328 = vmatmul.mubr.bf16.gmra.mxu0 %v2862
    %v7329 = vpop.f32.mrf.mxu0
    %v7330 = vadd.f32 %v7289, %v7329
    %v7331 = vpop.f32.mrf.mxu0
    %v7332 = vadd.f32 %v7291, %v7331
    %v7333 = vpop.f32.mrf.mxu0
    %v7334 = vpop.f32.mrf.mxu0
    %7335 = vdwg.mxu0
    %7336 = vmatprep.subr.bf16.mxu0 %v5879
    %7337 = vmatpush1.bf16.msra.mxu0 %v5878
    %7338 = vmatprep.subr.bf16.mxu0 %v5869
    %7339 = vmatpush1.bf16.msra.mxu0 %v5868
    %7340 = vmatprep.subr.bf16.mxu0 %v5859
    %7341 = vmatpush1.bf16.msra.mxu0 %v5858
    %7342 = vmatprep.subr.bf16.mxu0 %v5849
    %7343 = vmatpush1.bf16.msra.mxu0 %v5848
    %7344 = vmatprep.subr.bf16.mxu0 %v5839
    %7345 = vmatpush1.bf16.msra.mxu0 %v5838
    %7346 = vmatprep.subr.bf16.mxu0 %v5829
    %7347 = vmatpush1.bf16.msra.mxu0 %v5828
    %7348 = vmatprep.subr.bf16.mxu0 %v5819
    %7349 = vmatpush1.bf16.msra.mxu0 %v5818
    %7350 = vmatprep.subr.bf16.mxu0 %v5809
    %7351 = vmatpush1.bf16.msra.mxu0 %v5808
    %7352 = vmatprep.subr.bf16.mxu0 %v5959
    %7353 = vmatpush2.bf16.msra.mxu0 %v5958
    %7354 = vmatprep.subr.bf16.mxu0 %v5949
    %7355 = vmatpush2.bf16.msra.mxu0 %v5948
    %7356 = vmatprep.subr.bf16.mxu0 %v5939
    %7357 = vmatpush2.bf16.msra.mxu0 %v5938
    %7358 = vmatprep.subr.bf16.mxu0 %v5929
    %7359 = vmatpush2.bf16.msra.mxu0 %v5928
    %7360 = vmatprep.subr.bf16.mxu0 %v5919
    %7361 = vmatpush2.bf16.msra.mxu0 %v5918
    %7362 = vmatprep.subr.bf16.mxu0 %v5909
    %7363 = vmatpush2.bf16.msra.mxu0 %v5908
    %7364 = vmatprep.subr.bf16.mxu0 %v5899
    %7365 = vmatpush2.bf16.msra.mxu0 %v5898
    %7366 = vmatprep.subr.bf16.mxu0 %v5889
    %7367 = vmatpush2.bf16.msra.mxu0 %v5888
    %7368 = vmatprep.mubr.bf16.mxu0 %v2865
    %7369 = vmatmul.mubr.bf16.gmra.mxu0 %v2864
    %v7370 = vpop.f32.mrf.mxu0
    %v7371 = vadd.f32 %v7330, %v7370
    %v7372 = vpop.f32.mrf.mxu0
    %v7373 = vadd.f32 %v7332, %v7372
    %v7374 = vpop.f32.mrf.mxu0
    %v7375 = vpop.f32.mrf.mxu0
    %7376 = vdwg.mxu0
    %7377 = vmatprep.subr.bf16.mxu0 %v6039
    %7378 = vmatpush1.bf16.msra.mxu0 %v6038
    %7379 = vmatprep.subr.bf16.mxu0 %v6029
    %7380 = vmatpush1.bf16.msra.mxu0 %v6028
    %7381 = vmatprep.subr.bf16.mxu0 %v6019
    %7382 = vmatpush1.bf16.msra.mxu0 %v6018
    %7383 = vmatprep.subr.bf16.mxu0 %v6009
    %7384 = vmatpush1.bf16.msra.mxu0 %v6008
    %7385 = vmatprep.subr.bf16.mxu0 %v5999
    %7386 = vmatpush1.bf16.msra.mxu0 %v5998
    %7387 = vmatprep.subr.bf16.mxu0 %v5989
    %7388 = vmatpush1.bf16.msra.mxu0 %v5988
    %7389 = vmatprep.subr.bf16.mxu0 %v5979
    %7390 = vmatpush1.bf16.msra.mxu0 %v5978
    %7391 = vmatprep.subr.bf16.mxu0 %v5969
    %7392 = vmatpush1.bf16.msra.mxu0 %v5968
    %7393 = vmatprep.subr.bf16.mxu0 %v6119
    %7394 = vmatpush2.bf16.msra.mxu0 %v6118
    %7395 = vmatprep.subr.bf16.mxu0 %v6109
    %7396 = vmatpush2.bf16.msra.mxu0 %v6108
    %7397 = vmatprep.subr.bf16.mxu0 %v6099
    %7398 = vmatpush2.bf16.msra.mxu0 %v6098
    %7399 = vmatprep.subr.bf16.mxu0 %v6089
    %7400 = vmatpush2.bf16.msra.mxu0 %v6088
    %7401 = vmatprep.subr.bf16.mxu0 %v6079
    %7402 = vmatpush2.bf16.msra.mxu0 %v6078
    %7403 = vmatprep.subr.bf16.mxu0 %v6069
    %7404 = vmatpush2.bf16.msra.mxu0 %v6068
    %7405 = vmatprep.subr.bf16.mxu0 %v6059
    %7406 = vmatpush2.bf16.msra.mxu0 %v6058
    %7407 = vmatprep.subr.bf16.mxu0 %v6049
    %7408 = vmatpush2.bf16.msra.mxu0 %v6048
    %7409 = vmatprep.mubr.bf16.mxu0 %v2867
    %7410 = vmatmul.mubr.bf16.gmra.mxu0 %v2866
    %v7411 = vpop.f32.mrf.mxu0
    %v7412 = vadd.f32 %v7371, %v7411
    %v7413 = vpop.f32.mrf.mxu0
    %v7414 = vadd.f32 %v7373, %v7413
    %v7415 = vpop.f32.mrf.mxu0
    %v7416 = vpop.f32.mrf.mxu0
    %7417 = vdwg.mxu0
    %7418 = vmatprep.subr.bf16.mxu0 %v5561
    %7419 = vmatpush1.bf16.msra.mxu0 %v5560
    %7420 = vmatprep.subr.bf16.mxu0 %v5551
    %7421 = vmatpush1.bf16.msra.mxu0 %v5550
    %7422 = vmatprep.subr.bf16.mxu0 %v5541
    %7423 = vmatpush1.bf16.msra.mxu0 %v5540
    %7424 = vmatprep.subr.bf16.mxu0 %v5531
    %7425 = vmatpush1.bf16.msra.mxu0 %v5530
    %7426 = vmatprep.subr.bf16.mxu0 %v5521
    %7427 = vmatpush1.bf16.msra.mxu0 %v5520
    %7428 = vmatprep.subr.bf16.mxu0 %v5511
    %7429 = vmatpush1.bf16.msra.mxu0 %v5510
    %7430 = vmatprep.subr.bf16.mxu0 %v5501
    %7431 = vmatpush1.bf16.msra.mxu0 %v5500
    %7432 = vmatprep.subr.bf16.mxu0 %v5491
    %7433 = vmatpush1.bf16.msra.mxu0 %v5490
    %7434 = vmatprep.subr.bf16.mxu0 %v5641
    %7435 = vmatpush2.bf16.msra.mxu0 %v5640
    %7436 = vmatprep.subr.bf16.mxu0 %v5631
    %7437 = vmatpush2.bf16.msra.mxu0 %v5630
    %7438 = vmatprep.subr.bf16.mxu0 %v5621
    %7439 = vmatpush2.bf16.msra.mxu0 %v5620
    %7440 = vmatprep.subr.bf16.mxu0 %v5611
    %7441 = vmatpush2.bf16.msra.mxu0 %v5610
    %7442 = vmatprep.subr.bf16.mxu0 %v5601
    %7443 = vmatpush2.bf16.msra.mxu0 %v5600
    %7444 = vmatprep.subr.bf16.mxu0 %v5591
    %7445 = vmatpush2.bf16.msra.mxu0 %v5590
    %7446 = vmatprep.subr.bf16.mxu0 %v5581
    %7447 = vmatpush2.bf16.msra.mxu0 %v5580
    %7448 = vmatprep.subr.bf16.mxu0 %v5571
    %7449 = vmatpush2.bf16.msra.mxu0 %v5570
    %7450 = vmatprep.mubr.bf16.mxu0 %v2861
    %7451 = vmatmul.mubr.bf16.gmra.mxu0 %v2860
    %v7452 = vpop.f32.mrf.mxu0
    %v7453 = vadd.f32 %v3547, %v7452
    %v7454 = vpop.f32.mrf.mxu0
    %v7455 = vadd.f32 %v3551, %v7454
    %v7456 = vpop.f32.mrf.mxu0
    %v7457 = vpop.f32.mrf.mxu0
    %7458 = vdwg.mxu0
    %7459 = vmatprep.subr.bf16.mxu0 %v5721
    %7460 = vmatpush1.bf16.msra.mxu0 %v5720
    %7461 = vmatprep.subr.bf16.mxu0 %v5711
    %7462 = vmatpush1.bf16.msra.mxu0 %v5710
    %7463 = vmatprep.subr.bf16.mxu0 %v5701
    %7464 = vmatpush1.bf16.msra.mxu0 %v5700
    %7465 = vmatprep.subr.bf16.mxu0 %v5691
    %7466 = vmatpush1.bf16.msra.mxu0 %v5690
    %7467 = vmatprep.subr.bf16.mxu0 %v5681
    %7468 = vmatpush1.bf16.msra.mxu0 %v5680
    %7469 = vmatprep.subr.bf16.mxu0 %v5671
    %7470 = vmatpush1.bf16.msra.mxu0 %v5670
    %7471 = vmatprep.subr.bf16.mxu0 %v5661
    %7472 = vmatpush1.bf16.msra.mxu0 %v5660
    %7473 = vmatprep.subr.bf16.mxu0 %v5651
    %7474 = vmatpush1.bf16.msra.mxu0 %v5650
    %7475 = vmatprep.subr.bf16.mxu0 %v5801
    %7476 = vmatpush2.bf16.msra.mxu0 %v5800
    %7477 = vmatprep.subr.bf16.mxu0 %v5791
    %7478 = vmatpush2.bf16.msra.mxu0 %v5790
    %7479 = vmatprep.subr.bf16.mxu0 %v5781
    %7480 = vmatpush2.bf16.msra.mxu0 %v5780
    %7481 = vmatprep.subr.bf16.mxu0 %v5771
    %7482 = vmatpush2.bf16.msra.mxu0 %v5770
    %7483 = vmatprep.subr.bf16.mxu0 %v5761
    %7484 = vmatpush2.bf16.msra.mxu0 %v5760
    %7485 = vmatprep.subr.bf16.mxu0 %v5751
    %7486 = vmatpush2.bf16.msra.mxu0 %v5750
    %7487 = vmatprep.subr.bf16.mxu0 %v5741
    %7488 = vmatpush2.bf16.msra.mxu0 %v5740
    %7489 = vmatprep.subr.bf16.mxu0 %v5731
    %7490 = vmatpush2.bf16.msra.mxu0 %v5730
    %7491 = vmatprep.mubr.bf16.mxu0 %v2863
    %7492 = vmatmul.mubr.bf16.gmra.mxu0 %v2862
    %v7493 = vpop.f32.mrf.mxu0
    %v7494 = vadd.f32 %v7453, %v7493
    %v7495 = vpop.f32.mrf.mxu0
    %v7496 = vadd.f32 %v7455, %v7495
    %v7497 = vpop.f32.mrf.mxu0
    %v7498 = vpop.f32.mrf.mxu0
    %7499 = vdwg.mxu0
    %7500 = vmatprep.subr.bf16.mxu0 %v5881
    %7501 = vmatpush1.bf16.msra.mxu0 %v5880
    %7502 = vmatprep.subr.bf16.mxu0 %v5871
    %7503 = vmatpush1.bf16.msra.mxu0 %v5870
    %7504 = vmatprep.subr.bf16.mxu0 %v5861
    %7505 = vmatpush1.bf16.msra.mxu0 %v5860
    %7506 = vmatprep.subr.bf16.mxu0 %v5851
    %7507 = vmatpush1.bf16.msra.mxu0 %v5850
    %7508 = vmatprep.subr.bf16.mxu0 %v5841
    %7509 = vmatpush1.bf16.msra.mxu0 %v5840
    %7510 = vmatprep.subr.bf16.mxu0 %v5831
    %7511 = vmatpush1.bf16.msra.mxu0 %v5830
    %7512 = vmatprep.subr.bf16.mxu0 %v5821
    %7513 = vmatpush1.bf16.msra.mxu0 %v5820
    %7514 = vmatprep.subr.bf16.mxu0 %v5811
    %7515 = vmatpush1.bf16.msra.mxu0 %v5810
    %7516 = vmatprep.subr.bf16.mxu0 %v5961
    %7517 = vmatpush2.bf16.msra.mxu0 %v5960
    %7518 = vmatprep.subr.bf16.mxu0 %v5951
    %7519 = vmatpush2.bf16.msra.mxu0 %v5950
    %7520 = vmatprep.subr.bf16.mxu0 %v5941
    %7521 = vmatpush2.bf16.msra.mxu0 %v5940
    %7522 = vmatprep.subr.bf16.mxu0 %v5931
    %7523 = vmatpush2.bf16.msra.mxu0 %v5930
    %7524 = vmatprep.subr.bf16.mxu0 %v5921
    %7525 = vmatpush2.bf16.msra.mxu0 %v5920
    %7526 = vmatprep.subr.bf16.mxu0 %v5911
    %7527 = vmatpush2.bf16.msra.mxu0 %v5910
    %7528 = vmatprep.subr.bf16.mxu0 %v5901
    %7529 = vmatpush2.bf16.msra.mxu0 %v5900
    %7530 = vmatprep.subr.bf16.mxu0 %v5891
    %7531 = vmatpush2.bf16.msra.mxu0 %v5890
    %7532 = vmatprep.mubr.bf16.mxu0 %v2865
    %7533 = vmatmul.mubr.bf16.gmra.mxu0 %v2864
    %v7534 = vpop.f32.mrf.mxu0
    %v7535 = vadd.f32 %v7494, %v7534
    %v7536 = vpop.f32.mrf.mxu0
    %v7537 = vadd.f32 %v7496, %v7536
    %v7538 = vpop.f32.mrf.mxu0
    %v7539 = vpop.f32.mrf.mxu0
    %7540 = vdwg.mxu0
    %7541 = vmatprep.subr.bf16.mxu0 %v6041
    %7542 = vmatpush1.bf16.msra.mxu0 %v6040
    %7543 = vmatprep.subr.bf16.mxu0 %v6031
    %7544 = vmatpush1.bf16.msra.mxu0 %v6030
    %7545 = vmatprep.subr.bf16.mxu0 %v6021
    %7546 = vmatpush1.bf16.msra.mxu0 %v6020
    %7547 = vmatprep.subr.bf16.mxu0 %v6011
    %7548 = vmatpush1.bf16.msra.mxu0 %v6010
    %7549 = vmatprep.subr.bf16.mxu0 %v6001
    %7550 = vmatpush1.bf16.msra.mxu0 %v6000
    %7551 = vmatprep.subr.bf16.mxu0 %v5991
    %7552 = vmatpush1.bf16.msra.mxu0 %v5990
    %7553 = vmatprep.subr.bf16.mxu0 %v5981
    %7554 = vmatpush1.bf16.msra.mxu0 %v5980
    %7555 = vmatprep.subr.bf16.mxu0 %v5971
    %7556 = vmatpush1.bf16.msra.mxu0 %v5970
    %7557 = vmatprep.subr.bf16.mxu0 %v6121
    %7558 = vmatpush2.bf16.msra.mxu0 %v6120
    %7559 = vmatprep.subr.bf16.mxu0 %v6111
    %7560 = vmatpush2.bf16.msra.mxu0 %v6110
    %7561 = vmatprep.subr.bf16.mxu0 %v6101
    %7562 = vmatpush2.bf16.msra.mxu0 %v6100
    %7563 = vmatprep.subr.bf16.mxu0 %v6091
    %7564 = vmatpush2.bf16.msra.mxu0 %v6090
    %7565 = vmatprep.subr.bf16.mxu0 %v6081
    %7566 = vmatpush2.bf16.msra.mxu0 %v6080
    %7567 = vmatprep.subr.bf16.mxu0 %v6071
    %7568 = vmatpush2.bf16.msra.mxu0 %v6070
    %7569 = vmatprep.subr.bf16.mxu0 %v6061
    %7570 = vmatpush2.bf16.msra.mxu0 %v6060
    %7571 = vmatprep.subr.bf16.mxu0 %v6051
    %7572 = vmatpush2.bf16.msra.mxu0 %v6050
    %7573 = vmatprep.mubr.bf16.mxu0 %v2867
    %7574 = vmatmul.mubr.bf16.gmra.mxu0 %v2866
    %v7575 = vpop.f32.mrf.mxu0
    %v7576 = vadd.f32 %v7535, %v7575
    %v7577 = vpop.f32.mrf.mxu0
    %v7578 = vadd.f32 %v7537, %v7577
    %v7579 = vpop.f32.mrf.mxu0
    %v7580 = vpop.f32.mrf.mxu0
    %7581 = vdwg.mxu0
    %v7582 = vmax.f32 %v6920, 0.0
    %v7583 = vmax.f32 %v6922, 0.0
    %v7584 = vmax.f32 %v7084, 0.0
    %v7585 = vmax.f32 %v7086, 0.0
    %v7586 = vmax.f32 %v7248, 0.0
    %v7587 = vmax.f32 %v7250, 0.0
    %v7588 = vmax.f32 %v7412, 0.0
    %v7589 = vmax.f32 %v7414, 0.0
    %v7590 = vmax.f32 %v7576, 0.0
    %v7591 = vmax.f32 %v7578, 0.0
    %v7592 = vpack.c.bf16 %v7582, %v7582
    %v7593 = vpack.c.bf16 %v7583, %v7583
    %v7594 = vpack.c.bf16 %v7584, %v7584
    %v7595 = vpack.c.bf16 %v7585, %v7585
    %v7596 = vpack.c.bf16 %v7586, %v7586
    %v7597 = vpack.c.bf16 %v7587, %v7587
    %v7598 = vpack.c.bf16 %v7588, %v7588
    %v7599 = vpack.c.bf16 %v7589, %v7589
    %v7600 = vpack.c.bf16 %v7590, %v7590
    %v7601 = vpack.c.bf16 %v7591, %v7591
    %v7602 = vld [vmem:[#allocation20] sm:$0xff]
    %v7603 = vld [vmem:[#allocation20 + $0x8] sm:$0xff]
    %v7604 = vld [vmem:[#allocation20 + $0x10] sm:$0xff]
    %v7605 = vld [vmem:[#allocation20 + $0x18] sm:$0xff]
    %v7606 = vld [vmem:[#allocation20 + $0x20] sm:$0xff]
    %v7607 = vld [vmem:[#allocation20 + $0x28] sm:$0xff]
    %v7608 = vld [vmem:[#allocation20 + $0x30] sm:$0xff]
    %v7609 = vld [vmem:[#allocation20 + $0x38] sm:$0xff]
    %v7610 = vld [vmem:[#allocation20 + $0x40] sm:$0xff]
    %v7611 = vld [vmem:[#allocation20 + $0x48] sm:$0xff]
    %v7612 = vld [vmem:[#allocation20 + $0x50] sm:$0xff]
    %v7613 = vld [vmem:[#allocation20 + $0x58] sm:$0xff]
    %v7614 = vld [vmem:[#allocation20 + $0x60] sm:$0xff]
    %v7615 = vld [vmem:[#allocation20 + $0x68] sm:$0xff]
    %v7616 = vld [vmem:[#allocation20 + $0x70] sm:$0xff]
    %v7617 = vld [vmem:[#allocation20 + $0x78] sm:$0xff]
    %v7618 = vld [vmem:[#allocation20 + $0x80] sm:$0xff]
    %v7619 = vld [vmem:[#allocation20 + $0x88] sm:$0xff]
    %v7620 = vld [vmem:[#allocation20 + $0x90] sm:$0xff]
    %v7621 = vld [vmem:[#allocation20 + $0x98] sm:$0xff]
    %v7622 = vld [vmem:[#allocation20 + $0xa0] sm:$0xff]
    %v7623 = vld [vmem:[#allocation20 + $0xa8] sm:$0xff]
    %v7624 = vld [vmem:[#allocation20 + $0xb0] sm:$0xff]
    %v7625 = vld [vmem:[#allocation20 + $0xb8] sm:$0xff]
    %v7626 = vld [vmem:[#allocation20 + $0xc0] sm:$0xff]
    %v7627 = vld [vmem:[#allocation20 + $0xc8] sm:$0xff]
    %v7628 = vld [vmem:[#allocation20 + $0xd0] sm:$0xff]
    %v7629 = vld [vmem:[#allocation20 + $0xd8] sm:$0xff]
    %v7630 = vld [vmem:[#allocation20 + $0xe0] sm:$0xff]
    %v7631 = vld [vmem:[#allocation20 + $0xe8] sm:$0xff]
    %v7632 = vld [vmem:[#allocation20 + $0xf0] sm:$0xff]
    %v7633 = vld [vmem:[#allocation20 + $0xf8] sm:$0xff]
    %v7634 = vld [vmem:[#allocation22] sm:$0x3]
    %v7636 = vlaneseq
    %v7637 = vshrl.u32 %v7636, 7
    %v7638 = vsub.s32 0, %v7637
    %v7639 = vrot.slane %v7634, %v7638
    %v7640 = vlaneseq
    %v7641 = vshrl.u32 %v7640, 7
    %v7642 = vsub.s32 1, %v7641
    %v7643 = vrot.slane %v7634, %v7642
    %v7678 = vunpack.c.l.b16 %v7602
    %v7679 = vunpack.c.h.b16 %v7602
    %v7680 = vunpack.c.l.b16 %v7603
    %v7681 = vunpack.c.h.b16 %v7603
    %v7682 = vunpack.c.l.b16 %v7604
    %v7683 = vunpack.c.h.b16 %v7604
    %v7684 = vunpack.c.l.b16 %v7605
    %v7685 = vunpack.c.h.b16 %v7605
    %v7686 = vunpack.c.l.b16 %v7606
    %v7687 = vunpack.c.h.b16 %v7606
    %v7688 = vunpack.c.l.b16 %v7607
    %v7689 = vunpack.c.h.b16 %v7607
    %v7690 = vunpack.c.l.b16 %v7608
    %v7691 = vunpack.c.h.b16 %v7608
    %v7692 = vunpack.c.l.b16 %v7609
    %v7693 = vunpack.c.h.b16 %v7609
    %v7694 = vunpack.c.l.b16 %v7610
    %v7695 = vunpack.c.h.b16 %v7610
    %v7696 = vunpack.c.l.b16 %v7611
    %v7697 = vunpack.c.h.b16 %v7611
    %v7698 = vunpack.c.l.b16 %v7612
    %v7699 = vunpack.c.h.b16 %v7612
    %v7700 = vunpack.c.l.b16 %v7613
    %v7701 = vunpack.c.h.b16 %v7613
    %v7702 = vunpack.c.l.b16 %v7614
    %v7703 = vunpack.c.h.b16 %v7614
    %v7704 = vunpack.c.l.b16 %v7615
    %v7705 = vunpack.c.h.b16 %v7615
    %v7706 = vunpack.c.l.b16 %v7616
    %v7707 = vunpack.c.h.b16 %v7616
    %v7708 = vunpack.c.l.b16 %v7617
    %v7709 = vunpack.c.h.b16 %v7617
    %v7710 = vunpack.c.l.b16 %v7618
    %v7711 = vunpack.c.h.b16 %v7618
    %v7712 = vunpack.c.l.b16 %v7619
    %v7713 = vunpack.c.h.b16 %v7619
    %v7714 = vunpack.c.l.b16 %v7620
    %v7715 = vunpack.c.h.b16 %v7620
    %v7716 = vunpack.c.l.b16 %v7621
    %v7717 = vunpack.c.h.b16 %v7621
    %v7718 = vunpack.c.l.b16 %v7622
    %v7719 = vunpack.c.h.b16 %v7622
    %v7720 = vunpack.c.l.b16 %v7623
    %v7721 = vunpack.c.h.b16 %v7623
    %v7722 = vunpack.c.l.b16 %v7624
    %v7723 = vunpack.c.h.b16 %v7624
    %v7724 = vunpack.c.l.b16 %v7625
    %v7725 = vunpack.c.h.b16 %v7625
    %v7726 = vunpack.c.l.b16 %v7626
    %v7727 = vunpack.c.h.b16 %v7626
    %v7728 = vunpack.c.l.b16 %v7627
    %v7729 = vunpack.c.h.b16 %v7627
    %v7730 = vunpack.c.l.b16 %v7628
    %v7731 = vunpack.c.h.b16 %v7628
    %v7732 = vunpack.c.l.b16 %v7629
    %v7733 = vunpack.c.h.b16 %v7629
    %v7734 = vunpack.c.l.b16 %v7630
    %v7735 = vunpack.c.h.b16 %v7630
    %v7736 = vunpack.c.l.b16 %v7631
    %v7737 = vunpack.c.h.b16 %v7631
    %v7738 = vunpack.c.l.b16 %v7632
    %v7739 = vunpack.c.h.b16 %v7632
    %v7740 = vunpack.c.l.b16 %v7633
    %v7741 = vunpack.c.h.b16 %v7633
    %v7742 = vpack.c.b16 %v7680, %v7678
    %v7743 = vpack.c.b16 %v7681, %v7679
    %v7744 = vpack.c.b16 %v7684, %v7682
    %v7745 = vpack.c.b16 %v7685, %v7683
    %v7746 = vpack.c.b16 %v7688, %v7686
    %v7747 = vpack.c.b16 %v7689, %v7687
    %v7748 = vpack.c.b16 %v7692, %v7690
    %v7749 = vpack.c.b16 %v7693, %v7691
    %v7750 = vpack.c.b16 %v7696, %v7694
    %v7751 = vpack.c.b16 %v7697, %v7695
    %v7752 = vpack.c.b16 %v7700, %v7698
    %v7753 = vpack.c.b16 %v7701, %v7699
    %v7754 = vpack.c.b16 %v7704, %v7702
    %v7755 = vpack.c.b16 %v7705, %v7703
    %v7756 = vpack.c.b16 %v7708, %v7706
    %v7757 = vpack.c.b16 %v7709, %v7707
    %v7758 = vpack.c.b16 %v7712, %v7710
    %v7759 = vpack.c.b16 %v7713, %v7711
    %v7760 = vpack.c.b16 %v7716, %v7714
    %v7761 = vpack.c.b16 %v7717, %v7715
    %v7762 = vpack.c.b16 %v7720, %v7718
    %v7763 = vpack.c.b16 %v7721, %v7719
    %v7764 = vpack.c.b16 %v7724, %v7722
    %v7765 = vpack.c.b16 %v7725, %v7723
    %v7766 = vpack.c.b16 %v7728, %v7726
    %v7767 = vpack.c.b16 %v7729, %v7727
    %v7768 = vpack.c.b16 %v7732, %v7730
    %v7769 = vpack.c.b16 %v7733, %v7731
    %v7770 = vpack.c.b16 %v7736, %v7734
    %v7771 = vpack.c.b16 %v7737, %v7735
    %v7772 = vpack.c.b16 %v7740, %v7738
    %v7773 = vpack.c.b16 %v7741, %v7739
    %7806 = vmatprep.subr.bf16.mxu0 %v7757
    %7807 = vmatpush1.bf16.msra.mxu0 %v7756
    %7808 = vmatprep.subr.bf16.mxu0 %v7755
    %7809 = vmatpush1.bf16.msra.mxu0 %v7754
    %7810 = vmatprep.subr.bf16.mxu0 %v7753
    %7811 = vmatpush1.bf16.msra.mxu0 %v7752
    %7812 = vmatprep.subr.bf16.mxu0 %v7751
    %7813 = vmatpush1.bf16.msra.mxu0 %v7750
    %7814 = vmatprep.subr.bf16.mxu0 %v7749
    %7815 = vmatpush1.bf16.msra.mxu0 %v7748
    %7816 = vmatprep.subr.bf16.mxu0 %v7747
    %7817 = vmatpush1.bf16.msra.mxu0 %v7746
    %7818 = vmatprep.subr.bf16.mxu0 %v7745
    %7819 = vmatpush1.bf16.msra.mxu0 %v7744
    %7820 = vmatprep.subr.bf16.mxu0 %v7743
    %7821 = vmatpush1.bf16.msra.mxu0 %v7742
    %7822 = vmatprep.subr.bf16.mxu0 %v7773
    %7823 = vmatpush2.bf16.msra.mxu0 %v7772
    %7824 = vmatprep.subr.bf16.mxu0 %v7771
    %7825 = vmatpush2.bf16.msra.mxu0 %v7770
    %7826 = vmatprep.subr.bf16.mxu0 %v7769
    %7827 = vmatpush2.bf16.msra.mxu0 %v7768
    %7828 = vmatprep.subr.bf16.mxu0 %v7767
    %7829 = vmatpush2.bf16.msra.mxu0 %v7766
    %7830 = vmatprep.subr.bf16.mxu0 %v7765
    %7831 = vmatpush2.bf16.msra.mxu0 %v7764
    %7832 = vmatprep.subr.bf16.mxu0 %v7763
    %7833 = vmatpush2.bf16.msra.mxu0 %v7762
    %7834 = vmatprep.subr.bf16.mxu0 %v7761
    %7835 = vmatpush2.bf16.msra.mxu0 %v7760
    %7836 = vmatprep.subr.bf16.mxu0 %v7759
    %7837 = vmatpush2.bf16.msra.mxu0 %v7758
    %7838 = vmatprep.mubr.bf16.mxu0 %v7593
    %7839 = vmatmul.mubr.bf16.gmra.mxu0 %v7592
    %v7840 = vpop.f32.mrf.mxu0
    %v7841 = vadd.f32 %v7639, %v7840
    %v7842 = vpop.f32.mrf.mxu0
    %v7843 = vadd.f32 %v7643, %v7842
    %v7844 = vpop.f32.mrf.mxu0
    %v7845 = vpop.f32.mrf.mxu0
    %7846 = vdwg.mxu0
    %v7847 = vmax.f32 %v7841, 0.0
    %v7848 = vmax.f32 %v7843, 0.0
    %v7849 = vadd.f32 %v7847, 0.0
    %v7850 = vadd.f32 %v7848, 0.0
    %s7851 = scalar_lea.vmem [#allocation20], 256
    %v7852 = vld [vmem:[%s7851] sm:$0xff]
    %v7853 = vld [vmem:[%s7851 + $0x8] sm:$0xff]
    %v7854 = vld [vmem:[%s7851 + $0x10] sm:$0xff]
    %v7855 = vld [vmem:[%s7851 + $0x18] sm:$0xff]
    %v7856 = vld [vmem:[%s7851 + $0x20] sm:$0xff]
    %v7857 = vld [vmem:[%s7851 + $0x28] sm:$0xff]
    %v7858 = vld [vmem:[%s7851 + $0x30] sm:$0xff]
    %v7859 = vld [vmem:[%s7851 + $0x38] sm:$0xff]
    %v7860 = vld [vmem:[%s7851 + $0x40] sm:$0xff]
    %v7861 = vld [vmem:[%s7851 + $0x48] sm:$0xff]
    %v7862 = vld [vmem:[%s7851 + $0x50] sm:$0xff]
    %v7863 = vld [vmem:[%s7851 + $0x58] sm:$0xff]
    %v7864 = vld [vmem:[%s7851 + $0x60] sm:$0xff]
    %v7865 = vld [vmem:[%s7851 + $0x68] sm:$0xff]
    %v7866 = vld [vmem:[%s7851 + $0x70] sm:$0xff]
    %v7867 = vld [vmem:[%s7851 + $0x78] sm:$0xff]
    %v7868 = vld [vmem:[%s7851 + $0x80] sm:$0xff]
    %v7869 = vld [vmem:[%s7851 + $0x88] sm:$0xff]
    %v7870 = vld [vmem:[%s7851 + $0x90] sm:$0xff]
    %v7871 = vld [vmem:[%s7851 + $0x98] sm:$0xff]
    %v7872 = vld [vmem:[%s7851 + $0xa0] sm:$0xff]
    %v7873 = vld [vmem:[%s7851 + $0xa8] sm:$0xff]
    %v7874 = vld [vmem:[%s7851 + $0xb0] sm:$0xff]
    %v7875 = vld [vmem:[%s7851 + $0xb8] sm:$0xff]
    %v7876 = vld [vmem:[%s7851 + $0xc0] sm:$0xff]
    %v7877 = vld [vmem:[%s7851 + $0xc8] sm:$0xff]
    %v7878 = vld [vmem:[%s7851 + $0xd0] sm:$0xff]
    %v7879 = vld [vmem:[%s7851 + $0xd8] sm:$0xff]
    %v7880 = vld [vmem:[%s7851 + $0xe0] sm:$0xff]
    %v7881 = vld [vmem:[%s7851 + $0xe8] sm:$0xff]
    %v7882 = vld [vmem:[%s7851 + $0xf0] sm:$0xff]
    %v7883 = vld [vmem:[%s7851 + $0xf8] sm:$0xff]
    %s7884 = scalar_lea.vmem [#allocation22], 2
    %v7885 = vld [vmem:[%s7884] sm:$0x3]
    %v7887 = vlaneseq
    %v7888 = vshrl.u32 %v7887, 7
    %v7889 = vsub.s32 0, %v7888
    %v7890 = vrot.slane %v7885, %v7889
    %v7891 = vlaneseq
    %v7892 = vshrl.u32 %v7891, 7
    %v7893 = vsub.s32 1, %v7892
    %v7894 = vrot.slane %v7885, %v7893
    %v7929 = vunpack.c.l.b16 %v7852
    %v7930 = vunpack.c.h.b16 %v7852
    %v7931 = vunpack.c.l.b16 %v7853
    %v7932 = vunpack.c.h.b16 %v7853
    %v7933 = vunpack.c.l.b16 %v7854
    %v7934 = vunpack.c.h.b16 %v7854
    %v7935 = vunpack.c.l.b16 %v7855
    %v7936 = vunpack.c.h.b16 %v7855
    %v7937 = vunpack.c.l.b16 %v7856
    %v7938 = vunpack.c.h.b16 %v7856
    %v7939 = vunpack.c.l.b16 %v7857
    %v7940 = vunpack.c.h.b16 %v7857
    %v7941 = vunpack.c.l.b16 %v7858
    %v7942 = vunpack.c.h.b16 %v7858
    %v7943 = vunpack.c.l.b16 %v7859
    %v7944 = vunpack.c.h.b16 %v7859
    %v7945 = vunpack.c.l.b16 %v7860
    %v7946 = vunpack.c.h.b16 %v7860
    %v7947 = vunpack.c.l.b16 %v7861
    %v7948 = vunpack.c.h.b16 %v7861
    %v7949 = vunpack.c.l.b16 %v7862
    %v7950 = vunpack.c.h.b16 %v7862
    %v7951 = vunpack.c.l.b16 %v7863
    %v7952 = vunpack.c.h.b16 %v7863
    %v7953 = vunpack.c.l.b16 %v7864
    %v7954 = vunpack.c.h.b16 %v7864
    %v7955 = vunpack.c.l.b16 %v7865
    %v7956 = vunpack.c.h.b16 %v7865
    %v7957 = vunpack.c.l.b16 %v7866
    %v7958 = vunpack.c.h.b16 %v7866
    %v7959 = vunpack.c.l.b16 %v7867
    %v7960 = vunpack.c.h.b16 %v7867
    %v7961 = vunpack.c.l.b16 %v7868
    %v7962 = vunpack.c.h.b16 %v7868
    %v7963 = vunpack.c.l.b16 %v7869
    %v7964 = vunpack.c.h.b16 %v7869
    %v7965 = vunpack.c.l.b16 %v7870
    %v7966 = vunpack.c.h.b16 %v7870
    %v7967 = vunpack.c.l.b16 %v7871
    %v7968 = vunpack.c.h.b16 %v7871
    %v7969 = vunpack.c.l.b16 %v7872
    %v7970 = vunpack.c.h.b16 %v7872
    %v7971 = vunpack.c.l.b16 %v7873
    %v7972 = vunpack.c.h.b16 %v7873
    %v7973 = vunpack.c.l.b16 %v7874
    %v7974 = vunpack.c.h.b16 %v7874
    %v7975 = vunpack.c.l.b16 %v7875
    %v7976 = vunpack.c.h.b16 %v7875
    %v7977 = vunpack.c.l.b16 %v7876
    %v7978 = vunpack.c.h.b16 %v7876
    %v7979 = vunpack.c.l.b16 %v7877
    %v7980 = vunpack.c.h.b16 %v7877
    %v7981 = vunpack.c.l.b16 %v7878
    %v7982 = vunpack.c.h.b16 %v7878
    %v7983 = vunpack.c.l.b16 %v7879
    %v7984 = vunpack.c.h.b16 %v7879
    %v7985 = vunpack.c.l.b16 %v7880
    %v7986 = vunpack.c.h.b16 %v7880
    %v7987 = vunpack.c.l.b16 %v7881
    %v7988 = vunpack.c.h.b16 %v7881
    %v7989 = vunpack.c.l.b16 %v7882
    %v7990 = vunpack.c.h.b16 %v7882
    %v7991 = vunpack.c.l.b16 %v7883
    %v7992 = vunpack.c.h.b16 %v7883
    %v7993 = vpack.c.b16 %v7931, %v7929
    %v7994 = vpack.c.b16 %v7932, %v7930
    %v7995 = vpack.c.b16 %v7935, %v7933
    %v7996 = vpack.c.b16 %v7936, %v7934
    %v7997 = vpack.c.b16 %v7939, %v7937
    %v7998 = vpack.c.b16 %v7940, %v7938
    %v7999 = vpack.c.b16 %v7943, %v7941
    %v8000 = vpack.c.b16 %v7944, %v7942
    %v8001 = vpack.c.b16 %v7947, %v7945
    %v8002 = vpack.c.b16 %v7948, %v7946
    %v8003 = vpack.c.b16 %v7951, %v7949
    %v8004 = vpack.c.b16 %v7952, %v7950
    %v8005 = vpack.c.b16 %v7955, %v7953
    %v8006 = vpack.c.b16 %v7956, %v7954
    %v8007 = vpack.c.b16 %v7959, %v7957
    %v8008 = vpack.c.b16 %v7960, %v7958
    %v8009 = vpack.c.b16 %v7963, %v7961
    %v8010 = vpack.c.b16 %v7964, %v7962
    %v8011 = vpack.c.b16 %v7967, %v7965
    %v8012 = vpack.c.b16 %v7968, %v7966
    %v8013 = vpack.c.b16 %v7971, %v7969
    %v8014 = vpack.c.b16 %v7972, %v7970
    %v8015 = vpack.c.b16 %v7975, %v7973
    %v8016 = vpack.c.b16 %v7976, %v7974
    %v8017 = vpack.c.b16 %v7979, %v7977
    %v8018 = vpack.c.b16 %v7980, %v7978
    %v8019 = vpack.c.b16 %v7983, %v7981
    %v8020 = vpack.c.b16 %v7984, %v7982
    %v8021 = vpack.c.b16 %v7987, %v7985
    %v8022 = vpack.c.b16 %v7988, %v7986
    %v8023 = vpack.c.b16 %v7991, %v7989
    %v8024 = vpack.c.b16 %v7992, %v7990
    %8057 = vmatprep.subr.bf16.mxu0 %v8008
    %8058 = vmatpush1.bf16.msra.mxu0 %v8007
    %8059 = vmatprep.subr.bf16.mxu0 %v8006
    %8060 = vmatpush1.bf16.msra.mxu0 %v8005
    %8061 = vmatprep.subr.bf16.mxu0 %v8004
    %8062 = vmatpush1.bf16.msra.mxu0 %v8003
    %8063 = vmatprep.subr.bf16.mxu0 %v8002
    %8064 = vmatpush1.bf16.msra.mxu0 %v8001
    %8065 = vmatprep.subr.bf16.mxu0 %v8000
    %8066 = vmatpush1.bf16.msra.mxu0 %v7999
    %8067 = vmatprep.subr.bf16.mxu0 %v7998
    %8068 = vmatpush1.bf16.msra.mxu0 %v7997
    %8069 = vmatprep.subr.bf16.mxu0 %v7996
    %8070 = vmatpush1.bf16.msra.mxu0 %v7995
    %8071 = vmatprep.subr.bf16.mxu0 %v7994
    %8072 = vmatpush1.bf16.msra.mxu0 %v7993
    %8073 = vmatprep.subr.bf16.mxu0 %v8024
    %8074 = vmatpush2.bf16.msra.mxu0 %v8023
    %8075 = vmatprep.subr.bf16.mxu0 %v8022
    %8076 = vmatpush2.bf16.msra.mxu0 %v8021
    %8077 = vmatprep.subr.bf16.mxu0 %v8020
    %8078 = vmatpush2.bf16.msra.mxu0 %v8019
    %8079 = vmatprep.subr.bf16.mxu0 %v8018
    %8080 = vmatpush2.bf16.msra.mxu0 %v8017
    %8081 = vmatprep.subr.bf16.mxu0 %v8016
    %8082 = vmatpush2.bf16.msra.mxu0 %v8015
    %8083 = vmatprep.subr.bf16.mxu0 %v8014
    %8084 = vmatpush2.bf16.msra.mxu0 %v8013
    %8085 = vmatprep.subr.bf16.mxu0 %v8012
    %8086 = vmatpush2.bf16.msra.mxu0 %v8011
    %8087 = vmatprep.subr.bf16.mxu0 %v8010
    %8088 = vmatpush2.bf16.msra.mxu0 %v8009
    %8089 = vmatprep.mubr.bf16.mxu0 %v7595
    %8090 = vmatmul.mubr.bf16.gmra.mxu0 %v7594
    %v8091 = vpop.f32.mrf.mxu0
    %v8092 = vadd.f32 %v7890, %v8091
    %v8093 = vpop.f32.mrf.mxu0
    %v8094 = vadd.f32 %v7894, %v8093
    %v8095 = vpop.f32.mrf.mxu0
    %v8096 = vpop.f32.mrf.mxu0
    %8097 = vdwg.mxu0
    %v8098 = vmax.f32 %v8092, 0.0
    %v8099 = vmax.f32 %v8094, 0.0
    %v8100 = vadd.f32 %v7849, %v8098
    %v8101 = vadd.f32 %v7850, %v8099
    %s8102 = scalar_lea.vmem [#allocation20], 512
    %v8103 = vld [vmem:[%s8102] sm:$0xff]
    %v8104 = vld [vmem:[%s8102 + $0x8] sm:$0xff]
    %v8105 = vld [vmem:[%s8102 + $0x10] sm:$0xff]
    %v8106 = vld [vmem:[%s8102 + $0x18] sm:$0xff]
    %v8107 = vld [vmem:[%s8102 + $0x20] sm:$0xff]
    %v8108 = vld [vmem:[%s8102 + $0x28] sm:$0xff]
    %v8109 = vld [vmem:[%s8102 + $0x30] sm:$0xff]
    %v8110 = vld [vmem:[%s8102 + $0x38] sm:$0xff]
    %v8111 = vld [vmem:[%s8102 + $0x40] sm:$0xff]
    %v8112 = vld [vmem:[%s8102 + $0x48] sm:$0xff]
    %v8113 = vld [vmem:[%s8102 + $0x50] sm:$0xff]
    %v8114 = vld [vmem:[%s8102 + $0x58] sm:$0xff]
    %v8115 = vld [vmem:[%s8102 + $0x60] sm:$0xff]
    %v8116 = vld [vmem:[%s8102 + $0x68] sm:$0xff]
    %v8117 = vld [vmem:[%s8102 + $0x70] sm:$0xff]
    %v8118 = vld [vmem:[%s8102 + $0x78] sm:$0xff]
    %v8119 = vld [vmem:[%s8102 + $0x80] sm:$0xff]
    %v8120 = vld [vmem:[%s8102 + $0x88] sm:$0xff]
    %v8121 = vld [vmem:[%s8102 + $0x90] sm:$0xff]
    %v8122 = vld [vmem:[%s8102 + $0x98] sm:$0xff]
    %v8123 = vld [vmem:[%s8102 + $0xa0] sm:$0xff]
    %v8124 = vld [vmem:[%s8102 + $0xa8] sm:$0xff]
    %v8125 = vld [vmem:[%s8102 + $0xb0] sm:$0xff]
    %v8126 = vld [vmem:[%s8102 + $0xb8] sm:$0xff]
    %v8127 = vld [vmem:[%s8102 + $0xc0] sm:$0xff]
    %v8128 = vld [vmem:[%s8102 + $0xc8] sm:$0xff]
    %v8129 = vld [vmem:[%s8102 + $0xd0] sm:$0xff]
    %v8130 = vld [vmem:[%s8102 + $0xd8] sm:$0xff]
    %v8131 = vld [vmem:[%s8102 + $0xe0] sm:$0xff]
    %v8132 = vld [vmem:[%s8102 + $0xe8] sm:$0xff]
    %v8133 = vld [vmem:[%s8102 + $0xf0] sm:$0xff]
    %v8134 = vld [vmem:[%s8102 + $0xf8] sm:$0xff]
    %s8135 = scalar_lea.vmem [#allocation22], 4
    %v8136 = vld [vmem:[%s8135] sm:$0x3]
    %v8138 = vlaneseq
    %v8139 = vshrl.u32 %v8138, 7
    %v8140 = vsub.s32 0, %v8139
    %v8141 = vrot.slane %v8136, %v8140
    %v8142 = vlaneseq
    %v8143 = vshrl.u32 %v8142, 7
    %v8144 = vsub.s32 1, %v8143
    %v8145 = vrot.slane %v8136, %v8144
    %v8180 = vunpack.c.l.b16 %v8103
    %v8181 = vunpack.c.h.b16 %v8103
    %v8182 = vunpack.c.l.b16 %v8104
    %v8183 = vunpack.c.h.b16 %v8104
    %v8184 = vunpack.c.l.b16 %v8105
    %v8185 = vunpack.c.h.b16 %v8105
    %v8186 = vunpack.c.l.b16 %v8106
    %v8187 = vunpack.c.h.b16 %v8106
    %v8188 = vunpack.c.l.b16 %v8107
    %v8189 = vunpack.c.h.b16 %v8107
    %v8190 = vunpack.c.l.b16 %v8108
    %v8191 = vunpack.c.h.b16 %v8108
    %v8192 = vunpack.c.l.b16 %v8109
    %v8193 = vunpack.c.h.b16 %v8109
    %v8194 = vunpack.c.l.b16 %v8110
    %v8195 = vunpack.c.h.b16 %v8110
    %v8196 = vunpack.c.l.b16 %v8111
    %v8197 = vunpack.c.h.b16 %v8111
    %v8198 = vunpack.c.l.b16 %v8112
    %v8199 = vunpack.c.h.b16 %v8112
    %v8200 = vunpack.c.l.b16 %v8113
    %v8201 = vunpack.c.h.b16 %v8113
    %v8202 = vunpack.c.l.b16 %v8114
    %v8203 = vunpack.c.h.b16 %v8114
    %v8204 = vunpack.c.l.b16 %v8115
    %v8205 = vunpack.c.h.b16 %v8115
    %v8206 = vunpack.c.l.b16 %v8116
    %v8207 = vunpack.c.h.b16 %v8116
    %v8208 = vunpack.c.l.b16 %v8117
    %v8209 = vunpack.c.h.b16 %v8117
    %v8210 = vunpack.c.l.b16 %v8118
    %v8211 = vunpack.c.h.b16 %v8118
    %v8212 = vunpack.c.l.b16 %v8119
    %v8213 = vunpack.c.h.b16 %v8119
    %v8214 = vunpack.c.l.b16 %v8120
    %v8215 = vunpack.c.h.b16 %v8120
    %v8216 = vunpack.c.l.b16 %v8121
    %v8217 = vunpack.c.h.b16 %v8121
    %v8218 = vunpack.c.l.b16 %v8122
    %v8219 = vunpack.c.h.b16 %v8122
    %v8220 = vunpack.c.l.b16 %v8123
    %v8221 = vunpack.c.h.b16 %v8123
    %v8222 = vunpack.c.l.b16 %v8124
    %v8223 = vunpack.c.h.b16 %v8124
    %v8224 = vunpack.c.l.b16 %v8125
    %v8225 = vunpack.c.h.b16 %v8125
    %v8226 = vunpack.c.l.b16 %v8126
    %v8227 = vunpack.c.h.b16 %v8126
    %v8228 = vunpack.c.l.b16 %v8127
    %v8229 = vunpack.c.h.b16 %v8127
    %v8230 = vunpack.c.l.b16 %v8128
    %v8231 = vunpack.c.h.b16 %v8128
    %v8232 = vunpack.c.l.b16 %v8129
    %v8233 = vunpack.c.h.b16 %v8129
    %v8234 = vunpack.c.l.b16 %v8130
    %v8235 = vunpack.c.h.b16 %v8130
    %v8236 = vunpack.c.l.b16 %v8131
    %v8237 = vunpack.c.h.b16 %v8131
    %v8238 = vunpack.c.l.b16 %v8132
    %v8239 = vunpack.c.h.b16 %v8132
    %v8240 = vunpack.c.l.b16 %v8133
    %v8241 = vunpack.c.h.b16 %v8133
    %v8242 = vunpack.c.l.b16 %v8134
    %v8243 = vunpack.c.h.b16 %v8134
    %v8244 = vpack.c.b16 %v8182, %v8180
    %v8245 = vpack.c.b16 %v8183, %v8181
    %v8246 = vpack.c.b16 %v8186, %v8184
    %v8247 = vpack.c.b16 %v8187, %v8185
    %v8248 = vpack.c.b16 %v8190, %v8188
    %v8249 = vpack.c.b16 %v8191, %v8189
    %v8250 = vpack.c.b16 %v8194, %v8192
    %v8251 = vpack.c.b16 %v8195, %v8193
    %v8252 = vpack.c.b16 %v8198, %v8196
    %v8253 = vpack.c.b16 %v8199, %v8197
    %v8254 = vpack.c.b16 %v8202, %v8200
    %v8255 = vpack.c.b16 %v8203, %v8201
    %v8256 = vpack.c.b16 %v8206, %v8204
    %v8257 = vpack.c.b16 %v8207, %v8205
    %v8258 = vpack.c.b16 %v8210, %v8208
    %v8259 = vpack.c.b16 %v8211, %v8209
    %v8260 = vpack.c.b16 %v8214, %v8212
    %v8261 = vpack.c.b16 %v8215, %v8213
    %v8262 = vpack.c.b16 %v8218, %v8216
    %v8263 = vpack.c.b16 %v8219, %v8217
    %v8264 = vpack.c.b16 %v8222, %v8220
    %v8265 = vpack.c.b16 %v8223, %v8221
    %v8266 = vpack.c.b16 %v8226, %v8224
    %v8267 = vpack.c.b16 %v8227, %v8225
    %v8268 = vpack.c.b16 %v8230, %v8228
    %v8269 = vpack.c.b16 %v8231, %v8229
    %v8270 = vpack.c.b16 %v8234, %v8232
    %v8271 = vpack.c.b16 %v8235, %v8233
    %v8272 = vpack.c.b16 %v8238, %v8236
    %v8273 = vpack.c.b16 %v8239, %v8237
    %v8274 = vpack.c.b16 %v8242, %v8240
    %v8275 = vpack.c.b16 %v8243, %v8241
    %8308 = vmatprep.subr.bf16.mxu0 %v8259
    %8309 = vmatpush1.bf16.msra.mxu0 %v8258
    %8310 = vmatprep.subr.bf16.mxu0 %v8257
    %8311 = vmatpush1.bf16.msra.mxu0 %v8256
    %8312 = vmatprep.subr.bf16.mxu0 %v8255
    %8313 = vmatpush1.bf16.msra.mxu0 %v8254
    %8314 = vmatprep.subr.bf16.mxu0 %v8253
    %8315 = vmatpush1.bf16.msra.mxu0 %v8252
    %8316 = vmatprep.subr.bf16.mxu0 %v8251
    %8317 = vmatpush1.bf16.msra.mxu0 %v8250
    %8318 = vmatprep.subr.bf16.mxu0 %v8249
    %8319 = vmatpush1.bf16.msra.mxu0 %v8248
    %8320 = vmatprep.subr.bf16.mxu0 %v8247
    %8321 = vmatpush1.bf16.msra.mxu0 %v8246
    %8322 = vmatprep.subr.bf16.mxu0 %v8245
    %8323 = vmatpush1.bf16.msra.mxu0 %v8244
    %8324 = vmatprep.subr.bf16.mxu0 %v8275
    %8325 = vmatpush2.bf16.msra.mxu0 %v8274
    %8326 = vmatprep.subr.bf16.mxu0 %v8273
    %8327 = vmatpush2.bf16.msra.mxu0 %v8272
    %8328 = vmatprep.subr.bf16.mxu0 %v8271
    %8329 = vmatpush2.bf16.msra.mxu0 %v8270
    %8330 = vmatprep.subr.bf16.mxu0 %v8269
    %8331 = vmatpush2.bf16.msra.mxu0 %v8268
    %8332 = vmatprep.subr.bf16.mxu0 %v8267
    %8333 = vmatpush2.bf16.msra.mxu0 %v8266
    %8334 = vmatprep.subr.bf16.mxu0 %v8265
    %8335 = vmatpush2.bf16.msra.mxu0 %v8264
    %8336 = vmatprep.subr.bf16.mxu0 %v8263
    %8337 = vmatpush2.bf16.msra.mxu0 %v8262
    %8338 = vmatprep.subr.bf16.mxu0 %v8261
    %8339 = vmatpush2.bf16.msra.mxu0 %v8260
    %8340 = vmatprep.mubr.bf16.mxu0 %v7597
    %8341 = vmatmul.mubr.bf16.gmra.mxu0 %v7596
    %v8342 = vpop.f32.mrf.mxu0
    %v8343 = vadd.f32 %v8141, %v8342
    %v8344 = vpop.f32.mrf.mxu0
    %v8345 = vadd.f32 %v8145, %v8344
    %v8346 = vpop.f32.mrf.mxu0
    %v8347 = vpop.f32.mrf.mxu0
    %8348 = vdwg.mxu0
    %v8349 = vmax.f32 %v8343, 0.0
    %v8350 = vmax.f32 %v8345, 0.0
    %v8351 = vadd.f32 %v8100, %v8349
    %v8352 = vadd.f32 %v8101, %v8350
    %s8353 = scalar_lea.vmem [#allocation20], 768
    %v8354 = vld [vmem:[%s8353] sm:$0xff]
    %v8355 = vld [vmem:[%s8353 + $0x8] sm:$0xff]
    %v8356 = vld [vmem:[%s8353 + $0x10] sm:$0xff]
    %v8357 = vld [vmem:[%s8353 + $0x18] sm:$0xff]
    %v8358 = vld [vmem:[%s8353 + $0x20] sm:$0xff]
    %v8359 = vld [vmem:[%s8353 + $0x28] sm:$0xff]
    %v8360 = vld [vmem:[%s8353 + $0x30] sm:$0xff]
    %v8361 = vld [vmem:[%s8353 + $0x38] sm:$0xff]
    %v8362 = vld [vmem:[%s8353 + $0x40] sm:$0xff]
    %v8363 = vld [vmem:[%s8353 + $0x48] sm:$0xff]
    %v8364 = vld [vmem:[%s8353 + $0x50] sm:$0xff]
    %v8365 = vld [vmem:[%s8353 + $0x58] sm:$0xff]
    %v8366 = vld [vmem:[%s8353 + $0x60] sm:$0xff]
    %v8367 = vld [vmem:[%s8353 + $0x68] sm:$0xff]
    %v8368 = vld [vmem:[%s8353 + $0x70] sm:$0xff]
    %v8369 = vld [vmem:[%s8353 + $0x78] sm:$0xff]
    %v8370 = vld [vmem:[%s8353 + $0x80] sm:$0xff]
    %v8371 = vld [vmem:[%s8353 + $0x88] sm:$0xff]
    %v8372 = vld [vmem:[%s8353 + $0x90] sm:$0xff]
    %v8373 = vld [vmem:[%s8353 + $0x98] sm:$0xff]
    %v8374 = vld [vmem:[%s8353 + $0xa0] sm:$0xff]
    %v8375 = vld [vmem:[%s8353 + $0xa8] sm:$0xff]
    %v8376 = vld [vmem:[%s8353 + $0xb0] sm:$0xff]
    %v8377 = vld [vmem:[%s8353 + $0xb8] sm:$0xff]
    %v8378 = vld [vmem:[%s8353 + $0xc0] sm:$0xff]
    %v8379 = vld [vmem:[%s8353 + $0xc8] sm:$0xff]
    %v8380 = vld [vmem:[%s8353 + $0xd0] sm:$0xff]
    %v8381 = vld [vmem:[%s8353 + $0xd8] sm:$0xff]
    %v8382 = vld [vmem:[%s8353 + $0xe0] sm:$0xff]
    %v8383 = vld [vmem:[%s8353 + $0xe8] sm:$0xff]
    %v8384 = vld [vmem:[%s8353 + $0xf0] sm:$0xff]
    %v8385 = vld [vmem:[%s8353 + $0xf8] sm:$0xff]
    %s8386 = scalar_lea.vmem [#allocation22], 6
    %v8387 = vld [vmem:[%s8386] sm:$0x3]
    %v8389 = vlaneseq
    %v8390 = vshrl.u32 %v8389, 7
    %v8391 = vsub.s32 0, %v8390
    %v8392 = vrot.slane %v8387, %v8391
    %v8393 = vlaneseq
    %v8394 = vshrl.u32 %v8393, 7
    %v8395 = vsub.s32 1, %v8394
    %v8396 = vrot.slane %v8387, %v8395
    %v8431 = vunpack.c.l.b16 %v8354
    %v8432 = vunpack.c.h.b16 %v8354
    %v8433 = vunpack.c.l.b16 %v8355
    %v8434 = vunpack.c.h.b16 %v8355
    %v8435 = vunpack.c.l.b16 %v8356
    %v8436 = vunpack.c.h.b16 %v8356
    %v8437 = vunpack.c.l.b16 %v8357
    %v8438 = vunpack.c.h.b16 %v8357
    %v8439 = vunpack.c.l.b16 %v8358
    %v8440 = vunpack.c.h.b16 %v8358
    %v8441 = vunpack.c.l.b16 %v8359
    %v8442 = vunpack.c.h.b16 %v8359
    %v8443 = vunpack.c.l.b16 %v8360
    %v8444 = vunpack.c.h.b16 %v8360
    %v8445 = vunpack.c.l.b16 %v8361
    %v8446 = vunpack.c.h.b16 %v8361
    %v8447 = vunpack.c.l.b16 %v8362
    %v8448 = vunpack.c.h.b16 %v8362
    %v8449 = vunpack.c.l.b16 %v8363
    %v8450 = vunpack.c.h.b16 %v8363
    %v8451 = vunpack.c.l.b16 %v8364
    %v8452 = vunpack.c.h.b16 %v8364
    %v8453 = vunpack.c.l.b16 %v8365
    %v8454 = vunpack.c.h.b16 %v8365
    %v8455 = vunpack.c.l.b16 %v8366
    %v8456 = vunpack.c.h.b16 %v8366
    %v8457 = vunpack.c.l.b16 %v8367
    %v8458 = vunpack.c.h.b16 %v8367
    %v8459 = vunpack.c.l.b16 %v8368
    %v8460 = vunpack.c.h.b16 %v8368
    %v8461 = vunpack.c.l.b16 %v8369
    %v8462 = vunpack.c.h.b16 %v8369
    %v8463 = vunpack.c.l.b16 %v8370
    %v8464 = vunpack.c.h.b16 %v8370
    %v8465 = vunpack.c.l.b16 %v8371
    %v8466 = vunpack.c.h.b16 %v8371
    %v8467 = vunpack.c.l.b16 %v8372
    %v8468 = vunpack.c.h.b16 %v8372
    %v8469 = vunpack.c.l.b16 %v8373
    %v8470 = vunpack.c.h.b16 %v8373
    %v8471 = vunpack.c.l.b16 %v8374
    %v8472 = vunpack.c.h.b16 %v8374
    %v8473 = vunpack.c.l.b16 %v8375
    %v8474 = vunpack.c.h.b16 %v8375
    %v8475 = vunpack.c.l.b16 %v8376
    %v8476 = vunpack.c.h.b16 %v8376
    %v8477 = vunpack.c.l.b16 %v8377
    %v8478 = vunpack.c.h.b16 %v8377
    %v8479 = vunpack.c.l.b16 %v8378
    %v8480 = vunpack.c.h.b16 %v8378
    %v8481 = vunpack.c.l.b16 %v8379
    %v8482 = vunpack.c.h.b16 %v8379
    %v8483 = vunpack.c.l.b16 %v8380
    %v8484 = vunpack.c.h.b16 %v8380
    %v8485 = vunpack.c.l.b16 %v8381
    %v8486 = vunpack.c.h.b16 %v8381
    %v8487 = vunpack.c.l.b16 %v8382
    %v8488 = vunpack.c.h.b16 %v8382
    %v8489 = vunpack.c.l.b16 %v8383
    %v8490 = vunpack.c.h.b16 %v8383
    %v8491 = vunpack.c.l.b16 %v8384
    %v8492 = vunpack.c.h.b16 %v8384
    %v8493 = vunpack.c.l.b16 %v8385
    %v8494 = vunpack.c.h.b16 %v8385
    %v8495 = vpack.c.b16 %v8433, %v8431
    %v8496 = vpack.c.b16 %v8434, %v8432
    %v8497 = vpack.c.b16 %v8437, %v8435
    %v8498 = vpack.c.b16 %v8438, %v8436
    %v8499 = vpack.c.b16 %v8441, %v8439
    %v8500 = vpack.c.b16 %v8442, %v8440
    %v8501 = vpack.c.b16 %v8445, %v8443
    %v8502 = vpack.c.b16 %v8446, %v8444
    %v8503 = vpack.c.b16 %v8449, %v8447
    %v8504 = vpack.c.b16 %v8450, %v8448
    %v8505 = vpack.c.b16 %v8453, %v8451
    %v8506 = vpack.c.b16 %v8454, %v8452
    %v8507 = vpack.c.b16 %v8457, %v8455
    %v8508 = vpack.c.b16 %v8458, %v8456
    %v8509 = vpack.c.b16 %v8461, %v8459
    %v8510 = vpack.c.b16 %v8462, %v8460
    %v8511 = vpack.c.b16 %v8465, %v8463
    %v8512 = vpack.c.b16 %v8466, %v8464
    %v8513 = vpack.c.b16 %v8469, %v8467
    %v8514 = vpack.c.b16 %v8470, %v8468
    %v8515 = vpack.c.b16 %v8473, %v8471
    %v8516 = vpack.c.b16 %v8474, %v8472
    %v8517 = vpack.c.b16 %v8477, %v8475
    %v8518 = vpack.c.b16 %v8478, %v8476
    %v8519 = vpack.c.b16 %v8481, %v8479
    %v8520 = vpack.c.b16 %v8482, %v8480
    %v8521 = vpack.c.b16 %v8485, %v8483
    %v8522 = vpack.c.b16 %v8486, %v8484
    %v8523 = vpack.c.b16 %v8489, %v8487
    %v8524 = vpack.c.b16 %v8490, %v8488
    %v8525 = vpack.c.b16 %v8493, %v8491
    %v8526 = vpack.c.b16 %v8494, %v8492
    %8559 = vmatprep.subr.bf16.mxu0 %v8510
    %8560 = vmatpush1.bf16.msra.mxu0 %v8509
    %8561 = vmatprep.subr.bf16.mxu0 %v8508
    %8562 = vmatpush1.bf16.msra.mxu0 %v8507
    %8563 = vmatprep.subr.bf16.mxu0 %v8506
    %8564 = vmatpush1.bf16.msra.mxu0 %v8505
    %8565 = vmatprep.subr.bf16.mxu0 %v8504
    %8566 = vmatpush1.bf16.msra.mxu0 %v8503
    %8567 = vmatprep.subr.bf16.mxu0 %v8502
    %8568 = vmatpush1.bf16.msra.mxu0 %v8501
    %8569 = vmatprep.subr.bf16.mxu0 %v8500
    %8570 = vmatpush1.bf16.msra.mxu0 %v8499
    %8571 = vmatprep.subr.bf16.mxu0 %v8498
    %8572 = vmatpush1.bf16.msra.mxu0 %v8497
    %8573 = vmatprep.subr.bf16.mxu0 %v8496
    %8574 = vmatpush1.bf16.msra.mxu0 %v8495
    %8575 = vmatprep.subr.bf16.mxu0 %v8526
    %8576 = vmatpush2.bf16.msra.mxu0 %v8525
    %8577 = vmatprep.subr.bf16.mxu0 %v8524
    %8578 = vmatpush2.bf16.msra.mxu0 %v8523
    %8579 = vmatprep.subr.bf16.mxu0 %v8522
    %8580 = vmatpush2.bf16.msra.mxu0 %v8521
    %8581 = vmatprep.subr.bf16.mxu0 %v8520
    %8582 = vmatpush2.bf16.msra.mxu0 %v8519
    %8583 = vmatprep.subr.bf16.mxu0 %v8518
    %8584 = vmatpush2.bf16.msra.mxu0 %v8517
    %8585 = vmatprep.subr.bf16.mxu0 %v8516
    %8586 = vmatpush2.bf16.msra.mxu0 %v8515
    %8587 = vmatprep.subr.bf16.mxu0 %v8514
    %8588 = vmatpush2.bf16.msra.mxu0 %v8513
    %8589 = vmatprep.subr.bf16.mxu0 %v8512
    %8590 = vmatpush2.bf16.msra.mxu0 %v8511
    %8591 = vmatprep.mubr.bf16.mxu0 %v7599
    %8592 = vmatmul.mubr.bf16.gmra.mxu0 %v7598
    %v8593 = vpop.f32.mrf.mxu0
    %v8594 = vadd.f32 %v8392, %v8593
    %v8595 = vpop.f32.mrf.mxu0
    %v8596 = vadd.f32 %v8396, %v8595
    %v8597 = vpop.f32.mrf.mxu0
    %v8598 = vpop.f32.mrf.mxu0
    %8599 = vdwg.mxu0
    %v8600 = vmax.f32 %v8594, 0.0
    %v8601 = vmax.f32 %v8596, 0.0
    %v8602 = vadd.f32 %v8351, %v8600
    %v8603 = vadd.f32 %v8352, %v8601
    %s8604 = scalar_lea.vmem [#allocation20], 1024
    %v8605 = vld [vmem:[%s8604] sm:$0xff]
    %v8606 = vld [vmem:[%s8604 + $0x8] sm:$0xff]
    %v8607 = vld [vmem:[%s8604 + $0x10] sm:$0xff]
    %v8608 = vld [vmem:[%s8604 + $0x18] sm:$0xff]
    %v8609 = vld [vmem:[%s8604 + $0x20] sm:$0xff]
    %v8610 = vld [vmem:[%s8604 + $0x28] sm:$0xff]
    %v8611 = vld [vmem:[%s8604 + $0x30] sm:$0xff]
    %v8612 = vld [vmem:[%s8604 + $0x38] sm:$0xff]
    %v8613 = vld [vmem:[%s8604 + $0x40] sm:$0xff]
    %v8614 = vld [vmem:[%s8604 + $0x48] sm:$0xff]
    %v8615 = vld [vmem:[%s8604 + $0x50] sm:$0xff]
    %v8616 = vld [vmem:[%s8604 + $0x58] sm:$0xff]
    %v8617 = vld [vmem:[%s8604 + $0x60] sm:$0xff]
    %v8618 = vld [vmem:[%s8604 + $0x68] sm:$0xff]
    %v8619 = vld [vmem:[%s8604 + $0x70] sm:$0xff]
    %v8620 = vld [vmem:[%s8604 + $0x78] sm:$0xff]
    %v8621 = vld [vmem:[%s8604 + $0x80] sm:$0xff]
    %v8622 = vld [vmem:[%s8604 + $0x88] sm:$0xff]
    %v8623 = vld [vmem:[%s8604 + $0x90] sm:$0xff]
    %v8624 = vld [vmem:[%s8604 + $0x98] sm:$0xff]
    %v8625 = vld [vmem:[%s8604 + $0xa0] sm:$0xff]
    %v8626 = vld [vmem:[%s8604 + $0xa8] sm:$0xff]
    %v8627 = vld [vmem:[%s8604 + $0xb0] sm:$0xff]
    %v8628 = vld [vmem:[%s8604 + $0xb8] sm:$0xff]
    %v8629 = vld [vmem:[%s8604 + $0xc0] sm:$0xff]
    %v8630 = vld [vmem:[%s8604 + $0xc8] sm:$0xff]
    %v8631 = vld [vmem:[%s8604 + $0xd0] sm:$0xff]
    %v8632 = vld [vmem:[%s8604 + $0xd8] sm:$0xff]
    %v8633 = vld [vmem:[%s8604 + $0xe0] sm:$0xff]
    %v8634 = vld [vmem:[%s8604 + $0xe8] sm:$0xff]
    %v8635 = vld [vmem:[%s8604 + $0xf0] sm:$0xff]
    %v8636 = vld [vmem:[%s8604 + $0xf8] sm:$0xff]
    %s8637 = scalar_lea.vmem [#allocation22], 8
    %v8638 = vld [vmem:[%s8637] sm:$0x3]
    %v8640 = vlaneseq
    %v8641 = vshrl.u32 %v8640, 7
    %v8642 = vsub.s32 0, %v8641
    %v8643 = vrot.slane %v8638, %v8642
    %v8644 = vlaneseq
    %v8645 = vshrl.u32 %v8644, 7
    %v8646 = vsub.s32 1, %v8645
    %v8647 = vrot.slane %v8638, %v8646
    %v8682 = vunpack.c.l.b16 %v8605
    %v8683 = vunpack.c.h.b16 %v8605
    %v8684 = vunpack.c.l.b16 %v8606
    %v8685 = vunpack.c.h.b16 %v8606
    %v8686 = vunpack.c.l.b16 %v8607
    %v8687 = vunpack.c.h.b16 %v8607
    %v8688 = vunpack.c.l.b16 %v8608
    %v8689 = vunpack.c.h.b16 %v8608
    %v8690 = vunpack.c.l.b16 %v8609
    %v8691 = vunpack.c.h.b16 %v8609
    %v8692 = vunpack.c.l.b16 %v8610
    %v8693 = vunpack.c.h.b16 %v8610
    %v8694 = vunpack.c.l.b16 %v8611
    %v8695 = vunpack.c.h.b16 %v8611
    %v8696 = vunpack.c.l.b16 %v8612
    %v8697 = vunpack.c.h.b16 %v8612
    %v8698 = vunpack.c.l.b16 %v8613
    %v8699 = vunpack.c.h.b16 %v8613
    %v8700 = vunpack.c.l.b16 %v8614
    %v8701 = vunpack.c.h.b16 %v8614
    %v8702 = vunpack.c.l.b16 %v8615
    %v8703 = vunpack.c.h.b16 %v8615
    %v8704 = vunpack.c.l.b16 %v8616
    %v8705 = vunpack.c.h.b16 %v8616
    %v8706 = vunpack.c.l.b16 %v8617
    %v8707 = vunpack.c.h.b16 %v8617
    %v8708 = vunpack.c.l.b16 %v8618
    %v8709 = vunpack.c.h.b16 %v8618
    %v8710 = vunpack.c.l.b16 %v8619
    %v8711 = vunpack.c.h.b16 %v8619
    %v8712 = vunpack.c.l.b16 %v8620
    %v8713 = vunpack.c.h.b16 %v8620
    %v8714 = vunpack.c.l.b16 %v8621
    %v8715 = vunpack.c.h.b16 %v8621
    %v8716 = vunpack.c.l.b16 %v8622
    %v8717 = vunpack.c.h.b16 %v8622
    %v8718 = vunpack.c.l.b16 %v8623
    %v8719 = vunpack.c.h.b16 %v8623
    %v8720 = vunpack.c.l.b16 %v8624
    %v8721 = vunpack.c.h.b16 %v8624
    %v8722 = vunpack.c.l.b16 %v8625
    %v8723 = vunpack.c.h.b16 %v8625
    %v8724 = vunpack.c.l.b16 %v8626
    %v8725 = vunpack.c.h.b16 %v8626
    %v8726 = vunpack.c.l.b16 %v8627
    %v8727 = vunpack.c.h.b16 %v8627
    %v8728 = vunpack.c.l.b16 %v8628
    %v8729 = vunpack.c.h.b16 %v8628
    %v8730 = vunpack.c.l.b16 %v8629
    %v8731 = vunpack.c.h.b16 %v8629
    %v8732 = vunpack.c.l.b16 %v8630
    %v8733 = vunpack.c.h.b16 %v8630
    %v8734 = vunpack.c.l.b16 %v8631
    %v8735 = vunpack.c.h.b16 %v8631
    %v8736 = vunpack.c.l.b16 %v8632
    %v8737 = vunpack.c.h.b16 %v8632
    %v8738 = vunpack.c.l.b16 %v8633
    %v8739 = vunpack.c.h.b16 %v8633
    %v8740 = vunpack.c.l.b16 %v8634
    %v8741 = vunpack.c.h.b16 %v8634
    %v8742 = vunpack.c.l.b16 %v8635
    %v8743 = vunpack.c.h.b16 %v8635
    %v8744 = vunpack.c.l.b16 %v8636
    %v8745 = vunpack.c.h.b16 %v8636
    %v8746 = vpack.c.b16 %v8684, %v8682
    %v8747 = vpack.c.b16 %v8685, %v8683
    %v8748 = vpack.c.b16 %v8688, %v8686
    %v8749 = vpack.c.b16 %v8689, %v8687
    %v8750 = vpack.c.b16 %v8692, %v8690
    %v8751 = vpack.c.b16 %v8693, %v8691
    %v8752 = vpack.c.b16 %v8696, %v8694
    %v8753 = vpack.c.b16 %v8697, %v8695
    %v8754 = vpack.c.b16 %v8700, %v8698
    %v8755 = vpack.c.b16 %v8701, %v8699
    %v8756 = vpack.c.b16 %v8704, %v8702
    %v8757 = vpack.c.b16 %v8705, %v8703
    %v8758 = vpack.c.b16 %v8708, %v8706
    %v8759 = vpack.c.b16 %v8709, %v8707
    %v8760 = vpack.c.b16 %v8712, %v8710
    %v8761 = vpack.c.b16 %v8713, %v8711
    %v8762 = vpack.c.b16 %v8716, %v8714
    %v8763 = vpack.c.b16 %v8717, %v8715
    %v8764 = vpack.c.b16 %v8720, %v8718
    %v8765 = vpack.c.b16 %v8721, %v8719
    %v8766 = vpack.c.b16 %v8724, %v8722
    %v8767 = vpack.c.b16 %v8725, %v8723
    %v8768 = vpack.c.b16 %v8728, %v8726
    %v8769 = vpack.c.b16 %v8729, %v8727
    %v8770 = vpack.c.b16 %v8732, %v8730
    %v8771 = vpack.c.b16 %v8733, %v8731
    %v8772 = vpack.c.b16 %v8736, %v8734
    %v8773 = vpack.c.b16 %v8737, %v8735
    %v8774 = vpack.c.b16 %v8740, %v8738
    %v8775 = vpack.c.b16 %v8741, %v8739
    %v8776 = vpack.c.b16 %v8744, %v8742
    %v8777 = vpack.c.b16 %v8745, %v8743
    %8810 = vmatprep.subr.bf16.mxu0 %v8761
    %8811 = vmatpush1.bf16.msra.mxu0 %v8760
    %8812 = vmatprep.subr.bf16.mxu0 %v8759
    %8813 = vmatpush1.bf16.msra.mxu0 %v8758
    %8814 = vmatprep.subr.bf16.mxu0 %v8757
    %8815 = vmatpush1.bf16.msra.mxu0 %v8756
    %8816 = vmatprep.subr.bf16.mxu0 %v8755
    %8817 = vmatpush1.bf16.msra.mxu0 %v8754
    %8818 = vmatprep.subr.bf16.mxu0 %v8753
    %8819 = vmatpush1.bf16.msra.mxu0 %v8752
    %8820 = vmatprep.subr.bf16.mxu0 %v8751
    %8821 = vmatpush1.bf16.msra.mxu0 %v8750
    %8822 = vmatprep.subr.bf16.mxu0 %v8749
    %8823 = vmatpush1.bf16.msra.mxu0 %v8748
    %8824 = vmatprep.subr.bf16.mxu0 %v8747
    %8825 = vmatpush1.bf16.msra.mxu0 %v8746
    %8826 = vmatprep.subr.bf16.mxu0 %v8777
    %8827 = vmatpush2.bf16.msra.mxu0 %v8776
    %8828 = vmatprep.subr.bf16.mxu0 %v8775
    %8829 = vmatpush2.bf16.msra.mxu0 %v8774
    %8830 = vmatprep.subr.bf16.mxu0 %v8773
    %8831 = vmatpush2.bf16.msra.mxu0 %v8772
    %8832 = vmatprep.subr.bf16.mxu0 %v8771
    %8833 = vmatpush2.bf16.msra.mxu0 %v8770
    %8834 = vmatprep.subr.bf16.mxu0 %v8769
    %8835 = vmatpush2.bf16.msra.mxu0 %v8768
    %8836 = vmatprep.subr.bf16.mxu0 %v8767
    %8837 = vmatpush2.bf16.msra.mxu0 %v8766
    %8838 = vmatprep.subr.bf16.mxu0 %v8765
    %8839 = vmatpush2.bf16.msra.mxu0 %v8764
    %8840 = vmatprep.subr.bf16.mxu0 %v8763
    %8841 = vmatpush2.bf16.msra.mxu0 %v8762
    %8842 = vmatprep.mubr.bf16.mxu0 %v7601
    %8843 = vmatmul.mubr.bf16.gmra.mxu0 %v7600
    %v8844 = vpop.f32.mrf.mxu0
    %v8845 = vadd.f32 %v8643, %v8844
    %v8846 = vpop.f32.mrf.mxu0
    %v8847 = vadd.f32 %v8647, %v8846
    %v8848 = vpop.f32.mrf.mxu0
    %v8849 = vpop.f32.mrf.mxu0
    %8850 = vdwg.mxu0
    %v8851 = vmax.f32 %v8845, 0.0
    %v8852 = vmax.f32 %v8847, 0.0
    %v8853 = vadd.f32 %v8602, %v8851
    %v8854 = vadd.f32 %v8603, %v8852
    %v8855 = vtanh.pop %v8853
    %v8856 = vtanh.pop %v8854
    %8857 = vst [vmem:[#allocation23] sm:$0xff] %v8855
    %8858 = vst [vmem:[#allocation23 + $0x8] sm:$0xff] %v8856
    // Predicated region
    $region106: #{tpu_custom_call.1} parent=1 // pred_check
      _
    $region107: #{tpu_custom_call.1} parent=1 // pred_check_branch
      %8860 = sbr.rel (0) target = $region109
    $region108: #{tpu_custom_call.1} parent=1 // pred_region
      %s8862 = ssub.s32 256, 256
      %8863 = vsyncadd [#allocation4], %s8862
      %s8865 = sshll.u32 [#allocation23], 4
      %s8866 = int_to_ptr.vmem [resolvable:$true] %s8865
      %8868 = dma.vmem_to_hbm [thread:$0]  %s8866, 256, %s13, [#allocation4]
    $region109: #{tpu_custom_call.1} parent=1 // pred_fallthru
      _
    // Predicated region
    $region110: #{tpu_custom_call.1} parent=1 // pred_check
      _
    $region111: #{tpu_custom_call.1} parent=1 // pred_check_branch
      %8870 = sbr.rel (0) target = $region113
    $region112: #{tpu_custom_call.1} parent=1 // pred_region
      %8871 = dma.done [#allocation4], 256
    $region113: #{tpu_custom_call.1} parent=1 // pred_fallthru
      _
    %8872 = vsyncpa [#allocation3], 1
    %8873 = vsyncpa [#allocation6], 1
    %8874 = vsyncpa [#allocation9], 1
    %8875 = vsyncpa [#allocation12], 1
    %8876 = vsyncpa [#allocation15], 1
    %8877 = vsyncpa [#allocation18], 1
    %8878 = vsyncpa [#allocation21], 1
    %8879 = vsyncpa [#allocation4], 1

</llo_original>
